<compile_context>
chip_gen: v6e
topology: v6e:2x2x1
jax: 0.10.0
libtpu: 0.0.40
codegen_flags: <defaults>
</compile_context>

<pallas_src>
import functools

import jax
import jax.numpy as jnp
from jax import lax
from jax.experimental import pallas as pl
from jax.experimental.pallas import tpu as pltpu


_EPS = 1e-5            # nn.InstanceNorm2d default
_SPLIT_K_MIN_C = 128   # below this the long-K im2col matmul fills the MXU better


def _compiler_params():
    # Explicit scoped-VMEM limit (review): defaults (16 MiB v5e / 32 MiB v6e,v7x)
    # are far below what resident weights + whole-image tiles need.
    try:
        cap = pltpu.get_tpu_info().vmem_capacity_bytes
    except Exception:            # conservative fallback (v7x physical = 64 MiB)
        cap = 64 * 1024 * 1024
    vmem_limit = min(int(cap * 3 // 4), 100 * 1024 * 1024)
    return pltpu.CompilerParams(
        # Batch axis is "parallel". TODO(synk): add a "parallel" HW-tile axis so
        # both v7x TensorCores are busy when N == 1.
        dimension_semantics=("parallel",),
        vmem_limit_bytes=vmem_limit,
    )


# ----------------------------------------------------------------------------
# In-kernel helpers (everything stays in VMEM / vregs)
# ----------------------------------------------------------------------------
def _pad_hw(x_flat, h, w):
    """(h*w, c) -> (h+2, w+2, c) zero-padded, same dtype (bf16 in practice)."""
    c = x_flat.shape[-1]
    xs = x_flat.reshape(h, w, c)
    zr = jnp.zeros((1, w, c), x_flat.dtype)
    xp = jnp.concatenate([zr, xs, zr], axis=0)
    zc = jnp.zeros((h + 2, 1, c), x_flat.dtype)
    return jnp.concatenate([zc, xp, zc], axis=1)


def _conv3x3_multi(x_bf16, w_refs, h, w):
    """Shared-input 3x3 'same' convs on one (h*w, c) bf16 tile.

    Returns one (h*w, cout_i) f32 result per weight ref (each (9*c, cout_i),
    bf16).  All weights reuse the same padded buffer / tap matrix, so e.g.
    gamma+beta cost one im2col, not two, and no lane slice of a fused result.

    * c <  _SPLIT_K_MIN_C : build one (h*w, 9c) bf16 tap matrix, one long-K
      matmul per weight (best MXU utilization at small c).
    * c >= _SPLIT_K_MIN_C : keep only the padded (h+2, w+2, c) buffer and issue
      9 accumulating K=c matmuls per weight (no 9x tap VMEM blow-up, no 9-way
      lane concat; native to v7x's in-place-accumulating MRB).
    """
    c = x_bf16.shape[-1]
    hw = h * w
    if c >= _SPLIT_K_MIN_C:
        xp = _pad_hw(x_bf16, h, w)
        outs = [None] * len(w_refs)
        i = 0
        for dy in range(3):
            for dx in range(3):
                tap = xp[dy:dy + h, dx:dx + w, :].reshape(hw, c)
                for j, w_ref in enumerate(w_refs):
                    part = jnp.dot(tap, w_ref[i * c:(i + 1) * c, :],
                                   preferred_element_type=jnp.float32)
                    outs[j] = part if outs[j] is None else outs[j] + part
                i += 1
        return outs
    # long-K form: taps stay bf16 end-to-end
    xp = _pad_hw(x_bf16, h, w)
    taps = jnp.concatenate(
        [xp[dy:dy + h, dx:dx + w, :].reshape(hw, c)
         for dy in range(3) for dx in range(3)], axis=-1)          # (hw, 9c) bf16
    return [jnp.dot(taps, w_ref[...], preferred_element_type=jnp.float32)
            for w_ref in w_refs]


def _inorm_stats(x_f32, hw, eps):
    """Per-channel (1, C) mean and rsqrt(var+eps); one-pass, clamped variance."""
    inv = 1.0 / hw
    mean = jnp.sum(x_f32, axis=0, keepdims=True) * inv
    var = jnp.sum(x_f32 * x_f32, axis=0, keepdims=True) * inv - mean * mean
    var = jnp.maximum(var, 0.0)           # guard cancellation -> NaN under rsqrt
    return mean, lax.rsqrt(var + eps)
    # TODO(synk): if a bundle dump shows the XLU slot saturating, move these
    # axis-0 sums to the MXU (ones(1,hw) @ [x | x*x]).


def _leaky_relu(x):
    return jnp.where(x >= 0.0, x, 0.2 * x)


# ----------------------------------------------------------------------------
# The fused block kernel (one batch element per grid step)
# ----------------------------------------------------------------------------
def _block_kernel(x_ref, seg_ref,
                  w_sh_ref, b_sh_ref,
                  wg0_ref, bg0_ref, wb0_ref, bb0_ref,
                  wgs_ref, bgs_ref, wbs_ref, bbs_ref,
                  wg1_ref, bg1_ref, wb1_ref, bb1_ref,
                  w0_ref, b0_ref, w1_ref, b1_ref, ws_ref,
                  o_ref, *, h, w, nh, eps):
    hw = h * w

    # ---- fused mlp_shared of all three SPADE norms: relu(conv3x3(seg)) ------
    seg = seg_ref[0]                                       # (hw, label_nc) bf16
    (sh,) = _conv3x3_multi(seg, [w_sh_ref], h, w)
    actv = jnp.maximum(sh + b_sh_ref[...], 0.0).astype(jnp.bfloat16)  # (hw, 3nh)
    # Per-SPADE activations: lane slices are 128-aligned at production nh=128;
    # at the toy nh they are tiny in-VMEM relayouts (no HBM traffic).
    a0 = actv[:, 0 * nh:1 * nh]
    a1 = actv[:, 1 * nh:2 * nh]
    a_s = actv[:, 2 * nh:3 * nh]

    # ---- instance-norm stats of x (single live f32 copy; stats as vectors) --
    x = x_ref[0].astype(jnp.float32)                       # (hw, fin)
    mean_x, rstd_x = _inorm_stats(x, hw, eps)

    def spade(a_bf16, wg_ref, bg_ref, wb_ref, bb_ref, xin, mean, rstd):
        gamma, beta = _conv3x3_multi(a_bf16, [wg_ref, wb_ref], h, w)
        gamma = gamma + bg_ref[...]
        beta = beta + bb_ref[...]
        return ((xin - mean) * rstd) * (1.0 + gamma) + beta

    # ---- shortcut: x_s = conv_s(norm_s(x, seg))  (1x1, no bias) -------------
    ys = spade(a_s, wgs_ref, bgs_ref, wbs_ref, bbs_ref,
               x, mean_x, rstd_x).astype(jnp.bfloat16)
    x_s = jnp.dot(ys, ws_ref[...], preferred_element_type=jnp.float32)

    # ---- main path step 1: dx0 = conv_0(lrelu(norm_0(x, seg))) --------------
    y0 = _leaky_relu(spade(a0, wg0_ref, bg0_ref, wb0_ref, bb0_ref,
                           x, mean_x, rstd_x)).astype(jnp.bfloat16)
    (d0,) = _conv3x3_multi(y0, [w0_ref], h, w)
    dx0 = d0 + b0_ref[...]                                 # (hw, fmid) f32

    # ---- main path step 2 (fused; dx0 never leaves VMEM) --------------------
    mean_d, rstd_d = _inorm_stats(dx0, hw, eps)
    y1 = _leaky_relu(spade(a1, wg1_ref, bg1_ref, wb1_ref, bb1_ref,
                           dx0, mean_d, rstd_d)).astype(jnp.bfloat16)
    (d1,) = _conv3x3_multi(y1, [w1_ref], h, w)

    # residual add fused into the producer; bf16 writeback
    o_ref[0] = (d1 + b1_ref[...] + x_s).astype(o_ref.dtype)


# ----------------------------------------------------------------------------
# pallas_call wrapper
# ----------------------------------------------------------------------------
def _bat_spec(shape):
    """One batch element per grid step."""
    nrest = len(shape) - 1
    return pl.BlockSpec((1,) + tuple(shape[1:]),
                        lambda i, _n=nrest: (i,) + (0,) * _n)


def _rep_spec(shape):
    """Whole-array resident block (weights / biases), same for every step."""
    return pl.BlockSpec(tuple(shape), lambda i, _n=len(shape): (0,) * _n)


_WEIGHT_ORDER = ("w_sh", "b_sh",
                 "wg0", "bg0", "wb0", "bb0",
                 "wgs", "bgs", "wbs", "bbs",
                 "wg1", "bg1", "wb1", "bb1",
                 "w0", "b0", "w1", "b1", "ws")


def _fused_block(x, seg, params, h, w, nh):
    n, hw, _ = x.shape
    fout = params["w1"].shape[-1]
    weights = [params[k] for k in _WEIGHT_ORDER]
    return pl.pallas_call(
        functools.partial(_block_kernel, h=h, w=w, nh=nh, eps=_EPS),
        out_shape=jax.ShapeDtypeStruct((n, hw, fout), jnp.bfloat16),
        grid=(n,),
        in_specs=[_bat_spec(x.shape), _bat_spec(seg.shape)]
                 + [_rep_spec(a.shape) for a in weights],
        out_specs=_bat_spec((n, hw, fout)),
        compiler_params=_compiler_params(),
    )(x, seg, *weights)


# ----------------------------------------------------------------------------
# Block forward (glue: layout only — transposes / reshapes / dtype at the edge)
# ----------------------------------------------------------------------------
def resnet_block_with_spade(x_nchw, seg_nchw, params):
    n, fin, h, w = x_nchw.shape
    hw = h * w
    nh = params["wg0"].shape[0] // 9   # nhidden (static, from shapes)

    # NCHW -> (n, hw, C) bf16.  Casting x to bf16 at the HBM boundary (before
    # the in-kernel f32 instance-norm stats) is a deliberate bandwidth choice.
    x = jnp.transpose(x_nchw, (0, 2, 3, 1)).reshape(n, hw, fin).astype(jnp.bfloat16)
    # TODO(synk): F.interpolate(seg, size=x.shape[2:], 'nearest') is the identity
    # here; add a nearest resize in this glue if seg resolution ever differs.
    seg = jnp.transpose(seg_nchw, (0, 2, 3, 1))
    seg = seg.reshape(n, hw, seg.shape[-1]).astype(jnp.bfloat16)

    out = _fused_block(x, seg, params, h, w, nh)           # (n, hw, fout) bf16
    fout = out.shape[-1]
    # bf16 exit transpose (half the XLA pass); returns bf16 NCHW.
    return jnp.transpose(out.reshape(n, h, w, fout), (0, 3, 1, 2))


# ----------------------------------------------------------------------------
# Parameter setup (plain-JAX glue, done once)
# ----------------------------------------------------------------------------
def _spectral_normalize(w, key, n_iter=30):
    """Divide weight by its largest singular value (power iteration), matching
    torch.nn.utils.spectral_norm on the reshaped 2-D weight."""
    mat = w.reshape(-1, w.shape[-1])
    v = jax.random.normal(key, (mat.shape[-1],), jnp.float32)
    v = v / (jnp.linalg.norm(v) + 1e-12)
    u = mat @ v
    for _ in range(n_iter):
        u = mat @ v
        u = u / (jnp.linalg.norm(u) + 1e-12)
        v = mat.T @ u
        v = v / (jnp.linalg.norm(v) + 1e-12)
    sigma = u @ (mat @ v)
    return w / sigma


def prepare_block_params(raw):
    """Reshape natural HWIO parameters into kernel-ready bf16/f32 layouts."""
    def conv3(w_hwio):                      # (3,3,Cin,Cout) -> (9*Cin, Cout) bf16
        kh, kw, ci, co = w_hwio.shape
        return w_hwio.reshape(kh * kw * ci, co).astype(jnp.bfloat16)

    def bias(b):
        return b.reshape(1, -1).astype(jnp.float32)

    # One fused mlp_shared conv for all three SPADEs: [norm_0 | norm_1 | norm_s]
    w_sh = jnp.concatenate([raw["norm_0"]["w_shared"], raw["norm_1"]["w_shared"],
                            raw["norm_s"]["w_shared"]], axis=-1)
    b_sh = jnp.concatenate([raw["norm_0"]["b_shared"], raw["norm_1"]["b_shared"],
                            raw["norm_s"]["b_shared"]])

    def spade_w(sp):    # gamma / beta kept as SEPARATE weights (shared-tap matmuls)
        return (conv3(sp["w_gamma"]), bias(sp["b_gamma"]),
                conv3(sp["w_beta"]), bias(sp["b_beta"]))

    wg0, bg0, wb0, bb0 = spade_w(raw["norm_0"])
    wg1, bg1, wb1, bb1 = spade_w(raw["norm_1"])
    wgs, bgs, wbs, bbs = spade_w(raw["norm_s"])

    return dict(
        w_sh=conv3(w_sh), b_sh=bias(b_sh),
        wg0=wg0, bg0=bg0, wb0=wb0, bb0=bb0,
        wgs=wgs, bgs=bgs, wbs=wbs, bbs=bbs,
        wg1=wg1, bg1=bg1, wb1=wb1, bb1=bb1,
        w0=conv3(raw["conv_0_w"]), b0=bias(raw["conv_0_b"]),
        w1=conv3(raw["conv_1_w"]), b1=bias(raw["conv_1_b"]),
        ws=raw["conv_s_w"].astype(jnp.bfloat16),        # 1x1 conv_s, no bias
    )


if __name__ == "__main__":
    # Small synthetic config: fin=4, fout=8 -> learned_shortcut, fmiddle=4
    fin, fout = 4, 8
    fmid = min(fin, fout)
    semantic_nc, z_dim = 5, 3                 # opt.no_3dnoise = False
    label_nc = semantic_nc + z_dim            # SPADE conditional input = 8 ch
    nhidden = 32                              # SPADE hidden width (128 in paper)
    N, H, W = 2, 16, 16

    key = jax.random.PRNGKey(0)
    ks = jax.random.split(key, 16)
    scale = 0.1
    rn = lambda kk, shp: scale * jax.random.normal(kk, shp, jnp.float32)

    x = jax.random.normal(ks[0], (N, fin, H, W), jnp.float32)         # NCHW
    seg = jax.random.normal(ks[1], (N, label_nc, H, W), jnp.float32)  # NCHW

    def spade_raw(kk, norm_nc):
        k6 = jax.random.split(kk, 6)
        return dict(
            w_shared=rn(k6[0], (3, 3, label_nc, nhidden)),
            b_shared=rn(k6[1], (nhidden,)),
            w_gamma=rn(k6[2], (3, 3, nhidden, norm_nc)),
            b_gamma=rn(k6[3], (norm_nc,)),
            w_beta=rn(k6[4], (3, 3, nhidden, norm_nc)),
            b_beta=rn(k6[5], (norm_nc,)),
        )

    raw = dict(
        conv_0_w=_spectral_normalize(rn(ks[2], (3, 3, fin, fmid)), ks[10]),
        conv_0_b=rn(ks[3], (fmid,)),
        conv_1_w=_spectral_normalize(rn(ks[4], (3, 3, fmid, fout)), ks[11]),
        conv_1_b=rn(ks[5], (fout,)),
        conv_s_w=_spectral_normalize(rn(ks[6], (fin, fout)), ks[12]),
        norm_0=spade_raw(ks[7], fin),
        norm_1=spade_raw(ks[8], fmid),
        norm_s=spade_raw(ks[9], fin),
    )
    params = prepare_block_params(raw)

    fwd = jax.jit(resnet_block_with_spade)
    out = jax.block_until_ready(fwd(x, seg, params))
    assert out.shape == (N, fout, H, W)
    assert bool(jnp.all(jnp.isfinite(out.astype(jnp.float32))))
    print("KERNEL_OK")
</pallas_src>

<mosaic_0001>
module attributes {stable_mosaic.version = 11 : i64} {
  func.func @_block_kernel(%arg0: i32, %arg1: memref<1x256x4xbf16, #tpu.memory_space<vmem>>, %arg2: memref<1x256x8xbf16, #tpu.memory_space<vmem>>, %arg3: memref<72x96xbf16, #tpu.memory_space<vmem>>, %arg4: memref<1x96xf32, #tpu.memory_space<vmem>>, %arg5: memref<288x4xbf16, #tpu.memory_space<vmem>>, %arg6: memref<1x4xf32, #tpu.memory_space<vmem>>, %arg7: memref<288x4xbf16, #tpu.memory_space<vmem>>, %arg8: memref<1x4xf32, #tpu.memory_space<vmem>>, %arg9: memref<288x4xbf16, #tpu.memory_space<vmem>>, %arg10: memref<1x4xf32, #tpu.memory_space<vmem>>, %arg11: memref<288x4xbf16, #tpu.memory_space<vmem>>, %arg12: memref<1x4xf32, #tpu.memory_space<vmem>>, %arg13: memref<288x4xbf16, #tpu.memory_space<vmem>>, %arg14: memref<1x4xf32, #tpu.memory_space<vmem>>, %arg15: memref<288x4xbf16, #tpu.memory_space<vmem>>, %arg16: memref<1x4xf32, #tpu.memory_space<vmem>>, %arg17: memref<36x4xbf16, #tpu.memory_space<vmem>>, %arg18: memref<1x4xf32, #tpu.memory_space<vmem>>, %arg19: memref<36x8xbf16, #tpu.memory_space<vmem>>, %arg20: memref<1x8xf32, #tpu.memory_space<vmem>>, %arg21: memref<4x8xbf16, #tpu.memory_space<vmem>>, %arg22: memref<1x256x8xbf16, #tpu.memory_space<vmem>>) attributes {dimension_semantics = [#tpu.dimension_semantics<parallel>], iteration_bounds = array<i64: 2>, scalar_prefetch = 0 : i64, scratch_operands = 0 : i64, tpu.core_type = #tpu.core_type<tc>, window_params = [{transform_indices = @transform_0, window_bounds = array<i64: 1, 256, 4>}, {transform_indices = @transform_1, window_bounds = array<i64: 1, 256, 8>}, {pipeline_mode = #tpu.pipeline_mode<synchronous>, transform_indices = @transform_2, window_bounds = array<i64: 72, 96>}, {pipeline_mode = #tpu.pipeline_mode<synchronous>, transform_indices = @transform_3, window_bounds = array<i64: 1, 96>}, {pipeline_mode = #tpu.pipeline_mode<synchronous>, transform_indices = @transform_4, window_bounds = array<i64: 288, 4>}, {pipeline_mode = #tpu.pipeline_mode<synchronous>, transform_indices = @transform_5, window_bounds = array<i64: 1, 4>}, {pipeline_mode = #tpu.pipeline_mode<synchronous>, transform_indices = @transform_6, window_bounds = array<i64: 288, 4>}, {pipeline_mode = #tpu.pipeline_mode<synchronous>, transform_indices = @transform_7, window_bounds = array<i64: 1, 4>}, {pipeline_mode = #tpu.pipeline_mode<synchronous>, transform_indices = @transform_8, window_bounds = array<i64: 288, 4>}, {pipeline_mode = #tpu.pipeline_mode<synchronous>, transform_indices = @transform_9, window_bounds = array<i64: 1, 4>}, {pipeline_mode = #tpu.pipeline_mode<synchronous>, transform_indices = @transform_10, window_bounds = array<i64: 288, 4>}, {pipeline_mode = #tpu.pipeline_mode<synchronous>, transform_indices = @transform_11, window_bounds = array<i64: 1, 4>}, {pipeline_mode = #tpu.pipeline_mode<synchronous>, transform_indices = @transform_12, window_bounds = array<i64: 288, 4>}, {pipeline_mode = #tpu.pipeline_mode<synchronous>, transform_indices = @transform_13, window_bounds = array<i64: 1, 4>}, {pipeline_mode = #tpu.pipeline_mode<synchronous>, transform_indices = @transform_14, window_bounds = array<i64: 288, 4>}, {pipeline_mode = #tpu.pipeline_mode<synchronous>, transform_indices = @transform_15, window_bounds = array<i64: 1, 4>}, {pipeline_mode = #tpu.pipeline_mode<synchronous>, transform_indices = @transform_16, window_bounds = array<i64: 36, 4>}, {pipeline_mode = #tpu.pipeline_mode<synchronous>, transform_indices = @transform_17, window_bounds = array<i64: 1, 4>}, {pipeline_mode = #tpu.pipeline_mode<synchronous>, transform_indices = @transform_18, window_bounds = array<i64: 36, 8>}, {pipeline_mode = #tpu.pipeline_mode<synchronous>, transform_indices = @transform_19, window_bounds = array<i64: 1, 8>}, {pipeline_mode = #tpu.pipeline_mode<synchronous>, transform_indices = @transform_20, window_bounds = array<i64: 4, 8>}, {transform_indices = @transform_21, window_bounds = array<i64: 1, 256, 8>}]} {
    %c0 = arith.constant 0 : index
    %c0_0 = arith.constant 0 : index
    %c0_1 = arith.constant 0 : index
    %0 = vector.load %arg2[%c0, %c0_0, %c0_1] : memref<1x256x8xbf16, #tpu.memory_space<vmem>>, vector<1x256x8xbf16>
    %1 = vector.shape_cast %0 : vector<1x256x8xbf16> to vector<256x8xbf16>
    %2 = vector.shape_cast %1 : vector<256x8xbf16> to vector<16x16x8xbf16>
    %cst = arith.constant 0.000000e+00 : bf16
    %3 = vector.broadcast %cst : bf16 to vector<1x16x8xbf16>
    %4 = tpu.concatenate %3, %2, %3 in 0 : vector<1x16x8xbf16>, vector<16x16x8xbf16>, vector<1x16x8xbf16> -> vector<18x16x8xbf16>
    %cst_2 = arith.constant 0.000000e+00 : bf16
    %5 = vector.broadcast %cst_2 : bf16 to vector<18x1x8xbf16>
    %6 = tpu.concatenate %5, %4, %5 in 1 : vector<18x1x8xbf16>, vector<18x16x8xbf16>, vector<18x1x8xbf16> -> vector<18x18x8xbf16>
    %7 = vector.extract_strided_slice %6 {offsets = [0, 0, 0], sizes = [16, 16, 8], strides = [1, 1, 1]} : vector<18x18x8xbf16> to vector<16x16x8xbf16>
    %8 = vector.shape_cast %7 : vector<16x16x8xbf16> to vector<256x8xbf16>
    %9 = vector.extract_strided_slice %6 {offsets = [0, 1, 0], sizes = [16, 16, 8], strides = [1, 1, 1]} : vector<18x18x8xbf16> to vector<16x16x8xbf16>
    %10 = vector.shape_cast %9 : vector<16x16x8xbf16> to vector<256x8xbf16>
    %11 = vector.extract_strided_slice %6 {offsets = [0, 2, 0], sizes = [16, 16, 8], strides = [1, 1, 1]} : vector<18x18x8xbf16> to vector<16x16x8xbf16>
    %12 = vector.shape_cast %11 : vector<16x16x8xbf16> to vector<256x8xbf16>
    %13 = vector.extract_strided_slice %6 {offsets = [1, 0, 0], sizes = [16, 16, 8], strides = [1, 1, 1]} : vector<18x18x8xbf16> to vector<16x16x8xbf16>
    %14 = vector.shape_cast %13 : vector<16x16x8xbf16> to vector<256x8xbf16>
    %15 = vector.extract_strided_slice %6 {offsets = [1, 1, 0], sizes = [16, 16, 8], strides = [1, 1, 1]} : vector<18x18x8xbf16> to vector<16x16x8xbf16>
    %16 = vector.shape_cast %15 : vector<16x16x8xbf16> to vector<256x8xbf16>
    %17 = vector.extract_strided_slice %6 {offsets = [1, 2, 0], sizes = [16, 16, 8], strides = [1, 1, 1]} : vector<18x18x8xbf16> to vector<16x16x8xbf16>
    %18 = vector.shape_cast %17 : vector<16x16x8xbf16> to vector<256x8xbf16>
    %19 = vector.extract_strided_slice %6 {offsets = [2, 0, 0], sizes = [16, 16, 8], strides = [1, 1, 1]} : vector<18x18x8xbf16> to vector<16x16x8xbf16>
    %20 = vector.shape_cast %19 : vector<16x16x8xbf16> to vector<256x8xbf16>
    %21 = vector.extract_strided_slice %6 {offsets = [2, 1, 0], sizes = [16, 16, 8], strides = [1, 1, 1]} : vector<18x18x8xbf16> to vector<16x16x8xbf16>
    %22 = vector.shape_cast %21 : vector<16x16x8xbf16> to vector<256x8xbf16>
    %23 = vector.extract_strided_slice %6 {offsets = [2, 2, 0], sizes = [16, 16, 8], strides = [1, 1, 1]} : vector<18x18x8xbf16> to vector<16x16x8xbf16>
    %24 = vector.shape_cast %23 : vector<16x16x8xbf16> to vector<256x8xbf16>
    %25 = tpu.concatenate %8, %10, %12, %14, %16, %18, %20, %22, %24 in 1 : vector<256x8xbf16>, vector<256x8xbf16>, vector<256x8xbf16>, vector<256x8xbf16>, vector<256x8xbf16>, vector<256x8xbf16>, vector<256x8xbf16>, vector<256x8xbf16>, vector<256x8xbf16> -> vector<256x72xbf16>
    %c0_3 = arith.constant 0 : index
    %c0_4 = arith.constant 0 : index
    %26 = vector.load %arg3[%c0_3, %c0_4] : memref<72x96xbf16, #tpu.memory_space<vmem>>, vector<72x96xbf16>
    %cst_5 = arith.constant dense<0.000000e+00> : vector<256x96xf32>
    %27 = tpu.matmul %25, %26, %cst_5 {dimension_numbers = #tpu.dot_dimension_numbers<[1], [0], [0], [1], [0, 0, 1, 1], [], []>} : vector<256x72xbf16>, vector<72x96xbf16>, vector<256x96xf32> -> vector<256x96xf32>
    %c0_6 = arith.constant 0 : index
    %c0_7 = arith.constant 0 : index
    %28 = vector.load %arg4[%c0_6, %c0_7] : memref<1x96xf32, #tpu.memory_space<vmem>>, vector<1x96xf32>
    %29 = vector.broadcast %28 : vector<1x96xf32> to vector<256x96xf32>
    %30 = arith.addf %27, %29 : vector<256x96xf32>
    %cst_8 = arith.constant 0.000000e+00 : f32
    %31 = vector.broadcast %cst_8 : f32 to vector<256x96xf32>
    %32 = arith.maximumf %30, %31 : vector<256x96xf32>
    %33 = arith.truncf %32 : vector<256x96xf32> to vector<256x96xbf16>
    %34 = vector.extract_strided_slice %33 {offsets = [0, 0], sizes = [256, 32], strides = [1, 1]} : vector<256x96xbf16> to vector<256x32xbf16>
    %35 = vector.extract_strided_slice %33 {offsets = [0, 32], sizes = [256, 32], strides = [1, 1]} : vector<256x96xbf16> to vector<256x32xbf16>
    %36 = vector.extract_strided_slice %33 {offsets = [0, 64], sizes = [256, 32], strides = [1, 1]} : vector<256x96xbf16> to vector<256x32xbf16>
    %c0_9 = arith.constant 0 : index
    %c0_10 = arith.constant 0 : index
    %c0_11 = arith.constant 0 : index
    %37 = vector.load %arg1[%c0_9, %c0_10, %c0_11] : memref<1x256x4xbf16, #tpu.memory_space<vmem>>, vector<1x256x4xbf16>
    %38 = vector.shape_cast %37 : vector<1x256x4xbf16> to vector<256x4xbf16>
    %39 = arith.extf %38 : vector<256x4xbf16> to vector<256x4xf32>
    %cst_12 = arith.constant dense<0.000000e+00> : vector<4xf32>
    %40 = vector.multi_reduction <add>, %39, %cst_12 [0] : vector<256x4xf32> to vector<4xf32>
    %41 = vector.shape_cast %40 : vector<4xf32> to vector<1x4xf32>
    %cst_13 = arith.constant 3.906250e-03 : f32
    %42 = vector.broadcast %cst_13 : f32 to vector<1x4xf32>
    %43 = arith.mulf %41, %42 : vector<1x4xf32>
    %44 = arith.mulf %39, %39 : vector<256x4xf32>
    %cst_14 = arith.constant dense<0.000000e+00> : vector<4xf32>
    %45 = vector.multi_reduction <add>, %44, %cst_14 [0] : vector<256x4xf32> to vector<4xf32>
    %46 = vector.shape_cast %45 : vector<4xf32> to vector<1x4xf32>
    %cst_15 = arith.constant 3.906250e-03 : f32
    %47 = vector.broadcast %cst_15 : f32 to vector<1x4xf32>
    %48 = arith.mulf %46, %47 : vector<1x4xf32>
    %49 = arith.mulf %43, %43 : vector<1x4xf32>
    %50 = arith.subf %48, %49 : vector<1x4xf32>
    %cst_16 = arith.constant 0.000000e+00 : f32
    %51 = vector.broadcast %cst_16 : f32 to vector<1x4xf32>
    %52 = arith.maximumf %50, %51 : vector<1x4xf32>
    %cst_17 = arith.constant 9.99999974E-6 : f32
    %53 = vector.broadcast %cst_17 : f32 to vector<1x4xf32>
    %54 = arith.addf %52, %53 : vector<1x4xf32>
    %55 = math.rsqrt %54 : vector<1x4xf32>
    %56 = vector.shape_cast %36 : vector<256x32xbf16> to vector<16x16x32xbf16>
    %cst_18 = arith.constant 0.000000e+00 : bf16
    %57 = vector.broadcast %cst_18 : bf16 to vector<1x16x32xbf16>
    %58 = tpu.concatenate %57, %56, %57 in 0 : vector<1x16x32xbf16>, vector<16x16x32xbf16>, vector<1x16x32xbf16> -> vector<18x16x32xbf16>
    %cst_19 = arith.constant 0.000000e+00 : bf16
    %59 = vector.broadcast %cst_19 : bf16 to vector<18x1x32xbf16>
    %60 = tpu.concatenate %59, %58, %59 in 1 : vector<18x1x32xbf16>, vector<18x16x32xbf16>, vector<18x1x32xbf16> -> vector<18x18x32xbf16>
    %61 = vector.extract_strided_slice %60 {offsets = [0, 0, 0], sizes = [16, 16, 32], strides = [1, 1, 1]} : vector<18x18x32xbf16> to vector<16x16x32xbf16>
    %62 = vector.shape_cast %61 : vector<16x16x32xbf16> to vector<256x32xbf16>
    %63 = vector.extract_strided_slice %60 {offsets = [0, 1, 0], sizes = [16, 16, 32], strides = [1, 1, 1]} : vector<18x18x32xbf16> to vector<16x16x32xbf16>
    %64 = vector.shape_cast %63 : vector<16x16x32xbf16> to vector<256x32xbf16>
    %65 = vector.extract_strided_slice %60 {offsets = [0, 2, 0], sizes = [16, 16, 32], strides = [1, 1, 1]} : vector<18x18x32xbf16> to vector<16x16x32xbf16>
    %66 = vector.shape_cast %65 : vector<16x16x32xbf16> to vector<256x32xbf16>
    %67 = vector.extract_strided_slice %60 {offsets = [1, 0, 0], sizes = [16, 16, 32], strides = [1, 1, 1]} : vector<18x18x32xbf16> to vector<16x16x32xbf16>
    %68 = vector.shape_cast %67 : vector<16x16x32xbf16> to vector<256x32xbf16>
    %69 = vector.extract_strided_slice %60 {offsets = [1, 1, 0], sizes = [16, 16, 32], strides = [1, 1, 1]} : vector<18x18x32xbf16> to vector<16x16x32xbf16>
    %70 = vector.shape_cast %69 : vector<16x16x32xbf16> to vector<256x32xbf16>
    %71 = vector.extract_strided_slice %60 {offsets = [1, 2, 0], sizes = [16, 16, 32], strides = [1, 1, 1]} : vector<18x18x32xbf16> to vector<16x16x32xbf16>
    %72 = vector.shape_cast %71 : vector<16x16x32xbf16> to vector<256x32xbf16>
    %73 = vector.extract_strided_slice %60 {offsets = [2, 0, 0], sizes = [16, 16, 32], strides = [1, 1, 1]} : vector<18x18x32xbf16> to vector<16x16x32xbf16>
    %74 = vector.shape_cast %73 : vector<16x16x32xbf16> to vector<256x32xbf16>
    %75 = vector.extract_strided_slice %60 {offsets = [2, 1, 0], sizes = [16, 16, 32], strides = [1, 1, 1]} : vector<18x18x32xbf16> to vector<16x16x32xbf16>
    %76 = vector.shape_cast %75 : vector<16x16x32xbf16> to vector<256x32xbf16>
    %77 = vector.extract_strided_slice %60 {offsets = [2, 2, 0], sizes = [16, 16, 32], strides = [1, 1, 1]} : vector<18x18x32xbf16> to vector<16x16x32xbf16>
    %78 = vector.shape_cast %77 : vector<16x16x32xbf16> to vector<256x32xbf16>
    %79 = tpu.concatenate %62, %64, %66, %68, %70, %72, %74, %76, %78 in 1 : vector<256x32xbf16>, vector<256x32xbf16>, vector<256x32xbf16>, vector<256x32xbf16>, vector<256x32xbf16>, vector<256x32xbf16>, vector<256x32xbf16>, vector<256x32xbf16>, vector<256x32xbf16> -> vector<256x288xbf16>
    %c0_20 = arith.constant 0 : index
    %c0_21 = arith.constant 0 : index
    %80 = vector.load %arg9[%c0_20, %c0_21] : memref<288x4xbf16, #tpu.memory_space<vmem>>, vector<288x4xbf16>
    %cst_22 = arith.constant dense<0.000000e+00> : vector<256x4xf32>
    %81 = tpu.matmul %79, %80, %cst_22 {dimension_numbers = #tpu.dot_dimension_numbers<[1], [0], [0], [1], [0, 0, 1, 1], [], []>} : vector<256x288xbf16>, vector<288x4xbf16>, vector<256x4xf32> -> vector<256x4xf32>
    %c0_23 = arith.constant 0 : index
    %c0_24 = arith.constant 0 : index
    %82 = vector.load %arg11[%c0_23, %c0_24] : memref<288x4xbf16, #tpu.memory_space<vmem>>, vector<288x4xbf16>
    %cst_25 = arith.constant dense<0.000000e+00> : vector<256x4xf32>
    %83 = tpu.matmul %79, %82, %cst_25 {dimension_numbers = #tpu.dot_dimension_numbers<[1], [0], [0], [1], [0, 0, 1, 1], [], []>} : vector<256x288xbf16>, vector<288x4xbf16>, vector<256x4xf32> -> vector<256x4xf32>
    %c0_26 = arith.constant 0 : index
    %c0_27 = arith.constant 0 : index
    %84 = vector.load %arg10[%c0_26, %c0_27] : memref<1x4xf32, #tpu.memory_space<vmem>>, vector<1x4xf32>
    %85 = vector.broadcast %84 : vector<1x4xf32> to vector<256x4xf32>
    %86 = arith.addf %81, %85 : vector<256x4xf32>
    %c0_28 = arith.constant 0 : index
    %c0_29 = arith.constant 0 : index
    %87 = vector.load %arg12[%c0_28, %c0_29] : memref<1x4xf32, #tpu.memory_space<vmem>>, vector<1x4xf32>
    %88 = vector.broadcast %87 : vector<1x4xf32> to vector<256x4xf32>
    %89 = arith.addf %83, %88 : vector<256x4xf32>
    %90 = vector.broadcast %43 : vector<1x4xf32> to vector<256x4xf32>
    %91 = arith.subf %39, %90 : vector<256x4xf32>
    %92 = vector.broadcast %55 : vector<1x4xf32> to vector<256x4xf32>
    %93 = arith.mulf %91, %92 : vector<256x4xf32>
    %cst_30 = arith.constant 1.000000e+00 : f32
    %94 = vector.broadcast %cst_30 : f32 to vector<256x4xf32>
    %95 = arith.addf %94, %86 : vector<256x4xf32>
    %96 = arith.mulf %93, %95 : vector<256x4xf32>
    %97 = arith.addf %96, %89 : vector<256x4xf32>
    %98 = arith.truncf %97 : vector<256x4xf32> to vector<256x4xbf16>
    %c0_31 = arith.constant 0 : index
    %c0_32 = arith.constant 0 : index
    %99 = vector.load %arg21[%c0_31, %c0_32] : memref<4x8xbf16, #tpu.memory_space<vmem>>, vector<4x8xbf16>
    %cst_33 = arith.constant dense<0.000000e+00> : vector<256x8xf32>
    %100 = tpu.matmul %98, %99, %cst_33 {dimension_numbers = #tpu.dot_dimension_numbers<[1], [0], [0], [1], [0, 0, 1, 1], [], []>} : vector<256x4xbf16>, vector<4x8xbf16>, vector<256x8xf32> -> vector<256x8xf32>
    %101 = vector.shape_cast %34 : vector<256x32xbf16> to vector<16x16x32xbf16>
    %cst_34 = arith.constant 0.000000e+00 : bf16
    %102 = vector.broadcast %cst_34 : bf16 to vector<1x16x32xbf16>
    %103 = tpu.concatenate %102, %101, %102 in 0 : vector<1x16x32xbf16>, vector<16x16x32xbf16>, vector<1x16x32xbf16> -> vector<18x16x32xbf16>
    %cst_35 = arith.constant 0.000000e+00 : bf16
    %104 = vector.broadcast %cst_35 : bf16 to vector<18x1x32xbf16>
    %105 = tpu.concatenate %104, %103, %104 in 1 : vector<18x1x32xbf16>, vector<18x16x32xbf16>, vector<18x1x32xbf16> -> vector<18x18x32xbf16>
    %106 = vector.extract_strided_slice %105 {offsets = [0, 0, 0], sizes = [16, 16, 32], strides = [1, 1, 1]} : vector<18x18x32xbf16> to vector<16x16x32xbf16>
    %107 = vector.shape_cast %106 : vector<16x16x32xbf16> to vector<256x32xbf16>
    %108 = vector.extract_strided_slice %105 {offsets = [0, 1, 0], sizes = [16, 16, 32], strides = [1, 1, 1]} : vector<18x18x32xbf16> to vector<16x16x32xbf16>
    %109 = vector.shape_cast %108 : vector<16x16x32xbf16> to vector<256x32xbf16>
    %110 = vector.extract_strided_slice %105 {offsets = [0, 2, 0], sizes = [16, 16, 32], strides = [1, 1, 1]} : vector<18x18x32xbf16> to vector<16x16x32xbf16>
    %111 = vector.shape_cast %110 : vector<16x16x32xbf16> to vector<256x32xbf16>
    %112 = vector.extract_strided_slice %105 {offsets = [1, 0, 0], sizes = [16, 16, 32], strides = [1, 1, 1]} : vector<18x18x32xbf16> to vector<16x16x32xbf16>
    %113 = vector.shape_cast %112 : vector<16x16x32xbf16> to vector<256x32xbf16>
    %114 = vector.extract_strided_slice %105 {offsets = [1, 1, 0], sizes = [16, 16, 32], strides = [1, 1, 1]} : vector<18x18x32xbf16> to vector<16x16x32xbf16>
    %115 = vector.shape_cast %114 : vector<16x16x32xbf16> to vector<256x32xbf16>
    %116 = vector.extract_strided_slice %105 {offsets = [1, 2, 0], sizes = [16, 16, 32], strides = [1, 1, 1]} : vector<18x18x32xbf16> to vector<16x16x32xbf16>
    %117 = vector.shape_cast %116 : vector<16x16x32xbf16> to vector<256x32xbf16>
    %118 = vector.extract_strided_slice %105 {offsets = [2, 0, 0], sizes = [16, 16, 32], strides = [1, 1, 1]} : vector<18x18x32xbf16> to vector<16x16x32xbf16>
    %119 = vector.shape_cast %118 : vector<16x16x32xbf16> to vector<256x32xbf16>
    %120 = vector.extract_strided_slice %105 {offsets = [2, 1, 0], sizes = [16, 16, 32], strides = [1, 1, 1]} : vector<18x18x32xbf16> to vector<16x16x32xbf16>
    %121 = vector.shape_cast %120 : vector<16x16x32xbf16> to vector<256x32xbf16>
    %122 = vector.extract_strided_slice %105 {offsets = [2, 2, 0], sizes = [16, 16, 32], strides = [1, 1, 1]} : vector<18x18x32xbf16> to vector<16x16x32xbf16>
    %123 = vector.shape_cast %122 : vector<16x16x32xbf16> to vector<256x32xbf16>
    %124 = tpu.concatenate %107, %109, %111, %113, %115, %117, %119, %121, %123 in 1 : vector<256x32xbf16>, vector<256x32xbf16>, vector<256x32xbf16>, vector<256x32xbf16>, vector<256x32xbf16>, vector<256x32xbf16>, vector<256x32xbf16>, vector<256x32xbf16>, vector<256x32xbf16> -> vector<256x288xbf16>
    %c0_36 = arith.constant 0 : index
    %c0_37 = arith.constant 0 : index
    %125 = vector.load %arg5[%c0_36, %c0_37] : memref<288x4xbf16, #tpu.memory_space<vmem>>, vector<288x4xbf16>
    %cst_38 = arith.constant dense<0.000000e+00> : vector<256x4xf32>
    %126 = tpu.matmul %124, %125, %cst_38 {dimension_numbers = #tpu.dot_dimension_numbers<[1], [0], [0], [1], [0, 0, 1, 1], [], []>} : vector<256x288xbf16>, vector<288x4xbf16>, vector<256x4xf32> -> vector<256x4xf32>
    %c0_39 = arith.constant 0 : index
    %c0_40 = arith.constant 0 : index
    %127 = vector.load %arg7[%c0_39, %c0_40] : memref<288x4xbf16, #tpu.memory_space<vmem>>, vector<288x4xbf16>
    %cst_41 = arith.constant dense<0.000000e+00> : vector<256x4xf32>
    %128 = tpu.matmul %124, %127, %cst_41 {dimension_numbers = #tpu.dot_dimension_numbers<[1], [0], [0], [1], [0, 0, 1, 1], [], []>} : vector<256x288xbf16>, vector<288x4xbf16>, vector<256x4xf32> -> vector<256x4xf32>
    %c0_42 = arith.constant 0 : index
    %c0_43 = arith.constant 0 : index
    %129 = vector.load %arg6[%c0_42, %c0_43] : memref<1x4xf32, #tpu.memory_space<vmem>>, vector<1x4xf32>
    %130 = vector.broadcast %129 : vector<1x4xf32> to vector<256x4xf32>
    %131 = arith.addf %126, %130 : vector<256x4xf32>
    %c0_44 = arith.constant 0 : index
    %c0_45 = arith.constant 0 : index
    %132 = vector.load %arg8[%c0_44, %c0_45] : memref<1x4xf32, #tpu.memory_space<vmem>>, vector<1x4xf32>
    %133 = vector.broadcast %132 : vector<1x4xf32> to vector<256x4xf32>
    %134 = arith.addf %128, %133 : vector<256x4xf32>
    %135 = vector.broadcast %43 : vector<1x4xf32> to vector<256x4xf32>
    %136 = arith.subf %39, %135 : vector<256x4xf32>
    %137 = vector.broadcast %55 : vector<1x4xf32> to vector<256x4xf32>
    %138 = arith.mulf %136, %137 : vector<256x4xf32>
    %cst_46 = arith.constant 1.000000e+00 : f32
    %139 = vector.broadcast %cst_46 : f32 to vector<256x4xf32>
    %140 = arith.addf %139, %131 : vector<256x4xf32>
    %141 = arith.mulf %138, %140 : vector<256x4xf32>
    %142 = arith.addf %141, %134 : vector<256x4xf32>
    %cst_47 = arith.constant 0.000000e+00 : f32
    %143 = vector.broadcast %cst_47 : f32 to vector<256x4xf32>
    %144 = arith.cmpf oge, %142, %143 : vector<256x4xf32>
    %cst_48 = arith.constant 2.000000e-01 : f32
    %145 = vector.broadcast %cst_48 : f32 to vector<256x4xf32>
    %146 = arith.mulf %145, %142 : vector<256x4xf32>
    %147 = arith.select %144, %142, %146 : vector<256x4xi1>, vector<256x4xf32>
    %148 = arith.truncf %147 : vector<256x4xf32> to vector<256x4xbf16>
    %149 = vector.shape_cast %148 : vector<256x4xbf16> to vector<16x16x4xbf16>
    %cst_49 = arith.constant 0.000000e+00 : bf16
    %150 = vector.broadcast %cst_49 : bf16 to vector<1x16x4xbf16>
    %151 = tpu.concatenate %150, %149, %150 in 0 : vector<1x16x4xbf16>, vector<16x16x4xbf16>, vector<1x16x4xbf16> -> vector<18x16x4xbf16>
    %cst_50 = arith.constant 0.000000e+00 : bf16
    %152 = vector.broadcast %cst_50 : bf16 to vector<18x1x4xbf16>
    %153 = tpu.concatenate %152, %151, %152 in 1 : vector<18x1x4xbf16>, vector<18x16x4xbf16>, vector<18x1x4xbf16> -> vector<18x18x4xbf16>
    %154 = vector.extract_strided_slice %153 {offsets = [0, 0, 0], sizes = [16, 16, 4], strides = [1, 1, 1]} : vector<18x18x4xbf16> to vector<16x16x4xbf16>
    %155 = vector.shape_cast %154 : vector<16x16x4xbf16> to vector<256x4xbf16>
    %156 = vector.extract_strided_slice %153 {offsets = [0, 1, 0], sizes = [16, 16, 4], strides = [1, 1, 1]} : vector<18x18x4xbf16> to vector<16x16x4xbf16>
    %157 = vector.shape_cast %156 : vector<16x16x4xbf16> to vector<256x4xbf16>
    %158 = vector.extract_strided_slice %153 {offsets = [0, 2, 0], sizes = [16, 16, 4], strides = [1, 1, 1]} : vector<18x18x4xbf16> to vector<16x16x4xbf16>
    %159 = vector.shape_cast %158 : vector<16x16x4xbf16> to vector<256x4xbf16>
    %160 = vector.extract_strided_slice %153 {offsets = [1, 0, 0], sizes = [16, 16, 4], strides = [1, 1, 1]} : vector<18x18x4xbf16> to vector<16x16x4xbf16>
    %161 = vector.shape_cast %160 : vector<16x16x4xbf16> to vector<256x4xbf16>
    %162 = vector.extract_strided_slice %153 {offsets = [1, 1, 0], sizes = [16, 16, 4], strides = [1, 1, 1]} : vector<18x18x4xbf16> to vector<16x16x4xbf16>
    %163 = vector.shape_cast %162 : vector<16x16x4xbf16> to vector<256x4xbf16>
    %164 = vector.extract_strided_slice %153 {offsets = [1, 2, 0], sizes = [16, 16, 4], strides = [1, 1, 1]} : vector<18x18x4xbf16> to vector<16x16x4xbf16>
    %165 = vector.shape_cast %164 : vector<16x16x4xbf16> to vector<256x4xbf16>
    %166 = vector.extract_strided_slice %153 {offsets = [2, 0, 0], sizes = [16, 16, 4], strides = [1, 1, 1]} : vector<18x18x4xbf16> to vector<16x16x4xbf16>
    %167 = vector.shape_cast %166 : vector<16x16x4xbf16> to vector<256x4xbf16>
    %168 = vector.extract_strided_slice %153 {offsets = [2, 1, 0], sizes = [16, 16, 4], strides = [1, 1, 1]} : vector<18x18x4xbf16> to vector<16x16x4xbf16>
    %169 = vector.shape_cast %168 : vector<16x16x4xbf16> to vector<256x4xbf16>
    %170 = vector.extract_strided_slice %153 {offsets = [2, 2, 0], sizes = [16, 16, 4], strides = [1, 1, 1]} : vector<18x18x4xbf16> to vector<16x16x4xbf16>
    %171 = vector.shape_cast %170 : vector<16x16x4xbf16> to vector<256x4xbf16>
    %172 = tpu.concatenate %155, %157, %159, %161, %163, %165, %167, %169, %171 in 1 : vector<256x4xbf16>, vector<256x4xbf16>, vector<256x4xbf16>, vector<256x4xbf16>, vector<256x4xbf16>, vector<256x4xbf16>, vector<256x4xbf16>, vector<256x4xbf16>, vector<256x4xbf16> -> vector<256x36xbf16>
    %c0_51 = arith.constant 0 : index
    %c0_52 = arith.constant 0 : index
    %173 = vector.load %arg17[%c0_51, %c0_52] : memref<36x4xbf16, #tpu.memory_space<vmem>>, vector<36x4xbf16>
    %cst_53 = arith.constant dense<0.000000e+00> : vector<256x4xf32>
    %174 = tpu.matmul %172, %173, %cst_53 {dimension_numbers = #tpu.dot_dimension_numbers<[1], [0], [0], [1], [0, 0, 1, 1], [], []>} : vector<256x36xbf16>, vector<36x4xbf16>, vector<256x4xf32> -> vector<256x4xf32>
    %c0_54 = arith.constant 0 : index
    %c0_55 = arith.constant 0 : index
    %175 = vector.load %arg18[%c0_54, %c0_55] : memref<1x4xf32, #tpu.memory_space<vmem>>, vector<1x4xf32>
    %176 = vector.broadcast %175 : vector<1x4xf32> to vector<256x4xf32>
    %177 = arith.addf %174, %176 : vector<256x4xf32>
    %cst_56 = arith.constant dense<0.000000e+00> : vector<4xf32>
    %178 = vector.multi_reduction <add>, %177, %cst_56 [0] : vector<256x4xf32> to vector<4xf32>
    %179 = vector.shape_cast %178 : vector<4xf32> to vector<1x4xf32>
    %cst_57 = arith.constant 3.906250e-03 : f32
    %180 = vector.broadcast %cst_57 : f32 to vector<1x4xf32>
    %181 = arith.mulf %179, %180 : vector<1x4xf32>
    %182 = arith.mulf %177, %177 : vector<256x4xf32>
    %cst_58 = arith.constant dense<0.000000e+00> : vector<4xf32>
    %183 = vector.multi_reduction <add>, %182, %cst_58 [0] : vector<256x4xf32> to vector<4xf32>
    %184 = vector.shape_cast %183 : vector<4xf32> to vector<1x4xf32>
    %cst_59 = arith.constant 3.906250e-03 : f32
    %185 = vector.broadcast %cst_59 : f32 to vector<1x4xf32>
    %186 = arith.mulf %184, %185 : vector<1x4xf32>
    %187 = arith.mulf %181, %181 : vector<1x4xf32>
    %188 = arith.subf %186, %187 : vector<1x4xf32>
    %cst_60 = arith.constant 0.000000e+00 : f32
    %189 = vector.broadcast %cst_60 : f32 to vector<1x4xf32>
    %190 = arith.maximumf %188, %189 : vector<1x4xf32>
    %cst_61 = arith.constant 9.99999974E-6 : f32
    %191 = vector.broadcast %cst_61 : f32 to vector<1x4xf32>
    %192 = arith.addf %190, %191 : vector<1x4xf32>
    %193 = math.rsqrt %192 : vector<1x4xf32>
    %194 = vector.shape_cast %35 : vector<256x32xbf16> to vector<16x16x32xbf16>
    %cst_62 = arith.constant 0.000000e+00 : bf16
    %195 = vector.broadcast %cst_62 : bf16 to vector<1x16x32xbf16>
    %196 = tpu.concatenate %195, %194, %195 in 0 : vector<1x16x32xbf16>, vector<16x16x32xbf16>, vector<1x16x32xbf16> -> vector<18x16x32xbf16>
    %cst_63 = arith.constant 0.000000e+00 : bf16
    %197 = vector.broadcast %cst_63 : bf16 to vector<18x1x32xbf16>
    %198 = tpu.concatenate %197, %196, %197 in 1 : vector<18x1x32xbf16>, vector<18x16x32xbf16>, vector<18x1x32xbf16> -> vector<18x18x32xbf16>
    %199 = vector.extract_strided_slice %198 {offsets = [0, 0, 0], sizes = [16, 16, 32], strides = [1, 1, 1]} : vector<18x18x32xbf16> to vector<16x16x32xbf16>
    %200 = vector.shape_cast %199 : vector<16x16x32xbf16> to vector<256x32xbf16>
    %201 = vector.extract_strided_slice %198 {offsets = [0, 1, 0], sizes = [16, 16, 32], strides = [1, 1, 1]} : vector<18x18x32xbf16> to vector<16x16x32xbf16>
    %202 = vector.shape_cast %201 : vector<16x16x32xbf16> to vector<256x32xbf16>
    %203 = vector.extract_strided_slice %198 {offsets = [0, 2, 0], sizes = [16, 16, 32], strides = [1, 1, 1]} : vector<18x18x32xbf16> to vector<16x16x32xbf16>
    %204 = vector.shape_cast %203 : vector<16x16x32xbf16> to vector<256x32xbf16>
    %205 = vector.extract_strided_slice %198 {offsets = [1, 0, 0], sizes = [16, 16, 32], strides = [1, 1, 1]} : vector<18x18x32xbf16> to vector<16x16x32xbf16>
    %206 = vector.shape_cast %205 : vector<16x16x32xbf16> to vector<256x32xbf16>
    %207 = vector.extract_strided_slice %198 {offsets = [1, 1, 0], sizes = [16, 16, 32], strides = [1, 1, 1]} : vector<18x18x32xbf16> to vector<16x16x32xbf16>
    %208 = vector.shape_cast %207 : vector<16x16x32xbf16> to vector<256x32xbf16>
    %209 = vector.extract_strided_slice %198 {offsets = [1, 2, 0], sizes = [16, 16, 32], strides = [1, 1, 1]} : vector<18x18x32xbf16> to vector<16x16x32xbf16>
    %210 = vector.shape_cast %209 : vector<16x16x32xbf16> to vector<256x32xbf16>
    %211 = vector.extract_strided_slice %198 {offsets = [2, 0, 0], sizes = [16, 16, 32], strides = [1, 1, 1]} : vector<18x18x32xbf16> to vector<16x16x32xbf16>
    %212 = vector.shape_cast %211 : vector<16x16x32xbf16> to vector<256x32xbf16>
    %213 = vector.extract_strided_slice %198 {offsets = [2, 1, 0], sizes = [16, 16, 32], strides = [1, 1, 1]} : vector<18x18x32xbf16> to vector<16x16x32xbf16>
    %214 = vector.shape_cast %213 : vector<16x16x32xbf16> to vector<256x32xbf16>
    %215 = vector.extract_strided_slice %198 {offsets = [2, 2, 0], sizes = [16, 16, 32], strides = [1, 1, 1]} : vector<18x18x32xbf16> to vector<16x16x32xbf16>
    %216 = vector.shape_cast %215 : vector<16x16x32xbf16> to vector<256x32xbf16>
    %217 = tpu.concatenate %200, %202, %204, %206, %208, %210, %212, %214, %216 in 1 : vector<256x32xbf16>, vector<256x32xbf16>, vector<256x32xbf16>, vector<256x32xbf16>, vector<256x32xbf16>, vector<256x32xbf16>, vector<256x32xbf16>, vector<256x32xbf16>, vector<256x32xbf16> -> vector<256x288xbf16>
    %c0_64 = arith.constant 0 : index
    %c0_65 = arith.constant 0 : index
    %218 = vector.load %arg13[%c0_64, %c0_65] : memref<288x4xbf16, #tpu.memory_space<vmem>>, vector<288x4xbf16>
    %cst_66 = arith.constant dense<0.000000e+00> : vector<256x4xf32>
    %219 = tpu.matmul %217, %218, %cst_66 {dimension_numbers = #tpu.dot_dimension_numbers<[1], [0], [0], [1], [0, 0, 1, 1], [], []>} : vector<256x288xbf16>, vector<288x4xbf16>, vector<256x4xf32> -> vector<256x4xf32>
    %c0_67 = arith.constant 0 : index
    %c0_68 = arith.constant 0 : index
    %220 = vector.load %arg15[%c0_67, %c0_68] : memref<288x4xbf16, #tpu.memory_space<vmem>>, vector<288x4xbf16>
    %cst_69 = arith.constant dense<0.000000e+00> : vector<256x4xf32>
    %221 = tpu.matmul %217, %220, %cst_69 {dimension_numbers = #tpu.dot_dimension_numbers<[1], [0], [0], [1], [0, 0, 1, 1], [], []>} : vector<256x288xbf16>, vector<288x4xbf16>, vector<256x4xf32> -> vector<256x4xf32>
    %c0_70 = arith.constant 0 : index
    %c0_71 = arith.constant 0 : index
    %222 = vector.load %arg14[%c0_70, %c0_71] : memref<1x4xf32, #tpu.memory_space<vmem>>, vector<1x4xf32>
    %223 = vector.broadcast %222 : vector<1x4xf32> to vector<256x4xf32>
    %224 = arith.addf %219, %223 : vector<256x4xf32>
    %c0_72 = arith.constant 0 : index
    %c0_73 = arith.constant 0 : index
    %225 = vector.load %arg16[%c0_72, %c0_73] : memref<1x4xf32, #tpu.memory_space<vmem>>, vector<1x4xf32>
    %226 = vector.broadcast %225 : vector<1x4xf32> to vector<256x4xf32>
    %227 = arith.addf %221, %226 : vector<256x4xf32>
    %228 = vector.broadcast %181 : vector<1x4xf32> to vector<256x4xf32>
    %229 = arith.subf %177, %228 : vector<256x4xf32>
    %230 = vector.broadcast %193 : vector<1x4xf32> to vector<256x4xf32>
    %231 = arith.mulf %229, %230 : vector<256x4xf32>
    %cst_74 = arith.constant 1.000000e+00 : f32
    %232 = vector.broadcast %cst_74 : f32 to vector<256x4xf32>
    %233 = arith.addf %232, %224 : vector<256x4xf32>
    %234 = arith.mulf %231, %233 : vector<256x4xf32>
    %235 = arith.addf %234, %227 : vector<256x4xf32>
    %cst_75 = arith.constant 0.000000e+00 : f32
    %236 = vector.broadcast %cst_75 : f32 to vector<256x4xf32>
    %237 = arith.cmpf oge, %235, %236 : vector<256x4xf32>
    %cst_76 = arith.constant 2.000000e-01 : f32
    %238 = vector.broadcast %cst_76 : f32 to vector<256x4xf32>
    %239 = arith.mulf %238, %235 : vector<256x4xf32>
    %240 = arith.select %237, %235, %239 : vector<256x4xi1>, vector<256x4xf32>
    %241 = arith.truncf %240 : vector<256x4xf32> to vector<256x4xbf16>
    %242 = vector.shape_cast %241 : vector<256x4xbf16> to vector<16x16x4xbf16>
    %cst_77 = arith.constant 0.000000e+00 : bf16
    %243 = vector.broadcast %cst_77 : bf16 to vector<1x16x4xbf16>
    %244 = tpu.concatenate %243, %242, %243 in 0 : vector<1x16x4xbf16>, vector<16x16x4xbf16>, vector<1x16x4xbf16> -> vector<18x16x4xbf16>
    %cst_78 = arith.constant 0.000000e+00 : bf16
    %245 = vector.broadcast %cst_78 : bf16 to vector<18x1x4xbf16>
    %246 = tpu.concatenate %245, %244, %245 in 1 : vector<18x1x4xbf16>, vector<18x16x4xbf16>, vector<18x1x4xbf16> -> vector<18x18x4xbf16>
    %247 = vector.extract_strided_slice %246 {offsets = [0, 0, 0], sizes = [16, 16, 4], strides = [1, 1, 1]} : vector<18x18x4xbf16> to vector<16x16x4xbf16>
    %248 = vector.shape_cast %247 : vector<16x16x4xbf16> to vector<256x4xbf16>
    %249 = vector.extract_strided_slice %246 {offsets = [0, 1, 0], sizes = [16, 16, 4], strides = [1, 1, 1]} : vector<18x18x4xbf16> to vector<16x16x4xbf16>
    %250 = vector.shape_cast %249 : vector<16x16x4xbf16> to vector<256x4xbf16>
    %251 = vector.extract_strided_slice %246 {offsets = [0, 2, 0], sizes = [16, 16, 4], strides = [1, 1, 1]} : vector<18x18x4xbf16> to vector<16x16x4xbf16>
    %252 = vector.shape_cast %251 : vector<16x16x4xbf16> to vector<256x4xbf16>
    %253 = vector.extract_strided_slice %246 {offsets = [1, 0, 0], sizes = [16, 16, 4], strides = [1, 1, 1]} : vector<18x18x4xbf16> to vector<16x16x4xbf16>
    %254 = vector.shape_cast %253 : vector<16x16x4xbf16> to vector<256x4xbf16>
    %255 = vector.extract_strided_slice %246 {offsets = [1, 1, 0], sizes = [16, 16, 4], strides = [1, 1, 1]} : vector<18x18x4xbf16> to vector<16x16x4xbf16>
    %256 = vector.shape_cast %255 : vector<16x16x4xbf16> to vector<256x4xbf16>
    %257 = vector.extract_strided_slice %246 {offsets = [1, 2, 0], sizes = [16, 16, 4], strides = [1, 1, 1]} : vector<18x18x4xbf16> to vector<16x16x4xbf16>
    %258 = vector.shape_cast %257 : vector<16x16x4xbf16> to vector<256x4xbf16>
    %259 = vector.extract_strided_slice %246 {offsets = [2, 0, 0], sizes = [16, 16, 4], strides = [1, 1, 1]} : vector<18x18x4xbf16> to vector<16x16x4xbf16>
    %260 = vector.shape_cast %259 : vector<16x16x4xbf16> to vector<256x4xbf16>
    %261 = vector.extract_strided_slice %246 {offsets = [2, 1, 0], sizes = [16, 16, 4], strides = [1, 1, 1]} : vector<18x18x4xbf16> to vector<16x16x4xbf16>
    %262 = vector.shape_cast %261 : vector<16x16x4xbf16> to vector<256x4xbf16>
    %263 = vector.extract_strided_slice %246 {offsets = [2, 2, 0], sizes = [16, 16, 4], strides = [1, 1, 1]} : vector<18x18x4xbf16> to vector<16x16x4xbf16>
    %264 = vector.shape_cast %263 : vector<16x16x4xbf16> to vector<256x4xbf16>
    %265 = tpu.concatenate %248, %250, %252, %254, %256, %258, %260, %262, %264 in 1 : vector<256x4xbf16>, vector<256x4xbf16>, vector<256x4xbf16>, vector<256x4xbf16>, vector<256x4xbf16>, vector<256x4xbf16>, vector<256x4xbf16>, vector<256x4xbf16>, vector<256x4xbf16> -> vector<256x36xbf16>
    %c0_79 = arith.constant 0 : index
    %c0_80 = arith.constant 0 : index
    %266 = vector.load %arg19[%c0_79, %c0_80] : memref<36x8xbf16, #tpu.memory_space<vmem>>, vector<36x8xbf16>
    %cst_81 = arith.constant dense<0.000000e+00> : vector<256x8xf32>
    %267 = tpu.matmul %265, %266, %cst_81 {dimension_numbers = #tpu.dot_dimension_numbers<[1], [0], [0], [1], [0, 0, 1, 1], [], []>} : vector<256x36xbf16>, vector<36x8xbf16>, vector<256x8xf32> -> vector<256x8xf32>
    %c0_82 = arith.constant 0 : index
    %c0_83 = arith.constant 0 : index
    %268 = vector.load %arg20[%c0_82, %c0_83] : memref<1x8xf32, #tpu.memory_space<vmem>>, vector<1x8xf32>
    %269 = vector.broadcast %268 : vector<1x8xf32> to vector<256x8xf32>
    %270 = arith.addf %267, %269 : vector<256x8xf32>
    %271 = arith.addf %270, %100 : vector<256x8xf32>
    %272 = arith.truncf %271 : vector<256x8xf32> to vector<256x8xbf16>
    %c0_84 = arith.constant 0 : index
    %c0_85 = arith.constant 0 : index
    %c0_86 = arith.constant 0 : index
    %273 = vector.load %arg22[%c0_84, %c0_85, %c0_86] : memref<1x256x8xbf16, #tpu.memory_space<vmem>>, vector<1x256x8xbf16>
    %274 = vector.shape_cast %273 : vector<1x256x8xbf16> to vector<256x8xbf16>
    %275 = vector.shape_cast %272 : vector<256x8xbf16> to vector<1x256x8xbf16>
    tpu.vector_store %arg22[%c0_84, %c0_85, %c0_86], %275 {strides = array<i32>} : memref<1x256x8xbf16, #tpu.memory_space<vmem>>, vector<1x256x8xbf16>,
    return
  }
  func.func @transform_0(%arg0: i32) -> (i32, i32, i32) {
    %c0_i32 = arith.constant 0 : i32
    %c0_i32_0 = arith.constant 0 : i32
    %c0_i32_1 = arith.constant 0 : i32
    return %arg0, %c0_i32, %c0_i32_0 : i32, i32, i32
  }
  func.func @transform_1(%arg0: i32) -> (i32, i32, i32) {
    %c0_i32 = arith.constant 0 : i32
    %c0_i32_0 = arith.constant 0 : i32
    %c0_i32_1 = arith.constant 0 : i32
    return %arg0, %c0_i32, %c0_i32_0 : i32, i32, i32
  }
  func.func @transform_2(%arg0: i32) -> (i32, i32) {
    %c0_i32 = arith.constant 0 : i32
    %c0_i32_0 = arith.constant 0 : i32
    %c0_i32_1 = arith.constant 0 : i32
    return %c0_i32, %c0_i32_0 : i32, i32
  }
  func.func @transform_3(%arg0: i32) -> (i32, i32) {
    %c0_i32 = arith.constant 0 : i32
    %c0_i32_0 = arith.constant 0 : i32
    %c0_i32_1 = arith.constant 0 : i32
    return %c0_i32, %c0_i32_0 : i32, i32
  }
  func.func @transform_4(%arg0: i32) -> (i32, i32) {
    %c0_i32 = arith.constant 0 : i32
    %c0_i32_0 = arith.constant 0 : i32
    %c0_i32_1 = arith.constant 0 : i32
    return %c0_i32, %c0_i32_0 : i32, i32
  }
  func.func @transform_5(%arg0: i32) -> (i32, i32) {
    %c0_i32 = arith.constant 0 : i32
    %c0_i32_0 = arith.constant 0 : i32
    %c0_i32_1 = arith.constant 0 : i32
    return %c0_i32, %c0_i32_0 : i32, i32
  }
  func.func @transform_6(%arg0: i32) -> (i32, i32) {
    %c0_i32 = arith.constant 0 : i32
    %c0_i32_0 = arith.constant 0 : i32
    %c0_i32_1 = arith.constant 0 : i32
    return %c0_i32, %c0_i32_0 : i32, i32
  }
  func.func @transform_7(%arg0: i32) -> (i32, i32) {
    %c0_i32 = arith.constant 0 : i32
    %c0_i32_0 = arith.constant 0 : i32
    %c0_i32_1 = arith.constant 0 : i32
    return %c0_i32, %c0_i32_0 : i32, i32
  }
  func.func @transform_8(%arg0: i32) -> (i32, i32) {
    %c0_i32 = arith.constant 0 : i32
    %c0_i32_0 = arith.constant 0 : i32
    %c0_i32_1 = arith.constant 0 : i32
    return %c0_i32, %c0_i32_0 : i32, i32
  }
  func.func @transform_9(%arg0: i32) -> (i32, i32) {
    %c0_i32 = arith.constant 0 : i32
    %c0_i32_0 = arith.constant 0 : i32
    %c0_i32_1 = arith.constant 0 : i32
    return %c0_i32, %c0_i32_0 : i32, i32
  }
  func.func @transform_10(%arg0: i32) -> (i32, i32) {
    %c0_i32 = arith.constant 0 : i32
    %c0_i32_0 = arith.constant 0 : i32
    %c0_i32_1 = arith.constant 0 : i32
    return %c0_i32, %c0_i32_0 : i32, i32
  }
  func.func @transform_11(%arg0: i32) -> (i32, i32) {
    %c0_i32 = arith.constant 0 : i32
    %c0_i32_0 = arith.constant 0 : i32
    %c0_i32_1 = arith.constant 0 : i32
    return %c0_i32, %c0_i32_0 : i32, i32
  }
  func.func @transform_12(%arg0: i32) -> (i32, i32) {
    %c0_i32 = arith.constant 0 : i32
    %c0_i32_0 = arith.constant 0 : i32
    %c0_i32_1 = arith.constant 0 : i32
    return %c0_i32, %c0_i32_0 : i32, i32
  }
  func.func @transform_13(%arg0: i32) -> (i32, i32) {
    %c0_i32 = arith.constant 0 : i32
    %c0_i32_0 = arith.constant 0 : i32
    %c0_i32_1 = arith.constant 0 : i32
    return %c0_i32, %c0_i32_0 : i32, i32
  }
  func.func @transform_14(%arg0: i32) -> (i32, i32) {
    %c0_i32 = arith.constant 0 : i32
    %c0_i32_0 = arith.constant 0 : i32
    %c0_i32_1 = arith.constant 0 : i32
    return %c0_i32, %c0_i32_0 : i32, i32
  }
  func.func @transform_15(%arg0: i32) -> (i32, i32) {
    %c0_i32 = arith.constant 0 : i32
    %c0_i32_0 = arith.constant 0 : i32
    %c0_i32_1 = arith.constant 0 : i32
    return %c0_i32, %c0_i32_0 : i32, i32
  }
  func.func @transform_16(%arg0: i32) -> (i32, i32) {
    %c0_i32 = arith.constant 0 : i32
    %c0_i32_0 = arith.constant 0 : i32
    %c0_i32_1 = arith.constant 0 : i32
    return %c0_i32, %c0_i32_0 : i32, i32
  }
  func.func @transform_17(%arg0: i32) -> (i32, i32) {
    %c0_i32 = arith.constant 0 : i32
    %c0_i32_0 = arith.constant 0 : i32
    %c0_i32_1 = arith.constant 0 : i32
    return %c0_i32, %c0_i32_0 : i32, i32
  }
  func.func @transform_18(%arg0: i32) -> (i32, i32) {
    %c0_i32 = arith.constant 0 : i32
    %c0_i32_0 = arith.constant 0 : i32
    %c0_i32_1 = arith.constant 0 : i32
    return %c0_i32, %c0_i32_0 : i32, i32
  }
  func.func @transform_19(%arg0: i32) -> (i32, i32) {
    %c0_i32 = arith.constant 0 : i32
    %c0_i32_0 = arith.constant 0 : i32
    %c0_i32_1 = arith.constant 0 : i32
    return %c0_i32, %c0_i32_0 : i32, i32
  }
  func.func @transform_20(%arg0: i32) -> (i32, i32) {
    %c0_i32 = arith.constant 0 : i32
    %c0_i32_0 = arith.constant 0 : i32
    %c0_i32_1 = arith.constant 0 : i32
    return %c0_i32, %c0_i32_0 : i32, i32
  }
  func.func @transform_21(%arg0: i32) -> (i32, i32, i32) {
    %c0_i32 = arith.constant 0 : i32
    %c0_i32_0 = arith.constant 0 : i32
    %c0_i32_1 = arith.constant 0 : i32
    return %arg0, %c0_i32, %c0_i32_0 : i32, i32, i32
  }
}

</mosaic_0001>

<llo_original>
// kernel: resnet_block_with_spade.1
$region0: #{resnet_block_with_spade.1}
  #allocation0 [shape = 'u32[]', space=smem, size = 0x4, offset = 0x4, fixed_abs, tag = 'smem constant byte address 0x4 - core index']
  #allocation1 [shape = 'u32[144,128]{1,0:T(1,128)}', space=vmem, size = 0x12000, scoped, tag = 'internal scratch']
  %s0 = inlined_call_operand.vmem [shape: bf16[2,256,4], index: 0, kind: input, shape index: {}]
  %s1 = inlined_call_operand.vmem [shape: bf16[2,256,8], index: 1, kind: input, shape index: {}]
  %s2 = inlined_call_operand.vmem [shape: bf16[72,96], index: 2, kind: input, shape index: {}]
  %s3 = inlined_call_operand.vmem [shape: f32[1,96], index: 3, kind: input, shape index: {}]
  %s4 = inlined_call_operand.vmem [shape: bf16[288,4], index: 4, kind: input, shape index: {}]
  %s5 = inlined_call_operand.vmem [shape: f32[1,4], index: 5, kind: input, shape index: {}]
  %s6 = inlined_call_operand.vmem [shape: bf16[288,4], index: 6, kind: input, shape index: {}]
  %s7 = inlined_call_operand.vmem [shape: f32[1,4], index: 7, kind: input, shape index: {}]
  %s8 = inlined_call_operand.vmem [shape: bf16[288,4], index: 8, kind: input, shape index: {}]
  %s9 = inlined_call_operand.vmem [shape: f32[1,4], index: 9, kind: input, shape index: {}]
  %s10 = inlined_call_operand.vmem [shape: bf16[288,4], index: 10, kind: input, shape index: {}]
  %s11 = inlined_call_operand.vmem [shape: f32[1,4], index: 11, kind: input, shape index: {}]
  %s12 = inlined_call_operand.vmem [shape: bf16[288,4], index: 12, kind: input, shape index: {}]
  %s13 = inlined_call_operand.vmem [shape: f32[1,4], index: 13, kind: input, shape index: {}]
  %s14 = inlined_call_operand.vmem [shape: bf16[288,4], index: 14, kind: input, shape index: {}]
  %s15 = inlined_call_operand.vmem [shape: f32[1,4], index: 15, kind: input, shape index: {}]
  %s16 = inlined_call_operand.vmem [shape: bf16[36,4], index: 16, kind: input, shape index: {}]
  %s17 = inlined_call_operand.vmem [shape: f32[1,4], index: 17, kind: input, shape index: {}]
  %s18 = inlined_call_operand.vmem [shape: bf16[36,8], index: 18, kind: input, shape index: {}]
  %s19 = inlined_call_operand.vmem [shape: f32[1,8], index: 19, kind: input, shape index: {}]
  %s20 = inlined_call_operand.vmem [shape: bf16[4,8], index: 20, kind: input, shape index: {}]
  %s21 = inlined_call_operand.vmem [shape: bf16[2,256,8], index: 21, kind: output, shape index: {}]
  %s22 = sld [smem:[#allocation0]]
  $region117: #{resnet_block_with_spade.1} parent=0
    _
  %s24 = ssub.s32 1, %s22
  %s25 = scalar_select 0, %s24, %s22
  loop: start=0, step=1, limit=4
  $region2: #{resnet_block_with_spade.1} parent=0 // loop_pre_header
    _
  $region3: #{resnet_block_with_spade.1} parent=0 // loop_header
    %s27 = sphi 0, %s31
    %p28 = scmp.ge.s32.totalorder %s27, 4
    %s37 = sphi 0, %s39
    %s40 = sphi 0, %s37
    %s41 = sphi 0, %s40
    %s57 = sphi 0, %s41
    %s63 = sphi 0, %s65
    %s66 = sphi 0, %s63
    %s67 = sphi 0, %s66
    %s83 = sphi 0, %s67
    %s87 = sphi 0, %s87
    %s89 = sphi 0, %s87
    %s90 = sphi 0, %s89
    %s104 = sphi 0, %s90
    %s108 = sphi 0, %s108
    %s110 = sphi 0, %s108
    %s111 = sphi 0, %s110
    %s125 = sphi 0, %s111
    %s129 = sphi 0, %s129
    %s131 = sphi 0, %s129
    %s132 = sphi 0, %s131
    %s146 = sphi 0, %s132
    %s150 = sphi 0, %s150
    %s152 = sphi 0, %s150
    %s153 = sphi 0, %s152
    %s167 = sphi 0, %s153
    %s171 = sphi 0, %s171
    %s173 = sphi 0, %s171
    %s174 = sphi 0, %s173
    %s188 = sphi 0, %s174
    %s192 = sphi 0, %s192
    %s194 = sphi 0, %s192
    %s195 = sphi 0, %s194
    %s209 = sphi 0, %s195
    %s213 = sphi 0, %s213
    %s215 = sphi 0, %s213
    %s216 = sphi 0, %s215
    %s230 = sphi 0, %s216
    %s234 = sphi 0, %s234
    %s236 = sphi 0, %s234
    %s237 = sphi 0, %s236
    %s251 = sphi 0, %s237
    %s255 = sphi 0, %s255
    %s257 = sphi 0, %s255
    %s258 = sphi 0, %s257
    %s272 = sphi 0, %s258
    %s276 = sphi 0, %s276
    %s278 = sphi 0, %s276
    %s279 = sphi 0, %s278
    %s293 = sphi 0, %s279
    %s297 = sphi 0, %s297
    %s299 = sphi 0, %s297
    %s300 = sphi 0, %s299
    %s314 = sphi 0, %s300
    %s318 = sphi 0, %s318
    %s320 = sphi 0, %s318
    %s321 = sphi 0, %s320
    %s335 = sphi 0, %s321
    %s339 = sphi 0, %s339
    %s341 = sphi 0, %s339
    %s342 = sphi 0, %s341
    %s356 = sphi 0, %s342
    %s360 = sphi 0, %s360
    %s362 = sphi 0, %s360
    %s363 = sphi 0, %s362
    %s377 = sphi 0, %s363
    %s381 = sphi 0, %s381
    %s383 = sphi 0, %s381
    %s384 = sphi 0, %s383
    %s398 = sphi 0, %s384
    %s402 = sphi 0, %s402
    %s404 = sphi 0, %s402
    %s405 = sphi 0, %s404
    %s419 = sphi 0, %s405
    %s423 = sphi 0, %s423
    %s425 = sphi 0, %s423
    %s426 = sphi 0, %s425
    %s440 = sphi 0, %s426
    %s444 = sphi 0, %s444
    %s446 = sphi 0, %s444
    %s447 = sphi 0, %s446
    %s461 = sphi 0, %s447
    %s465 = sphi 0, %s465
    %s467 = sphi 0, %s465
    %s468 = sphi 0, %s467
    %s482 = sphi 0, %s468
    %s488 = sphi 0, %s490
    %s491 = sphi 0, %s488
    %s492 = sphi 0, %s491
    %s508 = sphi 0, %s492
  $region4: #{resnet_block_with_spade.1} parent=0 // loop_header_branch
    %30 = sbr.rel (%p28) target = $region8
  $region5: #{resnet_block_with_spade.1} parent=0 // loop_body
    %s32 = ssub.s32 %s27, 1
    %s33 = ssub.s32 %s27, 2
    %s34 = sadd.s32 %s27, 1
    %s35 = ssub.s32 %s27, %s34
    %p36 = scmp.eq.s32.totalorder %s35, 0
    %s38 = sadd.s32 %s37, 1
    %s39 = scalar_select %p36, %s37, %s38
    %p42 = pneg %p36
    %p43 = scmp.eq.s32.totalorder %s27, 1
    %p44 = por %p42, %p43
    %p45 = scmp.ne.s32.totalorder %s37, %s40
    %p46 = scmp.eq.s32.totalorder %s27, 0
    %p47 = por %p45, %p46
    %p48 = scmp.ne.s32.totalorder %s37, %s40
    %p49 = scmp.eq.s32.totalorder %s32, 1
    %p50 = por %p48, %p49
    %p51 = scmp.ne.s32.totalorder %s40, %s41
    %p52 = scmp.eq.s32.totalorder %s32, 0
    %p53 = por %p51, %p52
    %p54 = scmp.ne.s32.totalorder %s40, %s41
    %p55 = scmp.eq.s32.totalorder %s33, 1
    %p56 = por %p54, %p55
    %p58 = scmp.ne.s32.totalorder %s41, %s57
    %p59 = scmp.eq.s32.totalorder %s33, 0
    %p60 = por %p58, %p59
    %s61 = ssub.s32 %s27, %s34
    %p62 = scmp.eq.s32.totalorder %s61, 0
    %s64 = sadd.s32 %s63, 1
    %s65 = scalar_select %p62, %s63, %s64
    %p68 = pneg %p62
    %p69 = scmp.eq.s32.totalorder %s27, 1
    %p70 = por %p68, %p69
    %p71 = scmp.ne.s32.totalorder %s63, %s66
    %p72 = scmp.eq.s32.totalorder %s27, 0
    %p73 = por %p71, %p72
    %p74 = scmp.ne.s32.totalorder %s63, %s66
    %p75 = scmp.eq.s32.totalorder %s32, 1
    %p76 = por %p74, %p75
    %p77 = scmp.ne.s32.totalorder %s66, %s67
    %p78 = scmp.eq.s32.totalorder %s32, 0
    %p79 = por %p77, %p78
    %p80 = scmp.ne.s32.totalorder %s66, %s67
    %p81 = scmp.eq.s32.totalorder %s33, 1
    %p82 = por %p80, %p81
    %p84 = scmp.ne.s32.totalorder %s67, %s83
    %p85 = scmp.eq.s32.totalorder %s33, 0
    %p86 = por %p84, %p85
    %s88 = sadd.s32 %s87, 1
    %p91 = scmp.eq.s32.totalorder %s27, 1
    %p92 = scmp.ne.s32.totalorder %s87, %s89
    %p93 = scmp.eq.s32.totalorder %s27, 0
    %p94 = por %p92, %p93
    %p95 = scmp.ne.s32.totalorder %s87, %s89
    %p96 = scmp.eq.s32.totalorder %s32, 1
    %p97 = por %p95, %p96
    %p98 = scmp.ne.s32.totalorder %s89, %s90
    %p99 = scmp.eq.s32.totalorder %s32, 0
    %p100 = por %p98, %p99
    %p101 = scmp.ne.s32.totalorder %s89, %s90
    %p102 = scmp.eq.s32.totalorder %s33, 1
    %p103 = por %p101, %p102
    %p105 = scmp.ne.s32.totalorder %s90, %s104
    %p106 = scmp.eq.s32.totalorder %s33, 0
    %p107 = por %p105, %p106
    %s109 = sadd.s32 %s108, 1
    %p112 = scmp.eq.s32.totalorder %s27, 1
    %p113 = scmp.ne.s32.totalorder %s108, %s110
    %p114 = scmp.eq.s32.totalorder %s27, 0
    %p115 = por %p113, %p114
    %p116 = scmp.ne.s32.totalorder %s108, %s110
    %p117 = scmp.eq.s32.totalorder %s32, 1
    %p118 = por %p116, %p117
    %p119 = scmp.ne.s32.totalorder %s110, %s111
    %p120 = scmp.eq.s32.totalorder %s32, 0
    %p121 = por %p119, %p120
    %p122 = scmp.ne.s32.totalorder %s110, %s111
    %p123 = scmp.eq.s32.totalorder %s33, 1
    %p124 = por %p122, %p123
    %p126 = scmp.ne.s32.totalorder %s111, %s125
    %p127 = scmp.eq.s32.totalorder %s33, 0
    %p128 = por %p126, %p127
    %s130 = sadd.s32 %s129, 1
    %p133 = scmp.eq.s32.totalorder %s27, 1
    %p134 = scmp.ne.s32.totalorder %s129, %s131
    %p135 = scmp.eq.s32.totalorder %s27, 0
    %p136 = por %p134, %p135
    %p137 = scmp.ne.s32.totalorder %s129, %s131
    %p138 = scmp.eq.s32.totalorder %s32, 1
    %p139 = por %p137, %p138
    %p140 = scmp.ne.s32.totalorder %s131, %s132
    %p141 = scmp.eq.s32.totalorder %s32, 0
    %p142 = por %p140, %p141
    %p143 = scmp.ne.s32.totalorder %s131, %s132
    %p144 = scmp.eq.s32.totalorder %s33, 1
    %p145 = por %p143, %p144
    %p147 = scmp.ne.s32.totalorder %s132, %s146
    %p148 = scmp.eq.s32.totalorder %s33, 0
    %p149 = por %p147, %p148
    %s151 = sadd.s32 %s150, 1
    %p154 = scmp.eq.s32.totalorder %s27, 1
    %p155 = scmp.ne.s32.totalorder %s150, %s152
    %p156 = scmp.eq.s32.totalorder %s27, 0
    %p157 = por %p155, %p156
    %p158 = scmp.ne.s32.totalorder %s150, %s152
    %p159 = scmp.eq.s32.totalorder %s32, 1
    %p160 = por %p158, %p159
    %p161 = scmp.ne.s32.totalorder %s152, %s153
    %p162 = scmp.eq.s32.totalorder %s32, 0
    %p163 = por %p161, %p162
    %p164 = scmp.ne.s32.totalorder %s152, %s153
    %p165 = scmp.eq.s32.totalorder %s33, 1
    %p166 = por %p164, %p165
    %p168 = scmp.ne.s32.totalorder %s153, %s167
    %p169 = scmp.eq.s32.totalorder %s33, 0
    %p170 = por %p168, %p169
    %s172 = sadd.s32 %s171, 1
    %p175 = scmp.eq.s32.totalorder %s27, 1
    %p176 = scmp.ne.s32.totalorder %s171, %s173
    %p177 = scmp.eq.s32.totalorder %s27, 0
    %p178 = por %p176, %p177
    %p179 = scmp.ne.s32.totalorder %s171, %s173
    %p180 = scmp.eq.s32.totalorder %s32, 1
    %p181 = por %p179, %p180
    %p182 = scmp.ne.s32.totalorder %s173, %s174
    %p183 = scmp.eq.s32.totalorder %s32, 0
    %p184 = por %p182, %p183
    %p185 = scmp.ne.s32.totalorder %s173, %s174
    %p186 = scmp.eq.s32.totalorder %s33, 1
    %p187 = por %p185, %p186
    %p189 = scmp.ne.s32.totalorder %s174, %s188
    %p190 = scmp.eq.s32.totalorder %s33, 0
    %p191 = por %p189, %p190
    %s193 = sadd.s32 %s192, 1
    %p196 = scmp.eq.s32.totalorder %s27, 1
    %p197 = scmp.ne.s32.totalorder %s192, %s194
    %p198 = scmp.eq.s32.totalorder %s27, 0
    %p199 = por %p197, %p198
    %p200 = scmp.ne.s32.totalorder %s192, %s194
    %p201 = scmp.eq.s32.totalorder %s32, 1
    %p202 = por %p200, %p201
    %p203 = scmp.ne.s32.totalorder %s194, %s195
    %p204 = scmp.eq.s32.totalorder %s32, 0
    %p205 = por %p203, %p204
    %p206 = scmp.ne.s32.totalorder %s194, %s195
    %p207 = scmp.eq.s32.totalorder %s33, 1
    %p208 = por %p206, %p207
    %p210 = scmp.ne.s32.totalorder %s195, %s209
    %p211 = scmp.eq.s32.totalorder %s33, 0
    %p212 = por %p210, %p211
    %s214 = sadd.s32 %s213, 1
    %p217 = scmp.eq.s32.totalorder %s27, 1
    %p218 = scmp.ne.s32.totalorder %s213, %s215
    %p219 = scmp.eq.s32.totalorder %s27, 0
    %p220 = por %p218, %p219
    %p221 = scmp.ne.s32.totalorder %s213, %s215
    %p222 = scmp.eq.s32.totalorder %s32, 1
    %p223 = por %p221, %p222
    %p224 = scmp.ne.s32.totalorder %s215, %s216
    %p225 = scmp.eq.s32.totalorder %s32, 0
    %p226 = por %p224, %p225
    %p227 = scmp.ne.s32.totalorder %s215, %s216
    %p228 = scmp.eq.s32.totalorder %s33, 1
    %p229 = por %p227, %p228
    %p231 = scmp.ne.s32.totalorder %s216, %s230
    %p232 = scmp.eq.s32.totalorder %s33, 0
    %p233 = por %p231, %p232
    %s235 = sadd.s32 %s234, 1
    %p238 = scmp.eq.s32.totalorder %s27, 1
    %p239 = scmp.ne.s32.totalorder %s234, %s236
    %p240 = scmp.eq.s32.totalorder %s27, 0
    %p241 = por %p239, %p240
    %p242 = scmp.ne.s32.totalorder %s234, %s236
    %p243 = scmp.eq.s32.totalorder %s32, 1
    %p244 = por %p242, %p243
    %p245 = scmp.ne.s32.totalorder %s236, %s237
    %p246 = scmp.eq.s32.totalorder %s32, 0
    %p247 = por %p245, %p246
    %p248 = scmp.ne.s32.totalorder %s236, %s237
    %p249 = scmp.eq.s32.totalorder %s33, 1
    %p250 = por %p248, %p249
    %p252 = scmp.ne.s32.totalorder %s237, %s251
    %p253 = scmp.eq.s32.totalorder %s33, 0
    %p254 = por %p252, %p253
    %s256 = sadd.s32 %s255, 1
    %p259 = scmp.eq.s32.totalorder %s27, 1
    %p260 = scmp.ne.s32.totalorder %s255, %s257
    %p261 = scmp.eq.s32.totalorder %s27, 0
    %p262 = por %p260, %p261
    %p263 = scmp.ne.s32.totalorder %s255, %s257
    %p264 = scmp.eq.s32.totalorder %s32, 1
    %p265 = por %p263, %p264
    %p266 = scmp.ne.s32.totalorder %s257, %s258
    %p267 = scmp.eq.s32.totalorder %s32, 0
    %p268 = por %p266, %p267
    %p269 = scmp.ne.s32.totalorder %s257, %s258
    %p270 = scmp.eq.s32.totalorder %s33, 1
    %p271 = por %p269, %p270
    %p273 = scmp.ne.s32.totalorder %s258, %s272
    %p274 = scmp.eq.s32.totalorder %s33, 0
    %p275 = por %p273, %p274
    %s277 = sadd.s32 %s276, 1
    %p280 = scmp.eq.s32.totalorder %s27, 1
    %p281 = scmp.ne.s32.totalorder %s276, %s278
    %p282 = scmp.eq.s32.totalorder %s27, 0
    %p283 = por %p281, %p282
    %p284 = scmp.ne.s32.totalorder %s276, %s278
    %p285 = scmp.eq.s32.totalorder %s32, 1
    %p286 = por %p284, %p285
    %p287 = scmp.ne.s32.totalorder %s278, %s279
    %p288 = scmp.eq.s32.totalorder %s32, 0
    %p289 = por %p287, %p288
    %p290 = scmp.ne.s32.totalorder %s278, %s279
    %p291 = scmp.eq.s32.totalorder %s33, 1
    %p292 = por %p290, %p291
    %p294 = scmp.ne.s32.totalorder %s279, %s293
    %p295 = scmp.eq.s32.totalorder %s33, 0
    %p296 = por %p294, %p295
    %s298 = sadd.s32 %s297, 1
    %p301 = scmp.eq.s32.totalorder %s27, 1
    %p302 = scmp.ne.s32.totalorder %s297, %s299
    %p303 = scmp.eq.s32.totalorder %s27, 0
    %p304 = por %p302, %p303
    %p305 = scmp.ne.s32.totalorder %s297, %s299
    %p306 = scmp.eq.s32.totalorder %s32, 1
    %p307 = por %p305, %p306
    %p308 = scmp.ne.s32.totalorder %s299, %s300
    %p309 = scmp.eq.s32.totalorder %s32, 0
    %p310 = por %p308, %p309
    %p311 = scmp.ne.s32.totalorder %s299, %s300
    %p312 = scmp.eq.s32.totalorder %s33, 1
    %p313 = por %p311, %p312
    %p315 = scmp.ne.s32.totalorder %s300, %s314
    %p316 = scmp.eq.s32.totalorder %s33, 0
    %p317 = por %p315, %p316
    %s319 = sadd.s32 %s318, 1
    %p322 = scmp.eq.s32.totalorder %s27, 1
    %p323 = scmp.ne.s32.totalorder %s318, %s320
    %p324 = scmp.eq.s32.totalorder %s27, 0
    %p325 = por %p323, %p324
    %p326 = scmp.ne.s32.totalorder %s318, %s320
    %p327 = scmp.eq.s32.totalorder %s32, 1
    %p328 = por %p326, %p327
    %p329 = scmp.ne.s32.totalorder %s320, %s321
    %p330 = scmp.eq.s32.totalorder %s32, 0
    %p331 = por %p329, %p330
    %p332 = scmp.ne.s32.totalorder %s320, %s321
    %p333 = scmp.eq.s32.totalorder %s33, 1
    %p334 = por %p332, %p333
    %p336 = scmp.ne.s32.totalorder %s321, %s335
    %p337 = scmp.eq.s32.totalorder %s33, 0
    %p338 = por %p336, %p337
    %s340 = sadd.s32 %s339, 1
    %p343 = scmp.eq.s32.totalorder %s27, 1
    %p344 = scmp.ne.s32.totalorder %s339, %s341
    %p345 = scmp.eq.s32.totalorder %s27, 0
    %p346 = por %p344, %p345
    %p347 = scmp.ne.s32.totalorder %s339, %s341
    %p348 = scmp.eq.s32.totalorder %s32, 1
    %p349 = por %p347, %p348
    %p350 = scmp.ne.s32.totalorder %s341, %s342
    %p351 = scmp.eq.s32.totalorder %s32, 0
    %p352 = por %p350, %p351
    %p353 = scmp.ne.s32.totalorder %s341, %s342
    %p354 = scmp.eq.s32.totalorder %s33, 1
    %p355 = por %p353, %p354
    %p357 = scmp.ne.s32.totalorder %s342, %s356
    %p358 = scmp.eq.s32.totalorder %s33, 0
    %p359 = por %p357, %p358
    %s361 = sadd.s32 %s360, 1
    %p364 = scmp.eq.s32.totalorder %s27, 1
    %p365 = scmp.ne.s32.totalorder %s360, %s362
    %p366 = scmp.eq.s32.totalorder %s27, 0
    %p367 = por %p365, %p366
    %p368 = scmp.ne.s32.totalorder %s360, %s362
    %p369 = scmp.eq.s32.totalorder %s32, 1
    %p370 = por %p368, %p369
    %p371 = scmp.ne.s32.totalorder %s362, %s363
    %p372 = scmp.eq.s32.totalorder %s32, 0
    %p373 = por %p371, %p372
    %p374 = scmp.ne.s32.totalorder %s362, %s363
    %p375 = scmp.eq.s32.totalorder %s33, 1
    %p376 = por %p374, %p375
    %p378 = scmp.ne.s32.totalorder %s363, %s377
    %p379 = scmp.eq.s32.totalorder %s33, 0
    %p380 = por %p378, %p379
    %s382 = sadd.s32 %s381, 1
    %p385 = scmp.eq.s32.totalorder %s27, 1
    %p386 = scmp.ne.s32.totalorder %s381, %s383
    %p387 = scmp.eq.s32.totalorder %s27, 0
    %p388 = por %p386, %p387
    %p389 = scmp.ne.s32.totalorder %s381, %s383
    %p390 = scmp.eq.s32.totalorder %s32, 1
    %p391 = por %p389, %p390
    %p392 = scmp.ne.s32.totalorder %s383, %s384
    %p393 = scmp.eq.s32.totalorder %s32, 0
    %p394 = por %p392, %p393
    %p395 = scmp.ne.s32.totalorder %s383, %s384
    %p396 = scmp.eq.s32.totalorder %s33, 1
    %p397 = por %p395, %p396
    %p399 = scmp.ne.s32.totalorder %s384, %s398
    %p400 = scmp.eq.s32.totalorder %s33, 0
    %p401 = por %p399, %p400
    %s403 = sadd.s32 %s402, 1
    %p406 = scmp.eq.s32.totalorder %s27, 1
    %p407 = scmp.ne.s32.totalorder %s402, %s404
    %p408 = scmp.eq.s32.totalorder %s27, 0
    %p409 = por %p407, %p408
    %p410 = scmp.ne.s32.totalorder %s402, %s404
    %p411 = scmp.eq.s32.totalorder %s32, 1
    %p412 = por %p410, %p411
    %p413 = scmp.ne.s32.totalorder %s404, %s405
    %p414 = scmp.eq.s32.totalorder %s32, 0
    %p415 = por %p413, %p414
    %p416 = scmp.ne.s32.totalorder %s404, %s405
    %p417 = scmp.eq.s32.totalorder %s33, 1
    %p418 = por %p416, %p417
    %p420 = scmp.ne.s32.totalorder %s405, %s419
    %p421 = scmp.eq.s32.totalorder %s33, 0
    %p422 = por %p420, %p421
    %s424 = sadd.s32 %s423, 1
    %p427 = scmp.eq.s32.totalorder %s27, 1
    %p428 = scmp.ne.s32.totalorder %s423, %s425
    %p429 = scmp.eq.s32.totalorder %s27, 0
    %p430 = por %p428, %p429
    %p431 = scmp.ne.s32.totalorder %s423, %s425
    %p432 = scmp.eq.s32.totalorder %s32, 1
    %p433 = por %p431, %p432
    %p434 = scmp.ne.s32.totalorder %s425, %s426
    %p435 = scmp.eq.s32.totalorder %s32, 0
    %p436 = por %p434, %p435
    %p437 = scmp.ne.s32.totalorder %s425, %s426
    %p438 = scmp.eq.s32.totalorder %s33, 1
    %p439 = por %p437, %p438
    %p441 = scmp.ne.s32.totalorder %s426, %s440
    %p442 = scmp.eq.s32.totalorder %s33, 0
    %p443 = por %p441, %p442
    %s445 = sadd.s32 %s444, 1
    %p448 = scmp.eq.s32.totalorder %s27, 1
    %p449 = scmp.ne.s32.totalorder %s444, %s446
    %p450 = scmp.eq.s32.totalorder %s27, 0
    %p451 = por %p449, %p450
    %p452 = scmp.ne.s32.totalorder %s444, %s446
    %p453 = scmp.eq.s32.totalorder %s32, 1
    %p454 = por %p452, %p453
    %p455 = scmp.ne.s32.totalorder %s446, %s447
    %p456 = scmp.eq.s32.totalorder %s32, 0
    %p457 = por %p455, %p456
    %p458 = scmp.ne.s32.totalorder %s446, %s447
    %p459 = scmp.eq.s32.totalorder %s33, 1
    %p460 = por %p458, %p459
    %p462 = scmp.ne.s32.totalorder %s447, %s461
    %p463 = scmp.eq.s32.totalorder %s33, 0
    %p464 = por %p462, %p463
    %s466 = sadd.s32 %s465, 1
    %p469 = scmp.eq.s32.totalorder %s27, 1
    %p470 = scmp.ne.s32.totalorder %s465, %s467
    %p471 = scmp.eq.s32.totalorder %s27, 0
    %p472 = por %p470, %p471
    %p473 = scmp.ne.s32.totalorder %s465, %s467
    %p474 = scmp.eq.s32.totalorder %s32, 1
    %p475 = por %p473, %p474
    %p476 = scmp.ne.s32.totalorder %s467, %s468
    %p477 = scmp.eq.s32.totalorder %s32, 0
    %p478 = por %p476, %p477
    %p479 = scmp.ne.s32.totalorder %s467, %s468
    %p480 = scmp.eq.s32.totalorder %s33, 1
    %p481 = por %p479, %p480
    %p483 = scmp.ne.s32.totalorder %s468, %s482
    %p484 = scmp.eq.s32.totalorder %s33, 0
    %p485 = por %p483, %p484
    %s486 = ssub.s32 %s27, %s34
    %p487 = scmp.eq.s32.totalorder %s486, 0
    %s489 = sadd.s32 %s488, 1
    %s490 = scalar_select %p487, %s488, %s489
    %p493 = pneg %p487
    %p494 = scmp.eq.s32.totalorder %s27, 1
    %p495 = por %p493, %p494
    %p496 = scmp.ne.s32.totalorder %s488, %s491
    %p497 = scmp.eq.s32.totalorder %s27, 0
    %p498 = por %p496, %p497
    %p499 = scmp.ne.s32.totalorder %s488, %s491
    %p500 = scmp.eq.s32.totalorder %s32, 1
    %p501 = por %p499, %p500
    %p502 = scmp.ne.s32.totalorder %s491, %s492
    %p503 = scmp.eq.s32.totalorder %s32, 0
    %p504 = por %p502, %p503
    %p505 = scmp.ne.s32.totalorder %s491, %s492
    %p506 = scmp.eq.s32.totalorder %s33, 1
    %p507 = por %p505, %p506
    %p509 = scmp.ne.s32.totalorder %s492, %s508
    %p510 = scmp.eq.s32.totalorder %s33, 0
    %p511 = por %p509, %p510
    %p512 = scmp.le.s32.totalorder 1, %s27
    %p513 = scmp.lt.s32.totalorder %s27, 3
    %p514 = pnand %p512, %p513
    %p515 = pneg %p514
    // Predicated region
    $region9: #{resnet_block_with_spade.1} parent=5 // pred_check
      _
    $region10: #{resnet_block_with_spade.1} parent=5 // pred_check_branch
      %517 = sbr.rel (%p514) target = $region12
    $region11: #{resnet_block_with_spade.1} parent=5 // pred_region
      %s518 = ssub.s32 %s27, 1
      // Predicated region
      $region13: #{resnet_block_with_spade.1} parent=11 // pred_check
        %p519 = pneg %p100
      $region14: #{resnet_block_with_spade.1} parent=11 // pred_check_branch
        %521 = sbr.rel (%p519) target = $region16
      $region15: #{resnet_block_with_spade.1} parent=11 // pred_region
        _
      $region16: #{resnet_block_with_spade.1} parent=11 // pred_fallthru
        _
      // Predicated region
      $region17: #{resnet_block_with_spade.1} parent=11 // pred_check
        %p522 = pneg %p121
      $region18: #{resnet_block_with_spade.1} parent=11 // pred_check_branch
        %524 = sbr.rel (%p522) target = $region20
      $region19: #{resnet_block_with_spade.1} parent=11 // pred_region
        _
      $region20: #{resnet_block_with_spade.1} parent=11 // pred_fallthru
        _
      // Predicated region
      $region21: #{resnet_block_with_spade.1} parent=11 // pred_check
        %p525 = pneg %p142
      $region22: #{resnet_block_with_spade.1} parent=11 // pred_check_branch
        %527 = sbr.rel (%p525) target = $region24
      $region23: #{resnet_block_with_spade.1} parent=11 // pred_region
        _
      $region24: #{resnet_block_with_spade.1} parent=11 // pred_fallthru
        _
      // Predicated region
      $region25: #{resnet_block_with_spade.1} parent=11 // pred_check
        %p528 = pneg %p163
      $region26: #{resnet_block_with_spade.1} parent=11 // pred_check_branch
        %530 = sbr.rel (%p528) target = $region28
      $region27: #{resnet_block_with_spade.1} parent=11 // pred_region
        _
      $region28: #{resnet_block_with_spade.1} parent=11 // pred_fallthru
        _
      // Predicated region
      $region29: #{resnet_block_with_spade.1} parent=11 // pred_check
        %p531 = pneg %p184
      $region30: #{resnet_block_with_spade.1} parent=11 // pred_check_branch
        %533 = sbr.rel (%p531) target = $region32
      $region31: #{resnet_block_with_spade.1} parent=11 // pred_region
        _
      $region32: #{resnet_block_with_spade.1} parent=11 // pred_fallthru
        _
      // Predicated region
      $region33: #{resnet_block_with_spade.1} parent=11 // pred_check
        %p534 = pneg %p205
      $region34: #{resnet_block_with_spade.1} parent=11 // pred_check_branch
        %536 = sbr.rel (%p534) target = $region36
      $region35: #{resnet_block_with_spade.1} parent=11 // pred_region
        _
      $region36: #{resnet_block_with_spade.1} parent=11 // pred_fallthru
        _
      // Predicated region
      $region37: #{resnet_block_with_spade.1} parent=11 // pred_check
        %p537 = pneg %p226
      $region38: #{resnet_block_with_spade.1} parent=11 // pred_check_branch
        %539 = sbr.rel (%p537) target = $region40
      $region39: #{resnet_block_with_spade.1} parent=11 // pred_region
        _
      $region40: #{resnet_block_with_spade.1} parent=11 // pred_fallthru
        _
      // Predicated region
      $region41: #{resnet_block_with_spade.1} parent=11 // pred_check
        %p540 = pneg %p247
      $region42: #{resnet_block_with_spade.1} parent=11 // pred_check_branch
        %542 = sbr.rel (%p540) target = $region44
      $region43: #{resnet_block_with_spade.1} parent=11 // pred_region
        _
      $region44: #{resnet_block_with_spade.1} parent=11 // pred_fallthru
        _
      // Predicated region
      $region45: #{resnet_block_with_spade.1} parent=11 // pred_check
        %p543 = pneg %p268
      $region46: #{resnet_block_with_spade.1} parent=11 // pred_check_branch
        %545 = sbr.rel (%p543) target = $region48
      $region47: #{resnet_block_with_spade.1} parent=11 // pred_region
        _
      $region48: #{resnet_block_with_spade.1} parent=11 // pred_fallthru
        _
      // Predicated region
      $region49: #{resnet_block_with_spade.1} parent=11 // pred_check
        %p546 = pneg %p289
      $region50: #{resnet_block_with_spade.1} parent=11 // pred_check_branch
        %548 = sbr.rel (%p546) target = $region52
      $region51: #{resnet_block_with_spade.1} parent=11 // pred_region
        _
      $region52: #{resnet_block_with_spade.1} parent=11 // pred_fallthru
        _
      // Predicated region
      $region53: #{resnet_block_with_spade.1} parent=11 // pred_check
        %p549 = pneg %p310
      $region54: #{resnet_block_with_spade.1} parent=11 // pred_check_branch
        %551 = sbr.rel (%p549) target = $region56
      $region55: #{resnet_block_with_spade.1} parent=11 // pred_region
        _
      $region56: #{resnet_block_with_spade.1} parent=11 // pred_fallthru
        _
      // Predicated region
      $region57: #{resnet_block_with_spade.1} parent=11 // pred_check
        %p552 = pneg %p331
      $region58: #{resnet_block_with_spade.1} parent=11 // pred_check_branch
        %554 = sbr.rel (%p552) target = $region60
      $region59: #{resnet_block_with_spade.1} parent=11 // pred_region
        _
      $region60: #{resnet_block_with_spade.1} parent=11 // pred_fallthru
        _
      // Predicated region
      $region61: #{resnet_block_with_spade.1} parent=11 // pred_check
        %p555 = pneg %p352
      $region62: #{resnet_block_with_spade.1} parent=11 // pred_check_branch
        %557 = sbr.rel (%p555) target = $region64
      $region63: #{resnet_block_with_spade.1} parent=11 // pred_region
        _
      $region64: #{resnet_block_with_spade.1} parent=11 // pred_fallthru
        _
      // Predicated region
      $region65: #{resnet_block_with_spade.1} parent=11 // pred_check
        %p558 = pneg %p373
      $region66: #{resnet_block_with_spade.1} parent=11 // pred_check_branch
        %560 = sbr.rel (%p558) target = $region68
      $region67: #{resnet_block_with_spade.1} parent=11 // pred_region
        _
      $region68: #{resnet_block_with_spade.1} parent=11 // pred_fallthru
        _
      // Predicated region
      $region69: #{resnet_block_with_spade.1} parent=11 // pred_check
        %p561 = pneg %p394
      $region70: #{resnet_block_with_spade.1} parent=11 // pred_check_branch
        %563 = sbr.rel (%p561) target = $region72
      $region71: #{resnet_block_with_spade.1} parent=11 // pred_region
        _
      $region72: #{resnet_block_with_spade.1} parent=11 // pred_fallthru
        _
      // Predicated region
      $region73: #{resnet_block_with_spade.1} parent=11 // pred_check
        %p564 = pneg %p415
      $region74: #{resnet_block_with_spade.1} parent=11 // pred_check_branch
        %566 = sbr.rel (%p564) target = $region76
      $region75: #{resnet_block_with_spade.1} parent=11 // pred_region
        _
      $region76: #{resnet_block_with_spade.1} parent=11 // pred_fallthru
        _
      // Predicated region
      $region77: #{resnet_block_with_spade.1} parent=11 // pred_check
        %p567 = pneg %p436
      $region78: #{resnet_block_with_spade.1} parent=11 // pred_check_branch
        %569 = sbr.rel (%p567) target = $region80
      $region79: #{resnet_block_with_spade.1} parent=11 // pred_region
        _
      $region80: #{resnet_block_with_spade.1} parent=11 // pred_fallthru
        _
      // Predicated region
      $region81: #{resnet_block_with_spade.1} parent=11 // pred_check
        %p570 = pneg %p457
      $region82: #{resnet_block_with_spade.1} parent=11 // pred_check_branch
        %572 = sbr.rel (%p570) target = $region84
      $region83: #{resnet_block_with_spade.1} parent=11 // pred_region
        _
      $region84: #{resnet_block_with_spade.1} parent=11 // pred_fallthru
        _
      // Predicated region
      $region85: #{resnet_block_with_spade.1} parent=11 // pred_check
        %p573 = pneg %p478
      $region86: #{resnet_block_with_spade.1} parent=11 // pred_check_branch
        %575 = sbr.rel (%p573) target = $region88
      $region87: #{resnet_block_with_spade.1} parent=11 // pred_region
        _
      $region88: #{resnet_block_with_spade.1} parent=11 // pred_fallthru
        _
    $region12: #{resnet_block_with_spade.1} parent=5 // pred_fallthru
      _
    %p576 = scmp.lt.s32.totalorder %s27, 2
    // Predicated region
    $region89: #{resnet_block_with_spade.1} parent=5 // pred_check
      %p577 = pneg %p576
    $region90: #{resnet_block_with_spade.1} parent=5 // pred_check_branch
      %579 = sbr.rel (%p577) target = $region92
    $region91: #{resnet_block_with_spade.1} parent=5 // pred_region
      // Predicated region
      $region93: #{resnet_block_with_spade.1} parent=91 // pred_check
        %p580 = pneg %p47
      $region94: #{resnet_block_with_spade.1} parent=91 // pred_check_branch
        %582 = sbr.rel (%p580) target = $region96
      $region95: #{resnet_block_with_spade.1} parent=91 // pred_region
        %p583 = scmp.lt.s32.totalorder %s27, 1
        %s584 = scalar_select %p583, %s27, 1
        %s585 = smul.addr %s584, 32
        %s586 = smul.addr %s585, 4
        %s587 = scalar_lea.vmem %s0, %s586
      $region96: #{resnet_block_with_spade.1} parent=91 // pred_fallthru
        _
      // Predicated region
      $region97: #{resnet_block_with_spade.1} parent=91 // pred_check
        %p588 = pneg %p73
      $region98: #{resnet_block_with_spade.1} parent=91 // pred_check_branch
        %590 = sbr.rel (%p588) target = $region100
      $region99: #{resnet_block_with_spade.1} parent=91 // pred_region
        %p591 = scmp.lt.s32.totalorder %s27, 1
        %s592 = scalar_select %p591, %s27, 1
        %s593 = smul.addr %s592, 32
        %s594 = smul.addr %s593, 4
        %s595 = scalar_lea.vmem %s1, %s594
      $region100: #{resnet_block_with_spade.1} parent=91 // pred_fallthru
        _
    $region92: #{resnet_block_with_spade.1} parent=5 // pred_fallthru
      _
    %p596 = scmp.le.s32.totalorder 1, %s27
    %p597 = scmp.lt.s32.totalorder %s27, 3
    %p598 = pnand %p596, %p597
    %p599 = pneg %p598
    // Predicated region
    $region101: #{resnet_block_with_spade.1} parent=5 // pred_check
      _
    $region102: #{resnet_block_with_spade.1} parent=5 // pred_check_branch
      %601 = sbr.rel (%p598) target = $region104
    $region103: #{resnet_block_with_spade.1} parent=5 // pred_region
      %s602 = ssub.s32 %s27, 1
      %p603 = scmp.lt.s32.totalorder %s32, 1
      %s604 = scalar_select %p603, %s32, 1
      %s605 = smul.addr %s604, 32
      %s606 = smul.addr %s605, 4
      %s607 = scalar_lea.vmem %s0, %s606
      %p608 = pneg %p53
      %p609 = pneg %p50
      %p610 = scmp.lt.s32.totalorder %s32, 1
      %s611 = scalar_select %p610, %s32, 1
      %s612 = smul.addr %s611, 32
      %s613 = smul.addr %s612, 4
      %s614 = scalar_lea.vmem %s1, %s613
      %p615 = pneg %p79
      %p616 = pneg %p76
      %p617 = pneg %p100
      %p618 = pneg %p97
      %p619 = pneg %p121
      %p620 = pneg %p118
      %p621 = pneg %p142
      %p622 = pneg %p139
      %p623 = pneg %p163
      %p624 = pneg %p160
      %p625 = pneg %p184
      %p626 = pneg %p181
      %p627 = pneg %p205
      %p628 = pneg %p202
      %p629 = pneg %p226
      %p630 = pneg %p223
      %p631 = pneg %p247
      %p632 = pneg %p244
      %p633 = pneg %p268
      %p634 = pneg %p265
      %p635 = pneg %p289
      %p636 = pneg %p286
      %p637 = pneg %p310
      %p638 = pneg %p307
      %p639 = pneg %p331
      %p640 = pneg %p328
      %p641 = pneg %p352
      %p642 = pneg %p349
      %p643 = pneg %p373
      %p644 = pneg %p370
      %p645 = pneg %p394
      %p646 = pneg %p391
      %p647 = pneg %p415
      %p648 = pneg %p412
      %p649 = pneg %p436
      %p650 = pneg %p433
      %p651 = pneg %p457
      %p652 = pneg %p454
      %p653 = pneg %p478
      %p654 = pneg %p475
      %p655 = pneg %p504
      %p656 = pneg %p501
      %p657 = scmp.lt.s32.totalorder %s32, 1
      %s658 = scalar_select %p657, %s32, 1
      %s659 = smul.addr %s658, 32
      %s660 = smul.addr %s659, 4
      %s661 = scalar_lea.vmem %s21, %s660
      %p662 = scmp.lt.s32.totalorder %s32, 1
      %s663 = scalar_select %p662, %s32, 1
      %s664 = smul.addr %s663, 32
      %s665 = smul.addr %s664, 4
      %s666 = scalar_lea.vmem %s0, %s665
      %p667 = scmp.lt.s32.totalorder %s32, 1
      %s668 = scalar_select %p667, %s32, 1
      %s669 = smul.addr %s668, 32
      %s670 = smul.addr %s669, 4
      %s671 = scalar_lea.vmem %s1, %s670
      %p672 = scmp.lt.s32.totalorder %s32, 1
      %s673 = scalar_select %p672, %s32, 1
      %s674 = smul.addr %s673, 32
      %s675 = smul.addr %s674, 4
      %s676 = scalar_lea.vmem %s21, %s675
      %v678 = vld [vmem:[%s671] sm:$0xf]
      %v679 = vld [vmem:[%s671 + $0x4] sm:$0xf]
      %v680 = vld [vmem:[%s671 + $0x8] sm:$0xf]
      %v681 = vld [vmem:[%s671 + $0xc] sm:$0xf]
      %v682 = vld [vmem:[%s671 + $0x10] sm:$0xf]
      %v683 = vld [vmem:[%s671 + $0x14] sm:$0xf]
      %v684 = vld [vmem:[%s671 + $0x18] sm:$0xf]
      %v685 = vld [vmem:[%s671 + $0x1c] sm:$0xf]
      %v686 = vld [vmem:[%s671 + $0x20] sm:$0xf]
      %v687 = vld [vmem:[%s671 + $0x24] sm:$0xf]
      %v688 = vld [vmem:[%s671 + $0x28] sm:$0xf]
      %v689 = vld [vmem:[%s671 + $0x2c] sm:$0xf]
      %v690 = vld [vmem:[%s671 + $0x30] sm:$0xf]
      %v691 = vld [vmem:[%s671 + $0x34] sm:$0xf]
      %v692 = vld [vmem:[%s671 + $0x38] sm:$0xf]
      %v693 = vld [vmem:[%s671 + $0x3c] sm:$0xf]
      %v694 = vld [vmem:[%s671 + $0x40] sm:$0xf]
      %v695 = vld [vmem:[%s671 + $0x44] sm:$0xf]
      %v696 = vld [vmem:[%s671 + $0x48] sm:$0xf]
      %v697 = vld [vmem:[%s671 + $0x4c] sm:$0xf]
      %v698 = vld [vmem:[%s671 + $0x50] sm:$0xf]
      %v699 = vld [vmem:[%s671 + $0x54] sm:$0xf]
      %v700 = vld [vmem:[%s671 + $0x58] sm:$0xf]
      %v701 = vld [vmem:[%s671 + $0x5c] sm:$0xf]
      %v702 = vld [vmem:[%s671 + $0x60] sm:$0xf]
      %v703 = vld [vmem:[%s671 + $0x64] sm:$0xf]
      %v704 = vld [vmem:[%s671 + $0x68] sm:$0xf]
      %v705 = vld [vmem:[%s671 + $0x6c] sm:$0xf]
      %v706 = vld [vmem:[%s671 + $0x70] sm:$0xf]
      %v707 = vld [vmem:[%s671 + $0x74] sm:$0xf]
      %v708 = vld [vmem:[%s671 + $0x78] sm:$0xf]
      %v709 = vld [vmem:[%s671 + $0x7c] sm:$0xf]
      %v742 = vunpack.c.l.b16 %v678
      %v743 = vunpack.c.l.b16 %v679
      %v744 = vunpack.c.l.b16 %v680
      %v745 = vunpack.c.l.b16 %v681
      %v746 = vunpack.c.l.b16 %v682
      %v747 = vunpack.c.l.b16 %v683
      %v748 = vunpack.c.l.b16 %v684
      %v749 = vunpack.c.l.b16 %v685
      %v750 = vunpack.c.l.b16 %v686
      %v751 = vunpack.c.l.b16 %v687
      %v752 = vunpack.c.l.b16 %v688
      %v753 = vunpack.c.l.b16 %v689
      %v754 = vunpack.c.l.b16 %v690
      %v755 = vunpack.c.l.b16 %v691
      %v756 = vunpack.c.l.b16 %v692
      %v757 = vunpack.c.l.b16 %v693
      %v758 = vunpack.c.l.b16 %v694
      %v759 = vunpack.c.l.b16 %v695
      %v760 = vunpack.c.l.b16 %v696
      %v761 = vunpack.c.l.b16 %v697
      %v762 = vunpack.c.l.b16 %v698
      %v763 = vunpack.c.l.b16 %v699
      %v764 = vunpack.c.l.b16 %v700
      %v765 = vunpack.c.l.b16 %v701
      %v766 = vunpack.c.l.b16 %v702
      %v767 = vunpack.c.l.b16 %v703
      %v768 = vunpack.c.l.b16 %v704
      %v769 = vunpack.c.l.b16 %v705
      %v770 = vunpack.c.l.b16 %v706
      %v771 = vunpack.c.l.b16 %v707
      %v772 = vunpack.c.l.b16 %v708
      %v773 = vunpack.c.l.b16 %v709
      %v774 = vpack.c.b16 %v743, %v742
      %v775 = vpack.c.b16 %v745, %v744
      %v776 = vpack.c.b16 %v747, %v746
      %v777 = vpack.c.b16 %v749, %v748
      %v778 = vpack.c.b16 %v751, %v750
      %v779 = vpack.c.b16 %v753, %v752
      %v780 = vpack.c.b16 %v755, %v754
      %v781 = vpack.c.b16 %v757, %v756
      %v782 = vpack.c.b16 %v759, %v758
      %v783 = vpack.c.b16 %v761, %v760
      %v784 = vpack.c.b16 %v763, %v762
      %v785 = vpack.c.b16 %v765, %v764
      %v786 = vpack.c.b16 %v767, %v766
      %v787 = vpack.c.b16 %v769, %v768
      %v788 = vpack.c.b16 %v771, %v770
      %v789 = vpack.c.b16 %v773, %v772
      %v791 = vshrl.u32 0, 16
      %v793 = vrot.slane %v791, 7
      %v794 = vshll.u32 0, 16
      %v796 = vor.u32 %v793, %v794
      %v798 = vshrl.u32 %v774, 16
      %v800 = vrot.slane %v798, 7
      %v801 = vshll.u32 %v774, 16
      %v803 = vor.u32 %v800, %v801
      %v805 = vshrl.u32 %v775, 16
      %v807 = vrot.slane %v805, 7
      %v808 = vshll.u32 %v775, 16
      %v810 = vor.u32 %v807, %v808
      %v812 = vshrl.u32 %v776, 16
      %v814 = vrot.slane %v812, 7
      %v815 = vshll.u32 %v776, 16
      %v817 = vor.u32 %v814, %v815
      %v819 = vshrl.u32 %v777, 16
      %v821 = vrot.slane %v819, 7
      %v822 = vshll.u32 %v777, 16
      %v824 = vor.u32 %v821, %v822
      %v826 = vshrl.u32 %v778, 16
      %v828 = vrot.slane %v826, 7
      %v829 = vshll.u32 %v778, 16
      %v831 = vor.u32 %v828, %v829
      %v833 = vshrl.u32 %v779, 16
      %v835 = vrot.slane %v833, 7
      %v836 = vshll.u32 %v779, 16
      %v838 = vor.u32 %v835, %v836
      %v840 = vshrl.u32 %v780, 16
      %v842 = vrot.slane %v840, 7
      %v843 = vshll.u32 %v780, 16
      %v845 = vor.u32 %v842, %v843
      %v847 = vshrl.u32 %v781, 16
      %v849 = vrot.slane %v847, 7
      %v850 = vshll.u32 %v781, 16
      %v852 = vor.u32 %v849, %v850
      %v854 = vshrl.u32 %v782, 16
      %v856 = vrot.slane %v854, 7
      %v857 = vshll.u32 %v782, 16
      %v859 = vor.u32 %v856, %v857
      %v861 = vshrl.u32 %v783, 16
      %v863 = vrot.slane %v861, 7
      %v864 = vshll.u32 %v783, 16
      %v866 = vor.u32 %v863, %v864
      %v868 = vshrl.u32 %v784, 16
      %v870 = vrot.slane %v868, 7
      %v871 = vshll.u32 %v784, 16
      %v873 = vor.u32 %v870, %v871
      %v875 = vshrl.u32 %v785, 16
      %v877 = vrot.slane %v875, 7
      %v878 = vshll.u32 %v785, 16
      %v880 = vor.u32 %v877, %v878
      %v882 = vshrl.u32 %v786, 16
      %v884 = vrot.slane %v882, 7
      %v885 = vshll.u32 %v786, 16
      %v887 = vor.u32 %v884, %v885
      %v889 = vshrl.u32 %v787, 16
      %v891 = vrot.slane %v889, 7
      %v892 = vshll.u32 %v787, 16
      %v894 = vor.u32 %v891, %v892
      %v896 = vshrl.u32 %v788, 16
      %v898 = vrot.slane %v896, 7
      %v899 = vshll.u32 %v788, 16
      %v901 = vor.u32 %v898, %v899
      %v903 = vshrl.u32 %v789, 16
      %v905 = vrot.slane %v903, 7
      %v906 = vshll.u32 %v789, 16
      %v908 = vor.u32 %v905, %v906
      %vm943 = vcmask 1040384
      %vm944 = vsmask.f32 256
      %vm945 = vmand %vm943, %vm944
      %v946 = vsel %vm945, 0, %v796
      %v947 = vsel %vm945, 0, %v803
      %v948 = vsel %vm945, 0, %v810
      %v949 = vsel %vm945, 0, %v817
      %v950 = vsel %vm945, 0, %v824
      %v951 = vsel %vm945, 0, %v831
      %v952 = vsel %vm945, 0, %v838
      %v953 = vsel %vm945, 0, %v845
      %v954 = vsel %vm945, 0, %v852
      %v955 = vsel %vm945, 0, %v859
      %v956 = vsel %vm945, 0, %v866
      %v957 = vsel %vm945, 0, %v873
      %v958 = vsel %vm945, 0, %v880
      %v959 = vsel %vm945, 0, %v887
      %v960 = vsel %vm945, 0, %v894
      %v961 = vsel %vm945, 0, %v901
      %v962 = vsel %vm945, 0, %v908
      %v963 = vsel %vm945, %v793, 0
      %v964 = vsel %vm945, %v800, 0
      %v965 = vsel %vm945, %v807, 0
      %v966 = vsel %vm945, %v814, 0
      %v967 = vsel %vm945, %v821, 0
      %v968 = vsel %vm945, %v828, 0
      %v969 = vsel %vm945, %v835, 0
      %v970 = vsel %vm945, %v842, 0
      %v971 = vsel %vm945, %v849, 0
      %v972 = vsel %vm945, %v856, 0
      %v973 = vsel %vm945, %v863, 0
      %v974 = vsel %vm945, %v870, 0
      %v975 = vsel %vm945, %v877, 0
      %v976 = vsel %vm945, %v884, 0
      %v977 = vsel %vm945, %v891, 0
      %v978 = vsel %vm945, %v898, 0
      %v979 = vsel %vm945, %v905, 0
      %vm980 = vsmask.f32 7424
      %v982 = vshrl.u32 %v946, 16
      %v984 = vshll.u32 %v946, 16
      %v986 = vrot.slane %v984, 1
      %v987 = vor.u32 %v982, %v986
      %v989 = vshll.u32 %v963, 16
      %v991 = vrot.slane %v989, 1
      %v992 = vsel %vm980, %v987, %v991
      %v994 = vshrl.u32 %v947, 16
      %v996 = vshll.u32 %v947, 16
      %v998 = vrot.slane %v996, 1
      %v999 = vor.u32 %v994, %v998
      %v1001 = vshll.u32 %v964, 16
      %v1003 = vrot.slane %v1001, 1
      %v1004 = vsel %vm980, %v999, %v1003
      %v1006 = vshrl.u32 %v948, 16
      %v1008 = vshll.u32 %v948, 16
      %v1010 = vrot.slane %v1008, 1
      %v1011 = vor.u32 %v1006, %v1010
      %v1013 = vshll.u32 %v965, 16
      %v1015 = vrot.slane %v1013, 1
      %v1016 = vsel %vm980, %v1011, %v1015
      %v1018 = vshrl.u32 %v949, 16
      %v1020 = vshll.u32 %v949, 16
      %v1022 = vrot.slane %v1020, 1
      %v1023 = vor.u32 %v1018, %v1022
      %v1025 = vshll.u32 %v966, 16
      %v1027 = vrot.slane %v1025, 1
      %v1028 = vsel %vm980, %v1023, %v1027
      %v1030 = vshrl.u32 %v950, 16
      %v1032 = vshll.u32 %v950, 16
      %v1034 = vrot.slane %v1032, 1
      %v1035 = vor.u32 %v1030, %v1034
      %v1037 = vshll.u32 %v967, 16
      %v1039 = vrot.slane %v1037, 1
      %v1040 = vsel %vm980, %v1035, %v1039
      %v1042 = vshrl.u32 %v951, 16
      %v1044 = vshll.u32 %v951, 16
      %v1046 = vrot.slane %v1044, 1
      %v1047 = vor.u32 %v1042, %v1046
      %v1049 = vshll.u32 %v968, 16
      %v1051 = vrot.slane %v1049, 1
      %v1052 = vsel %vm980, %v1047, %v1051
      %v1054 = vshrl.u32 %v952, 16
      %v1056 = vshll.u32 %v952, 16
      %v1058 = vrot.slane %v1056, 1
      %v1059 = vor.u32 %v1054, %v1058
      %v1061 = vshll.u32 %v969, 16
      %v1063 = vrot.slane %v1061, 1
      %v1064 = vsel %vm980, %v1059, %v1063
      %v1066 = vshrl.u32 %v953, 16
      %v1068 = vshll.u32 %v953, 16
      %v1070 = vrot.slane %v1068, 1
      %v1071 = vor.u32 %v1066, %v1070
      %v1073 = vshll.u32 %v970, 16
      %v1075 = vrot.slane %v1073, 1
      %v1076 = vsel %vm980, %v1071, %v1075
      %v1078 = vshrl.u32 %v954, 16
      %v1080 = vshll.u32 %v954, 16
      %v1082 = vrot.slane %v1080, 1
      %v1083 = vor.u32 %v1078, %v1082
      %v1085 = vshll.u32 %v971, 16
      %v1087 = vrot.slane %v1085, 1
      %v1088 = vsel %vm980, %v1083, %v1087
      %v1090 = vshrl.u32 %v955, 16
      %v1092 = vshll.u32 %v955, 16
      %v1094 = vrot.slane %v1092, 1
      %v1095 = vor.u32 %v1090, %v1094
      %v1097 = vshll.u32 %v972, 16
      %v1099 = vrot.slane %v1097, 1
      %v1100 = vsel %vm980, %v1095, %v1099
      %v1102 = vshrl.u32 %v956, 16
      %v1104 = vshll.u32 %v956, 16
      %v1106 = vrot.slane %v1104, 1
      %v1107 = vor.u32 %v1102, %v1106
      %v1109 = vshll.u32 %v973, 16
      %v1111 = vrot.slane %v1109, 1
      %v1112 = vsel %vm980, %v1107, %v1111
      %v1114 = vshrl.u32 %v957, 16
      %v1116 = vshll.u32 %v957, 16
      %v1118 = vrot.slane %v1116, 1
      %v1119 = vor.u32 %v1114, %v1118
      %v1121 = vshll.u32 %v974, 16
      %v1123 = vrot.slane %v1121, 1
      %v1124 = vsel %vm980, %v1119, %v1123
      %v1126 = vshrl.u32 %v958, 16
      %v1128 = vshll.u32 %v958, 16
      %v1130 = vrot.slane %v1128, 1
      %v1131 = vor.u32 %v1126, %v1130
      %v1133 = vshll.u32 %v975, 16
      %v1135 = vrot.slane %v1133, 1
      %v1136 = vsel %vm980, %v1131, %v1135
      %v1138 = vshrl.u32 %v959, 16
      %v1140 = vshll.u32 %v959, 16
      %v1142 = vrot.slane %v1140, 1
      %v1143 = vor.u32 %v1138, %v1142
      %v1145 = vshll.u32 %v976, 16
      %v1147 = vrot.slane %v1145, 1
      %v1148 = vsel %vm980, %v1143, %v1147
      %v1150 = vshrl.u32 %v960, 16
      %v1152 = vshll.u32 %v960, 16
      %v1154 = vrot.slane %v1152, 1
      %v1155 = vor.u32 %v1150, %v1154
      %v1157 = vshll.u32 %v977, 16
      %v1159 = vrot.slane %v1157, 1
      %v1160 = vsel %vm980, %v1155, %v1159
      %v1162 = vshrl.u32 %v961, 16
      %v1164 = vshll.u32 %v961, 16
      %v1166 = vrot.slane %v1164, 1
      %v1167 = vor.u32 %v1162, %v1166
      %v1169 = vshll.u32 %v978, 16
      %v1171 = vrot.slane %v1169, 1
      %v1172 = vsel %vm980, %v1167, %v1171
      %vm1205 = vcmask 1046528
      %v1206 = vrot.slane %v946, 1
      %v1207 = vrot.slane %v963, 1
      %v1208 = vsel %vm1205, %v1206, %v1207
      %v1209 = vrot.slane %v947, 1
      %v1210 = vrot.slane %v964, 1
      %v1211 = vsel %vm1205, %v1209, %v1210
      %v1212 = vrot.slane %v948, 1
      %v1213 = vrot.slane %v965, 1
      %v1214 = vsel %vm1205, %v1212, %v1213
      %v1215 = vrot.slane %v949, 1
      %v1216 = vrot.slane %v966, 1
      %v1217 = vsel %vm1205, %v1215, %v1216
      %v1218 = vrot.slane %v950, 1
      %v1219 = vrot.slane %v967, 1
      %v1220 = vsel %vm1205, %v1218, %v1219
      %v1221 = vrot.slane %v951, 1
      %v1222 = vrot.slane %v968, 1
      %v1223 = vsel %vm1205, %v1221, %v1222
      %v1224 = vrot.slane %v952, 1
      %v1225 = vrot.slane %v969, 1
      %v1226 = vsel %vm1205, %v1224, %v1225
      %v1227 = vrot.slane %v953, 1
      %v1228 = vrot.slane %v970, 1
      %v1229 = vsel %vm1205, %v1227, %v1228
      %v1230 = vrot.slane %v954, 1
      %v1231 = vrot.slane %v971, 1
      %v1232 = vsel %vm1205, %v1230, %v1231
      %v1233 = vrot.slane %v955, 1
      %v1234 = vrot.slane %v972, 1
      %v1235 = vsel %vm1205, %v1233, %v1234
      %v1236 = vrot.slane %v956, 1
      %v1237 = vrot.slane %v973, 1
      %v1238 = vsel %vm1205, %v1236, %v1237
      %v1239 = vrot.slane %v957, 1
      %v1240 = vrot.slane %v974, 1
      %v1241 = vsel %vm1205, %v1239, %v1240
      %v1242 = vrot.slane %v958, 1
      %v1243 = vrot.slane %v975, 1
      %v1244 = vsel %vm1205, %v1242, %v1243
      %v1245 = vrot.slane %v959, 1
      %v1246 = vrot.slane %v976, 1
      %v1247 = vsel %vm1205, %v1245, %v1246
      %v1248 = vrot.slane %v960, 1
      %v1249 = vrot.slane %v977, 1
      %v1250 = vsel %vm1205, %v1248, %v1249
      %v1251 = vrot.slane %v961, 1
      %v1252 = vrot.slane %v978, 1
      %v1253 = vsel %vm1205, %v1251, %v1252
      %v1255 = vshrl.u32 %v962, 16
      %v1257 = vshll.u32 %v962, 16
      %v1259 = vrot.slane %v1257, 1
      %v1260 = vor.u32 %v1255, %v1259
      %v1262 = vshll.u32 %v979, 16
      %v1264 = vrot.slane %v1262, 1
      %v1265 = vsel %vm980, %v1260, %v1264
      %v1268 = vrot.slane %v962, 1
      %v1269 = vrot.slane %v979, 1
      %v1270 = vsel %vm1205, %v1268, %v1269
      %1271 = vrot.lane.b32.xlu0 %v992, 8
      %v1272 = vpop.permute.xlu0 %1271
      %1273 = vrot.lane.b32.xlu0 %v1004, 8
      %v1274 = vpop.permute.xlu0 %1273
      %1275 = vrot.lane.b32.xlu0 %v1016, 8
      %v1276 = vpop.permute.xlu0 %1275
      %1277 = vrot.lane.b32.xlu0 %v1028, 8
      %v1278 = vpop.permute.xlu0 %1277
      %1279 = vrot.lane.b32.xlu0 %v1040, 8
      %v1280 = vpop.permute.xlu0 %1279
      %1281 = vrot.lane.b32.xlu0 %v1052, 8
      %v1282 = vpop.permute.xlu0 %1281
      %1283 = vrot.lane.b32.xlu0 %v1064, 8
      %v1284 = vpop.permute.xlu0 %1283
      %1285 = vrot.lane.b32.xlu0 %v1076, 8
      %v1286 = vpop.permute.xlu0 %1285
      %1287 = vrot.lane.b32.xlu0 %v1088, 8
      %v1288 = vpop.permute.xlu0 %1287
      %1289 = vrot.lane.b32.xlu0 %v1100, 8
      %v1290 = vpop.permute.xlu0 %1289
      %1291 = vrot.lane.b32.xlu0 %v1112, 8
      %v1292 = vpop.permute.xlu0 %1291
      %1293 = vrot.lane.b32.xlu0 %v1124, 8
      %v1294 = vpop.permute.xlu0 %1293
      %1295 = vrot.lane.b32.xlu0 %v1136, 8
      %v1296 = vpop.permute.xlu0 %1295
      %1297 = vrot.lane.b32.xlu0 %v1148, 8
      %v1298 = vpop.permute.xlu0 %1297
      %1299 = vrot.lane.b32.xlu0 %v1160, 8
      %v1300 = vpop.permute.xlu0 %1299
      %1301 = vrot.lane.b32.xlu0 %v1172, 8
      %v1302 = vpop.permute.xlu0 %1301
      %1303 = vrot.lane.b32.xlu0 %v1208, 16
      %v1304 = vpop.permute.xlu0 %1303
      %1305 = vrot.lane.b32.xlu0 %v1211, 16
      %v1306 = vpop.permute.xlu0 %1305
      %1307 = vrot.lane.b32.xlu0 %v1214, 16
      %v1308 = vpop.permute.xlu0 %1307
      %1309 = vrot.lane.b32.xlu0 %v1217, 16
      %v1310 = vpop.permute.xlu0 %1309
      %1311 = vrot.lane.b32.xlu0 %v1220, 16
      %v1312 = vpop.permute.xlu0 %1311
      %1313 = vrot.lane.b32.xlu0 %v1223, 16
      %v1314 = vpop.permute.xlu0 %1313
      %1315 = vrot.lane.b32.xlu0 %v1226, 16
      %v1316 = vpop.permute.xlu0 %1315
      %1317 = vrot.lane.b32.xlu0 %v1229, 16
      %v1318 = vpop.permute.xlu0 %1317
      %1319 = vrot.lane.b32.xlu0 %v1232, 16
      %v1320 = vpop.permute.xlu0 %1319
      %1321 = vrot.lane.b32.xlu0 %v1235, 16
      %v1322 = vpop.permute.xlu0 %1321
      %1323 = vrot.lane.b32.xlu0 %v1238, 16
      %v1324 = vpop.permute.xlu0 %1323
      %1325 = vrot.lane.b32.xlu0 %v1241, 16
      %v1326 = vpop.permute.xlu0 %1325
      %1327 = vrot.lane.b32.xlu0 %v1244, 16
      %v1328 = vpop.permute.xlu0 %1327
      %1329 = vrot.lane.b32.xlu0 %v1247, 16
      %v1330 = vpop.permute.xlu0 %1329
      %1331 = vrot.lane.b32.xlu0 %v1250, 16
      %v1332 = vpop.permute.xlu0 %1331
      %1333 = vrot.lane.b32.xlu0 %v1253, 16
      %v1334 = vpop.permute.xlu0 %1333
      %1335 = vrot.lane.b32.xlu0 %v947, 24
      %v1336 = vpop.permute.xlu0 %1335
      %1337 = vrot.lane.b32.xlu0 %v948, 24
      %v1338 = vpop.permute.xlu0 %1337
      %1339 = vrot.lane.b32.xlu0 %v949, 24
      %v1340 = vpop.permute.xlu0 %1339
      %1341 = vrot.lane.b32.xlu0 %v950, 24
      %v1342 = vpop.permute.xlu0 %1341
      %1343 = vrot.lane.b32.xlu0 %v951, 24
      %v1344 = vpop.permute.xlu0 %1343
      %1345 = vrot.lane.b32.xlu0 %v952, 24
      %v1346 = vpop.permute.xlu0 %1345
      %1347 = vrot.lane.b32.xlu0 %v953, 24
      %v1348 = vpop.permute.xlu0 %1347
      %1349 = vrot.lane.b32.xlu0 %v954, 24
      %v1350 = vpop.permute.xlu0 %1349
      %1351 = vrot.lane.b32.xlu0 %v955, 24
      %v1352 = vpop.permute.xlu0 %1351
      %1353 = vrot.lane.b32.xlu0 %v956, 24
      %v1354 = vpop.permute.xlu0 %1353
      %1355 = vrot.lane.b32.xlu0 %v957, 24
      %v1356 = vpop.permute.xlu0 %1355
      %1357 = vrot.lane.b32.xlu0 %v958, 24
      %v1358 = vpop.permute.xlu0 %1357
      %1359 = vrot.lane.b32.xlu0 %v959, 24
      %v1360 = vpop.permute.xlu0 %1359
      %1361 = vrot.lane.b32.xlu0 %v960, 24
      %v1362 = vpop.permute.xlu0 %1361
      %1363 = vrot.lane.b32.xlu0 %v961, 24
      %v1364 = vpop.permute.xlu0 %1363
      %1365 = vrot.lane.b32.xlu0 %v962, 24
      %v1366 = vpop.permute.xlu0 %1365
      %1367 = vrot.lane.b32.xlu0 %v1004, 32
      %v1368 = vpop.permute.xlu0 %1367
      %1369 = vrot.lane.b32.xlu0 %v1016, 32
      %v1370 = vpop.permute.xlu0 %1369
      %1371 = vrot.lane.b32.xlu0 %v1028, 32
      %v1372 = vpop.permute.xlu0 %1371
      %1373 = vrot.lane.b32.xlu0 %v1040, 32
      %v1374 = vpop.permute.xlu0 %1373
      %1375 = vrot.lane.b32.xlu0 %v1052, 32
      %v1376 = vpop.permute.xlu0 %1375
      %1377 = vrot.lane.b32.xlu0 %v1064, 32
      %v1378 = vpop.permute.xlu0 %1377
      %1379 = vrot.lane.b32.xlu0 %v1076, 32
      %v1380 = vpop.permute.xlu0 %1379
      %1381 = vrot.lane.b32.xlu0 %v1088, 32
      %v1382 = vpop.permute.xlu0 %1381
      %1383 = vrot.lane.b32.xlu0 %v1100, 32
      %v1384 = vpop.permute.xlu0 %1383
      %1385 = vrot.lane.b32.xlu0 %v1112, 32
      %v1386 = vpop.permute.xlu0 %1385
      %1387 = vrot.lane.b32.xlu0 %v1124, 32
      %v1388 = vpop.permute.xlu0 %1387
      %1389 = vrot.lane.b32.xlu0 %v1136, 32
      %v1390 = vpop.permute.xlu0 %1389
      %1391 = vrot.lane.b32.xlu0 %v1148, 32
      %v1392 = vpop.permute.xlu0 %1391
      %1393 = vrot.lane.b32.xlu0 %v1160, 32
      %v1394 = vpop.permute.xlu0 %1393
      %1395 = vrot.lane.b32.xlu0 %v1172, 32
      %v1396 = vpop.permute.xlu0 %1395
      %1397 = vrot.lane.b32.xlu0 %v1265, 32
      %v1398 = vpop.permute.xlu0 %1397
      %1399 = vrot.lane.b32.xlu0 %v1211, 40
      %v1400 = vpop.permute.xlu0 %1399
      %1401 = vrot.lane.b32.xlu0 %v1214, 40
      %v1402 = vpop.permute.xlu0 %1401
      %1403 = vrot.lane.b32.xlu0 %v1217, 40
      %v1404 = vpop.permute.xlu0 %1403
      %1405 = vrot.lane.b32.xlu0 %v1220, 40
      %v1406 = vpop.permute.xlu0 %1405
      %1407 = vrot.lane.b32.xlu0 %v1223, 40
      %v1408 = vpop.permute.xlu0 %1407
      %1409 = vrot.lane.b32.xlu0 %v1226, 40
      %v1410 = vpop.permute.xlu0 %1409
      %1411 = vrot.lane.b32.xlu0 %v1229, 40
      %v1412 = vpop.permute.xlu0 %1411
      %1413 = vrot.lane.b32.xlu0 %v1232, 40
      %v1414 = vpop.permute.xlu0 %1413
      %1415 = vrot.lane.b32.xlu0 %v1235, 40
      %v1416 = vpop.permute.xlu0 %1415
      %1417 = vrot.lane.b32.xlu0 %v1238, 40
      %v1418 = vpop.permute.xlu0 %1417
      %1419 = vrot.lane.b32.xlu0 %v1241, 40
      %v1420 = vpop.permute.xlu0 %1419
      %1421 = vrot.lane.b32.xlu0 %v1244, 40
      %v1422 = vpop.permute.xlu0 %1421
      %1423 = vrot.lane.b32.xlu0 %v1247, 40
      %v1424 = vpop.permute.xlu0 %1423
      %1425 = vrot.lane.b32.xlu0 %v1250, 40
      %v1426 = vpop.permute.xlu0 %1425
      %1427 = vrot.lane.b32.xlu0 %v1253, 40
      %v1428 = vpop.permute.xlu0 %1427
      %1429 = vrot.lane.b32.xlu0 %v1270, 40
      %v1430 = vpop.permute.xlu0 %1429
      %1431 = vrot.lane.b32.xlu0 %v948, 48
      %v1432 = vpop.permute.xlu0 %1431
      %1433 = vrot.lane.b32.xlu0 %v949, 48
      %v1434 = vpop.permute.xlu0 %1433
      %1435 = vrot.lane.b32.xlu0 %v950, 48
      %v1436 = vpop.permute.xlu0 %1435
      %1437 = vrot.lane.b32.xlu0 %v951, 48
      %v1438 = vpop.permute.xlu0 %1437
      %1439 = vrot.lane.b32.xlu0 %v952, 48
      %v1440 = vpop.permute.xlu0 %1439
      %1441 = vrot.lane.b32.xlu0 %v953, 48
      %v1442 = vpop.permute.xlu0 %1441
      %1443 = vrot.lane.b32.xlu0 %v954, 48
      %v1444 = vpop.permute.xlu0 %1443
      %1445 = vrot.lane.b32.xlu0 %v955, 48
      %v1446 = vpop.permute.xlu0 %1445
      %1447 = vrot.lane.b32.xlu0 %v956, 48
      %v1448 = vpop.permute.xlu0 %1447
      %1449 = vrot.lane.b32.xlu0 %v957, 48
      %v1450 = vpop.permute.xlu0 %1449
      %1451 = vrot.lane.b32.xlu0 %v958, 48
      %v1452 = vpop.permute.xlu0 %1451
      %1453 = vrot.lane.b32.xlu0 %v959, 48
      %v1454 = vpop.permute.xlu0 %1453
      %1455 = vrot.lane.b32.xlu0 %v960, 48
      %v1456 = vpop.permute.xlu0 %1455
      %1457 = vrot.lane.b32.xlu0 %v961, 48
      %v1458 = vpop.permute.xlu0 %1457
      %1459 = vrot.lane.b32.xlu0 %v962, 48
      %v1460 = vpop.permute.xlu0 %1459
      %1461 = vrot.lane.b32.xlu0 %v946, 48
      %v1462 = vpop.permute.xlu0 %1461
      %1463 = vrot.lane.b32.xlu0 %v1016, 56
      %v1464 = vpop.permute.xlu0 %1463
      %1465 = vrot.lane.b32.xlu0 %v1028, 56
      %v1466 = vpop.permute.xlu0 %1465
      %1467 = vrot.lane.b32.xlu0 %v1040, 56
      %v1468 = vpop.permute.xlu0 %1467
      %1469 = vrot.lane.b32.xlu0 %v1052, 56
      %v1470 = vpop.permute.xlu0 %1469
      %1471 = vrot.lane.b32.xlu0 %v1064, 56
      %v1472 = vpop.permute.xlu0 %1471
      %1473 = vrot.lane.b32.xlu0 %v1076, 56
      %v1474 = vpop.permute.xlu0 %1473
      %1475 = vrot.lane.b32.xlu0 %v1088, 56
      %v1476 = vpop.permute.xlu0 %1475
      %1477 = vrot.lane.b32.xlu0 %v1100, 56
      %v1478 = vpop.permute.xlu0 %1477
      %1479 = vrot.lane.b32.xlu0 %v1112, 56
      %v1480 = vpop.permute.xlu0 %1479
      %1481 = vrot.lane.b32.xlu0 %v1124, 56
      %v1482 = vpop.permute.xlu0 %1481
      %1483 = vrot.lane.b32.xlu0 %v1136, 56
      %v1484 = vpop.permute.xlu0 %1483
      %1485 = vrot.lane.b32.xlu0 %v1148, 56
      %v1486 = vpop.permute.xlu0 %1485
      %1487 = vrot.lane.b32.xlu0 %v1160, 56
      %v1488 = vpop.permute.xlu0 %1487
      %1489 = vrot.lane.b32.xlu0 %v1172, 56
      %v1490 = vpop.permute.xlu0 %1489
      %1491 = vrot.lane.b32.xlu0 %v1265, 56
      %v1492 = vpop.permute.xlu0 %1491
      %1493 = vrot.lane.b32.xlu0 %v992, 56
      %v1494 = vpop.permute.xlu0 %1493
      %1495 = vrot.lane.b32.xlu0 %v1214, 64
      %v1496 = vpop.permute.xlu0 %1495
      %1497 = vrot.lane.b32.xlu0 %v1217, 64
      %v1498 = vpop.permute.xlu0 %1497
      %1499 = vrot.lane.b32.xlu0 %v1220, 64
      %v1500 = vpop.permute.xlu0 %1499
      %1501 = vrot.lane.b32.xlu0 %v1223, 64
      %v1502 = vpop.permute.xlu0 %1501
      %1503 = vrot.lane.b32.xlu0 %v1226, 64
      %v1504 = vpop.permute.xlu0 %1503
      %1505 = vrot.lane.b32.xlu0 %v1229, 64
      %v1506 = vpop.permute.xlu0 %1505
      %1507 = vrot.lane.b32.xlu0 %v1232, 64
      %v1508 = vpop.permute.xlu0 %1507
      %1509 = vrot.lane.b32.xlu0 %v1235, 64
      %v1510 = vpop.permute.xlu0 %1509
      %1511 = vrot.lane.b32.xlu0 %v1238, 64
      %v1512 = vpop.permute.xlu0 %1511
      %1513 = vrot.lane.b32.xlu0 %v1241, 64
      %v1514 = vpop.permute.xlu0 %1513
      %1515 = vrot.lane.b32.xlu0 %v1244, 64
      %v1516 = vpop.permute.xlu0 %1515
      %1517 = vrot.lane.b32.xlu0 %v1247, 64
      %v1518 = vpop.permute.xlu0 %1517
      %1519 = vrot.lane.b32.xlu0 %v1250, 64
      %v1520 = vpop.permute.xlu0 %1519
      %1521 = vrot.lane.b32.xlu0 %v1253, 64
      %v1522 = vpop.permute.xlu0 %1521
      %1523 = vrot.lane.b32.xlu0 %v1270, 64
      %v1524 = vpop.permute.xlu0 %1523
      %1525 = vrot.lane.b32.xlu0 %v1208, 64
      %v1526 = vpop.permute.xlu0 %1525
      %vm1527 = vcmask 64512
      %v1529 = vsel %vm1527, %v946, %v1272
      %v1531 = vsel %vm1527, %v947, %v1274
      %v1533 = vsel %vm1527, %v948, %v1276
      %v1535 = vsel %vm1527, %v949, %v1278
      %v1537 = vsel %vm1527, %v950, %v1280
      %v1539 = vsel %vm1527, %v951, %v1282
      %v1541 = vsel %vm1527, %v952, %v1284
      %v1543 = vsel %vm1527, %v953, %v1286
      %v1545 = vsel %vm1527, %v954, %v1288
      %v1547 = vsel %vm1527, %v955, %v1290
      %v1549 = vsel %vm1527, %v956, %v1292
      %v1551 = vsel %vm1527, %v957, %v1294
      %v1553 = vsel %vm1527, %v958, %v1296
      %v1555 = vsel %vm1527, %v959, %v1298
      %v1557 = vsel %vm1527, %v960, %v1300
      %v1559 = vsel %vm1527, %v961, %v1302
      %vm1560 = vcmask 130048
      %v1562 = vsel %vm1560, %v1529, %v1304
      %v1564 = vsel %vm1560, %v1531, %v1306
      %v1566 = vsel %vm1560, %v1533, %v1308
      %v1568 = vsel %vm1560, %v1535, %v1310
      %v1570 = vsel %vm1560, %v1537, %v1312
      %v1572 = vsel %vm1560, %v1539, %v1314
      %v1574 = vsel %vm1560, %v1541, %v1316
      %v1576 = vsel %vm1560, %v1543, %v1318
      %v1578 = vsel %vm1560, %v1545, %v1320
      %v1580 = vsel %vm1560, %v1547, %v1322
      %v1582 = vsel %vm1560, %v1549, %v1324
      %v1584 = vsel %vm1560, %v1551, %v1326
      %v1586 = vsel %vm1560, %v1553, %v1328
      %v1588 = vsel %vm1560, %v1555, %v1330
      %v1590 = vsel %vm1560, %v1557, %v1332
      %v1592 = vsel %vm1560, %v1559, %v1334
      %vm1593 = vcmask 195584
      %v1595 = vsel %vm1593, %v1562, %v1336
      %v1597 = vsel %vm1593, %v1564, %v1338
      %v1599 = vsel %vm1593, %v1566, %v1340
      %v1601 = vsel %vm1593, %v1568, %v1342
      %v1603 = vsel %vm1593, %v1570, %v1344
      %v1605 = vsel %vm1593, %v1572, %v1346
      %v1607 = vsel %vm1593, %v1574, %v1348
      %v1609 = vsel %vm1593, %v1576, %v1350
      %v1611 = vsel %vm1593, %v1578, %v1352
      %v1613 = vsel %vm1593, %v1580, %v1354
      %v1615 = vsel %vm1593, %v1582, %v1356
      %v1617 = vsel %vm1593, %v1584, %v1358
      %v1619 = vsel %vm1593, %v1586, %v1360
      %v1621 = vsel %vm1593, %v1588, %v1362
      %v1623 = vsel %vm1593, %v1590, %v1364
      %v1625 = vsel %vm1593, %v1592, %v1366
      %vm1626 = vcmask 261120
      %v1628 = vsel %vm1626, %v1595, %v1368
      %v1630 = vsel %vm1626, %v1597, %v1370
      %v1632 = vsel %vm1626, %v1599, %v1372
      %v1634 = vsel %vm1626, %v1601, %v1374
      %v1636 = vsel %vm1626, %v1603, %v1376
      %v1638 = vsel %vm1626, %v1605, %v1378
      %v1640 = vsel %vm1626, %v1607, %v1380
      %v1642 = vsel %vm1626, %v1609, %v1382
      %v1644 = vsel %vm1626, %v1611, %v1384
      %v1646 = vsel %vm1626, %v1613, %v1386
      %v1648 = vsel %vm1626, %v1615, %v1388
      %v1650 = vsel %vm1626, %v1617, %v1390
      %v1652 = vsel %vm1626, %v1619, %v1392
      %v1654 = vsel %vm1626, %v1621, %v1394
      %v1656 = vsel %vm1626, %v1623, %v1396
      %v1658 = vsel %vm1626, %v1625, %v1398
      %vm1659 = vcmask 326656
      %v1661 = vsel %vm1659, %v1628, %v1400
      %v1663 = vsel %vm1659, %v1630, %v1402
      %v1665 = vsel %vm1659, %v1632, %v1404
      %v1667 = vsel %vm1659, %v1634, %v1406
      %v1669 = vsel %vm1659, %v1636, %v1408
      %v1671 = vsel %vm1659, %v1638, %v1410
      %v1673 = vsel %vm1659, %v1640, %v1412
      %v1675 = vsel %vm1659, %v1642, %v1414
      %v1677 = vsel %vm1659, %v1644, %v1416
      %v1679 = vsel %vm1659, %v1646, %v1418
      %v1681 = vsel %vm1659, %v1648, %v1420
      %v1683 = vsel %vm1659, %v1650, %v1422
      %v1685 = vsel %vm1659, %v1652, %v1424
      %v1687 = vsel %vm1659, %v1654, %v1426
      %v1689 = vsel %vm1659, %v1656, %v1428
      %v1691 = vsel %vm1659, %v1658, %v1430
      %vm1692 = vcmask 392192
      %v1694 = vsel %vm1692, %v1661, %v1432
      %v1696 = vsel %vm1692, %v1663, %v1434
      %v1698 = vsel %vm1692, %v1665, %v1436
      %v1700 = vsel %vm1692, %v1667, %v1438
      %v1702 = vsel %vm1692, %v1669, %v1440
      %v1704 = vsel %vm1692, %v1671, %v1442
      %v1706 = vsel %vm1692, %v1673, %v1444
      %v1708 = vsel %vm1692, %v1675, %v1446
      %v1710 = vsel %vm1692, %v1677, %v1448
      %v1712 = vsel %vm1692, %v1679, %v1450
      %v1714 = vsel %vm1692, %v1681, %v1452
      %v1716 = vsel %vm1692, %v1683, %v1454
      %v1718 = vsel %vm1692, %v1685, %v1456
      %v1720 = vsel %vm1692, %v1687, %v1458
      %v1722 = vsel %vm1692, %v1689, %v1460
      %v1724 = vsel %vm1692, %v1691, %v1462
      %vm1725 = vcmask 457728
      %v1727 = vsel %vm1725, %v1694, %v1464
      %v1729 = vsel %vm1725, %v1696, %v1466
      %v1731 = vsel %vm1725, %v1698, %v1468
      %v1733 = vsel %vm1725, %v1700, %v1470
      %v1735 = vsel %vm1725, %v1702, %v1472
      %v1737 = vsel %vm1725, %v1704, %v1474
      %v1739 = vsel %vm1725, %v1706, %v1476
      %v1741 = vsel %vm1725, %v1708, %v1478
      %v1743 = vsel %vm1725, %v1710, %v1480
      %v1745 = vsel %vm1725, %v1712, %v1482
      %v1747 = vsel %vm1725, %v1714, %v1484
      %v1749 = vsel %vm1725, %v1716, %v1486
      %v1751 = vsel %vm1725, %v1718, %v1488
      %v1753 = vsel %vm1725, %v1720, %v1490
      %v1755 = vsel %vm1725, %v1722, %v1492
      %v1757 = vsel %vm1725, %v1724, %v1494
      %vm1758 = vcmask 523264
      %v1760 = vsel %vm1758, %v1727, %v1496
      %v1762 = vsel %vm1758, %v1729, %v1498
      %v1764 = vsel %vm1758, %v1731, %v1500
      %v1766 = vsel %vm1758, %v1733, %v1502
      %v1768 = vsel %vm1758, %v1735, %v1504
      %v1770 = vsel %vm1758, %v1737, %v1506
      %v1772 = vsel %vm1758, %v1739, %v1508
      %v1774 = vsel %vm1758, %v1741, %v1510
      %v1776 = vsel %vm1758, %v1743, %v1512
      %v1778 = vsel %vm1758, %v1745, %v1514
      %v1780 = vsel %vm1758, %v1747, %v1516
      %v1782 = vsel %vm1758, %v1749, %v1518
      %v1784 = vsel %vm1758, %v1751, %v1520
      %v1786 = vsel %vm1758, %v1753, %v1522
      %v1788 = vsel %vm1758, %v1755, %v1524
      %v1790 = vsel %vm1758, %v1757, %v1526
      %v1791 = vld [vmem:[%s2] sm:$0xf]
      %v1792 = vld [vmem:[%s2 + $0x4] sm:$0xf]
      %v1793 = vld [vmem:[%s2 + $0x8] sm:$0xf]
      %v1794 = vld [vmem:[%s2 + $0xc] sm:$0xf]
      %v1795 = vld [vmem:[%s2 + $0x10] sm:$0xf]
      %v1796 = vld [vmem:[%s2 + $0x14] sm:$0xf]
      %v1797 = vld [vmem:[%s2 + $0x18] sm:$0xf]
      %v1798 = vld [vmem:[%s2 + $0x1c] sm:$0xf]
      %v1799 = vld [vmem:[%s2 + $0x20] sm:$0xf]
      %v1800 = vld [vmem:[%s3] sm:$0x1]
      %v1802 = vlaneseq
      %v1803 = vshrl.u32 %v1802, 7
      %v1804 = vsub.s32 0, %v1803
      %v1805 = vrot.slane %v1800, %v1804
      %v1816 = vunpack.c.l.b16 %v1791
      %v1817 = vunpack.c.l.b16 %v1792
      %v1818 = vunpack.c.l.b16 %v1793
      %v1819 = vunpack.c.l.b16 %v1794
      %v1820 = vunpack.c.l.b16 %v1795
      %v1821 = vunpack.c.l.b16 %v1796
      %v1822 = vunpack.c.l.b16 %v1797
      %v1823 = vunpack.c.l.b16 %v1798
      %v1824 = vunpack.c.l.b16 %v1799
      %v1825 = vpack.c.b16 %v1817, %v1816
      %v1826 = vpack.c.b16 %v1819, %v1818
      %v1827 = vpack.c.b16 %v1821, %v1820
      %v1828 = vpack.c.b16 %v1823, %v1822
      %v1829 = vpack.c.b16 %v1824, %v1824
      %vm1834 = vcmask 588800
      %v1835 = vsel %vm1834, %v1760, 0
      %v1837 = vsel %vm1834, %v1762, 0
      %v1839 = vsel %vm1834, %v1764, 0
      %v1841 = vsel %vm1834, %v1766, 0
      %v1843 = vsel %vm1834, %v1768, 0
      %v1845 = vsel %vm1834, %v1770, 0
      %v1847 = vsel %vm1834, %v1772, 0
      %v1849 = vsel %vm1834, %v1774, 0
      %v1851 = vsel %vm1834, %v1776, 0
      %v1853 = vsel %vm1834, %v1778, 0
      %v1855 = vsel %vm1834, %v1780, 0
      %v1857 = vsel %vm1834, %v1782, 0
      %v1859 = vsel %vm1834, %v1784, 0
      %v1861 = vsel %vm1834, %v1786, 0
      %v1863 = vsel %vm1834, %v1788, 0
      %v1865 = vsel %vm1834, %v1790, 0
      %vm1867 = vcmask 1043456
      %v1869 = vsel %vm1867, %v1829, 0
      %1871 = vmatprep.subr.bf16.mxu0 0
      %1872 = vmatpush1.bf16.msra.mxu0 0
      %1873 = vmatprep.subr.bf16.mxu0 0
      %1874 = vmatpush1.bf16.msra.mxu0 0
      %1875 = vmatprep.subr.bf16.mxu0 0
      %1876 = vmatpush1.bf16.msra.mxu0 0
      %1877 = vmatprep.subr.bf16.mxu0 0
      %1878 = vmatpush1.bf16.msra.mxu0 %v1869
      %1879 = vmatprep.subr.bf16.mxu0 0
      %1880 = vmatpush1.bf16.msra.mxu0 %v1828
      %1881 = vmatprep.subr.bf16.mxu0 0
      %1882 = vmatpush1.bf16.msra.mxu0 %v1827
      %1883 = vmatprep.subr.bf16.mxu0 0
      %1884 = vmatpush1.bf16.msra.mxu0 %v1826
      %1885 = vmatprep.subr.bf16.mxu0 0
      %1886 = vmatpush1.bf16.msra.mxu0 %v1825
      %1887 = vmatprep.subr.bf16.mxu0 0
      %1888 = vmatpush2.bf16.msra.mxu0 0
      %1889 = vmatprep.subr.bf16.mxu0 0
      %1890 = vmatpush2.bf16.msra.mxu0 0
      %1891 = vmatprep.subr.bf16.mxu0 0
      %1892 = vmatpush2.bf16.msra.mxu0 0
      %1893 = vmatprep.subr.bf16.mxu0 0
      %1894 = vmatpush2.bf16.msra.mxu0 0
      %1895 = vmatprep.subr.bf16.mxu0 0
      %1896 = vmatpush2.bf16.msra.mxu0 0
      %1897 = vmatprep.subr.bf16.mxu0 0
      %1898 = vmatpush2.bf16.msra.mxu0 0
      %1899 = vmatprep.subr.bf16.mxu0 0
      %1900 = vmatpush2.bf16.msra.mxu0 0
      %1901 = vmatprep.subr.bf16.mxu0 0
      %1902 = vmatpush2.bf16.msra.mxu0 0
      %1903 = vmatprep.mubr.bf16.mxu0 0
      %1904 = vmatmul.mubr.bf16.gmra.mxu0 %v1835
      %v1905 = vpop.f32.mrf.mxu0
      %v1906 = vadd.f32 %v1805, %v1905
      %v1907 = vpop.f32.mrf.mxu0
      %v1908 = vpop.f32.mrf.mxu0
      %v1909 = vadd.f32 %v1805, %v1908
      %v1910 = vpop.f32.mrf.mxu0
      %1911 = vmatprep.mubr.bf16.mxu0 0
      %1912 = vmatmul.mubr.bf16.gmra.mxu0 %v1837
      %v1913 = vpop.f32.mrf.mxu0
      %v1914 = vadd.f32 %v1805, %v1913
      %v1915 = vpop.f32.mrf.mxu0
      %v1916 = vpop.f32.mrf.mxu0
      %v1917 = vadd.f32 %v1805, %v1916
      %v1918 = vpop.f32.mrf.mxu0
      %1919 = vmatprep.mubr.bf16.mxu0 0
      %1920 = vmatmul.mubr.bf16.gmra.mxu0 %v1839
      %v1921 = vpop.f32.mrf.mxu0
      %v1922 = vadd.f32 %v1805, %v1921
      %v1923 = vpop.f32.mrf.mxu0
      %v1924 = vpop.f32.mrf.mxu0
      %v1925 = vadd.f32 %v1805, %v1924
      %v1926 = vpop.f32.mrf.mxu0
      %1927 = vmatprep.mubr.bf16.mxu0 0
      %1928 = vmatmul.mubr.bf16.gmra.mxu0 %v1841
      %v1929 = vpop.f32.mrf.mxu0
      %v1930 = vadd.f32 %v1805, %v1929
      %v1931 = vpop.f32.mrf.mxu0
      %v1932 = vpop.f32.mrf.mxu0
      %v1933 = vadd.f32 %v1805, %v1932
      %v1934 = vpop.f32.mrf.mxu0
      %1935 = vmatprep.mubr.bf16.mxu0 0
      %1936 = vmatmul.mubr.bf16.gmra.mxu0 %v1843
      %v1937 = vpop.f32.mrf.mxu0
      %v1938 = vadd.f32 %v1805, %v1937
      %v1939 = vpop.f32.mrf.mxu0
      %v1940 = vpop.f32.mrf.mxu0
      %v1941 = vadd.f32 %v1805, %v1940
      %v1942 = vpop.f32.mrf.mxu0
      %1943 = vmatprep.mubr.bf16.mxu0 0
      %1944 = vmatmul.mubr.bf16.gmra.mxu0 %v1845
      %v1945 = vpop.f32.mrf.mxu0
      %v1946 = vadd.f32 %v1805, %v1945
      %v1947 = vpop.f32.mrf.mxu0
      %v1948 = vpop.f32.mrf.mxu0
      %v1949 = vadd.f32 %v1805, %v1948
      %v1950 = vpop.f32.mrf.mxu0
      %1951 = vmatprep.mubr.bf16.mxu0 0
      %1952 = vmatmul.mubr.bf16.gmra.mxu0 %v1847
      %v1953 = vpop.f32.mrf.mxu0
      %v1954 = vadd.f32 %v1805, %v1953
      %v1955 = vpop.f32.mrf.mxu0
      %v1956 = vpop.f32.mrf.mxu0
      %v1957 = vadd.f32 %v1805, %v1956
      %v1958 = vpop.f32.mrf.mxu0
      %1959 = vmatprep.mubr.bf16.mxu0 0
      %1960 = vmatmul.mubr.bf16.gmra.mxu0 %v1849
      %v1961 = vpop.f32.mrf.mxu0
      %v1962 = vadd.f32 %v1805, %v1961
      %v1963 = vpop.f32.mrf.mxu0
      %v1964 = vpop.f32.mrf.mxu0
      %v1965 = vadd.f32 %v1805, %v1964
      %v1966 = vpop.f32.mrf.mxu0
      %1967 = vmatprep.mubr.bf16.mxu0 0
      %1968 = vmatmul.mubr.bf16.gmra.mxu0 %v1851
      %v1969 = vpop.f32.mrf.mxu0
      %v1970 = vadd.f32 %v1805, %v1969
      %v1971 = vpop.f32.mrf.mxu0
      %v1972 = vpop.f32.mrf.mxu0
      %v1973 = vadd.f32 %v1805, %v1972
      %v1974 = vpop.f32.mrf.mxu0
      %1975 = vmatprep.mubr.bf16.mxu0 0
      %1976 = vmatmul.mubr.bf16.gmra.mxu0 %v1853
      %v1977 = vpop.f32.mrf.mxu0
      %v1978 = vadd.f32 %v1805, %v1977
      %v1979 = vpop.f32.mrf.mxu0
      %v1980 = vpop.f32.mrf.mxu0
      %v1981 = vadd.f32 %v1805, %v1980
      %v1982 = vpop.f32.mrf.mxu0
      %1983 = vmatprep.mubr.bf16.mxu0 0
      %1984 = vmatmul.mubr.bf16.gmra.mxu0 %v1855
      %v1985 = vpop.f32.mrf.mxu0
      %v1986 = vadd.f32 %v1805, %v1985
      %v1987 = vpop.f32.mrf.mxu0
      %v1988 = vpop.f32.mrf.mxu0
      %v1989 = vadd.f32 %v1805, %v1988
      %v1990 = vpop.f32.mrf.mxu0
      %1991 = vmatprep.mubr.bf16.mxu0 0
      %1992 = vmatmul.mubr.bf16.gmra.mxu0 %v1857
      %v1993 = vpop.f32.mrf.mxu0
      %v1994 = vadd.f32 %v1805, %v1993
      %v1995 = vpop.f32.mrf.mxu0
      %v1996 = vpop.f32.mrf.mxu0
      %v1997 = vadd.f32 %v1805, %v1996
      %v1998 = vpop.f32.mrf.mxu0
      %1999 = vmatprep.mubr.bf16.mxu0 0
      %2000 = vmatmul.mubr.bf16.gmra.mxu0 %v1859
      %v2001 = vpop.f32.mrf.mxu0
      %v2002 = vadd.f32 %v1805, %v2001
      %v2003 = vpop.f32.mrf.mxu0
      %v2004 = vpop.f32.mrf.mxu0
      %v2005 = vadd.f32 %v1805, %v2004
      %v2006 = vpop.f32.mrf.mxu0
      %2007 = vmatprep.mubr.bf16.mxu0 0
      %2008 = vmatmul.mubr.bf16.gmra.mxu0 %v1861
      %v2009 = vpop.f32.mrf.mxu0
      %v2010 = vadd.f32 %v1805, %v2009
      %v2011 = vpop.f32.mrf.mxu0
      %v2012 = vpop.f32.mrf.mxu0
      %v2013 = vadd.f32 %v1805, %v2012
      %v2014 = vpop.f32.mrf.mxu0
      %2015 = vmatprep.mubr.bf16.mxu0 0
      %2016 = vmatmul.mubr.bf16.gmra.mxu0 %v1863
      %v2017 = vpop.f32.mrf.mxu0
      %v2018 = vadd.f32 %v1805, %v2017
      %v2019 = vpop.f32.mrf.mxu0
      %v2020 = vpop.f32.mrf.mxu0
      %v2021 = vadd.f32 %v1805, %v2020
      %v2022 = vpop.f32.mrf.mxu0
      %2023 = vmatprep.mubr.bf16.mxu0 0
      %2024 = vmatmul.mubr.bf16.gmra.mxu0 %v1865
      %v2025 = vpop.f32.mrf.mxu0
      %v2026 = vadd.f32 %v1805, %v2025
      %v2027 = vpop.f32.mrf.mxu0
      %v2028 = vpop.f32.mrf.mxu0
      %v2029 = vadd.f32 %v1805, %v2028
      %v2030 = vpop.f32.mrf.mxu0
      %2031 = vdwg.mxu0
      %v2032 = vmax.f32 %v1906, 0.0
      %v2033 = vmax.f32 %v1909, 0.0
      %v2034 = vmax.f32 %v1914, 0.0
      %v2035 = vmax.f32 %v1917, 0.0
      %v2036 = vmax.f32 %v1922, 0.0
      %v2037 = vmax.f32 %v1925, 0.0
      %v2038 = vmax.f32 %v1930, 0.0
      %v2039 = vmax.f32 %v1933, 0.0
      %v2040 = vmax.f32 %v1938, 0.0
      %v2041 = vmax.f32 %v1941, 0.0
      %v2042 = vmax.f32 %v1946, 0.0
      %v2043 = vmax.f32 %v1949, 0.0
      %v2044 = vmax.f32 %v1954, 0.0
      %v2045 = vmax.f32 %v1957, 0.0
      %v2046 = vmax.f32 %v1962, 0.0
      %v2047 = vmax.f32 %v1965, 0.0
      %v2048 = vmax.f32 %v1970, 0.0
      %v2049 = vmax.f32 %v1973, 0.0
      %v2050 = vmax.f32 %v1978, 0.0
      %v2051 = vmax.f32 %v1981, 0.0
      %v2052 = vmax.f32 %v1986, 0.0
      %v2053 = vmax.f32 %v1989, 0.0
      %v2054 = vmax.f32 %v1994, 0.0
      %v2055 = vmax.f32 %v1997, 0.0
      %v2056 = vmax.f32 %v2002, 0.0
      %v2057 = vmax.f32 %v2005, 0.0
      %v2058 = vmax.f32 %v2010, 0.0
      %v2059 = vmax.f32 %v2013, 0.0
      %v2060 = vmax.f32 %v2018, 0.0
      %v2061 = vmax.f32 %v2021, 0.0
      %v2062 = vmax.f32 %v2026, 0.0
      %v2063 = vmax.f32 %v2029, 0.0
      %v2064 = vpack.c.bf16 %v2033, %v2032
      %v2065 = vpack.c.bf16 %v2035, %v2034
      %v2066 = vpack.c.bf16 %v2037, %v2036
      %v2067 = vpack.c.bf16 %v2039, %v2038
      %v2068 = vpack.c.bf16 %v2041, %v2040
      %v2069 = vpack.c.bf16 %v2043, %v2042
      %v2070 = vpack.c.bf16 %v2045, %v2044
      %v2071 = vpack.c.bf16 %v2047, %v2046
      %v2072 = vpack.c.bf16 %v2049, %v2048
      %v2073 = vpack.c.bf16 %v2051, %v2050
      %v2074 = vpack.c.bf16 %v2053, %v2052
      %v2075 = vpack.c.bf16 %v2055, %v2054
      %v2076 = vpack.c.bf16 %v2057, %v2056
      %v2077 = vpack.c.bf16 %v2059, %v2058
      %v2078 = vpack.c.bf16 %v2061, %v2060
      %v2079 = vpack.c.bf16 %v2063, %v2062
      %v2080 = vld [vmem:[%s666] sm:$0xf]
      %v2081 = vld [vmem:[%s666 + $0x4] sm:$0xf]
      %v2082 = vld [vmem:[%s666 + $0x8] sm:$0xf]
      %v2083 = vld [vmem:[%s666 + $0xc] sm:$0xf]
      %v2084 = vld [vmem:[%s666 + $0x10] sm:$0xf]
      %v2085 = vld [vmem:[%s666 + $0x14] sm:$0xf]
      %v2086 = vld [vmem:[%s666 + $0x18] sm:$0xf]
      %v2087 = vld [vmem:[%s666 + $0x1c] sm:$0xf]
      %v2088 = vld [vmem:[%s666 + $0x20] sm:$0xf]
      %v2089 = vld [vmem:[%s666 + $0x24] sm:$0xf]
      %v2090 = vld [vmem:[%s666 + $0x28] sm:$0xf]
      %v2091 = vld [vmem:[%s666 + $0x2c] sm:$0xf]
      %v2092 = vld [vmem:[%s666 + $0x30] sm:$0xf]
      %v2093 = vld [vmem:[%s666 + $0x34] sm:$0xf]
      %v2094 = vld [vmem:[%s666 + $0x38] sm:$0xf]
      %v2095 = vld [vmem:[%s666 + $0x3c] sm:$0xf]
      %v2096 = vld [vmem:[%s666 + $0x40] sm:$0xf]
      %v2097 = vld [vmem:[%s666 + $0x44] sm:$0xf]
      %v2098 = vld [vmem:[%s666 + $0x48] sm:$0xf]
      %v2099 = vld [vmem:[%s666 + $0x4c] sm:$0xf]
      %v2100 = vld [vmem:[%s666 + $0x50] sm:$0xf]
      %v2101 = vld [vmem:[%s666 + $0x54] sm:$0xf]
      %v2102 = vld [vmem:[%s666 + $0x58] sm:$0xf]
      %v2103 = vld [vmem:[%s666 + $0x5c] sm:$0xf]
      %v2104 = vld [vmem:[%s666 + $0x60] sm:$0xf]
      %v2105 = vld [vmem:[%s666 + $0x64] sm:$0xf]
      %v2106 = vld [vmem:[%s666 + $0x68] sm:$0xf]
      %v2107 = vld [vmem:[%s666 + $0x6c] sm:$0xf]
      %v2108 = vld [vmem:[%s666 + $0x70] sm:$0xf]
      %v2109 = vld [vmem:[%s666 + $0x74] sm:$0xf]
      %v2110 = vld [vmem:[%s666 + $0x78] sm:$0xf]
      %v2111 = vld [vmem:[%s666 + $0x7c] sm:$0xf]
      %v2112 = vunpack.c.l.bf16 %v2080
      %v2113 = vunpack.c.l.bf16 %v2081
      %v2114 = vunpack.c.l.bf16 %v2082
      %v2115 = vunpack.c.l.bf16 %v2083
      %v2116 = vunpack.c.l.bf16 %v2084
      %v2117 = vunpack.c.l.bf16 %v2085
      %v2118 = vunpack.c.l.bf16 %v2086
      %v2119 = vunpack.c.l.bf16 %v2087
      %v2120 = vunpack.c.l.bf16 %v2088
      %v2121 = vunpack.c.l.bf16 %v2089
      %v2122 = vunpack.c.l.bf16 %v2090
      %v2123 = vunpack.c.l.bf16 %v2091
      %v2124 = vunpack.c.l.bf16 %v2092
      %v2125 = vunpack.c.l.bf16 %v2093
      %v2126 = vunpack.c.l.bf16 %v2094
      %v2127 = vunpack.c.l.bf16 %v2095
      %v2128 = vunpack.c.l.bf16 %v2096
      %v2129 = vunpack.c.l.bf16 %v2097
      %v2130 = vunpack.c.l.bf16 %v2098
      %v2131 = vunpack.c.l.bf16 %v2099
      %v2132 = vunpack.c.l.bf16 %v2100
      %v2133 = vunpack.c.l.bf16 %v2101
      %v2134 = vunpack.c.l.bf16 %v2102
      %v2135 = vunpack.c.l.bf16 %v2103
      %v2136 = vunpack.c.l.bf16 %v2104
      %v2137 = vunpack.c.l.bf16 %v2105
      %v2138 = vunpack.c.l.bf16 %v2106
      %v2139 = vunpack.c.l.bf16 %v2107
      %v2140 = vunpack.c.l.bf16 %v2108
      %v2141 = vunpack.c.l.bf16 %v2109
      %v2142 = vunpack.c.l.bf16 %v2110
      %v2143 = vunpack.c.l.bf16 %v2111
      %vm2144 = vcmask 31744
      %v2145 = vsel %vm2144, %v2112, 0.0
      %v2146 = vsel %vm2144, %v2113, 0.0
      %v2147 = vadd.f32 %v2145, %v2146
      %v2148 = vsel %vm2144, %v2114, 0.0
      %v2149 = vadd.f32 %v2147, %v2148
      %v2150 = vsel %vm2144, %v2115, 0.0
      %v2151 = vadd.f32 %v2149, %v2150
      %v2152 = vsel %vm2144, %v2116, 0.0
      %v2153 = vadd.f32 %v2151, %v2152
      %v2154 = vsel %vm2144, %v2117, 0.0
      %v2155 = vadd.f32 %v2153, %v2154
      %v2156 = vsel %vm2144, %v2118, 0.0
      %v2157 = vadd.f32 %v2155, %v2156
      %v2158 = vsel %vm2144, %v2119, 0.0
      %v2159 = vadd.f32 %v2157, %v2158
      %v2160 = vsel %vm2144, %v2120, 0.0
      %v2161 = vadd.f32 %v2159, %v2160
      %v2162 = vsel %vm2144, %v2121, 0.0
      %v2163 = vadd.f32 %v2161, %v2162
      %v2164 = vsel %vm2144, %v2122, 0.0
      %v2165 = vadd.f32 %v2163, %v2164
      %v2166 = vsel %vm2144, %v2123, 0.0
      %v2167 = vadd.f32 %v2165, %v2166
      %v2168 = vsel %vm2144, %v2124, 0.0
      %v2169 = vadd.f32 %v2167, %v2168
      %v2170 = vsel %vm2144, %v2125, 0.0
      %v2171 = vadd.f32 %v2169, %v2170
      %v2172 = vsel %vm2144, %v2126, 0.0
      %v2173 = vadd.f32 %v2171, %v2172
      %v2174 = vsel %vm2144, %v2127, 0.0
      %v2175 = vadd.f32 %v2173, %v2174
      %v2176 = vsel %vm2144, %v2128, 0.0
      %v2177 = vadd.f32 %v2175, %v2176
      %v2178 = vsel %vm2144, %v2129, 0.0
      %v2179 = vadd.f32 %v2177, %v2178
      %v2180 = vsel %vm2144, %v2130, 0.0
      %v2181 = vadd.f32 %v2179, %v2180
      %v2182 = vsel %vm2144, %v2131, 0.0
      %v2183 = vadd.f32 %v2181, %v2182
      %v2184 = vsel %vm2144, %v2132, 0.0
      %v2185 = vadd.f32 %v2183, %v2184
      %v2186 = vsel %vm2144, %v2133, 0.0
      %v2187 = vadd.f32 %v2185, %v2186
      %v2188 = vsel %vm2144, %v2134, 0.0
      %v2189 = vadd.f32 %v2187, %v2188
      %v2190 = vsel %vm2144, %v2135, 0.0
      %v2191 = vadd.f32 %v2189, %v2190
      %v2192 = vsel %vm2144, %v2136, 0.0
      %v2193 = vadd.f32 %v2191, %v2192
      %v2194 = vsel %vm2144, %v2137, 0.0
      %v2195 = vadd.f32 %v2193, %v2194
      %v2196 = vsel %vm2144, %v2138, 0.0
      %v2197 = vadd.f32 %v2195, %v2196
      %v2198 = vsel %vm2144, %v2139, 0.0
      %v2199 = vadd.f32 %v2197, %v2198
      %v2200 = vsel %vm2144, %v2140, 0.0
      %v2201 = vadd.f32 %v2199, %v2200
      %v2202 = vsel %vm2144, %v2141, 0.0
      %v2203 = vadd.f32 %v2201, %v2202
      %v2204 = vsel %vm2144, %v2142, 0.0
      %v2205 = vadd.f32 %v2203, %v2204
      %v2206 = vsel %vm2144, %v2143, 0.0
      %v2207 = vadd.f32 %v2205, %v2206
      %v2208 = vrot.slane %v2207, 4
      %v2209 = vadd.f32 %v2207, %v2208
      %v2210 = vrot.slane %v2209, 2
      %v2211 = vadd.f32 %v2209, %v2210
      %v2212 = vrot.slane %v2211, 1
      %v2213 = vadd.f32 %v2211, %v2212
      %v2214 = vmul.f32 %v2213, 0.00390625
      %v2215 = vmul.f32 %v2112, %v2112
      %v2216 = vmul.f32 %v2113, %v2113
      %v2217 = vmul.f32 %v2114, %v2114
      %v2218 = vmul.f32 %v2115, %v2115
      %v2219 = vmul.f32 %v2116, %v2116
      %v2220 = vmul.f32 %v2117, %v2117
      %v2221 = vmul.f32 %v2118, %v2118
      %v2222 = vmul.f32 %v2119, %v2119
      %v2223 = vmul.f32 %v2120, %v2120
      %v2224 = vmul.f32 %v2121, %v2121
      %v2225 = vmul.f32 %v2122, %v2122
      %v2226 = vmul.f32 %v2123, %v2123
      %v2227 = vmul.f32 %v2124, %v2124
      %v2228 = vmul.f32 %v2125, %v2125
      %v2229 = vmul.f32 %v2126, %v2126
      %v2230 = vmul.f32 %v2127, %v2127
      %v2231 = vmul.f32 %v2128, %v2128
      %v2232 = vmul.f32 %v2129, %v2129
      %v2233 = vmul.f32 %v2130, %v2130
      %v2234 = vmul.f32 %v2131, %v2131
      %v2235 = vmul.f32 %v2132, %v2132
      %v2236 = vmul.f32 %v2133, %v2133
      %v2237 = vmul.f32 %v2134, %v2134
      %v2238 = vmul.f32 %v2135, %v2135
      %v2239 = vmul.f32 %v2136, %v2136
      %v2240 = vmul.f32 %v2137, %v2137
      %v2241 = vmul.f32 %v2138, %v2138
      %v2242 = vmul.f32 %v2139, %v2139
      %v2243 = vmul.f32 %v2140, %v2140
      %v2244 = vmul.f32 %v2141, %v2141
      %v2245 = vmul.f32 %v2142, %v2142
      %v2246 = vmul.f32 %v2143, %v2143
      %v2247 = vsel %vm2144, %v2215, 0.0
      %v2248 = vsel %vm2144, %v2216, 0.0
      %v2249 = vadd.f32 %v2247, %v2248
      %v2250 = vsel %vm2144, %v2217, 0.0
      %v2251 = vadd.f32 %v2249, %v2250
      %v2252 = vsel %vm2144, %v2218, 0.0
      %v2253 = vadd.f32 %v2251, %v2252
      %v2254 = vsel %vm2144, %v2219, 0.0
      %v2255 = vadd.f32 %v2253, %v2254
      %v2256 = vsel %vm2144, %v2220, 0.0
      %v2257 = vadd.f32 %v2255, %v2256
      %v2258 = vsel %vm2144, %v2221, 0.0
      %v2259 = vadd.f32 %v2257, %v2258
      %v2260 = vsel %vm2144, %v2222, 0.0
      %v2261 = vadd.f32 %v2259, %v2260
      %v2262 = vsel %vm2144, %v2223, 0.0
      %v2263 = vadd.f32 %v2261, %v2262
      %v2264 = vsel %vm2144, %v2224, 0.0
      %v2265 = vadd.f32 %v2263, %v2264
      %v2266 = vsel %vm2144, %v2225, 0.0
      %v2267 = vadd.f32 %v2265, %v2266
      %v2268 = vsel %vm2144, %v2226, 0.0
      %v2269 = vadd.f32 %v2267, %v2268
      %v2270 = vsel %vm2144, %v2227, 0.0
      %v2271 = vadd.f32 %v2269, %v2270
      %v2272 = vsel %vm2144, %v2228, 0.0
      %v2273 = vadd.f32 %v2271, %v2272
      %v2274 = vsel %vm2144, %v2229, 0.0
      %v2275 = vadd.f32 %v2273, %v2274
      %v2276 = vsel %vm2144, %v2230, 0.0
      %v2277 = vadd.f32 %v2275, %v2276
      %v2278 = vsel %vm2144, %v2231, 0.0
      %v2279 = vadd.f32 %v2277, %v2278
      %v2280 = vsel %vm2144, %v2232, 0.0
      %v2281 = vadd.f32 %v2279, %v2280
      %v2282 = vsel %vm2144, %v2233, 0.0
      %v2283 = vadd.f32 %v2281, %v2282
      %v2284 = vsel %vm2144, %v2234, 0.0
      %v2285 = vadd.f32 %v2283, %v2284
      %v2286 = vsel %vm2144, %v2235, 0.0
      %v2287 = vadd.f32 %v2285, %v2286
      %v2288 = vsel %vm2144, %v2236, 0.0
      %v2289 = vadd.f32 %v2287, %v2288
      %v2290 = vsel %vm2144, %v2237, 0.0
      %v2291 = vadd.f32 %v2289, %v2290
      %v2292 = vsel %vm2144, %v2238, 0.0
      %v2293 = vadd.f32 %v2291, %v2292
      %v2294 = vsel %vm2144, %v2239, 0.0
      %v2295 = vadd.f32 %v2293, %v2294
      %v2296 = vsel %vm2144, %v2240, 0.0
      %v2297 = vadd.f32 %v2295, %v2296
      %v2298 = vsel %vm2144, %v2241, 0.0
      %v2299 = vadd.f32 %v2297, %v2298
      %v2300 = vsel %vm2144, %v2242, 0.0
      %v2301 = vadd.f32 %v2299, %v2300
      %v2302 = vsel %vm2144, %v2243, 0.0
      %v2303 = vadd.f32 %v2301, %v2302
      %v2304 = vsel %vm2144, %v2244, 0.0
      %v2305 = vadd.f32 %v2303, %v2304
      %v2306 = vsel %vm2144, %v2245, 0.0
      %v2307 = vadd.f32 %v2305, %v2306
      %v2308 = vsel %vm2144, %v2246, 0.0
      %v2309 = vadd.f32 %v2307, %v2308
      %v2310 = vrot.slane %v2309, 4
      %v2311 = vadd.f32 %v2309, %v2310
      %v2312 = vrot.slane %v2311, 2
      %v2313 = vadd.f32 %v2311, %v2312
      %v2314 = vrot.slane %v2313, 1
      %v2315 = vadd.f32 %v2313, %v2314
      %v2316 = vmul.f32 %v2315, 0.00390625
      %v2317 = vmul.f32 %v2214, %v2214
      %v2318 = vsub.f32 %v2316, %v2317
      %v2319 = vmax.f32 %v2318, 0.0
      %v2320 = vadd.f32 %v2319, 1e-05
      %v2321 = vrsqrt.pop %v2320
      %2338 = vrot.lane.b32.xlu0 %v2064, 64
      %v2339 = vpop.permute.xlu0 %2338
      %2340 = vrot.lane.b32.xlu0 %v2065, 64
      %v2341 = vpop.permute.xlu0 %2340
      %2342 = vrot.lane.b32.xlu0 %v2066, 64
      %v2343 = vpop.permute.xlu0 %2342
      %2344 = vrot.lane.b32.xlu0 %v2067, 64
      %v2345 = vpop.permute.xlu0 %2344
      %2346 = vrot.lane.b32.xlu0 %v2068, 64
      %v2347 = vpop.permute.xlu0 %2346
      %2348 = vrot.lane.b32.xlu0 %v2069, 64
      %v2349 = vpop.permute.xlu0 %2348
      %2350 = vrot.lane.b32.xlu0 %v2070, 64
      %v2351 = vpop.permute.xlu0 %2350
      %2352 = vrot.lane.b32.xlu0 %v2071, 64
      %v2353 = vpop.permute.xlu0 %2352
      %2354 = vrot.lane.b32.xlu0 %v2072, 64
      %v2355 = vpop.permute.xlu0 %2354
      %2356 = vrot.lane.b32.xlu0 %v2073, 64
      %v2357 = vpop.permute.xlu0 %2356
      %2358 = vrot.lane.b32.xlu0 %v2074, 64
      %v2359 = vpop.permute.xlu0 %2358
      %2360 = vrot.lane.b32.xlu0 %v2075, 64
      %v2361 = vpop.permute.xlu0 %2360
      %2362 = vrot.lane.b32.xlu0 %v2076, 64
      %v2363 = vpop.permute.xlu0 %2362
      %2364 = vrot.lane.b32.xlu0 %v2077, 64
      %v2365 = vpop.permute.xlu0 %2364
      %2366 = vrot.lane.b32.xlu0 %v2078, 64
      %v2367 = vpop.permute.xlu0 %2366
      %2368 = vrot.lane.b32.xlu0 %v2079, 64
      %v2369 = vpop.permute.xlu0 %2368
      %v2371 = vshrl.u32 %v2339, 16
      %v2373 = vrot.slane %v2371, 7
      %v2374 = vshll.u32 %v2339, 16
      %v2376 = vor.u32 %v2373, %v2374
      %v2378 = vshrl.u32 %v2341, 16
      %v2380 = vrot.slane %v2378, 7
      %v2381 = vshll.u32 %v2341, 16
      %v2383 = vor.u32 %v2380, %v2381
      %v2385 = vshrl.u32 %v2343, 16
      %v2387 = vrot.slane %v2385, 7
      %v2388 = vshll.u32 %v2343, 16
      %v2390 = vor.u32 %v2387, %v2388
      %v2392 = vshrl.u32 %v2345, 16
      %v2394 = vrot.slane %v2392, 7
      %v2395 = vshll.u32 %v2345, 16
      %v2397 = vor.u32 %v2394, %v2395
      %v2399 = vshrl.u32 %v2347, 16
      %v2401 = vrot.slane %v2399, 7
      %v2402 = vshll.u32 %v2347, 16
      %v2404 = vor.u32 %v2401, %v2402
      %v2406 = vshrl.u32 %v2349, 16
      %v2408 = vrot.slane %v2406, 7
      %v2409 = vshll.u32 %v2349, 16
      %v2411 = vor.u32 %v2408, %v2409
      %v2413 = vshrl.u32 %v2351, 16
      %v2415 = vrot.slane %v2413, 7
      %v2416 = vshll.u32 %v2351, 16
      %v2418 = vor.u32 %v2415, %v2416
      %v2420 = vshrl.u32 %v2353, 16
      %v2422 = vrot.slane %v2420, 7
      %v2423 = vshll.u32 %v2353, 16
      %v2425 = vor.u32 %v2422, %v2423
      %v2427 = vshrl.u32 %v2355, 16
      %v2429 = vrot.slane %v2427, 7
      %v2430 = vshll.u32 %v2355, 16
      %v2432 = vor.u32 %v2429, %v2430
      %v2434 = vshrl.u32 %v2357, 16
      %v2436 = vrot.slane %v2434, 7
      %v2437 = vshll.u32 %v2357, 16
      %v2439 = vor.u32 %v2436, %v2437
      %v2441 = vshrl.u32 %v2359, 16
      %v2443 = vrot.slane %v2441, 7
      %v2444 = vshll.u32 %v2359, 16
      %v2446 = vor.u32 %v2443, %v2444
      %v2448 = vshrl.u32 %v2361, 16
      %v2450 = vrot.slane %v2448, 7
      %v2451 = vshll.u32 %v2361, 16
      %v2453 = vor.u32 %v2450, %v2451
      %v2455 = vshrl.u32 %v2363, 16
      %v2457 = vrot.slane %v2455, 7
      %v2458 = vshll.u32 %v2363, 16
      %v2460 = vor.u32 %v2457, %v2458
      %v2462 = vshrl.u32 %v2365, 16
      %v2464 = vrot.slane %v2462, 7
      %v2465 = vshll.u32 %v2365, 16
      %v2467 = vor.u32 %v2464, %v2465
      %v2469 = vshrl.u32 %v2367, 16
      %v2471 = vrot.slane %v2469, 7
      %v2472 = vshll.u32 %v2367, 16
      %v2474 = vor.u32 %v2471, %v2472
      %v2476 = vshrl.u32 %v2369, 16
      %v2478 = vrot.slane %v2476, 7
      %v2479 = vshll.u32 %v2369, 16
      %v2481 = vor.u32 %v2478, %v2479
      %v2514 = vsel %vm945, 0, %v2376
      %v2515 = vsel %vm945, 0, %v2383
      %v2516 = vsel %vm945, 0, %v2390
      %v2517 = vsel %vm945, 0, %v2397
      %v2518 = vsel %vm945, 0, %v2404
      %v2519 = vsel %vm945, 0, %v2411
      %v2520 = vsel %vm945, 0, %v2418
      %v2521 = vsel %vm945, 0, %v2425
      %v2522 = vsel %vm945, 0, %v2432
      %v2523 = vsel %vm945, 0, %v2439
      %v2524 = vsel %vm945, 0, %v2446
      %v2525 = vsel %vm945, 0, %v2453
      %v2526 = vsel %vm945, 0, %v2460
      %v2527 = vsel %vm945, 0, %v2467
      %v2528 = vsel %vm945, 0, %v2474
      %v2529 = vsel %vm945, 0, %v2481
      %v2530 = vsel %vm945, %v2373, 0
      %v2531 = vsel %vm945, %v2380, 0
      %v2532 = vsel %vm945, %v2387, 0
      %v2533 = vsel %vm945, %v2394, 0
      %v2534 = vsel %vm945, %v2401, 0
      %v2535 = vsel %vm945, %v2408, 0
      %v2536 = vsel %vm945, %v2415, 0
      %v2537 = vsel %vm945, %v2422, 0
      %v2538 = vsel %vm945, %v2429, 0
      %v2539 = vsel %vm945, %v2436, 0
      %v2540 = vsel %vm945, %v2443, 0
      %v2541 = vsel %vm945, %v2450, 0
      %v2542 = vsel %vm945, %v2457, 0
      %v2543 = vsel %vm945, %v2464, 0
      %v2544 = vsel %vm945, %v2471, 0
      %v2545 = vsel %vm945, %v2478, 0
      %v2547 = vshrl.u32 %v2514, 16
      %v2549 = vshll.u32 %v2514, 16
      %v2551 = vrot.slane %v2549, 1
      %v2552 = vor.u32 %v2547, %v2551
      %v2554 = vshll.u32 %v2530, 16
      %v2556 = vrot.slane %v2554, 1
      %v2557 = vsel %vm980, %v2552, %v2556
      %v2559 = vshrl.u32 %v2515, 16
      %v2561 = vshll.u32 %v2515, 16
      %v2563 = vrot.slane %v2561, 1
      %v2564 = vor.u32 %v2559, %v2563
      %v2566 = vshll.u32 %v2531, 16
      %v2568 = vrot.slane %v2566, 1
      %v2569 = vsel %vm980, %v2564, %v2568
      %v2571 = vshrl.u32 %v2516, 16
      %v2573 = vshll.u32 %v2516, 16
      %v2575 = vrot.slane %v2573, 1
      %v2576 = vor.u32 %v2571, %v2575
      %v2578 = vshll.u32 %v2532, 16
      %v2580 = vrot.slane %v2578, 1
      %v2581 = vsel %vm980, %v2576, %v2580
      %v2583 = vshrl.u32 %v2517, 16
      %v2585 = vshll.u32 %v2517, 16
      %v2587 = vrot.slane %v2585, 1
      %v2588 = vor.u32 %v2583, %v2587
      %v2590 = vshll.u32 %v2533, 16
      %v2592 = vrot.slane %v2590, 1
      %v2593 = vsel %vm980, %v2588, %v2592
      %v2595 = vshrl.u32 %v2518, 16
      %v2597 = vshll.u32 %v2518, 16
      %v2599 = vrot.slane %v2597, 1
      %v2600 = vor.u32 %v2595, %v2599
      %v2602 = vshll.u32 %v2534, 16
      %v2604 = vrot.slane %v2602, 1
      %v2605 = vsel %vm980, %v2600, %v2604
      %v2607 = vshrl.u32 %v2519, 16
      %v2609 = vshll.u32 %v2519, 16
      %v2611 = vrot.slane %v2609, 1
      %v2612 = vor.u32 %v2607, %v2611
      %v2614 = vshll.u32 %v2535, 16
      %v2616 = vrot.slane %v2614, 1
      %v2617 = vsel %vm980, %v2612, %v2616
      %v2619 = vshrl.u32 %v2520, 16
      %v2621 = vshll.u32 %v2520, 16
      %v2623 = vrot.slane %v2621, 1
      %v2624 = vor.u32 %v2619, %v2623
      %v2626 = vshll.u32 %v2536, 16
      %v2628 = vrot.slane %v2626, 1
      %v2629 = vsel %vm980, %v2624, %v2628
      %v2631 = vshrl.u32 %v2521, 16
      %v2633 = vshll.u32 %v2521, 16
      %v2635 = vrot.slane %v2633, 1
      %v2636 = vor.u32 %v2631, %v2635
      %v2638 = vshll.u32 %v2537, 16
      %v2640 = vrot.slane %v2638, 1
      %v2641 = vsel %vm980, %v2636, %v2640
      %v2643 = vshrl.u32 %v2522, 16
      %v2645 = vshll.u32 %v2522, 16
      %v2647 = vrot.slane %v2645, 1
      %v2648 = vor.u32 %v2643, %v2647
      %v2650 = vshll.u32 %v2538, 16
      %v2652 = vrot.slane %v2650, 1
      %v2653 = vsel %vm980, %v2648, %v2652
      %v2655 = vshrl.u32 %v2523, 16
      %v2657 = vshll.u32 %v2523, 16
      %v2659 = vrot.slane %v2657, 1
      %v2660 = vor.u32 %v2655, %v2659
      %v2662 = vshll.u32 %v2539, 16
      %v2664 = vrot.slane %v2662, 1
      %v2665 = vsel %vm980, %v2660, %v2664
      %v2667 = vshrl.u32 %v2524, 16
      %v2669 = vshll.u32 %v2524, 16
      %v2671 = vrot.slane %v2669, 1
      %v2672 = vor.u32 %v2667, %v2671
      %v2674 = vshll.u32 %v2540, 16
      %v2676 = vrot.slane %v2674, 1
      %v2677 = vsel %vm980, %v2672, %v2676
      %v2679 = vshrl.u32 %v2525, 16
      %v2681 = vshll.u32 %v2525, 16
      %v2683 = vrot.slane %v2681, 1
      %v2684 = vor.u32 %v2679, %v2683
      %v2686 = vshll.u32 %v2541, 16
      %v2688 = vrot.slane %v2686, 1
      %v2689 = vsel %vm980, %v2684, %v2688
      %v2691 = vshrl.u32 %v2526, 16
      %v2693 = vshll.u32 %v2526, 16
      %v2695 = vrot.slane %v2693, 1
      %v2696 = vor.u32 %v2691, %v2695
      %v2698 = vshll.u32 %v2542, 16
      %v2700 = vrot.slane %v2698, 1
      %v2701 = vsel %vm980, %v2696, %v2700
      %v2703 = vshrl.u32 %v2527, 16
      %v2705 = vshll.u32 %v2527, 16
      %v2707 = vrot.slane %v2705, 1
      %v2708 = vor.u32 %v2703, %v2707
      %v2710 = vshll.u32 %v2543, 16
      %v2712 = vrot.slane %v2710, 1
      %v2713 = vsel %vm980, %v2708, %v2712
      %v2715 = vshrl.u32 %v2528, 16
      %v2717 = vshll.u32 %v2528, 16
      %v2719 = vrot.slane %v2717, 1
      %v2720 = vor.u32 %v2715, %v2719
      %v2722 = vshll.u32 %v2544, 16
      %v2724 = vrot.slane %v2722, 1
      %v2725 = vsel %vm980, %v2720, %v2724
      %v2756 = vrot.slane %v2514, 1
      %v2757 = vrot.slane %v2530, 1
      %v2758 = vsel %vm1205, %v2756, %v2757
      %v2759 = vrot.slane %v2515, 1
      %v2760 = vrot.slane %v2531, 1
      %v2761 = vsel %vm1205, %v2759, %v2760
      %v2762 = vrot.slane %v2516, 1
      %v2763 = vrot.slane %v2532, 1
      %v2764 = vsel %vm1205, %v2762, %v2763
      %v2765 = vrot.slane %v2517, 1
      %v2766 = vrot.slane %v2533, 1
      %v2767 = vsel %vm1205, %v2765, %v2766
      %v2768 = vrot.slane %v2518, 1
      %v2769 = vrot.slane %v2534, 1
      %v2770 = vsel %vm1205, %v2768, %v2769
      %v2771 = vrot.slane %v2519, 1
      %v2772 = vrot.slane %v2535, 1
      %v2773 = vsel %vm1205, %v2771, %v2772
      %v2774 = vrot.slane %v2520, 1
      %v2775 = vrot.slane %v2536, 1
      %v2776 = vsel %vm1205, %v2774, %v2775
      %v2777 = vrot.slane %v2521, 1
      %v2778 = vrot.slane %v2537, 1
      %v2779 = vsel %vm1205, %v2777, %v2778
      %v2780 = vrot.slane %v2522, 1
      %v2781 = vrot.slane %v2538, 1
      %v2782 = vsel %vm1205, %v2780, %v2781
      %v2783 = vrot.slane %v2523, 1
      %v2784 = vrot.slane %v2539, 1
      %v2785 = vsel %vm1205, %v2783, %v2784
      %v2786 = vrot.slane %v2524, 1
      %v2787 = vrot.slane %v2540, 1
      %v2788 = vsel %vm1205, %v2786, %v2787
      %v2789 = vrot.slane %v2525, 1
      %v2790 = vrot.slane %v2541, 1
      %v2791 = vsel %vm1205, %v2789, %v2790
      %v2792 = vrot.slane %v2526, 1
      %v2793 = vrot.slane %v2542, 1
      %v2794 = vsel %vm1205, %v2792, %v2793
      %v2795 = vrot.slane %v2527, 1
      %v2796 = vrot.slane %v2543, 1
      %v2797 = vsel %vm1205, %v2795, %v2796
      %v2798 = vrot.slane %v2528, 1
      %v2799 = vrot.slane %v2544, 1
      %v2800 = vsel %vm1205, %v2798, %v2799
      %v2802 = vshrl.u32 %v2529, 16
      %v2804 = vshll.u32 %v2529, 16
      %v2806 = vrot.slane %v2804, 1
      %v2807 = vor.u32 %v2802, %v2806
      %v2809 = vshll.u32 %v2545, 16
      %v2811 = vrot.slane %v2809, 1
      %v2812 = vsel %vm980, %v2807, %v2811
      %v2815 = vrot.slane %v2529, 1
      %v2816 = vrot.slane %v2545, 1
      %v2817 = vsel %vm1205, %v2815, %v2816
      %2818 = vrot.lane.b32.xlu0 %v992, 32
      %v2819 = vpop.permute.xlu0 %2818
      %2820 = vrot.lane.b32.xlu0 %v2557, 32
      %v2821 = vpop.permute.xlu0 %2820
      %2822 = vrot.lane.b32.xlu0 %v2569, 32
      %v2823 = vpop.permute.xlu0 %2822
      %2824 = vrot.lane.b32.xlu0 %v2581, 32
      %v2825 = vpop.permute.xlu0 %2824
      %2826 = vrot.lane.b32.xlu0 %v2593, 32
      %v2827 = vpop.permute.xlu0 %2826
      %2828 = vrot.lane.b32.xlu0 %v2605, 32
      %v2829 = vpop.permute.xlu0 %2828
      %2830 = vrot.lane.b32.xlu0 %v2617, 32
      %v2831 = vpop.permute.xlu0 %2830
      %2832 = vrot.lane.b32.xlu0 %v2629, 32
      %v2833 = vpop.permute.xlu0 %2832
      %2834 = vrot.lane.b32.xlu0 %v2641, 32
      %v2835 = vpop.permute.xlu0 %2834
      %2836 = vrot.lane.b32.xlu0 %v2653, 32
      %v2837 = vpop.permute.xlu0 %2836
      %2838 = vrot.lane.b32.xlu0 %v2665, 32
      %v2839 = vpop.permute.xlu0 %2838
      %2840 = vrot.lane.b32.xlu0 %v2677, 32
      %v2841 = vpop.permute.xlu0 %2840
      %2842 = vrot.lane.b32.xlu0 %v2689, 32
      %v2843 = vpop.permute.xlu0 %2842
      %2844 = vrot.lane.b32.xlu0 %v2701, 32
      %v2845 = vpop.permute.xlu0 %2844
      %2846 = vrot.lane.b32.xlu0 %v2713, 32
      %v2847 = vpop.permute.xlu0 %2846
      %2848 = vrot.lane.b32.xlu0 %v2725, 32
      %v2849 = vpop.permute.xlu0 %2848
      %2850 = vrot.lane.b32.xlu0 %v2758, 64
      %v2851 = vpop.permute.xlu0 %2850
      %2852 = vrot.lane.b32.xlu0 %v2761, 64
      %v2853 = vpop.permute.xlu0 %2852
      %2854 = vrot.lane.b32.xlu0 %v2764, 64
      %v2855 = vpop.permute.xlu0 %2854
      %2856 = vrot.lane.b32.xlu0 %v2767, 64
      %v2857 = vpop.permute.xlu0 %2856
      %2858 = vrot.lane.b32.xlu0 %v2770, 64
      %v2859 = vpop.permute.xlu0 %2858
      %2860 = vrot.lane.b32.xlu0 %v2773, 64
      %v2861 = vpop.permute.xlu0 %2860
      %2862 = vrot.lane.b32.xlu0 %v2776, 64
      %v2863 = vpop.permute.xlu0 %2862
      %2864 = vrot.lane.b32.xlu0 %v2779, 64
      %v2865 = vpop.permute.xlu0 %2864
      %2866 = vrot.lane.b32.xlu0 %v2782, 64
      %v2867 = vpop.permute.xlu0 %2866
      %2868 = vrot.lane.b32.xlu0 %v2785, 64
      %v2869 = vpop.permute.xlu0 %2868
      %2870 = vrot.lane.b32.xlu0 %v2788, 64
      %v2871 = vpop.permute.xlu0 %2870
      %2872 = vrot.lane.b32.xlu0 %v2791, 64
      %v2873 = vpop.permute.xlu0 %2872
      %2874 = vrot.lane.b32.xlu0 %v2794, 64
      %v2875 = vpop.permute.xlu0 %2874
      %2876 = vrot.lane.b32.xlu0 %v2797, 64
      %v2877 = vpop.permute.xlu0 %2876
      %2878 = vrot.lane.b32.xlu0 %v2800, 64
      %v2879 = vpop.permute.xlu0 %2878
      %2880 = vrot.lane.b32.xlu0 %v2514, 96
      %v2881 = vpop.permute.xlu0 %2880
      %2882 = vrot.lane.b32.xlu0 %v2515, 96
      %v2883 = vpop.permute.xlu0 %2882
      %2884 = vrot.lane.b32.xlu0 %v2516, 96
      %v2885 = vpop.permute.xlu0 %2884
      %2886 = vrot.lane.b32.xlu0 %v2517, 96
      %v2887 = vpop.permute.xlu0 %2886
      %2888 = vrot.lane.b32.xlu0 %v2518, 96
      %v2889 = vpop.permute.xlu0 %2888
      %2890 = vrot.lane.b32.xlu0 %v2519, 96
      %v2891 = vpop.permute.xlu0 %2890
      %2892 = vrot.lane.b32.xlu0 %v2520, 96
      %v2893 = vpop.permute.xlu0 %2892
      %2894 = vrot.lane.b32.xlu0 %v2521, 96
      %v2895 = vpop.permute.xlu0 %2894
      %2896 = vrot.lane.b32.xlu0 %v2522, 96
      %v2897 = vpop.permute.xlu0 %2896
      %2898 = vrot.lane.b32.xlu0 %v2523, 96
      %v2899 = vpop.permute.xlu0 %2898
      %2900 = vrot.lane.b32.xlu0 %v2524, 96
      %v2901 = vpop.permute.xlu0 %2900
      %2902 = vrot.lane.b32.xlu0 %v2525, 96
      %v2903 = vpop.permute.xlu0 %2902
      %2904 = vrot.lane.b32.xlu0 %v2526, 96
      %v2905 = vpop.permute.xlu0 %2904
      %2906 = vrot.lane.b32.xlu0 %v2527, 96
      %v2907 = vpop.permute.xlu0 %2906
      %2908 = vrot.lane.b32.xlu0 %v2528, 96
      %v2909 = vpop.permute.xlu0 %2908
      %2910 = vrot.lane.b32.xlu0 %v2529, 96
      %v2911 = vpop.permute.xlu0 %2910
      %2912 = vrot.lane.b32.xlu0 %v2758, 32
      %v2913 = vpop.permute.xlu0 %2912
      %2914 = vrot.lane.b32.xlu0 %v2761, 32
      %v2915 = vpop.permute.xlu0 %2914
      %2916 = vrot.lane.b32.xlu0 %v2764, 32
      %v2917 = vpop.permute.xlu0 %2916
      %2918 = vrot.lane.b32.xlu0 %v2767, 32
      %v2919 = vpop.permute.xlu0 %2918
      %2920 = vrot.lane.b32.xlu0 %v2770, 32
      %v2921 = vpop.permute.xlu0 %2920
      %2922 = vrot.lane.b32.xlu0 %v2773, 32
      %v2923 = vpop.permute.xlu0 %2922
      %2924 = vrot.lane.b32.xlu0 %v2776, 32
      %v2925 = vpop.permute.xlu0 %2924
      %2926 = vrot.lane.b32.xlu0 %v2779, 32
      %v2927 = vpop.permute.xlu0 %2926
      %2928 = vrot.lane.b32.xlu0 %v2782, 32
      %v2929 = vpop.permute.xlu0 %2928
      %2930 = vrot.lane.b32.xlu0 %v2785, 32
      %v2931 = vpop.permute.xlu0 %2930
      %2932 = vrot.lane.b32.xlu0 %v2788, 32
      %v2933 = vpop.permute.xlu0 %2932
      %2934 = vrot.lane.b32.xlu0 %v2791, 32
      %v2935 = vpop.permute.xlu0 %2934
      %2936 = vrot.lane.b32.xlu0 %v2794, 32
      %v2937 = vpop.permute.xlu0 %2936
      %2938 = vrot.lane.b32.xlu0 %v2797, 32
      %v2939 = vpop.permute.xlu0 %2938
      %2940 = vrot.lane.b32.xlu0 %v2800, 32
      %v2941 = vpop.permute.xlu0 %2940
      %2942 = vrot.lane.b32.xlu0 %v2817, 32
      %v2943 = vpop.permute.xlu0 %2942
      %2944 = vrot.lane.b32.xlu0 %v2515, 64
      %v2945 = vpop.permute.xlu0 %2944
      %2946 = vrot.lane.b32.xlu0 %v2516, 64
      %v2947 = vpop.permute.xlu0 %2946
      %2948 = vrot.lane.b32.xlu0 %v2517, 64
      %v2949 = vpop.permute.xlu0 %2948
      %2950 = vrot.lane.b32.xlu0 %v2518, 64
      %v2951 = vpop.permute.xlu0 %2950
      %2952 = vrot.lane.b32.xlu0 %v2519, 64
      %v2953 = vpop.permute.xlu0 %2952
      %2954 = vrot.lane.b32.xlu0 %v2520, 64
      %v2955 = vpop.permute.xlu0 %2954
      %2956 = vrot.lane.b32.xlu0 %v2521, 64
      %v2957 = vpop.permute.xlu0 %2956
      %2958 = vrot.lane.b32.xlu0 %v2522, 64
      %v2959 = vpop.permute.xlu0 %2958
      %2960 = vrot.lane.b32.xlu0 %v2523, 64
      %v2961 = vpop.permute.xlu0 %2960
      %2962 = vrot.lane.b32.xlu0 %v2524, 64
      %v2963 = vpop.permute.xlu0 %2962
      %2964 = vrot.lane.b32.xlu0 %v2525, 64
      %v2965 = vpop.permute.xlu0 %2964
      %2966 = vrot.lane.b32.xlu0 %v2526, 64
      %v2967 = vpop.permute.xlu0 %2966
      %2968 = vrot.lane.b32.xlu0 %v2527, 64
      %v2969 = vpop.permute.xlu0 %2968
      %2970 = vrot.lane.b32.xlu0 %v2528, 64
      %v2971 = vpop.permute.xlu0 %2970
      %2972 = vrot.lane.b32.xlu0 %v2529, 64
      %v2973 = vpop.permute.xlu0 %2972
      %2974 = vrot.lane.b32.xlu0 %v946, 64
      %v2975 = vpop.permute.xlu0 %2974
      %2976 = vrot.lane.b32.xlu0 %v2569, 96
      %v2977 = vpop.permute.xlu0 %2976
      %2978 = vrot.lane.b32.xlu0 %v2581, 96
      %v2979 = vpop.permute.xlu0 %2978
      %2980 = vrot.lane.b32.xlu0 %v2593, 96
      %v2981 = vpop.permute.xlu0 %2980
      %2982 = vrot.lane.b32.xlu0 %v2605, 96
      %v2983 = vpop.permute.xlu0 %2982
      %2984 = vrot.lane.b32.xlu0 %v2617, 96
      %v2985 = vpop.permute.xlu0 %2984
      %2986 = vrot.lane.b32.xlu0 %v2629, 96
      %v2987 = vpop.permute.xlu0 %2986
      %2988 = vrot.lane.b32.xlu0 %v2641, 96
      %v2989 = vpop.permute.xlu0 %2988
      %2990 = vrot.lane.b32.xlu0 %v2653, 96
      %v2991 = vpop.permute.xlu0 %2990
      %2992 = vrot.lane.b32.xlu0 %v2665, 96
      %v2993 = vpop.permute.xlu0 %2992
      %2994 = vrot.lane.b32.xlu0 %v2677, 96
      %v2995 = vpop.permute.xlu0 %2994
      %2996 = vrot.lane.b32.xlu0 %v2689, 96
      %v2997 = vpop.permute.xlu0 %2996
      %2998 = vrot.lane.b32.xlu0 %v2701, 96
      %v2999 = vpop.permute.xlu0 %2998
      %3000 = vrot.lane.b32.xlu0 %v2713, 96
      %v3001 = vpop.permute.xlu0 %3000
      %3002 = vrot.lane.b32.xlu0 %v2725, 96
      %v3003 = vpop.permute.xlu0 %3002
      %3004 = vrot.lane.b32.xlu0 %v2812, 96
      %v3005 = vpop.permute.xlu0 %3004
      %3006 = vrot.lane.b32.xlu0 %v992, 96
      %v3007 = vpop.permute.xlu0 %3006
      %v3009 = vsel %vm1626, %v946, %v2819
      %v3011 = vsel %vm1626, %v2514, %v2821
      %v3013 = vsel %vm1626, %v2515, %v2823
      %v3015 = vsel %vm1626, %v2516, %v2825
      %v3017 = vsel %vm1626, %v2517, %v2827
      %v3019 = vsel %vm1626, %v2518, %v2829
      %v3021 = vsel %vm1626, %v2519, %v2831
      %v3023 = vsel %vm1626, %v2520, %v2833
      %v3025 = vsel %vm1626, %v2521, %v2835
      %v3027 = vsel %vm1626, %v2522, %v2837
      %v3029 = vsel %vm1626, %v2523, %v2839
      %v3031 = vsel %vm1626, %v2524, %v2841
      %v3033 = vsel %vm1626, %v2525, %v2843
      %v3035 = vsel %vm1626, %v2526, %v2845
      %v3037 = vsel %vm1626, %v2527, %v2847
      %v3039 = vsel %vm1626, %v2528, %v2849
      %v3040 = vsel %vm1758, %v3009, %v1526
      %v3042 = vsel %vm1758, %v3011, %v2851
      %v3044 = vsel %vm1758, %v3013, %v2853
      %v3046 = vsel %vm1758, %v3015, %v2855
      %v3048 = vsel %vm1758, %v3017, %v2857
      %v3050 = vsel %vm1758, %v3019, %v2859
      %v3052 = vsel %vm1758, %v3021, %v2861
      %v3054 = vsel %vm1758, %v3023, %v2863
      %v3056 = vsel %vm1758, %v3025, %v2865
      %v3058 = vsel %vm1758, %v3027, %v2867
      %v3060 = vsel %vm1758, %v3029, %v2869
      %v3062 = vsel %vm1758, %v3031, %v2871
      %v3064 = vsel %vm1758, %v3033, %v2873
      %v3066 = vsel %vm1758, %v3035, %v2875
      %v3068 = vsel %vm1758, %v3037, %v2877
      %v3070 = vsel %vm1758, %v3039, %v2879
      %vm3071 = vcmask 785408
      %v3073 = vsel %vm3071, %v3040, %v2881
      %v3076 = vsel %vm3071, %v3042, %v2883
      %v3079 = vsel %vm3071, %v3044, %v2885
      %v3082 = vsel %vm3071, %v3046, %v2887
      %v3085 = vsel %vm3071, %v3048, %v2889
      %v3088 = vsel %vm3071, %v3050, %v2891
      %v3091 = vsel %vm3071, %v3052, %v2893
      %v3094 = vsel %vm3071, %v3054, %v2895
      %v3097 = vsel %vm3071, %v3056, %v2897
      %v3100 = vsel %vm3071, %v3058, %v2899
      %v3103 = vsel %vm3071, %v3060, %v2901
      %v3106 = vsel %vm3071, %v3062, %v2903
      %v3109 = vsel %vm3071, %v3064, %v2905
      %v3112 = vsel %vm3071, %v3066, %v2907
      %v3115 = vsel %vm3071, %v3068, %v2909
      %v3118 = vsel %vm3071, %v3070, %v2911
      %v3122 = vsel %vm1626, %v2557, %v2913
      %v3125 = vsel %vm1626, %v2569, %v2915
      %v3128 = vsel %vm1626, %v2581, %v2917
      %v3131 = vsel %vm1626, %v2593, %v2919
      %v3134 = vsel %vm1626, %v2605, %v2921
      %v3137 = vsel %vm1626, %v2617, %v2923
      %v3140 = vsel %vm1626, %v2629, %v2925
      %v3143 = vsel %vm1626, %v2641, %v2927
      %v3146 = vsel %vm1626, %v2653, %v2929
      %v3149 = vsel %vm1626, %v2665, %v2931
      %v3152 = vsel %vm1626, %v2677, %v2933
      %v3155 = vsel %vm1626, %v2689, %v2935
      %v3158 = vsel %vm1626, %v2701, %v2937
      %v3161 = vsel %vm1626, %v2713, %v2939
      %v3164 = vsel %vm1626, %v2725, %v2941
      %v3167 = vsel %vm1626, %v2812, %v2943
      %v3169 = vsel %vm1758, %v3122, %v2945
      %v3171 = vsel %vm1758, %v3125, %v2947
      %v3173 = vsel %vm1758, %v3128, %v2949
      %v3175 = vsel %vm1758, %v3131, %v2951
      %v3177 = vsel %vm1758, %v3134, %v2953
      %v3179 = vsel %vm1758, %v3137, %v2955
      %v3181 = vsel %vm1758, %v3140, %v2957
      %v3183 = vsel %vm1758, %v3143, %v2959
      %v3185 = vsel %vm1758, %v3146, %v2961
      %v3187 = vsel %vm1758, %v3149, %v2963
      %v3189 = vsel %vm1758, %v3152, %v2965
      %v3191 = vsel %vm1758, %v3155, %v2967
      %v3193 = vsel %vm1758, %v3158, %v2969
      %v3195 = vsel %vm1758, %v3161, %v2971
      %v3197 = vsel %vm1758, %v3164, %v2973
      %v3199 = vsel %vm1758, %v3167, %v2975
      %v3201 = vsel %vm3071, %v3169, %v2977
      %v3204 = vsel %vm3071, %v3171, %v2979
      %v3207 = vsel %vm3071, %v3173, %v2981
      %v3210 = vsel %vm3071, %v3175, %v2983
      %v3213 = vsel %vm3071, %v3177, %v2985
      %v3216 = vsel %vm3071, %v3179, %v2987
      %v3219 = vsel %vm3071, %v3181, %v2989
      %v3222 = vsel %vm3071, %v3183, %v2991
      %v3225 = vsel %vm3071, %v3185, %v2993
      %v3228 = vsel %vm3071, %v3187, %v2995
      %v3231 = vsel %vm3071, %v3189, %v2997
      %v3234 = vsel %vm3071, %v3191, %v2999
      %v3237 = vsel %vm3071, %v3193, %v3001
      %v3240 = vsel %vm3071, %v3195, %v3003
      %v3243 = vsel %vm3071, %v3197, %v3005
      %v3246 = vsel %vm3071, %v3199, %v3007
      %v3248 = vld [vmem:[%s8] sm:$0xf]
      %v3249 = vld [vmem:[%s8 + $0x4] sm:$0xf]
      %v3250 = vld [vmem:[%s8 + $0x8] sm:$0xf]
      %v3251 = vld [vmem:[%s8 + $0xc] sm:$0xf]
      %v3252 = vld [vmem:[%s8 + $0x10] sm:$0xf]
      %v3253 = vld [vmem:[%s8 + $0x14] sm:$0xf]
      %v3254 = vld [vmem:[%s8 + $0x18] sm:$0xf]
      %v3255 = vld [vmem:[%s8 + $0x1c] sm:$0xf]
      %v3256 = vld [vmem:[%s8 + $0x20] sm:$0xf]
      %v3257 = vld [vmem:[%s8 + $0x24] sm:$0xf]
      %v3258 = vld [vmem:[%s8 + $0x28] sm:$0xf]
      %v3259 = vld [vmem:[%s8 + $0x2c] sm:$0xf]
      %v3260 = vld [vmem:[%s8 + $0x30] sm:$0xf]
      %v3261 = vld [vmem:[%s8 + $0x34] sm:$0xf]
      %v3262 = vld [vmem:[%s8 + $0x38] sm:$0xf]
      %v3263 = vld [vmem:[%s8 + $0x3c] sm:$0xf]
      %v3264 = vld [vmem:[%s8 + $0x40] sm:$0xf]
      %v3265 = vld [vmem:[%s8 + $0x44] sm:$0xf]
      %v3266 = vld [vmem:[%s8 + $0x48] sm:$0xf]
      %v3267 = vld [vmem:[%s8 + $0x4c] sm:$0xf]
      %v3268 = vld [vmem:[%s8 + $0x50] sm:$0xf]
      %v3269 = vld [vmem:[%s8 + $0x54] sm:$0xf]
      %v3270 = vld [vmem:[%s8 + $0x58] sm:$0xf]
      %v3271 = vld [vmem:[%s8 + $0x5c] sm:$0xf]
      %v3272 = vld [vmem:[%s8 + $0x60] sm:$0xf]
      %v3273 = vld [vmem:[%s8 + $0x64] sm:$0xf]
      %v3274 = vld [vmem:[%s8 + $0x68] sm:$0xf]
      %v3275 = vld [vmem:[%s8 + $0x6c] sm:$0xf]
      %v3276 = vld [vmem:[%s8 + $0x70] sm:$0xf]
      %v3277 = vld [vmem:[%s8 + $0x74] sm:$0xf]
      %v3278 = vld [vmem:[%s8 + $0x78] sm:$0xf]
      %v3279 = vld [vmem:[%s8 + $0x7c] sm:$0xf]
      %v3280 = vld [vmem:[%s8 + $0x80] sm:$0xf]
      %v3281 = vld [vmem:[%s8 + $0x84] sm:$0xf]
      %v3282 = vld [vmem:[%s8 + $0x88] sm:$0xf]
      %v3283 = vld [vmem:[%s8 + $0x8c] sm:$0xf]
      %v3284 = vld [vmem:[%s10] sm:$0xf]
      %v3285 = vld [vmem:[%s10 + $0x4] sm:$0xf]
      %v3286 = vld [vmem:[%s10 + $0x8] sm:$0xf]
      %v3287 = vld [vmem:[%s10 + $0xc] sm:$0xf]
      %v3288 = vld [vmem:[%s10 + $0x10] sm:$0xf]
      %v3289 = vld [vmem:[%s10 + $0x14] sm:$0xf]
      %v3290 = vld [vmem:[%s10 + $0x18] sm:$0xf]
      %v3291 = vld [vmem:[%s10 + $0x1c] sm:$0xf]
      %v3292 = vld [vmem:[%s10 + $0x20] sm:$0xf]
      %v3293 = vld [vmem:[%s10 + $0x24] sm:$0xf]
      %v3294 = vld [vmem:[%s10 + $0x28] sm:$0xf]
      %v3295 = vld [vmem:[%s10 + $0x2c] sm:$0xf]
      %v3296 = vld [vmem:[%s10 + $0x30] sm:$0xf]
      %v3297 = vld [vmem:[%s10 + $0x34] sm:$0xf]
      %v3298 = vld [vmem:[%s10 + $0x38] sm:$0xf]
      %v3299 = vld [vmem:[%s10 + $0x3c] sm:$0xf]
      %v3300 = vld [vmem:[%s10 + $0x40] sm:$0xf]
      %v3301 = vld [vmem:[%s10 + $0x44] sm:$0xf]
      %v3302 = vld [vmem:[%s10 + $0x48] sm:$0xf]
      %v3303 = vld [vmem:[%s10 + $0x4c] sm:$0xf]
      %v3304 = vld [vmem:[%s10 + $0x50] sm:$0xf]
      %v3305 = vld [vmem:[%s10 + $0x54] sm:$0xf]
      %v3306 = vld [vmem:[%s10 + $0x58] sm:$0xf]
      %v3307 = vld [vmem:[%s10 + $0x5c] sm:$0xf]
      %v3308 = vld [vmem:[%s10 + $0x60] sm:$0xf]
      %v3309 = vld [vmem:[%s10 + $0x64] sm:$0xf]
      %v3310 = vld [vmem:[%s10 + $0x68] sm:$0xf]
      %v3311 = vld [vmem:[%s10 + $0x6c] sm:$0xf]
      %v3312 = vld [vmem:[%s10 + $0x70] sm:$0xf]
      %v3313 = vld [vmem:[%s10 + $0x74] sm:$0xf]
      %v3314 = vld [vmem:[%s10 + $0x78] sm:$0xf]
      %v3315 = vld [vmem:[%s10 + $0x7c] sm:$0xf]
      %v3316 = vld [vmem:[%s10 + $0x80] sm:$0xf]
      %v3317 = vld [vmem:[%s10 + $0x84] sm:$0xf]
      %v3318 = vld [vmem:[%s10 + $0x88] sm:$0xf]
      %v3319 = vld [vmem:[%s10 + $0x8c] sm:$0xf]
      %v3320 = vld [vmem:[%s9] sm:$0x1]
      %v3322 = vlaneseq
      %v3323 = vshrl.u32 %v3322, 7
      %v3324 = vsub.s32 0, %v3323
      %v3325 = vrot.slane %v3320, %v3324
      %v3363 = vunpack.c.l.b16 %v3248
      %v3364 = vunpack.c.l.b16 %v3249
      %v3365 = vunpack.c.l.b16 %v3250
      %v3366 = vunpack.c.l.b16 %v3251
      %v3367 = vunpack.c.l.b16 %v3252
      %v3368 = vunpack.c.l.b16 %v3253
      %v3369 = vunpack.c.l.b16 %v3254
      %v3370 = vunpack.c.l.b16 %v3255
      %v3371 = vunpack.c.l.b16 %v3256
      %v3372 = vunpack.c.l.b16 %v3257
      %v3373 = vunpack.c.l.b16 %v3258
      %v3374 = vunpack.c.l.b16 %v3259
      %v3375 = vunpack.c.l.b16 %v3260
      %v3376 = vunpack.c.l.b16 %v3261
      %v3377 = vunpack.c.l.b16 %v3262
      %v3378 = vunpack.c.l.b16 %v3263
      %v3379 = vunpack.c.l.b16 %v3264
      %v3380 = vunpack.c.l.b16 %v3265
      %v3381 = vunpack.c.l.b16 %v3266
      %v3382 = vunpack.c.l.b16 %v3267
      %v3383 = vunpack.c.l.b16 %v3268
      %v3384 = vunpack.c.l.b16 %v3269
      %v3385 = vunpack.c.l.b16 %v3270
      %v3386 = vunpack.c.l.b16 %v3271
      %v3387 = vunpack.c.l.b16 %v3272
      %v3388 = vunpack.c.l.b16 %v3273
      %v3389 = vunpack.c.l.b16 %v3274
      %v3390 = vunpack.c.l.b16 %v3275
      %v3391 = vunpack.c.l.b16 %v3276
      %v3392 = vunpack.c.l.b16 %v3277
      %v3393 = vunpack.c.l.b16 %v3278
      %v3394 = vunpack.c.l.b16 %v3279
      %v3395 = vunpack.c.l.b16 %v3280
      %v3396 = vunpack.c.l.b16 %v3281
      %v3397 = vunpack.c.l.b16 %v3282
      %v3398 = vunpack.c.l.b16 %v3283
      %v3399 = vpack.c.b16 %v3364, %v3363
      %v3400 = vpack.c.b16 %v3366, %v3365
      %v3401 = vpack.c.b16 %v3368, %v3367
      %v3402 = vpack.c.b16 %v3370, %v3369
      %v3403 = vpack.c.b16 %v3372, %v3371
      %v3404 = vpack.c.b16 %v3374, %v3373
      %v3405 = vpack.c.b16 %v3376, %v3375
      %v3406 = vpack.c.b16 %v3378, %v3377
      %v3407 = vpack.c.b16 %v3380, %v3379
      %v3408 = vpack.c.b16 %v3382, %v3381
      %v3409 = vpack.c.b16 %v3384, %v3383
      %v3410 = vpack.c.b16 %v3386, %v3385
      %v3411 = vpack.c.b16 %v3388, %v3387
      %v3412 = vpack.c.b16 %v3390, %v3389
      %v3413 = vpack.c.b16 %v3392, %v3391
      %v3414 = vpack.c.b16 %v3394, %v3393
      %v3415 = vpack.c.b16 %v3396, %v3395
      %v3416 = vpack.c.b16 %v3398, %v3397
      %v3436 = vsel %vm1626, %v2761, 0
      %v3439 = vsel %vm1626, %v2764, 0
      %v3442 = vsel %vm1626, %v2767, 0
      %v3445 = vsel %vm1626, %v2770, 0
      %v3448 = vsel %vm1626, %v2773, 0
      %v3451 = vsel %vm1626, %v2776, 0
      %v3454 = vsel %vm1626, %v2779, 0
      %v3457 = vsel %vm1626, %v2782, 0
      %v3460 = vsel %vm1626, %v2785, 0
      %v3463 = vsel %vm1626, %v2788, 0
      %v3466 = vsel %vm1626, %v2791, 0
      %v3469 = vsel %vm1626, %v2794, 0
      %v3472 = vsel %vm1626, %v2797, 0
      %v3475 = vsel %vm1626, %v2800, 0
      %v3478 = vsel %vm1626, %v2817, 0
      %v3481 = vsel %vm1626, %v1208, 0
      %3483 = vmatprep.subr.bf16.mxu0 0
      %3484 = vmatpush1.bf16.msra.mxu0 %v3406
      %3485 = vmatprep.subr.bf16.mxu0 0
      %3486 = vmatpush1.bf16.msra.mxu0 %v3405
      %3487 = vmatprep.subr.bf16.mxu0 0
      %3488 = vmatpush1.bf16.msra.mxu0 %v3404
      %3489 = vmatprep.subr.bf16.mxu0 0
      %3490 = vmatpush1.bf16.msra.mxu0 %v3403
      %3491 = vmatprep.subr.bf16.mxu0 0
      %3492 = vmatpush1.bf16.msra.mxu0 %v3402
      %3493 = vmatprep.subr.bf16.mxu0 0
      %3494 = vmatpush1.bf16.msra.mxu0 %v3401
      %3495 = vmatprep.subr.bf16.mxu0 0
      %3496 = vmatpush1.bf16.msra.mxu0 %v3400
      %3497 = vmatprep.subr.bf16.mxu0 0
      %3498 = vmatpush1.bf16.msra.mxu0 %v3399
      %3499 = vmatprep.subr.bf16.mxu0 0
      %3500 = vmatpush2.bf16.msra.mxu0 %v3414
      %3501 = vmatprep.subr.bf16.mxu0 0
      %3502 = vmatpush2.bf16.msra.mxu0 %v3413
      %3503 = vmatprep.subr.bf16.mxu0 0
      %3504 = vmatpush2.bf16.msra.mxu0 %v3412
      %3505 = vmatprep.subr.bf16.mxu0 0
      %3506 = vmatpush2.bf16.msra.mxu0 %v3411
      %3507 = vmatprep.subr.bf16.mxu0 0
      %3508 = vmatpush2.bf16.msra.mxu0 %v3410
      %3509 = vmatprep.subr.bf16.mxu0 0
      %3510 = vmatpush2.bf16.msra.mxu0 %v3409
      %3511 = vmatprep.subr.bf16.mxu0 0
      %3512 = vmatpush2.bf16.msra.mxu0 %v3408
      %3513 = vmatprep.subr.bf16.mxu0 0
      %3514 = vmatpush2.bf16.msra.mxu0 %v3407
      %3515 = vmatprep.mubr.bf16.mxu0 %v3201
      %3516 = vmatmul.mubr.bf16.gmra.mxu0 %v3073
      %v3517 = vpop.f32.mrf.mxu0
      %v3518 = vadd.f32 %v3325, %v3517
      %v3519 = vpop.f32.mrf.mxu0
      %v3520 = vpop.f32.mrf.mxu0
      %v3521 = vadd.f32 %v3325, %v3520
      %v3522 = vpop.f32.mrf.mxu0
      %3523 = vmatprep.mubr.bf16.mxu0 %v3204
      %3524 = vmatmul.mubr.bf16.gmra.mxu0 %v3076
      %v3525 = vpop.f32.mrf.mxu0
      %v3526 = vadd.f32 %v3325, %v3525
      %v3527 = vpop.f32.mrf.mxu0
      %v3528 = vpop.f32.mrf.mxu0
      %v3529 = vadd.f32 %v3325, %v3528
      %v3530 = vpop.f32.mrf.mxu0
      %3531 = vmatprep.mubr.bf16.mxu0 %v3207
      %3532 = vmatmul.mubr.bf16.gmra.mxu0 %v3079
      %v3533 = vpop.f32.mrf.mxu0
      %v3534 = vadd.f32 %v3325, %v3533
      %v3535 = vpop.f32.mrf.mxu0
      %v3536 = vpop.f32.mrf.mxu0
      %v3537 = vadd.f32 %v3325, %v3536
      %v3538 = vpop.f32.mrf.mxu0
      %3539 = vmatprep.mubr.bf16.mxu0 %v3210
      %3540 = vmatmul.mubr.bf16.gmra.mxu0 %v3082
      %v3541 = vpop.f32.mrf.mxu0
      %v3542 = vadd.f32 %v3325, %v3541
      %v3543 = vpop.f32.mrf.mxu0
      %v3544 = vpop.f32.mrf.mxu0
      %v3545 = vadd.f32 %v3325, %v3544
      %v3546 = vpop.f32.mrf.mxu0
      %3547 = vmatprep.mubr.bf16.mxu0 %v3213
      %3548 = vmatmul.mubr.bf16.gmra.mxu0 %v3085
      %v3549 = vpop.f32.mrf.mxu0
      %v3550 = vadd.f32 %v3325, %v3549
      %v3551 = vpop.f32.mrf.mxu0
      %v3552 = vpop.f32.mrf.mxu0
      %v3553 = vadd.f32 %v3325, %v3552
      %v3554 = vpop.f32.mrf.mxu0
      %3555 = vmatprep.mubr.bf16.mxu0 %v3216
      %3556 = vmatmul.mubr.bf16.gmra.mxu0 %v3088
      %v3557 = vpop.f32.mrf.mxu0
      %v3558 = vadd.f32 %v3325, %v3557
      %v3559 = vpop.f32.mrf.mxu0
      %v3560 = vpop.f32.mrf.mxu0
      %v3561 = vadd.f32 %v3325, %v3560
      %v3562 = vpop.f32.mrf.mxu0
      %3563 = vmatprep.mubr.bf16.mxu0 %v3219
      %3564 = vmatmul.mubr.bf16.gmra.mxu0 %v3091
      %v3565 = vpop.f32.mrf.mxu0
      %v3566 = vadd.f32 %v3325, %v3565
      %v3567 = vpop.f32.mrf.mxu0
      %v3568 = vpop.f32.mrf.mxu0
      %v3569 = vadd.f32 %v3325, %v3568
      %v3570 = vpop.f32.mrf.mxu0
      %3571 = vmatprep.mubr.bf16.mxu0 %v3222
      %3572 = vmatmul.mubr.bf16.gmra.mxu0 %v3094
      %v3573 = vpop.f32.mrf.mxu0
      %v3574 = vadd.f32 %v3325, %v3573
      %v3575 = vpop.f32.mrf.mxu0
      %v3576 = vpop.f32.mrf.mxu0
      %v3577 = vadd.f32 %v3325, %v3576
      %v3578 = vpop.f32.mrf.mxu0
      %3579 = vmatprep.mubr.bf16.mxu0 %v3225
      %3580 = vmatmul.mubr.bf16.gmra.mxu0 %v3097
      %v3581 = vpop.f32.mrf.mxu0
      %v3582 = vadd.f32 %v3325, %v3581
      %v3583 = vpop.f32.mrf.mxu0
      %v3584 = vpop.f32.mrf.mxu0
      %v3585 = vadd.f32 %v3325, %v3584
      %v3586 = vpop.f32.mrf.mxu0
      %3587 = vmatprep.mubr.bf16.mxu0 %v3228
      %3588 = vmatmul.mubr.bf16.gmra.mxu0 %v3100
      %v3589 = vpop.f32.mrf.mxu0
      %v3590 = vadd.f32 %v3325, %v3589
      %v3591 = vpop.f32.mrf.mxu0
      %v3592 = vpop.f32.mrf.mxu0
      %v3593 = vadd.f32 %v3325, %v3592
      %v3594 = vpop.f32.mrf.mxu0
      %3595 = vmatprep.mubr.bf16.mxu0 %v3231
      %3596 = vmatmul.mubr.bf16.gmra.mxu0 %v3103
      %v3597 = vpop.f32.mrf.mxu0
      %v3598 = vadd.f32 %v3325, %v3597
      %v3599 = vpop.f32.mrf.mxu0
      %v3600 = vpop.f32.mrf.mxu0
      %v3601 = vadd.f32 %v3325, %v3600
      %v3602 = vpop.f32.mrf.mxu0
      %3603 = vmatprep.mubr.bf16.mxu0 %v3234
      %3604 = vmatmul.mubr.bf16.gmra.mxu0 %v3106
      %v3605 = vpop.f32.mrf.mxu0
      %v3606 = vadd.f32 %v3325, %v3605
      %v3607 = vpop.f32.mrf.mxu0
      %v3608 = vpop.f32.mrf.mxu0
      %v3609 = vadd.f32 %v3325, %v3608
      %v3610 = vpop.f32.mrf.mxu0
      %3611 = vmatprep.mubr.bf16.mxu0 %v3237
      %3612 = vmatmul.mubr.bf16.gmra.mxu0 %v3109
      %v3613 = vpop.f32.mrf.mxu0
      %v3614 = vadd.f32 %v3325, %v3613
      %v3615 = vpop.f32.mrf.mxu0
      %v3616 = vpop.f32.mrf.mxu0
      %v3617 = vadd.f32 %v3325, %v3616
      %v3618 = vpop.f32.mrf.mxu0
      %3619 = vmatprep.mubr.bf16.mxu0 %v3240
      %3620 = vmatmul.mubr.bf16.gmra.mxu0 %v3112
      %v3621 = vpop.f32.mrf.mxu0
      %v3622 = vadd.f32 %v3325, %v3621
      %v3623 = vpop.f32.mrf.mxu0
      %v3624 = vpop.f32.mrf.mxu0
      %v3625 = vadd.f32 %v3325, %v3624
      %v3626 = vpop.f32.mrf.mxu0
      %3627 = vmatprep.mubr.bf16.mxu0 %v3243
      %3628 = vmatmul.mubr.bf16.gmra.mxu0 %v3115
      %v3629 = vpop.f32.mrf.mxu0
      %v3630 = vadd.f32 %v3325, %v3629
      %v3631 = vpop.f32.mrf.mxu0
      %v3632 = vpop.f32.mrf.mxu0
      %v3633 = vadd.f32 %v3325, %v3632
      %v3634 = vpop.f32.mrf.mxu0
      %3635 = vmatprep.mubr.bf16.mxu0 %v3246
      %3636 = vmatmul.mubr.bf16.gmra.mxu0 %v3118
      %v3637 = vpop.f32.mrf.mxu0
      %v3638 = vadd.f32 %v3325, %v3637
      %v3639 = vpop.f32.mrf.mxu0
      %v3640 = vpop.f32.mrf.mxu0
      %v3641 = vadd.f32 %v3325, %v3640
      %v3642 = vpop.f32.mrf.mxu0
      %3643 = vdwg.mxu0
      %3644 = vmatprep.subr.bf16.mxu0 0
      %3645 = vmatpush1.bf16.msra.mxu0 0
      %3646 = vmatprep.subr.bf16.mxu0 0
      %3647 = vmatpush1.bf16.msra.mxu0 0
      %3648 = vmatprep.subr.bf16.mxu0 0
      %3649 = vmatpush1.bf16.msra.mxu0 0
      %3650 = vmatprep.subr.bf16.mxu0 0
      %3651 = vmatpush1.bf16.msra.mxu0 0
      %3652 = vmatprep.subr.bf16.mxu0 0
      %3653 = vmatpush1.bf16.msra.mxu0 0
      %3654 = vmatprep.subr.bf16.mxu0 0
      %3655 = vmatpush1.bf16.msra.mxu0 0
      %3656 = vmatprep.subr.bf16.mxu0 0
      %3657 = vmatpush1.bf16.msra.mxu0 %v3416
      %3658 = vmatprep.subr.bf16.mxu0 0
      %3659 = vmatpush1.bf16.msra.mxu0 %v3415
      %3660 = vmatprep.subr.bf16.mxu0 0
      %3661 = vmatpush2.bf16.msra.mxu0 0
      %3662 = vmatprep.subr.bf16.mxu0 0
      %3663 = vmatpush2.bf16.msra.mxu0 0
      %3664 = vmatprep.subr.bf16.mxu0 0
      %3665 = vmatpush2.bf16.msra.mxu0 0
      %3666 = vmatprep.subr.bf16.mxu0 0
      %3667 = vmatpush2.bf16.msra.mxu0 0
      %3668 = vmatprep.subr.bf16.mxu0 0
      %3669 = vmatpush2.bf16.msra.mxu0 0
      %3670 = vmatprep.subr.bf16.mxu0 0
      %3671 = vmatpush2.bf16.msra.mxu0 0
      %3672 = vmatprep.subr.bf16.mxu0 0
      %3673 = vmatpush2.bf16.msra.mxu0 0
      %3674 = vmatprep.subr.bf16.mxu0 0
      %3675 = vmatpush2.bf16.msra.mxu0 0
      %3676 = vmatprep.mubr.bf16.mxu0 0
      %3677 = vmatmul.mubr.bf16.gmra.mxu0 %v3436
      %v3678 = vpop.f32.mrf.mxu0
      %v3679 = vadd.f32 %v3518, %v3678
      %v3680 = vpop.f32.mrf.mxu0
      %v3681 = vpop.f32.mrf.mxu0
      %v3682 = vadd.f32 %v3521, %v3681
      %v3683 = vpop.f32.mrf.mxu0
      %3684 = vmatprep.mubr.bf16.mxu0 0
      %3685 = vmatmul.mubr.bf16.gmra.mxu0 %v3439
      %v3686 = vpop.f32.mrf.mxu0
      %v3687 = vadd.f32 %v3526, %v3686
      %v3688 = vpop.f32.mrf.mxu0
      %v3689 = vpop.f32.mrf.mxu0
      %v3690 = vadd.f32 %v3529, %v3689
      %v3691 = vpop.f32.mrf.mxu0
      %3692 = vmatprep.mubr.bf16.mxu0 0
      %3693 = vmatmul.mubr.bf16.gmra.mxu0 %v3442
      %v3694 = vpop.f32.mrf.mxu0
      %v3695 = vadd.f32 %v3534, %v3694
      %v3696 = vpop.f32.mrf.mxu0
      %v3697 = vpop.f32.mrf.mxu0
      %v3698 = vadd.f32 %v3537, %v3697
      %v3699 = vpop.f32.mrf.mxu0
      %3700 = vmatprep.mubr.bf16.mxu0 0
      %3701 = vmatmul.mubr.bf16.gmra.mxu0 %v3445
      %v3702 = vpop.f32.mrf.mxu0
      %v3703 = vadd.f32 %v3542, %v3702
      %v3704 = vpop.f32.mrf.mxu0
      %v3705 = vpop.f32.mrf.mxu0
      %v3706 = vadd.f32 %v3545, %v3705
      %v3707 = vpop.f32.mrf.mxu0
      %3708 = vmatprep.mubr.bf16.mxu0 0
      %3709 = vmatmul.mubr.bf16.gmra.mxu0 %v3448
      %v3710 = vpop.f32.mrf.mxu0
      %v3711 = vadd.f32 %v3550, %v3710
      %v3712 = vpop.f32.mrf.mxu0
      %v3713 = vpop.f32.mrf.mxu0
      %v3714 = vadd.f32 %v3553, %v3713
      %v3715 = vpop.f32.mrf.mxu0
      %3716 = vmatprep.mubr.bf16.mxu0 0
      %3717 = vmatmul.mubr.bf16.gmra.mxu0 %v3451
      %v3718 = vpop.f32.mrf.mxu0
      %v3719 = vadd.f32 %v3558, %v3718
      %v3720 = vpop.f32.mrf.mxu0
      %v3721 = vpop.f32.mrf.mxu0
      %v3722 = vadd.f32 %v3561, %v3721
      %v3723 = vpop.f32.mrf.mxu0
      %3724 = vmatprep.mubr.bf16.mxu0 0
      %3725 = vmatmul.mubr.bf16.gmra.mxu0 %v3454
      %v3726 = vpop.f32.mrf.mxu0
      %v3727 = vadd.f32 %v3566, %v3726
      %v3728 = vpop.f32.mrf.mxu0
      %v3729 = vpop.f32.mrf.mxu0
      %v3730 = vadd.f32 %v3569, %v3729
      %v3731 = vpop.f32.mrf.mxu0
      %3732 = vmatprep.mubr.bf16.mxu0 0
      %3733 = vmatmul.mubr.bf16.gmra.mxu0 %v3457
      %v3734 = vpop.f32.mrf.mxu0
      %v3735 = vadd.f32 %v3574, %v3734
      %v3736 = vpop.f32.mrf.mxu0
      %v3737 = vpop.f32.mrf.mxu0
      %v3738 = vadd.f32 %v3577, %v3737
      %v3739 = vpop.f32.mrf.mxu0
      %3740 = vmatprep.mubr.bf16.mxu0 0
      %3741 = vmatmul.mubr.bf16.gmra.mxu0 %v3460
      %v3742 = vpop.f32.mrf.mxu0
      %v3743 = vadd.f32 %v3582, %v3742
      %v3744 = vpop.f32.mrf.mxu0
      %v3745 = vpop.f32.mrf.mxu0
      %v3746 = vadd.f32 %v3585, %v3745
      %v3747 = vpop.f32.mrf.mxu0
      %3748 = vmatprep.mubr.bf16.mxu0 0
      %3749 = vmatmul.mubr.bf16.gmra.mxu0 %v3463
      %v3750 = vpop.f32.mrf.mxu0
      %v3751 = vadd.f32 %v3590, %v3750
      %v3752 = vpop.f32.mrf.mxu0
      %v3753 = vpop.f32.mrf.mxu0
      %v3754 = vadd.f32 %v3593, %v3753
      %v3755 = vpop.f32.mrf.mxu0
      %3756 = vmatprep.mubr.bf16.mxu0 0
      %3757 = vmatmul.mubr.bf16.gmra.mxu0 %v3466
      %v3758 = vpop.f32.mrf.mxu0
      %v3759 = vadd.f32 %v3598, %v3758
      %v3760 = vpop.f32.mrf.mxu0
      %v3761 = vpop.f32.mrf.mxu0
      %v3762 = vadd.f32 %v3601, %v3761
      %v3763 = vpop.f32.mrf.mxu0
      %3764 = vmatprep.mubr.bf16.mxu0 0
      %3765 = vmatmul.mubr.bf16.gmra.mxu0 %v3469
      %v3766 = vpop.f32.mrf.mxu0
      %v3767 = vadd.f32 %v3606, %v3766
      %v3768 = vpop.f32.mrf.mxu0
      %v3769 = vpop.f32.mrf.mxu0
      %v3770 = vadd.f32 %v3609, %v3769
      %v3771 = vpop.f32.mrf.mxu0
      %3772 = vmatprep.mubr.bf16.mxu0 0
      %3773 = vmatmul.mubr.bf16.gmra.mxu0 %v3472
      %v3774 = vpop.f32.mrf.mxu0
      %v3775 = vadd.f32 %v3614, %v3774
      %v3776 = vpop.f32.mrf.mxu0
      %v3777 = vpop.f32.mrf.mxu0
      %v3778 = vadd.f32 %v3617, %v3777
      %v3779 = vpop.f32.mrf.mxu0
      %3780 = vmatprep.mubr.bf16.mxu0 0
      %3781 = vmatmul.mubr.bf16.gmra.mxu0 %v3475
      %v3782 = vpop.f32.mrf.mxu0
      %v3783 = vadd.f32 %v3622, %v3782
      %v3784 = vpop.f32.mrf.mxu0
      %v3785 = vpop.f32.mrf.mxu0
      %v3786 = vadd.f32 %v3625, %v3785
      %v3787 = vpop.f32.mrf.mxu0
      %3788 = vmatprep.mubr.bf16.mxu0 0
      %3789 = vmatmul.mubr.bf16.gmra.mxu0 %v3478
      %v3790 = vpop.f32.mrf.mxu0
      %v3791 = vadd.f32 %v3630, %v3790
      %v3792 = vpop.f32.mrf.mxu0
      %v3793 = vpop.f32.mrf.mxu0
      %v3794 = vadd.f32 %v3633, %v3793
      %v3795 = vpop.f32.mrf.mxu0
      %3796 = vmatprep.mubr.bf16.mxu0 0
      %3797 = vmatmul.mubr.bf16.gmra.mxu0 %v3481
      %v3798 = vpop.f32.mrf.mxu0
      %v3799 = vadd.f32 %v3638, %v3798
      %v3800 = vpop.f32.mrf.mxu0
      %v3801 = vpop.f32.mrf.mxu0
      %v3802 = vadd.f32 %v3641, %v3801
      %v3803 = vpop.f32.mrf.mxu0
      %3804 = vdwg.mxu0
      %v3805 = vld [vmem:[%s11] sm:$0x1]
      %v3807 = vlaneseq
      %v3808 = vshrl.u32 %v3807, 7
      %v3809 = vsub.s32 0, %v3808
      %v3810 = vrot.slane %v3805, %v3809
      %v3848 = vunpack.c.l.b16 %v3284
      %v3849 = vunpack.c.l.b16 %v3285
      %v3850 = vunpack.c.l.b16 %v3286
      %v3851 = vunpack.c.l.b16 %v3287
      %v3852 = vunpack.c.l.b16 %v3288
      %v3853 = vunpack.c.l.b16 %v3289
      %v3854 = vunpack.c.l.b16 %v3290
      %v3855 = vunpack.c.l.b16 %v3291
      %v3856 = vunpack.c.l.b16 %v3292
      %v3857 = vunpack.c.l.b16 %v3293
      %v3858 = vunpack.c.l.b16 %v3294
      %v3859 = vunpack.c.l.b16 %v3295
      %v3860 = vunpack.c.l.b16 %v3296
      %v3861 = vunpack.c.l.b16 %v3297
      %v3862 = vunpack.c.l.b16 %v3298
      %v3863 = vunpack.c.l.b16 %v3299
      %v3864 = vunpack.c.l.b16 %v3300
      %v3865 = vunpack.c.l.b16 %v3301
      %v3866 = vunpack.c.l.b16 %v3302
      %v3867 = vunpack.c.l.b16 %v3303
      %v3868 = vunpack.c.l.b16 %v3304
      %v3869 = vunpack.c.l.b16 %v3305
      %v3870 = vunpack.c.l.b16 %v3306
      %v3871 = vunpack.c.l.b16 %v3307
      %v3872 = vunpack.c.l.b16 %v3308
      %v3873 = vunpack.c.l.b16 %v3309
      %v3874 = vunpack.c.l.b16 %v3310
      %v3875 = vunpack.c.l.b16 %v3311
      %v3876 = vunpack.c.l.b16 %v3312
      %v3877 = vunpack.c.l.b16 %v3313
      %v3878 = vunpack.c.l.b16 %v3314
      %v3879 = vunpack.c.l.b16 %v3315
      %v3880 = vunpack.c.l.b16 %v3316
      %v3881 = vunpack.c.l.b16 %v3317
      %v3882 = vunpack.c.l.b16 %v3318
      %v3883 = vunpack.c.l.b16 %v3319
      %v3884 = vpack.c.b16 %v3849, %v3848
      %v3885 = vpack.c.b16 %v3851, %v3850
      %v3886 = vpack.c.b16 %v3853, %v3852
      %v3887 = vpack.c.b16 %v3855, %v3854
      %v3888 = vpack.c.b16 %v3857, %v3856
      %v3889 = vpack.c.b16 %v3859, %v3858
      %v3890 = vpack.c.b16 %v3861, %v3860
      %v3891 = vpack.c.b16 %v3863, %v3862
      %v3892 = vpack.c.b16 %v3865, %v3864
      %v3893 = vpack.c.b16 %v3867, %v3866
      %v3894 = vpack.c.b16 %v3869, %v3868
      %v3895 = vpack.c.b16 %v3871, %v3870
      %v3896 = vpack.c.b16 %v3873, %v3872
      %v3897 = vpack.c.b16 %v3875, %v3874
      %v3898 = vpack.c.b16 %v3877, %v3876
      %v3899 = vpack.c.b16 %v3879, %v3878
      %v3900 = vpack.c.b16 %v3881, %v3880
      %v3901 = vpack.c.b16 %v3883, %v3882
      %3920 = vmatprep.subr.bf16.mxu0 0
      %3921 = vmatpush1.bf16.msra.mxu0 %v3891
      %3922 = vmatprep.subr.bf16.mxu0 0
      %3923 = vmatpush1.bf16.msra.mxu0 %v3890
      %3924 = vmatprep.subr.bf16.mxu0 0
      %3925 = vmatpush1.bf16.msra.mxu0 %v3889
      %3926 = vmatprep.subr.bf16.mxu0 0
      %3927 = vmatpush1.bf16.msra.mxu0 %v3888
      %3928 = vmatprep.subr.bf16.mxu0 0
      %3929 = vmatpush1.bf16.msra.mxu0 %v3887
      %3930 = vmatprep.subr.bf16.mxu0 0
      %3931 = vmatpush1.bf16.msra.mxu0 %v3886
      %3932 = vmatprep.subr.bf16.mxu0 0
      %3933 = vmatpush1.bf16.msra.mxu0 %v3885
      %3934 = vmatprep.subr.bf16.mxu0 0
      %3935 = vmatpush1.bf16.msra.mxu0 %v3884
      %3936 = vmatprep.subr.bf16.mxu0 0
      %3937 = vmatpush2.bf16.msra.mxu0 %v3899
      %3938 = vmatprep.subr.bf16.mxu0 0
      %3939 = vmatpush2.bf16.msra.mxu0 %v3898
      %3940 = vmatprep.subr.bf16.mxu0 0
      %3941 = vmatpush2.bf16.msra.mxu0 %v3897
      %3942 = vmatprep.subr.bf16.mxu0 0
      %3943 = vmatpush2.bf16.msra.mxu0 %v3896
      %3944 = vmatprep.subr.bf16.mxu0 0
      %3945 = vmatpush2.bf16.msra.mxu0 %v3895
      %3946 = vmatprep.subr.bf16.mxu0 0
      %3947 = vmatpush2.bf16.msra.mxu0 %v3894
      %3948 = vmatprep.subr.bf16.mxu0 0
      %3949 = vmatpush2.bf16.msra.mxu0 %v3893
      %3950 = vmatprep.subr.bf16.mxu0 0
      %3951 = vmatpush2.bf16.msra.mxu0 %v3892
      %3952 = vmatprep.mubr.bf16.mxu0 %v3201
      %3953 = vmatmul.mubr.bf16.gmra.mxu0 %v3073
      %v3954 = vpop.f32.mrf.mxu0
      %v3955 = vadd.f32 %v3810, %v3954
      %v3956 = vpop.f32.mrf.mxu0
      %v3957 = vpop.f32.mrf.mxu0
      %v3958 = vadd.f32 %v3810, %v3957
      %v3959 = vpop.f32.mrf.mxu0
      %3960 = vmatprep.mubr.bf16.mxu0 %v3204
      %3961 = vmatmul.mubr.bf16.gmra.mxu0 %v3076
      %v3962 = vpop.f32.mrf.mxu0
      %v3963 = vadd.f32 %v3810, %v3962
      %v3964 = vpop.f32.mrf.mxu0
      %v3965 = vpop.f32.mrf.mxu0
      %v3966 = vadd.f32 %v3810, %v3965
      %v3967 = vpop.f32.mrf.mxu0
      %3968 = vmatprep.mubr.bf16.mxu0 %v3207
      %3969 = vmatmul.mubr.bf16.gmra.mxu0 %v3079
      %v3970 = vpop.f32.mrf.mxu0
      %v3971 = vadd.f32 %v3810, %v3970
      %v3972 = vpop.f32.mrf.mxu0
      %v3973 = vpop.f32.mrf.mxu0
      %v3974 = vadd.f32 %v3810, %v3973
      %v3975 = vpop.f32.mrf.mxu0
      %3976 = vmatprep.mubr.bf16.mxu0 %v3210
      %3977 = vmatmul.mubr.bf16.gmra.mxu0 %v3082
      %v3978 = vpop.f32.mrf.mxu0
      %v3979 = vadd.f32 %v3810, %v3978
      %v3980 = vpop.f32.mrf.mxu0
      %v3981 = vpop.f32.mrf.mxu0
      %v3982 = vadd.f32 %v3810, %v3981
      %v3983 = vpop.f32.mrf.mxu0
      %3984 = vmatprep.mubr.bf16.mxu0 %v3213
      %3985 = vmatmul.mubr.bf16.gmra.mxu0 %v3085
      %v3986 = vpop.f32.mrf.mxu0
      %v3987 = vadd.f32 %v3810, %v3986
      %v3988 = vpop.f32.mrf.mxu0
      %v3989 = vpop.f32.mrf.mxu0
      %v3990 = vadd.f32 %v3810, %v3989
      %v3991 = vpop.f32.mrf.mxu0
      %3992 = vmatprep.mubr.bf16.mxu0 %v3216
      %3993 = vmatmul.mubr.bf16.gmra.mxu0 %v3088
      %v3994 = vpop.f32.mrf.mxu0
      %v3995 = vadd.f32 %v3810, %v3994
      %v3996 = vpop.f32.mrf.mxu0
      %v3997 = vpop.f32.mrf.mxu0
      %v3998 = vadd.f32 %v3810, %v3997
      %v3999 = vpop.f32.mrf.mxu0
      %4000 = vmatprep.mubr.bf16.mxu0 %v3219
      %4001 = vmatmul.mubr.bf16.gmra.mxu0 %v3091
      %v4002 = vpop.f32.mrf.mxu0
      %v4003 = vadd.f32 %v3810, %v4002
      %v4004 = vpop.f32.mrf.mxu0
      %v4005 = vpop.f32.mrf.mxu0
      %v4006 = vadd.f32 %v3810, %v4005
      %v4007 = vpop.f32.mrf.mxu0
      %4008 = vmatprep.mubr.bf16.mxu0 %v3222
      %4009 = vmatmul.mubr.bf16.gmra.mxu0 %v3094
      %v4010 = vpop.f32.mrf.mxu0
      %v4011 = vadd.f32 %v3810, %v4010
      %v4012 = vpop.f32.mrf.mxu0
      %v4013 = vpop.f32.mrf.mxu0
      %v4014 = vadd.f32 %v3810, %v4013
      %v4015 = vpop.f32.mrf.mxu0
      %4016 = vmatprep.mubr.bf16.mxu0 %v3225
      %4017 = vmatmul.mubr.bf16.gmra.mxu0 %v3097
      %v4018 = vpop.f32.mrf.mxu0
      %v4019 = vadd.f32 %v3810, %v4018
      %v4020 = vpop.f32.mrf.mxu0
      %v4021 = vpop.f32.mrf.mxu0
      %v4022 = vadd.f32 %v3810, %v4021
      %v4023 = vpop.f32.mrf.mxu0
      %4024 = vmatprep.mubr.bf16.mxu0 %v3228
      %4025 = vmatmul.mubr.bf16.gmra.mxu0 %v3100
      %v4026 = vpop.f32.mrf.mxu0
      %v4027 = vadd.f32 %v3810, %v4026
      %v4028 = vpop.f32.mrf.mxu0
      %v4029 = vpop.f32.mrf.mxu0
      %v4030 = vadd.f32 %v3810, %v4029
      %v4031 = vpop.f32.mrf.mxu0
      %4032 = vmatprep.mubr.bf16.mxu0 %v3231
      %4033 = vmatmul.mubr.bf16.gmra.mxu0 %v3103
      %v4034 = vpop.f32.mrf.mxu0
      %v4035 = vadd.f32 %v3810, %v4034
      %v4036 = vpop.f32.mrf.mxu0
      %v4037 = vpop.f32.mrf.mxu0
      %v4038 = vadd.f32 %v3810, %v4037
      %v4039 = vpop.f32.mrf.mxu0
      %4040 = vmatprep.mubr.bf16.mxu0 %v3234
      %4041 = vmatmul.mubr.bf16.gmra.mxu0 %v3106
      %v4042 = vpop.f32.mrf.mxu0
      %v4043 = vadd.f32 %v3810, %v4042
      %v4044 = vpop.f32.mrf.mxu0
      %v4045 = vpop.f32.mrf.mxu0
      %v4046 = vadd.f32 %v3810, %v4045
      %v4047 = vpop.f32.mrf.mxu0
      %4048 = vmatprep.mubr.bf16.mxu0 %v3237
      %4049 = vmatmul.mubr.bf16.gmra.mxu0 %v3109
      %v4050 = vpop.f32.mrf.mxu0
      %v4051 = vadd.f32 %v3810, %v4050
      %v4052 = vpop.f32.mrf.mxu0
      %v4053 = vpop.f32.mrf.mxu0
      %v4054 = vadd.f32 %v3810, %v4053
      %v4055 = vpop.f32.mrf.mxu0
      %4056 = vmatprep.mubr.bf16.mxu0 %v3240
      %4057 = vmatmul.mubr.bf16.gmra.mxu0 %v3112
      %v4058 = vpop.f32.mrf.mxu0
      %v4059 = vadd.f32 %v3810, %v4058
      %v4060 = vpop.f32.mrf.mxu0
      %v4061 = vpop.f32.mrf.mxu0
      %v4062 = vadd.f32 %v3810, %v4061
      %v4063 = vpop.f32.mrf.mxu0
      %4064 = vmatprep.mubr.bf16.mxu0 %v3243
      %4065 = vmatmul.mubr.bf16.gmra.mxu0 %v3115
      %v4066 = vpop.f32.mrf.mxu0
      %v4067 = vadd.f32 %v3810, %v4066
      %v4068 = vpop.f32.mrf.mxu0
      %v4069 = vpop.f32.mrf.mxu0
      %v4070 = vadd.f32 %v3810, %v4069
      %v4071 = vpop.f32.mrf.mxu0
      %4072 = vmatprep.mubr.bf16.mxu0 %v3246
      %4073 = vmatmul.mubr.bf16.gmra.mxu0 %v3118
      %v4074 = vpop.f32.mrf.mxu0
      %v4075 = vadd.f32 %v3810, %v4074
      %v4076 = vpop.f32.mrf.mxu0
      %v4077 = vpop.f32.mrf.mxu0
      %v4078 = vadd.f32 %v3810, %v4077
      %v4079 = vpop.f32.mrf.mxu0
      %4080 = vdwg.mxu0
      %4081 = vmatprep.subr.bf16.mxu0 0
      %4082 = vmatpush1.bf16.msra.mxu0 0
      %4083 = vmatprep.subr.bf16.mxu0 0
      %4084 = vmatpush1.bf16.msra.mxu0 0
      %4085 = vmatprep.subr.bf16.mxu0 0
      %4086 = vmatpush1.bf16.msra.mxu0 0
      %4087 = vmatprep.subr.bf16.mxu0 0
      %4088 = vmatpush1.bf16.msra.mxu0 0
      %4089 = vmatprep.subr.bf16.mxu0 0
      %4090 = vmatpush1.bf16.msra.mxu0 0
      %4091 = vmatprep.subr.bf16.mxu0 0
      %4092 = vmatpush1.bf16.msra.mxu0 0
      %4093 = vmatprep.subr.bf16.mxu0 0
      %4094 = vmatpush1.bf16.msra.mxu0 %v3901
      %4095 = vmatprep.subr.bf16.mxu0 0
      %4096 = vmatpush1.bf16.msra.mxu0 %v3900
      %4097 = vmatprep.subr.bf16.mxu0 0
      %4098 = vmatpush2.bf16.msra.mxu0 0
      %4099 = vmatprep.subr.bf16.mxu0 0
      %4100 = vmatpush2.bf16.msra.mxu0 0
      %4101 = vmatprep.subr.bf16.mxu0 0
      %4102 = vmatpush2.bf16.msra.mxu0 0
      %4103 = vmatprep.subr.bf16.mxu0 0
      %4104 = vmatpush2.bf16.msra.mxu0 0
      %4105 = vmatprep.subr.bf16.mxu0 0
      %4106 = vmatpush2.bf16.msra.mxu0 0
      %4107 = vmatprep.subr.bf16.mxu0 0
      %4108 = vmatpush2.bf16.msra.mxu0 0
      %4109 = vmatprep.subr.bf16.mxu0 0
      %4110 = vmatpush2.bf16.msra.mxu0 0
      %4111 = vmatprep.subr.bf16.mxu0 0
      %4112 = vmatpush2.bf16.msra.mxu0 0
      %4113 = vmatprep.mubr.bf16.mxu0 0
      %4114 = vmatmul.mubr.bf16.gmra.mxu0 %v3436
      %v4115 = vpop.f32.mrf.mxu0
      %v4116 = vadd.f32 %v3955, %v4115
      %v4117 = vpop.f32.mrf.mxu0
      %v4118 = vpop.f32.mrf.mxu0
      %v4119 = vadd.f32 %v3958, %v4118
      %v4120 = vpop.f32.mrf.mxu0
      %4121 = vmatprep.mubr.bf16.mxu0 0
      %4122 = vmatmul.mubr.bf16.gmra.mxu0 %v3439
      %v4123 = vpop.f32.mrf.mxu0
      %v4124 = vadd.f32 %v3963, %v4123
      %v4125 = vpop.f32.mrf.mxu0
      %v4126 = vpop.f32.mrf.mxu0
      %v4127 = vadd.f32 %v3966, %v4126
      %v4128 = vpop.f32.mrf.mxu0
      %4129 = vmatprep.mubr.bf16.mxu0 0
      %4130 = vmatmul.mubr.bf16.gmra.mxu0 %v3442
      %v4131 = vpop.f32.mrf.mxu0
      %v4132 = vadd.f32 %v3971, %v4131
      %v4133 = vpop.f32.mrf.mxu0
      %v4134 = vpop.f32.mrf.mxu0
      %v4135 = vadd.f32 %v3974, %v4134
      %v4136 = vpop.f32.mrf.mxu0
      %4137 = vmatprep.mubr.bf16.mxu0 0
      %4138 = vmatmul.mubr.bf16.gmra.mxu0 %v3445
      %v4139 = vpop.f32.mrf.mxu0
      %v4140 = vadd.f32 %v3979, %v4139
      %v4141 = vpop.f32.mrf.mxu0
      %v4142 = vpop.f32.mrf.mxu0
      %v4143 = vadd.f32 %v3982, %v4142
      %v4144 = vpop.f32.mrf.mxu0
      %4145 = vmatprep.mubr.bf16.mxu0 0
      %4146 = vmatmul.mubr.bf16.gmra.mxu0 %v3448
      %v4147 = vpop.f32.mrf.mxu0
      %v4148 = vadd.f32 %v3987, %v4147
      %v4149 = vpop.f32.mrf.mxu0
      %v4150 = vpop.f32.mrf.mxu0
      %v4151 = vadd.f32 %v3990, %v4150
      %v4152 = vpop.f32.mrf.mxu0
      %4153 = vmatprep.mubr.bf16.mxu0 0
      %4154 = vmatmul.mubr.bf16.gmra.mxu0 %v3451
      %v4155 = vpop.f32.mrf.mxu0
      %v4156 = vadd.f32 %v3995, %v4155
      %v4157 = vpop.f32.mrf.mxu0
      %v4158 = vpop.f32.mrf.mxu0
      %v4159 = vadd.f32 %v3998, %v4158
      %v4160 = vpop.f32.mrf.mxu0
      %4161 = vmatprep.mubr.bf16.mxu0 0
      %4162 = vmatmul.mubr.bf16.gmra.mxu0 %v3454
      %v4163 = vpop.f32.mrf.mxu0
      %v4164 = vadd.f32 %v4003, %v4163
      %v4165 = vpop.f32.mrf.mxu0
      %v4166 = vpop.f32.mrf.mxu0
      %v4167 = vadd.f32 %v4006, %v4166
      %v4168 = vpop.f32.mrf.mxu0
      %4169 = vmatprep.mubr.bf16.mxu0 0
      %4170 = vmatmul.mubr.bf16.gmra.mxu0 %v3457
      %v4171 = vpop.f32.mrf.mxu0
      %v4172 = vadd.f32 %v4011, %v4171
      %v4173 = vpop.f32.mrf.mxu0
      %v4174 = vpop.f32.mrf.mxu0
      %v4175 = vadd.f32 %v4014, %v4174
      %v4176 = vpop.f32.mrf.mxu0
      %4177 = vmatprep.mubr.bf16.mxu0 0
      %4178 = vmatmul.mubr.bf16.gmra.mxu0 %v3460
      %v4179 = vpop.f32.mrf.mxu0
      %v4180 = vadd.f32 %v4019, %v4179
      %v4181 = vpop.f32.mrf.mxu0
      %v4182 = vpop.f32.mrf.mxu0
      %v4183 = vadd.f32 %v4022, %v4182
      %v4184 = vpop.f32.mrf.mxu0
      %4185 = vmatprep.mubr.bf16.mxu0 0
      %4186 = vmatmul.mubr.bf16.gmra.mxu0 %v3463
      %v4187 = vpop.f32.mrf.mxu0
      %v4188 = vadd.f32 %v4027, %v4187
      %v4189 = vpop.f32.mrf.mxu0
      %v4190 = vpop.f32.mrf.mxu0
      %v4191 = vadd.f32 %v4030, %v4190
      %v4192 = vpop.f32.mrf.mxu0
      %4193 = vmatprep.mubr.bf16.mxu0 0
      %4194 = vmatmul.mubr.bf16.gmra.mxu0 %v3466
      %v4195 = vpop.f32.mrf.mxu0
      %v4196 = vadd.f32 %v4035, %v4195
      %v4197 = vpop.f32.mrf.mxu0
      %v4198 = vpop.f32.mrf.mxu0
      %v4199 = vadd.f32 %v4038, %v4198
      %v4200 = vpop.f32.mrf.mxu0
      %4201 = vmatprep.mubr.bf16.mxu0 0
      %4202 = vmatmul.mubr.bf16.gmra.mxu0 %v3469
      %v4203 = vpop.f32.mrf.mxu0
      %v4204 = vadd.f32 %v4043, %v4203
      %v4205 = vpop.f32.mrf.mxu0
      %v4206 = vpop.f32.mrf.mxu0
      %v4207 = vadd.f32 %v4046, %v4206
      %v4208 = vpop.f32.mrf.mxu0
      %4209 = vmatprep.mubr.bf16.mxu0 0
      %4210 = vmatmul.mubr.bf16.gmra.mxu0 %v3472
      %v4211 = vpop.f32.mrf.mxu0
      %v4212 = vadd.f32 %v4051, %v4211
      %v4213 = vpop.f32.mrf.mxu0
      %v4214 = vpop.f32.mrf.mxu0
      %v4215 = vadd.f32 %v4054, %v4214
      %v4216 = vpop.f32.mrf.mxu0
      %4217 = vmatprep.mubr.bf16.mxu0 0
      %4218 = vmatmul.mubr.bf16.gmra.mxu0 %v3475
      %v4219 = vpop.f32.mrf.mxu0
      %v4220 = vadd.f32 %v4059, %v4219
      %v4221 = vpop.f32.mrf.mxu0
      %v4222 = vpop.f32.mrf.mxu0
      %v4223 = vadd.f32 %v4062, %v4222
      %v4224 = vpop.f32.mrf.mxu0
      %4225 = vmatprep.mubr.bf16.mxu0 0
      %4226 = vmatmul.mubr.bf16.gmra.mxu0 %v3478
      %v4227 = vpop.f32.mrf.mxu0
      %v4228 = vadd.f32 %v4067, %v4227
      %v4229 = vpop.f32.mrf.mxu0
      %v4230 = vpop.f32.mrf.mxu0
      %v4231 = vadd.f32 %v4070, %v4230
      %v4232 = vpop.f32.mrf.mxu0
      %4233 = vmatprep.mubr.bf16.mxu0 0
      %4234 = vmatmul.mubr.bf16.gmra.mxu0 %v3481
      %v4235 = vpop.f32.mrf.mxu0
      %v4236 = vadd.f32 %v4075, %v4235
      %v4237 = vpop.f32.mrf.mxu0
      %v4238 = vpop.f32.mrf.mxu0
      %v4239 = vadd.f32 %v4078, %v4238
      %v4240 = vpop.f32.mrf.mxu0
      %4241 = vdwg.mxu0
      %v4242 = vsub.f32 %v2112, %v2214
      %v4243 = vsub.f32 %v2113, %v2214
      %v4244 = vsub.f32 %v2114, %v2214
      %v4245 = vsub.f32 %v2115, %v2214
      %v4246 = vsub.f32 %v2116, %v2214
      %v4247 = vsub.f32 %v2117, %v2214
      %v4248 = vsub.f32 %v2118, %v2214
      %v4249 = vsub.f32 %v2119, %v2214
      %v4250 = vsub.f32 %v2120, %v2214
      %v4251 = vsub.f32 %v2121, %v2214
      %v4252 = vsub.f32 %v2122, %v2214
      %v4253 = vsub.f32 %v2123, %v2214
      %v4254 = vsub.f32 %v2124, %v2214
      %v4255 = vsub.f32 %v2125, %v2214
      %v4256 = vsub.f32 %v2126, %v2214
      %v4257 = vsub.f32 %v2127, %v2214
      %v4258 = vsub.f32 %v2128, %v2214
      %v4259 = vsub.f32 %v2129, %v2214
      %v4260 = vsub.f32 %v2130, %v2214
      %v4261 = vsub.f32 %v2131, %v2214
      %v4262 = vsub.f32 %v2132, %v2214
      %v4263 = vsub.f32 %v2133, %v2214
      %v4264 = vsub.f32 %v2134, %v2214
      %v4265 = vsub.f32 %v2135, %v2214
      %v4266 = vsub.f32 %v2136, %v2214
      %v4267 = vsub.f32 %v2137, %v2214
      %v4268 = vsub.f32 %v2138, %v2214
      %v4269 = vsub.f32 %v2139, %v2214
      %v4270 = vsub.f32 %v2140, %v2214
      %v4271 = vsub.f32 %v2141, %v2214
      %v4272 = vsub.f32 %v2142, %v2214
      %v4273 = vsub.f32 %v2143, %v2214
      %v4274 = vmul.f32 %v4242, %v2321
      %v4275 = vmul.f32 %v4243, %v2321
      %v4276 = vmul.f32 %v4244, %v2321
      %v4277 = vmul.f32 %v4245, %v2321
      %v4278 = vmul.f32 %v4246, %v2321
      %v4279 = vmul.f32 %v4247, %v2321
      %v4280 = vmul.f32 %v4248, %v2321
      %v4281 = vmul.f32 %v4249, %v2321
      %v4282 = vmul.f32 %v4250, %v2321
      %v4283 = vmul.f32 %v4251, %v2321
      %v4284 = vmul.f32 %v4252, %v2321
      %v4285 = vmul.f32 %v4253, %v2321
      %v4286 = vmul.f32 %v4254, %v2321
      %v4287 = vmul.f32 %v4255, %v2321
      %v4288 = vmul.f32 %v4256, %v2321
      %v4289 = vmul.f32 %v4257, %v2321
      %v4290 = vmul.f32 %v4258, %v2321
      %v4291 = vmul.f32 %v4259, %v2321
      %v4292 = vmul.f32 %v4260, %v2321
      %v4293 = vmul.f32 %v4261, %v2321
      %v4294 = vmul.f32 %v4262, %v2321
      %v4295 = vmul.f32 %v4263, %v2321
      %v4296 = vmul.f32 %v4264, %v2321
      %v4297 = vmul.f32 %v4265, %v2321
      %v4298 = vmul.f32 %v4266, %v2321
      %v4299 = vmul.f32 %v4267, %v2321
      %v4300 = vmul.f32 %v4268, %v2321
      %v4301 = vmul.f32 %v4269, %v2321
      %v4302 = vmul.f32 %v4270, %v2321
      %v4303 = vmul.f32 %v4271, %v2321
      %v4304 = vmul.f32 %v4272, %v2321
      %v4305 = vmul.f32 %v4273, %v2321
      %v4306 = vadd.f32 %v3679, 1.0
      %v4307 = vadd.f32 %v3682, 1.0
      %v4308 = vadd.f32 %v3687, 1.0
      %v4309 = vadd.f32 %v3690, 1.0
      %v4310 = vadd.f32 %v3695, 1.0
      %v4311 = vadd.f32 %v3698, 1.0
      %v4312 = vadd.f32 %v3703, 1.0
      %v4313 = vadd.f32 %v3706, 1.0
      %v4314 = vadd.f32 %v3711, 1.0
      %v4315 = vadd.f32 %v3714, 1.0
      %v4316 = vadd.f32 %v3719, 1.0
      %v4317 = vadd.f32 %v3722, 1.0
      %v4318 = vadd.f32 %v3727, 1.0
      %v4319 = vadd.f32 %v3730, 1.0
      %v4320 = vadd.f32 %v3735, 1.0
      %v4321 = vadd.f32 %v3738, 1.0
      %v4322 = vadd.f32 %v3743, 1.0
      %v4323 = vadd.f32 %v3746, 1.0
      %v4324 = vadd.f32 %v3751, 1.0
      %v4325 = vadd.f32 %v3754, 1.0
      %v4326 = vadd.f32 %v3759, 1.0
      %v4327 = vadd.f32 %v3762, 1.0
      %v4328 = vadd.f32 %v3767, 1.0
      %v4329 = vadd.f32 %v3770, 1.0
      %v4330 = vadd.f32 %v3775, 1.0
      %v4331 = vadd.f32 %v3778, 1.0
      %v4332 = vadd.f32 %v3783, 1.0
      %v4333 = vadd.f32 %v3786, 1.0
      %v4334 = vadd.f32 %v3791, 1.0
      %v4335 = vadd.f32 %v3794, 1.0
      %v4336 = vadd.f32 %v3799, 1.0
      %v4337 = vadd.f32 %v3802, 1.0
      %v4338 = vmul.f32 %v4274, %v4306
      %v4339 = vmul.f32 %v4275, %v4307
      %v4340 = vmul.f32 %v4276, %v4308
      %v4341 = vmul.f32 %v4277, %v4309
      %v4342 = vmul.f32 %v4278, %v4310
      %v4343 = vmul.f32 %v4279, %v4311
      %v4344 = vmul.f32 %v4280, %v4312
      %v4345 = vmul.f32 %v4281, %v4313
      %v4346 = vmul.f32 %v4282, %v4314
      %v4347 = vmul.f32 %v4283, %v4315
      %v4348 = vmul.f32 %v4284, %v4316
      %v4349 = vmul.f32 %v4285, %v4317
      %v4350 = vmul.f32 %v4286, %v4318
      %v4351 = vmul.f32 %v4287, %v4319
      %v4352 = vmul.f32 %v4288, %v4320
      %v4353 = vmul.f32 %v4289, %v4321
      %v4354 = vmul.f32 %v4290, %v4322
      %v4355 = vmul.f32 %v4291, %v4323
      %v4356 = vmul.f32 %v4292, %v4324
      %v4357 = vmul.f32 %v4293, %v4325
      %v4358 = vmul.f32 %v4294, %v4326
      %v4359 = vmul.f32 %v4295, %v4327
      %v4360 = vmul.f32 %v4296, %v4328
      %v4361 = vmul.f32 %v4297, %v4329
      %v4362 = vmul.f32 %v4298, %v4330
      %v4363 = vmul.f32 %v4299, %v4331
      %v4364 = vmul.f32 %v4300, %v4332
      %v4365 = vmul.f32 %v4301, %v4333
      %v4366 = vmul.f32 %v4302, %v4334
      %v4367 = vmul.f32 %v4303, %v4335
      %v4368 = vmul.f32 %v4304, %v4336
      %v4369 = vmul.f32 %v4305, %v4337
      %v4370 = vadd.f32 %v4338, %v4116
      %v4371 = vadd.f32 %v4339, %v4119
      %v4372 = vadd.f32 %v4340, %v4124
      %v4373 = vadd.f32 %v4341, %v4127
      %v4374 = vadd.f32 %v4342, %v4132
      %v4375 = vadd.f32 %v4343, %v4135
      %v4376 = vadd.f32 %v4344, %v4140
      %v4377 = vadd.f32 %v4345, %v4143
      %v4378 = vadd.f32 %v4346, %v4148
      %v4379 = vadd.f32 %v4347, %v4151
      %v4380 = vadd.f32 %v4348, %v4156
      %v4381 = vadd.f32 %v4349, %v4159
      %v4382 = vadd.f32 %v4350, %v4164
      %v4383 = vadd.f32 %v4351, %v4167
      %v4384 = vadd.f32 %v4352, %v4172
      %v4385 = vadd.f32 %v4353, %v4175
      %v4386 = vadd.f32 %v4354, %v4180
      %v4387 = vadd.f32 %v4355, %v4183
      %v4388 = vadd.f32 %v4356, %v4188
      %v4389 = vadd.f32 %v4357, %v4191
      %v4390 = vadd.f32 %v4358, %v4196
      %v4391 = vadd.f32 %v4359, %v4199
      %v4392 = vadd.f32 %v4360, %v4204
      %v4393 = vadd.f32 %v4361, %v4207
      %v4394 = vadd.f32 %v4362, %v4212
      %v4395 = vadd.f32 %v4363, %v4215
      %v4396 = vadd.f32 %v4364, %v4220
      %v4397 = vadd.f32 %v4365, %v4223
      %v4398 = vadd.f32 %v4366, %v4228
      %v4399 = vadd.f32 %v4367, %v4231
      %v4400 = vadd.f32 %v4368, %v4236
      %v4401 = vadd.f32 %v4369, %v4239
      %v4402 = vpack.c.bf16 %v4371, %v4370
      %v4403 = vpack.c.bf16 %v4373, %v4372
      %v4404 = vpack.c.bf16 %v4375, %v4374
      %v4405 = vpack.c.bf16 %v4377, %v4376
      %v4406 = vpack.c.bf16 %v4379, %v4378
      %v4407 = vpack.c.bf16 %v4381, %v4380
      %v4408 = vpack.c.bf16 %v4383, %v4382
      %v4409 = vpack.c.bf16 %v4385, %v4384
      %v4410 = vpack.c.bf16 %v4387, %v4386
      %v4411 = vpack.c.bf16 %v4389, %v4388
      %v4412 = vpack.c.bf16 %v4391, %v4390
      %v4413 = vpack.c.bf16 %v4393, %v4392
      %v4414 = vpack.c.bf16 %v4395, %v4394
      %v4415 = vpack.c.bf16 %v4397, %v4396
      %v4416 = vpack.c.bf16 %v4399, %v4398
      %v4417 = vpack.c.bf16 %v4401, %v4400
      %v4418 = vld [vmem:[%s20] sm:$0x3]
      %v4420 = vsel %vm2144, %v4402, 0
      %v4423 = vsel %vm2144, %v4403, 0
      %v4426 = vsel %vm2144, %v4404, 0
      %v4429 = vsel %vm2144, %v4405, 0
      %v4432 = vsel %vm2144, %v4406, 0
      %v4435 = vsel %vm2144, %v4407, 0
      %v4438 = vsel %vm2144, %v4408, 0
      %v4441 = vsel %vm2144, %v4409, 0
      %v4444 = vsel %vm2144, %v4410, 0
      %v4447 = vsel %vm2144, %v4411, 0
      %v4450 = vsel %vm2144, %v4412, 0
      %v4453 = vsel %vm2144, %v4413, 0
      %v4456 = vsel %vm2144, %v4414, 0
      %v4459 = vsel %vm2144, %v4415, 0
      %v4462 = vsel %vm2144, %v4416, 0
      %v4465 = vsel %vm2144, %v4417, 0
      %vm4467 = vcmask 1041408
      %v4469 = vsel %vm4467, %v4418, 0
      %4471 = vmatprep.subr.bf16.mxu0 0
      %4472 = vmatpush1.bf16.msra.mxu0 0
      %4473 = vmatprep.subr.bf16.mxu0 0
      %4474 = vmatpush1.bf16.msra.mxu0 0
      %4475 = vmatprep.subr.bf16.mxu0 0
      %4476 = vmatpush1.bf16.msra.mxu0 0
      %4477 = vmatprep.subr.bf16.mxu0 0
      %4478 = vmatpush1.bf16.msra.mxu0 0
      %4479 = vmatprep.subr.bf16.mxu0 0
      %4480 = vmatpush1.bf16.msra.mxu0 0
      %4481 = vmatprep.subr.bf16.mxu0 0
      %4482 = vmatpush1.bf16.msra.mxu0 0
      %4483 = vmatprep.subr.bf16.mxu0 0
      %4484 = vmatpush1.bf16.msra.mxu0 0
      %4485 = vmatprep.subr.bf16.mxu0 0
      %4486 = vmatpush1.bf16.msra.mxu0 %v4469
      %4487 = vmatprep.subr.bf16.mxu0 0
      %4488 = vmatpush2.bf16.msra.mxu0 0
      %4489 = vmatprep.subr.bf16.mxu0 0
      %4490 = vmatpush2.bf16.msra.mxu0 0
      %4491 = vmatprep.subr.bf16.mxu0 0
      %4492 = vmatpush2.bf16.msra.mxu0 0
      %4493 = vmatprep.subr.bf16.mxu0 0
      %4494 = vmatpush2.bf16.msra.mxu0 0
      %4495 = vmatprep.subr.bf16.mxu0 0
      %4496 = vmatpush2.bf16.msra.mxu0 0
      %4497 = vmatprep.subr.bf16.mxu0 0
      %4498 = vmatpush2.bf16.msra.mxu0 0
      %4499 = vmatprep.subr.bf16.mxu0 0
      %4500 = vmatpush2.bf16.msra.mxu0 0
      %4501 = vmatprep.subr.bf16.mxu0 0
      %4502 = vmatpush2.bf16.msra.mxu0 0
      %4503 = vmatprep.mubr.bf16.mxu0 0
      %4504 = vmatmul.mubr.bf16.gmra.mxu0 %v4420
      %v4505 = vpop.f32.mrf.mxu0
      %v4506 = vadd.f32 0.0, %v4505
      %v4507 = vpop.f32.mrf.mxu0
      %v4508 = vpop.f32.mrf.mxu0
      %v4509 = vadd.f32 0.0, %v4508
      %v4510 = vpop.f32.mrf.mxu0
      %4511 = vmatprep.mubr.bf16.mxu0 0
      %4512 = vmatmul.mubr.bf16.gmra.mxu0 %v4423
      %v4513 = vpop.f32.mrf.mxu0
      %v4514 = vadd.f32 0.0, %v4513
      %v4515 = vpop.f32.mrf.mxu0
      %v4516 = vpop.f32.mrf.mxu0
      %v4517 = vadd.f32 0.0, %v4516
      %v4518 = vpop.f32.mrf.mxu0
      %4519 = vmatprep.mubr.bf16.mxu0 0
      %4520 = vmatmul.mubr.bf16.gmra.mxu0 %v4426
      %v4521 = vpop.f32.mrf.mxu0
      %v4522 = vadd.f32 0.0, %v4521
      %v4523 = vpop.f32.mrf.mxu0
      %v4524 = vpop.f32.mrf.mxu0
      %v4525 = vadd.f32 0.0, %v4524
      %v4526 = vpop.f32.mrf.mxu0
      %4527 = vmatprep.mubr.bf16.mxu0 0
      %4528 = vmatmul.mubr.bf16.gmra.mxu0 %v4429
      %v4529 = vpop.f32.mrf.mxu0
      %v4530 = vadd.f32 0.0, %v4529
      %v4531 = vpop.f32.mrf.mxu0
      %v4532 = vpop.f32.mrf.mxu0
      %v4533 = vadd.f32 0.0, %v4532
      %v4534 = vpop.f32.mrf.mxu0
      %4535 = vmatprep.mubr.bf16.mxu0 0
      %4536 = vmatmul.mubr.bf16.gmra.mxu0 %v4432
      %v4537 = vpop.f32.mrf.mxu0
      %v4538 = vadd.f32 0.0, %v4537
      %v4539 = vpop.f32.mrf.mxu0
      %v4540 = vpop.f32.mrf.mxu0
      %v4541 = vadd.f32 0.0, %v4540
      %v4542 = vpop.f32.mrf.mxu0
      %4543 = vmatprep.mubr.bf16.mxu0 0
      %4544 = vmatmul.mubr.bf16.gmra.mxu0 %v4435
      %v4545 = vpop.f32.mrf.mxu0
      %v4546 = vadd.f32 0.0, %v4545
      %v4547 = vpop.f32.mrf.mxu0
      %v4548 = vpop.f32.mrf.mxu0
      %v4549 = vadd.f32 0.0, %v4548
      %v4550 = vpop.f32.mrf.mxu0
      %4551 = vmatprep.mubr.bf16.mxu0 0
      %4552 = vmatmul.mubr.bf16.gmra.mxu0 %v4438
      %v4553 = vpop.f32.mrf.mxu0
      %v4554 = vadd.f32 0.0, %v4553
      %v4555 = vpop.f32.mrf.mxu0
      %v4556 = vpop.f32.mrf.mxu0
      %v4557 = vadd.f32 0.0, %v4556
      %v4558 = vpop.f32.mrf.mxu0
      %4559 = vmatprep.mubr.bf16.mxu0 0
      %4560 = vmatmul.mubr.bf16.gmra.mxu0 %v4441
      %v4561 = vpop.f32.mrf.mxu0
      %v4562 = vadd.f32 0.0, %v4561
      %v4563 = vpop.f32.mrf.mxu0
      %v4564 = vpop.f32.mrf.mxu0
      %v4565 = vadd.f32 0.0, %v4564
      %v4566 = vpop.f32.mrf.mxu0
      %4567 = vmatprep.mubr.bf16.mxu0 0
      %4568 = vmatmul.mubr.bf16.gmra.mxu0 %v4444
      %v4569 = vpop.f32.mrf.mxu0
      %v4570 = vadd.f32 0.0, %v4569
      %v4571 = vpop.f32.mrf.mxu0
      %v4572 = vpop.f32.mrf.mxu0
      %v4573 = vadd.f32 0.0, %v4572
      %v4574 = vpop.f32.mrf.mxu0
      %4575 = vmatprep.mubr.bf16.mxu0 0
      %4576 = vmatmul.mubr.bf16.gmra.mxu0 %v4447
      %v4577 = vpop.f32.mrf.mxu0
      %v4578 = vadd.f32 0.0, %v4577
      %v4579 = vpop.f32.mrf.mxu0
      %v4580 = vpop.f32.mrf.mxu0
      %v4581 = vadd.f32 0.0, %v4580
      %v4582 = vpop.f32.mrf.mxu0
      %4583 = vmatprep.mubr.bf16.mxu0 0
      %4584 = vmatmul.mubr.bf16.gmra.mxu0 %v4450
      %v4585 = vpop.f32.mrf.mxu0
      %v4586 = vadd.f32 0.0, %v4585
      %v4587 = vpop.f32.mrf.mxu0
      %v4588 = vpop.f32.mrf.mxu0
      %v4589 = vadd.f32 0.0, %v4588
      %v4590 = vpop.f32.mrf.mxu0
      %4591 = vmatprep.mubr.bf16.mxu0 0
      %4592 = vmatmul.mubr.bf16.gmra.mxu0 %v4453
      %v4593 = vpop.f32.mrf.mxu0
      %v4594 = vadd.f32 0.0, %v4593
      %v4595 = vpop.f32.mrf.mxu0
      %v4596 = vpop.f32.mrf.mxu0
      %v4597 = vadd.f32 0.0, %v4596
      %v4598 = vpop.f32.mrf.mxu0
      %4599 = vmatprep.mubr.bf16.mxu0 0
      %4600 = vmatmul.mubr.bf16.gmra.mxu0 %v4456
      %v4601 = vpop.f32.mrf.mxu0
      %v4602 = vadd.f32 0.0, %v4601
      %v4603 = vpop.f32.mrf.mxu0
      %v4604 = vpop.f32.mrf.mxu0
      %v4605 = vadd.f32 0.0, %v4604
      %v4606 = vpop.f32.mrf.mxu0
      %4607 = vmatprep.mubr.bf16.mxu0 0
      %4608 = vmatmul.mubr.bf16.gmra.mxu0 %v4459
      %v4609 = vpop.f32.mrf.mxu0
      %v4610 = vadd.f32 0.0, %v4609
      %v4611 = vpop.f32.mrf.mxu0
      %v4612 = vpop.f32.mrf.mxu0
      %v4613 = vadd.f32 0.0, %v4612
      %v4614 = vpop.f32.mrf.mxu0
      %4615 = vmatprep.mubr.bf16.mxu0 0
      %4616 = vmatmul.mubr.bf16.gmra.mxu0 %v4462
      %v4617 = vpop.f32.mrf.mxu0
      %v4618 = vadd.f32 0.0, %v4617
      %v4619 = vpop.f32.mrf.mxu0
      %v4620 = vpop.f32.mrf.mxu0
      %v4621 = vadd.f32 0.0, %v4620
      %v4622 = vpop.f32.mrf.mxu0
      %4623 = vmatprep.mubr.bf16.mxu0 0
      %4624 = vmatmul.mubr.bf16.gmra.mxu0 %v4465
      %v4625 = vpop.f32.mrf.mxu0
      %v4626 = vadd.f32 0.0, %v4625
      %v4627 = vpop.f32.mrf.mxu0
      %v4628 = vpop.f32.mrf.mxu0
      %v4629 = vadd.f32 0.0, %v4628
      %v4630 = vpop.f32.mrf.mxu0
      %4631 = vdwg.mxu0
      %v4633 = vshrl.u32 %v2064, 16
      %v4635 = vrot.slane %v4633, 7
      %v4636 = vshll.u32 %v2064, 16
      %v4638 = vor.u32 %v4635, %v4636
      %v4640 = vshrl.u32 %v2065, 16
      %v4642 = vrot.slane %v4640, 7
      %v4643 = vshll.u32 %v2065, 16
      %v4645 = vor.u32 %v4642, %v4643
      %v4647 = vshrl.u32 %v2066, 16
      %v4649 = vrot.slane %v4647, 7
      %v4650 = vshll.u32 %v2066, 16
      %v4652 = vor.u32 %v4649, %v4650
      %v4654 = vshrl.u32 %v2067, 16
      %v4656 = vrot.slane %v4654, 7
      %v4657 = vshll.u32 %v2067, 16
      %v4659 = vor.u32 %v4656, %v4657
      %v4661 = vshrl.u32 %v2068, 16
      %v4663 = vrot.slane %v4661, 7
      %v4664 = vshll.u32 %v2068, 16
      %v4666 = vor.u32 %v4663, %v4664
      %v4668 = vshrl.u32 %v2069, 16
      %v4670 = vrot.slane %v4668, 7
      %v4671 = vshll.u32 %v2069, 16
      %v4673 = vor.u32 %v4670, %v4671
      %v4675 = vshrl.u32 %v2070, 16
      %v4677 = vrot.slane %v4675, 7
      %v4678 = vshll.u32 %v2070, 16
      %v4680 = vor.u32 %v4677, %v4678
      %v4682 = vshrl.u32 %v2071, 16
      %v4684 = vrot.slane %v4682, 7
      %v4685 = vshll.u32 %v2071, 16
      %v4687 = vor.u32 %v4684, %v4685
      %v4689 = vshrl.u32 %v2072, 16
      %v4691 = vrot.slane %v4689, 7
      %v4692 = vshll.u32 %v2072, 16
      %v4694 = vor.u32 %v4691, %v4692
      %v4696 = vshrl.u32 %v2073, 16
      %v4698 = vrot.slane %v4696, 7
      %v4699 = vshll.u32 %v2073, 16
      %v4701 = vor.u32 %v4698, %v4699
      %v4703 = vshrl.u32 %v2074, 16
      %v4705 = vrot.slane %v4703, 7
      %v4706 = vshll.u32 %v2074, 16
      %v4708 = vor.u32 %v4705, %v4706
      %v4710 = vshrl.u32 %v2075, 16
      %v4712 = vrot.slane %v4710, 7
      %v4713 = vshll.u32 %v2075, 16
      %v4715 = vor.u32 %v4712, %v4713
      %v4717 = vshrl.u32 %v2076, 16
      %v4719 = vrot.slane %v4717, 7
      %v4720 = vshll.u32 %v2076, 16
      %v4722 = vor.u32 %v4719, %v4720
      %v4724 = vshrl.u32 %v2077, 16
      %v4726 = vrot.slane %v4724, 7
      %v4727 = vshll.u32 %v2077, 16
      %v4729 = vor.u32 %v4726, %v4727
      %v4731 = vshrl.u32 %v2078, 16
      %v4733 = vrot.slane %v4731, 7
      %v4734 = vshll.u32 %v2078, 16
      %v4736 = vor.u32 %v4733, %v4734
      %v4738 = vshrl.u32 %v2079, 16
      %v4740 = vrot.slane %v4738, 7
      %v4741 = vshll.u32 %v2079, 16
      %v4743 = vor.u32 %v4740, %v4741
      %v4776 = vsel %vm945, 0, %v4638
      %v4777 = vsel %vm945, 0, %v4645
      %v4778 = vsel %vm945, 0, %v4652
      %v4779 = vsel %vm945, 0, %v4659
      %v4780 = vsel %vm945, 0, %v4666
      %v4781 = vsel %vm945, 0, %v4673
      %v4782 = vsel %vm945, 0, %v4680
      %v4783 = vsel %vm945, 0, %v4687
      %v4784 = vsel %vm945, 0, %v4694
      %v4785 = vsel %vm945, 0, %v4701
      %v4786 = vsel %vm945, 0, %v4708
      %v4787 = vsel %vm945, 0, %v4715
      %v4788 = vsel %vm945, 0, %v4722
      %v4789 = vsel %vm945, 0, %v4729
      %v4790 = vsel %vm945, 0, %v4736
      %v4791 = vsel %vm945, 0, %v4743
      %v4792 = vsel %vm945, %v4635, 0
      %v4793 = vsel %vm945, %v4642, 0
      %v4794 = vsel %vm945, %v4649, 0
      %v4795 = vsel %vm945, %v4656, 0
      %v4796 = vsel %vm945, %v4663, 0
      %v4797 = vsel %vm945, %v4670, 0
      %v4798 = vsel %vm945, %v4677, 0
      %v4799 = vsel %vm945, %v4684, 0
      %v4800 = vsel %vm945, %v4691, 0
      %v4801 = vsel %vm945, %v4698, 0
      %v4802 = vsel %vm945, %v4705, 0
      %v4803 = vsel %vm945, %v4712, 0
      %v4804 = vsel %vm945, %v4719, 0
      %v4805 = vsel %vm945, %v4726, 0
      %v4806 = vsel %vm945, %v4733, 0
      %v4807 = vsel %vm945, %v4740, 0
      %v4809 = vshrl.u32 %v4776, 16
      %v4811 = vshll.u32 %v4776, 16
      %v4813 = vrot.slane %v4811, 1
      %v4814 = vor.u32 %v4809, %v4813
      %v4816 = vshll.u32 %v4792, 16
      %v4818 = vrot.slane %v4816, 1
      %v4819 = vsel %vm980, %v4814, %v4818
      %v4821 = vshrl.u32 %v4777, 16
      %v4823 = vshll.u32 %v4777, 16
      %v4825 = vrot.slane %v4823, 1
      %v4826 = vor.u32 %v4821, %v4825
      %v4828 = vshll.u32 %v4793, 16
      %v4830 = vrot.slane %v4828, 1
      %v4831 = vsel %vm980, %v4826, %v4830
      %v4833 = vshrl.u32 %v4778, 16
      %v4835 = vshll.u32 %v4778, 16
      %v4837 = vrot.slane %v4835, 1
      %v4838 = vor.u32 %v4833, %v4837
      %v4840 = vshll.u32 %v4794, 16
      %v4842 = vrot.slane %v4840, 1
      %v4843 = vsel %vm980, %v4838, %v4842
      %v4845 = vshrl.u32 %v4779, 16
      %v4847 = vshll.u32 %v4779, 16
      %v4849 = vrot.slane %v4847, 1
      %v4850 = vor.u32 %v4845, %v4849
      %v4852 = vshll.u32 %v4795, 16
      %v4854 = vrot.slane %v4852, 1
      %v4855 = vsel %vm980, %v4850, %v4854
      %v4857 = vshrl.u32 %v4780, 16
      %v4859 = vshll.u32 %v4780, 16
      %v4861 = vrot.slane %v4859, 1
      %v4862 = vor.u32 %v4857, %v4861
      %v4864 = vshll.u32 %v4796, 16
      %v4866 = vrot.slane %v4864, 1
      %v4867 = vsel %vm980, %v4862, %v4866
      %v4869 = vshrl.u32 %v4781, 16
      %v4871 = vshll.u32 %v4781, 16
      %v4873 = vrot.slane %v4871, 1
      %v4874 = vor.u32 %v4869, %v4873
      %v4876 = vshll.u32 %v4797, 16
      %v4878 = vrot.slane %v4876, 1
      %v4879 = vsel %vm980, %v4874, %v4878
      %v4881 = vshrl.u32 %v4782, 16
      %v4883 = vshll.u32 %v4782, 16
      %v4885 = vrot.slane %v4883, 1
      %v4886 = vor.u32 %v4881, %v4885
      %v4888 = vshll.u32 %v4798, 16
      %v4890 = vrot.slane %v4888, 1
      %v4891 = vsel %vm980, %v4886, %v4890
      %v4893 = vshrl.u32 %v4783, 16
      %v4895 = vshll.u32 %v4783, 16
      %v4897 = vrot.slane %v4895, 1
      %v4898 = vor.u32 %v4893, %v4897
      %v4900 = vshll.u32 %v4799, 16
      %v4902 = vrot.slane %v4900, 1
      %v4903 = vsel %vm980, %v4898, %v4902
      %v4905 = vshrl.u32 %v4784, 16
      %v4907 = vshll.u32 %v4784, 16
      %v4909 = vrot.slane %v4907, 1
      %v4910 = vor.u32 %v4905, %v4909
      %v4912 = vshll.u32 %v4800, 16
      %v4914 = vrot.slane %v4912, 1
      %v4915 = vsel %vm980, %v4910, %v4914
      %v4917 = vshrl.u32 %v4785, 16
      %v4919 = vshll.u32 %v4785, 16
      %v4921 = vrot.slane %v4919, 1
      %v4922 = vor.u32 %v4917, %v4921
      %v4924 = vshll.u32 %v4801, 16
      %v4926 = vrot.slane %v4924, 1
      %v4927 = vsel %vm980, %v4922, %v4926
      %v4929 = vshrl.u32 %v4786, 16
      %v4931 = vshll.u32 %v4786, 16
      %v4933 = vrot.slane %v4931, 1
      %v4934 = vor.u32 %v4929, %v4933
      %v4936 = vshll.u32 %v4802, 16
      %v4938 = vrot.slane %v4936, 1
      %v4939 = vsel %vm980, %v4934, %v4938
      %v4941 = vshrl.u32 %v4787, 16
      %v4943 = vshll.u32 %v4787, 16
      %v4945 = vrot.slane %v4943, 1
      %v4946 = vor.u32 %v4941, %v4945
      %v4948 = vshll.u32 %v4803, 16
      %v4950 = vrot.slane %v4948, 1
      %v4951 = vsel %vm980, %v4946, %v4950
      %v4953 = vshrl.u32 %v4788, 16
      %v4955 = vshll.u32 %v4788, 16
      %v4957 = vrot.slane %v4955, 1
      %v4958 = vor.u32 %v4953, %v4957
      %v4960 = vshll.u32 %v4804, 16
      %v4962 = vrot.slane %v4960, 1
      %v4963 = vsel %vm980, %v4958, %v4962
      %v4965 = vshrl.u32 %v4789, 16
      %v4967 = vshll.u32 %v4789, 16
      %v4969 = vrot.slane %v4967, 1
      %v4970 = vor.u32 %v4965, %v4969
      %v4972 = vshll.u32 %v4805, 16
      %v4974 = vrot.slane %v4972, 1
      %v4975 = vsel %vm980, %v4970, %v4974
      %v4977 = vshrl.u32 %v4790, 16
      %v4979 = vshll.u32 %v4790, 16
      %v4981 = vrot.slane %v4979, 1
      %v4982 = vor.u32 %v4977, %v4981
      %v4984 = vshll.u32 %v4806, 16
      %v4986 = vrot.slane %v4984, 1
      %v4987 = vsel %vm980, %v4982, %v4986
      %v5018 = vrot.slane %v4776, 1
      %v5019 = vrot.slane %v4792, 1
      %v5020 = vsel %vm1205, %v5018, %v5019
      %v5021 = vrot.slane %v4777, 1
      %v5022 = vrot.slane %v4793, 1
      %v5023 = vsel %vm1205, %v5021, %v5022
      %v5024 = vrot.slane %v4778, 1
      %v5025 = vrot.slane %v4794, 1
      %v5026 = vsel %vm1205, %v5024, %v5025
      %v5027 = vrot.slane %v4779, 1
      %v5028 = vrot.slane %v4795, 1
      %v5029 = vsel %vm1205, %v5027, %v5028
      %v5030 = vrot.slane %v4780, 1
      %v5031 = vrot.slane %v4796, 1
      %v5032 = vsel %vm1205, %v5030, %v5031
      %v5033 = vrot.slane %v4781, 1
      %v5034 = vrot.slane %v4797, 1
      %v5035 = vsel %vm1205, %v5033, %v5034
      %v5036 = vrot.slane %v4782, 1
      %v5037 = vrot.slane %v4798, 1
      %v5038 = vsel %vm1205, %v5036, %v5037
      %v5039 = vrot.slane %v4783, 1
      %v5040 = vrot.slane %v4799, 1
      %v5041 = vsel %vm1205, %v5039, %v5040
      %v5042 = vrot.slane %v4784, 1
      %v5043 = vrot.slane %v4800, 1
      %v5044 = vsel %vm1205, %v5042, %v5043
      %v5045 = vrot.slane %v4785, 1
      %v5046 = vrot.slane %v4801, 1
      %v5047 = vsel %vm1205, %v5045, %v5046
      %v5048 = vrot.slane %v4786, 1
      %v5049 = vrot.slane %v4802, 1
      %v5050 = vsel %vm1205, %v5048, %v5049
      %v5051 = vrot.slane %v4787, 1
      %v5052 = vrot.slane %v4803, 1
      %v5053 = vsel %vm1205, %v5051, %v5052
      %v5054 = vrot.slane %v4788, 1
      %v5055 = vrot.slane %v4804, 1
      %v5056 = vsel %vm1205, %v5054, %v5055
      %v5057 = vrot.slane %v4789, 1
      %v5058 = vrot.slane %v4805, 1
      %v5059 = vsel %vm1205, %v5057, %v5058
      %v5060 = vrot.slane %v4790, 1
      %v5061 = vrot.slane %v4806, 1
      %v5062 = vsel %vm1205, %v5060, %v5061
      %v5064 = vshrl.u32 %v4791, 16
      %v5066 = vshll.u32 %v4791, 16
      %v5068 = vrot.slane %v5066, 1
      %v5069 = vor.u32 %v5064, %v5068
      %v5071 = vshll.u32 %v4807, 16
      %v5073 = vrot.slane %v5071, 1
      %v5074 = vsel %vm980, %v5069, %v5073
      %v5077 = vrot.slane %v4791, 1
      %v5078 = vrot.slane %v4807, 1
      %v5079 = vsel %vm1205, %v5077, %v5078
      %5080 = vrot.lane.b32.xlu0 %v4819, 32
      %v5081 = vpop.permute.xlu0 %5080
      %5082 = vrot.lane.b32.xlu0 %v4831, 32
      %v5083 = vpop.permute.xlu0 %5082
      %5084 = vrot.lane.b32.xlu0 %v4843, 32
      %v5085 = vpop.permute.xlu0 %5084
      %5086 = vrot.lane.b32.xlu0 %v4855, 32
      %v5087 = vpop.permute.xlu0 %5086
      %5088 = vrot.lane.b32.xlu0 %v4867, 32
      %v5089 = vpop.permute.xlu0 %5088
      %5090 = vrot.lane.b32.xlu0 %v4879, 32
      %v5091 = vpop.permute.xlu0 %5090
      %5092 = vrot.lane.b32.xlu0 %v4891, 32
      %v5093 = vpop.permute.xlu0 %5092
      %5094 = vrot.lane.b32.xlu0 %v4903, 32
      %v5095 = vpop.permute.xlu0 %5094
      %5096 = vrot.lane.b32.xlu0 %v4915, 32
      %v5097 = vpop.permute.xlu0 %5096
      %5098 = vrot.lane.b32.xlu0 %v4927, 32
      %v5099 = vpop.permute.xlu0 %5098
      %5100 = vrot.lane.b32.xlu0 %v4939, 32
      %v5101 = vpop.permute.xlu0 %5100
      %5102 = vrot.lane.b32.xlu0 %v4951, 32
      %v5103 = vpop.permute.xlu0 %5102
      %5104 = vrot.lane.b32.xlu0 %v4963, 32
      %v5105 = vpop.permute.xlu0 %5104
      %5106 = vrot.lane.b32.xlu0 %v4975, 32
      %v5107 = vpop.permute.xlu0 %5106
      %5108 = vrot.lane.b32.xlu0 %v4987, 32
      %v5109 = vpop.permute.xlu0 %5108
      %5110 = vrot.lane.b32.xlu0 %v5020, 64
      %v5111 = vpop.permute.xlu0 %5110
      %5112 = vrot.lane.b32.xlu0 %v5023, 64
      %v5113 = vpop.permute.xlu0 %5112
      %5114 = vrot.lane.b32.xlu0 %v5026, 64
      %v5115 = vpop.permute.xlu0 %5114
      %5116 = vrot.lane.b32.xlu0 %v5029, 64
      %v5117 = vpop.permute.xlu0 %5116
      %5118 = vrot.lane.b32.xlu0 %v5032, 64
      %v5119 = vpop.permute.xlu0 %5118
      %5120 = vrot.lane.b32.xlu0 %v5035, 64
      %v5121 = vpop.permute.xlu0 %5120
      %5122 = vrot.lane.b32.xlu0 %v5038, 64
      %v5123 = vpop.permute.xlu0 %5122
      %5124 = vrot.lane.b32.xlu0 %v5041, 64
      %v5125 = vpop.permute.xlu0 %5124
      %5126 = vrot.lane.b32.xlu0 %v5044, 64
      %v5127 = vpop.permute.xlu0 %5126
      %5128 = vrot.lane.b32.xlu0 %v5047, 64
      %v5129 = vpop.permute.xlu0 %5128
      %5130 = vrot.lane.b32.xlu0 %v5050, 64
      %v5131 = vpop.permute.xlu0 %5130
      %5132 = vrot.lane.b32.xlu0 %v5053, 64
      %v5133 = vpop.permute.xlu0 %5132
      %5134 = vrot.lane.b32.xlu0 %v5056, 64
      %v5135 = vpop.permute.xlu0 %5134
      %5136 = vrot.lane.b32.xlu0 %v5059, 64
      %v5137 = vpop.permute.xlu0 %5136
      %5138 = vrot.lane.b32.xlu0 %v5062, 64
      %v5139 = vpop.permute.xlu0 %5138
      %5140 = vrot.lane.b32.xlu0 %v4776, 96
      %v5141 = vpop.permute.xlu0 %5140
      %5142 = vrot.lane.b32.xlu0 %v4777, 96
      %v5143 = vpop.permute.xlu0 %5142
      %5144 = vrot.lane.b32.xlu0 %v4778, 96
      %v5145 = vpop.permute.xlu0 %5144
      %5146 = vrot.lane.b32.xlu0 %v4779, 96
      %v5147 = vpop.permute.xlu0 %5146
      %5148 = vrot.lane.b32.xlu0 %v4780, 96
      %v5149 = vpop.permute.xlu0 %5148
      %5150 = vrot.lane.b32.xlu0 %v4781, 96
      %v5151 = vpop.permute.xlu0 %5150
      %5152 = vrot.lane.b32.xlu0 %v4782, 96
      %v5153 = vpop.permute.xlu0 %5152
      %5154 = vrot.lane.b32.xlu0 %v4783, 96
      %v5155 = vpop.permute.xlu0 %5154
      %5156 = vrot.lane.b32.xlu0 %v4784, 96
      %v5157 = vpop.permute.xlu0 %5156
      %5158 = vrot.lane.b32.xlu0 %v4785, 96
      %v5159 = vpop.permute.xlu0 %5158
      %5160 = vrot.lane.b32.xlu0 %v4786, 96
      %v5161 = vpop.permute.xlu0 %5160
      %5162 = vrot.lane.b32.xlu0 %v4787, 96
      %v5163 = vpop.permute.xlu0 %5162
      %5164 = vrot.lane.b32.xlu0 %v4788, 96
      %v5165 = vpop.permute.xlu0 %5164
      %5166 = vrot.lane.b32.xlu0 %v4789, 96
      %v5167 = vpop.permute.xlu0 %5166
      %5168 = vrot.lane.b32.xlu0 %v4790, 96
      %v5169 = vpop.permute.xlu0 %5168
      %5170 = vrot.lane.b32.xlu0 %v4791, 96
      %v5171 = vpop.permute.xlu0 %5170
      %5172 = vrot.lane.b32.xlu0 %v5020, 32
      %v5173 = vpop.permute.xlu0 %5172
      %5174 = vrot.lane.b32.xlu0 %v5023, 32
      %v5175 = vpop.permute.xlu0 %5174
      %5176 = vrot.lane.b32.xlu0 %v5026, 32
      %v5177 = vpop.permute.xlu0 %5176
      %5178 = vrot.lane.b32.xlu0 %v5029, 32
      %v5179 = vpop.permute.xlu0 %5178
      %5180 = vrot.lane.b32.xlu0 %v5032, 32
      %v5181 = vpop.permute.xlu0 %5180
      %5182 = vrot.lane.b32.xlu0 %v5035, 32
      %v5183 = vpop.permute.xlu0 %5182
      %5184 = vrot.lane.b32.xlu0 %v5038, 32
      %v5185 = vpop.permute.xlu0 %5184
      %5186 = vrot.lane.b32.xlu0 %v5041, 32
      %v5187 = vpop.permute.xlu0 %5186
      %5188 = vrot.lane.b32.xlu0 %v5044, 32
      %v5189 = vpop.permute.xlu0 %5188
      %5190 = vrot.lane.b32.xlu0 %v5047, 32
      %v5191 = vpop.permute.xlu0 %5190
      %5192 = vrot.lane.b32.xlu0 %v5050, 32
      %v5193 = vpop.permute.xlu0 %5192
      %5194 = vrot.lane.b32.xlu0 %v5053, 32
      %v5195 = vpop.permute.xlu0 %5194
      %5196 = vrot.lane.b32.xlu0 %v5056, 32
      %v5197 = vpop.permute.xlu0 %5196
      %5198 = vrot.lane.b32.xlu0 %v5059, 32
      %v5199 = vpop.permute.xlu0 %5198
      %5200 = vrot.lane.b32.xlu0 %v5062, 32
      %v5201 = vpop.permute.xlu0 %5200
      %5202 = vrot.lane.b32.xlu0 %v5079, 32
      %v5203 = vpop.permute.xlu0 %5202
      %5204 = vrot.lane.b32.xlu0 %v4777, 64
      %v5205 = vpop.permute.xlu0 %5204
      %5206 = vrot.lane.b32.xlu0 %v4778, 64
      %v5207 = vpop.permute.xlu0 %5206
      %5208 = vrot.lane.b32.xlu0 %v4779, 64
      %v5209 = vpop.permute.xlu0 %5208
      %5210 = vrot.lane.b32.xlu0 %v4780, 64
      %v5211 = vpop.permute.xlu0 %5210
      %5212 = vrot.lane.b32.xlu0 %v4781, 64
      %v5213 = vpop.permute.xlu0 %5212
      %5214 = vrot.lane.b32.xlu0 %v4782, 64
      %v5215 = vpop.permute.xlu0 %5214
      %5216 = vrot.lane.b32.xlu0 %v4783, 64
      %v5217 = vpop.permute.xlu0 %5216
      %5218 = vrot.lane.b32.xlu0 %v4784, 64
      %v5219 = vpop.permute.xlu0 %5218
      %5220 = vrot.lane.b32.xlu0 %v4785, 64
      %v5221 = vpop.permute.xlu0 %5220
      %5222 = vrot.lane.b32.xlu0 %v4786, 64
      %v5223 = vpop.permute.xlu0 %5222
      %5224 = vrot.lane.b32.xlu0 %v4787, 64
      %v5225 = vpop.permute.xlu0 %5224
      %5226 = vrot.lane.b32.xlu0 %v4788, 64
      %v5227 = vpop.permute.xlu0 %5226
      %5228 = vrot.lane.b32.xlu0 %v4789, 64
      %v5229 = vpop.permute.xlu0 %5228
      %5230 = vrot.lane.b32.xlu0 %v4790, 64
      %v5231 = vpop.permute.xlu0 %5230
      %5232 = vrot.lane.b32.xlu0 %v4791, 64
      %v5233 = vpop.permute.xlu0 %5232
      %5234 = vrot.lane.b32.xlu0 %v4831, 96
      %v5235 = vpop.permute.xlu0 %5234
      %5236 = vrot.lane.b32.xlu0 %v4843, 96
      %v5237 = vpop.permute.xlu0 %5236
      %5238 = vrot.lane.b32.xlu0 %v4855, 96
      %v5239 = vpop.permute.xlu0 %5238
      %5240 = vrot.lane.b32.xlu0 %v4867, 96
      %v5241 = vpop.permute.xlu0 %5240
      %5242 = vrot.lane.b32.xlu0 %v4879, 96
      %v5243 = vpop.permute.xlu0 %5242
      %5244 = vrot.lane.b32.xlu0 %v4891, 96
      %v5245 = vpop.permute.xlu0 %5244
      %5246 = vrot.lane.b32.xlu0 %v4903, 96
      %v5247 = vpop.permute.xlu0 %5246
      %5248 = vrot.lane.b32.xlu0 %v4915, 96
      %v5249 = vpop.permute.xlu0 %5248
      %5250 = vrot.lane.b32.xlu0 %v4927, 96
      %v5251 = vpop.permute.xlu0 %5250
      %5252 = vrot.lane.b32.xlu0 %v4939, 96
      %v5253 = vpop.permute.xlu0 %5252
      %5254 = vrot.lane.b32.xlu0 %v4951, 96
      %v5255 = vpop.permute.xlu0 %5254
      %5256 = vrot.lane.b32.xlu0 %v4963, 96
      %v5257 = vpop.permute.xlu0 %5256
      %5258 = vrot.lane.b32.xlu0 %v4975, 96
      %v5259 = vpop.permute.xlu0 %5258
      %5260 = vrot.lane.b32.xlu0 %v4987, 96
      %v5261 = vpop.permute.xlu0 %5260
      %5262 = vrot.lane.b32.xlu0 %v5074, 96
      %v5263 = vpop.permute.xlu0 %5262
      %v5265 = vsel %vm1626, %v4776, %v5081
      %v5267 = vsel %vm1626, %v4777, %v5083
      %v5269 = vsel %vm1626, %v4778, %v5085
      %v5271 = vsel %vm1626, %v4779, %v5087
      %v5273 = vsel %vm1626, %v4780, %v5089
      %v5275 = vsel %vm1626, %v4781, %v5091
      %v5277 = vsel %vm1626, %v4782, %v5093
      %v5279 = vsel %vm1626, %v4783, %v5095
      %v5281 = vsel %vm1626, %v4784, %v5097
      %v5283 = vsel %vm1626, %v4785, %v5099
      %v5285 = vsel %vm1626, %v4786, %v5101
      %v5287 = vsel %vm1626, %v4787, %v5103
      %v5289 = vsel %vm1626, %v4788, %v5105
      %v5291 = vsel %vm1626, %v4789, %v5107
      %v5293 = vsel %vm1626, %v4790, %v5109
      %v5295 = vsel %vm1758, %v5265, %v5111
      %v5297 = vsel %vm1758, %v5267, %v5113
      %v5299 = vsel %vm1758, %v5269, %v5115
      %v5301 = vsel %vm1758, %v5271, %v5117
      %v5303 = vsel %vm1758, %v5273, %v5119
      %v5305 = vsel %vm1758, %v5275, %v5121
      %v5307 = vsel %vm1758, %v5277, %v5123
      %v5309 = vsel %vm1758, %v5279, %v5125
      %v5311 = vsel %vm1758, %v5281, %v5127
      %v5313 = vsel %vm1758, %v5283, %v5129
      %v5315 = vsel %vm1758, %v5285, %v5131
      %v5317 = vsel %vm1758, %v5287, %v5133
      %v5319 = vsel %vm1758, %v5289, %v5135
      %v5321 = vsel %vm1758, %v5291, %v5137
      %v5323 = vsel %vm1758, %v5293, %v5139
      %v5325 = vsel %vm3071, %v3040, %v5141
      %v5328 = vsel %vm3071, %v5295, %v5143
      %v5331 = vsel %vm3071, %v5297, %v5145
      %v5334 = vsel %vm3071, %v5299, %v5147
      %v5337 = vsel %vm3071, %v5301, %v5149
      %v5340 = vsel %vm3071, %v5303, %v5151
      %v5343 = vsel %vm3071, %v5305, %v5153
      %v5346 = vsel %vm3071, %v5307, %v5155
      %v5349 = vsel %vm3071, %v5309, %v5157
      %v5352 = vsel %vm3071, %v5311, %v5159
      %v5355 = vsel %vm3071, %v5313, %v5161
      %v5358 = vsel %vm3071, %v5315, %v5163
      %v5361 = vsel %vm3071, %v5317, %v5165
      %v5364 = vsel %vm3071, %v5319, %v5167
      %v5367 = vsel %vm3071, %v5321, %v5169
      %v5370 = vsel %vm3071, %v5323, %v5171
      %v5374 = vsel %vm1626, %v4819, %v5173
      %v5377 = vsel %vm1626, %v4831, %v5175
      %v5380 = vsel %vm1626, %v4843, %v5177
      %v5383 = vsel %vm1626, %v4855, %v5179
      %v5386 = vsel %vm1626, %v4867, %v5181
      %v5389 = vsel %vm1626, %v4879, %v5183
      %v5392 = vsel %vm1626, %v4891, %v5185
      %v5395 = vsel %vm1626, %v4903, %v5187
      %v5398 = vsel %vm1626, %v4915, %v5189
      %v5401 = vsel %vm1626, %v4927, %v5191
      %v5404 = vsel %vm1626, %v4939, %v5193
      %v5407 = vsel %vm1626, %v4951, %v5195
      %v5410 = vsel %vm1626, %v4963, %v5197
      %v5413 = vsel %vm1626, %v4975, %v5199
      %v5416 = vsel %vm1626, %v4987, %v5201
      %v5419 = vsel %vm1626, %v5074, %v5203
      %v5421 = vsel %vm1758, %v5374, %v5205
      %v5423 = vsel %vm1758, %v5377, %v5207
      %v5425 = vsel %vm1758, %v5380, %v5209
      %v5427 = vsel %vm1758, %v5383, %v5211
      %v5429 = vsel %vm1758, %v5386, %v5213
      %v5431 = vsel %vm1758, %v5389, %v5215
      %v5433 = vsel %vm1758, %v5392, %v5217
      %v5435 = vsel %vm1758, %v5395, %v5219
      %v5437 = vsel %vm1758, %v5398, %v5221
      %v5439 = vsel %vm1758, %v5401, %v5223
      %v5441 = vsel %vm1758, %v5404, %v5225
      %v5443 = vsel %vm1758, %v5407, %v5227
      %v5445 = vsel %vm1758, %v5410, %v5229
      %v5447 = vsel %vm1758, %v5413, %v5231
      %v5449 = vsel %vm1758, %v5416, %v5233
      %v5450 = vsel %vm1758, %v5419, %v2975
      %v5452 = vsel %vm3071, %v5421, %v5235
      %v5455 = vsel %vm3071, %v5423, %v5237
      %v5458 = vsel %vm3071, %v5425, %v5239
      %v5461 = vsel %vm3071, %v5427, %v5241
      %v5464 = vsel %vm3071, %v5429, %v5243
      %v5467 = vsel %vm3071, %v5431, %v5245
      %v5470 = vsel %vm3071, %v5433, %v5247
      %v5473 = vsel %vm3071, %v5435, %v5249
      %v5476 = vsel %vm3071, %v5437, %v5251
      %v5479 = vsel %vm3071, %v5439, %v5253
      %v5482 = vsel %vm3071, %v5441, %v5255
      %v5485 = vsel %vm3071, %v5443, %v5257
      %v5488 = vsel %vm3071, %v5445, %v5259
      %v5491 = vsel %vm3071, %v5447, %v5261
      %v5494 = vsel %vm3071, %v5449, %v5263
      %v5496 = vsel %vm3071, %v5450, %v3007
      %v5498 = vld [vmem:[%s4] sm:$0xf]
      %v5499 = vld [vmem:[%s4 + $0x4] sm:$0xf]
      %v5500 = vld [vmem:[%s4 + $0x8] sm:$0xf]
      %v5501 = vld [vmem:[%s4 + $0xc] sm:$0xf]
      %v5502 = vld [vmem:[%s4 + $0x10] sm:$0xf]
      %v5503 = vld [vmem:[%s4 + $0x14] sm:$0xf]
      %v5504 = vld [vmem:[%s4 + $0x18] sm:$0xf]
      %v5505 = vld [vmem:[%s4 + $0x1c] sm:$0xf]
      %v5506 = vld [vmem:[%s4 + $0x20] sm:$0xf]
      %v5507 = vld [vmem:[%s4 + $0x24] sm:$0xf]
      %v5508 = vld [vmem:[%s4 + $0x28] sm:$0xf]
      %v5509 = vld [vmem:[%s4 + $0x2c] sm:$0xf]
      %v5510 = vld [vmem:[%s4 + $0x30] sm:$0xf]
      %v5511 = vld [vmem:[%s4 + $0x34] sm:$0xf]
      %v5512 = vld [vmem:[%s4 + $0x38] sm:$0xf]
      %v5513 = vld [vmem:[%s4 + $0x3c] sm:$0xf]
      %v5514 = vld [vmem:[%s4 + $0x40] sm:$0xf]
      %v5515 = vld [vmem:[%s4 + $0x44] sm:$0xf]
      %v5516 = vld [vmem:[%s4 + $0x48] sm:$0xf]
      %v5517 = vld [vmem:[%s4 + $0x4c] sm:$0xf]
      %v5518 = vld [vmem:[%s4 + $0x50] sm:$0xf]
      %v5519 = vld [vmem:[%s4 + $0x54] sm:$0xf]
      %v5520 = vld [vmem:[%s4 + $0x58] sm:$0xf]
      %v5521 = vld [vmem:[%s4 + $0x5c] sm:$0xf]
      %v5522 = vld [vmem:[%s4 + $0x60] sm:$0xf]
      %v5523 = vld [vmem:[%s4 + $0x64] sm:$0xf]
      %v5524 = vld [vmem:[%s4 + $0x68] sm:$0xf]
      %v5525 = vld [vmem:[%s4 + $0x6c] sm:$0xf]
      %v5526 = vld [vmem:[%s4 + $0x70] sm:$0xf]
      %v5527 = vld [vmem:[%s4 + $0x74] sm:$0xf]
      %v5528 = vld [vmem:[%s4 + $0x78] sm:$0xf]
      %v5529 = vld [vmem:[%s4 + $0x7c] sm:$0xf]
      %v5530 = vld [vmem:[%s4 + $0x80] sm:$0xf]
      %v5531 = vld [vmem:[%s4 + $0x84] sm:$0xf]
      %v5532 = vld [vmem:[%s4 + $0x88] sm:$0xf]
      %v5533 = vld [vmem:[%s4 + $0x8c] sm:$0xf]
      %v5534 = vld [vmem:[%s6] sm:$0xf]
      %v5535 = vld [vmem:[%s6 + $0x4] sm:$0xf]
      %v5536 = vld [vmem:[%s6 + $0x8] sm:$0xf]
      %v5537 = vld [vmem:[%s6 + $0xc] sm:$0xf]
      %v5538 = vld [vmem:[%s6 + $0x10] sm:$0xf]
      %v5539 = vld [vmem:[%s6 + $0x14] sm:$0xf]
      %v5540 = vld [vmem:[%s6 + $0x18] sm:$0xf]
      %v5541 = vld [vmem:[%s6 + $0x1c] sm:$0xf]
      %v5542 = vld [vmem:[%s6 + $0x20] sm:$0xf]
      %v5543 = vld [vmem:[%s6 + $0x24] sm:$0xf]
      %v5544 = vld [vmem:[%s6 + $0x28] sm:$0xf]
      %v5545 = vld [vmem:[%s6 + $0x2c] sm:$0xf]
      %v5546 = vld [vmem:[%s6 + $0x30] sm:$0xf]
      %v5547 = vld [vmem:[%s6 + $0x34] sm:$0xf]
      %v5548 = vld [vmem:[%s6 + $0x38] sm:$0xf]
      %v5549 = vld [vmem:[%s6 + $0x3c] sm:$0xf]
      %v5550 = vld [vmem:[%s6 + $0x40] sm:$0xf]
      %v5551 = vld [vmem:[%s6 + $0x44] sm:$0xf]
      %v5552 = vld [vmem:[%s6 + $0x48] sm:$0xf]
      %v5553 = vld [vmem:[%s6 + $0x4c] sm:$0xf]
      %v5554 = vld [vmem:[%s6 + $0x50] sm:$0xf]
      %v5555 = vld [vmem:[%s6 + $0x54] sm:$0xf]
      %v5556 = vld [vmem:[%s6 + $0x58] sm:$0xf]
      %v5557 = vld [vmem:[%s6 + $0x5c] sm:$0xf]
      %v5558 = vld [vmem:[%s6 + $0x60] sm:$0xf]
      %v5559 = vld [vmem:[%s6 + $0x64] sm:$0xf]
      %v5560 = vld [vmem:[%s6 + $0x68] sm:$0xf]
      %v5561 = vld [vmem:[%s6 + $0x6c] sm:$0xf]
      %v5562 = vld [vmem:[%s6 + $0x70] sm:$0xf]
      %v5563 = vld [vmem:[%s6 + $0x74] sm:$0xf]
      %v5564 = vld [vmem:[%s6 + $0x78] sm:$0xf]
      %v5565 = vld [vmem:[%s6 + $0x7c] sm:$0xf]
      %v5566 = vld [vmem:[%s6 + $0x80] sm:$0xf]
      %v5567 = vld [vmem:[%s6 + $0x84] sm:$0xf]
      %v5568 = vld [vmem:[%s6 + $0x88] sm:$0xf]
      %v5569 = vld [vmem:[%s6 + $0x8c] sm:$0xf]
      %v5570 = vld [vmem:[%s5] sm:$0x1]
      %v5572 = vlaneseq
      %v5573 = vshrl.u32 %v5572, 7
      %v5574 = vsub.s32 0, %v5573
      %v5575 = vrot.slane %v5570, %v5574
      %v5613 = vunpack.c.l.b16 %v5498
      %v5614 = vunpack.c.l.b16 %v5499
      %v5615 = vunpack.c.l.b16 %v5500
      %v5616 = vunpack.c.l.b16 %v5501
      %v5617 = vunpack.c.l.b16 %v5502
      %v5618 = vunpack.c.l.b16 %v5503
      %v5619 = vunpack.c.l.b16 %v5504
      %v5620 = vunpack.c.l.b16 %v5505
      %v5621 = vunpack.c.l.b16 %v5506
      %v5622 = vunpack.c.l.b16 %v5507
      %v5623 = vunpack.c.l.b16 %v5508
      %v5624 = vunpack.c.l.b16 %v5509
      %v5625 = vunpack.c.l.b16 %v5510
      %v5626 = vunpack.c.l.b16 %v5511
      %v5627 = vunpack.c.l.b16 %v5512
      %v5628 = vunpack.c.l.b16 %v5513
      %v5629 = vunpack.c.l.b16 %v5514
      %v5630 = vunpack.c.l.b16 %v5515
      %v5631 = vunpack.c.l.b16 %v5516
      %v5632 = vunpack.c.l.b16 %v5517
      %v5633 = vunpack.c.l.b16 %v5518
      %v5634 = vunpack.c.l.b16 %v5519
      %v5635 = vunpack.c.l.b16 %v5520
      %v5636 = vunpack.c.l.b16 %v5521
      %v5637 = vunpack.c.l.b16 %v5522
      %v5638 = vunpack.c.l.b16 %v5523
      %v5639 = vunpack.c.l.b16 %v5524
      %v5640 = vunpack.c.l.b16 %v5525
      %v5641 = vunpack.c.l.b16 %v5526
      %v5642 = vunpack.c.l.b16 %v5527
      %v5643 = vunpack.c.l.b16 %v5528
      %v5644 = vunpack.c.l.b16 %v5529
      %v5645 = vunpack.c.l.b16 %v5530
      %v5646 = vunpack.c.l.b16 %v5531
      %v5647 = vunpack.c.l.b16 %v5532
      %v5648 = vunpack.c.l.b16 %v5533
      %v5649 = vpack.c.b16 %v5614, %v5613
      %v5650 = vpack.c.b16 %v5616, %v5615
      %v5651 = vpack.c.b16 %v5618, %v5617
      %v5652 = vpack.c.b16 %v5620, %v5619
      %v5653 = vpack.c.b16 %v5622, %v5621
      %v5654 = vpack.c.b16 %v5624, %v5623
      %v5655 = vpack.c.b16 %v5626, %v5625
      %v5656 = vpack.c.b16 %v5628, %v5627
      %v5657 = vpack.c.b16 %v5630, %v5629
      %v5658 = vpack.c.b16 %v5632, %v5631
      %v5659 = vpack.c.b16 %v5634, %v5633
      %v5660 = vpack.c.b16 %v5636, %v5635
      %v5661 = vpack.c.b16 %v5638, %v5637
      %v5662 = vpack.c.b16 %v5640, %v5639
      %v5663 = vpack.c.b16 %v5642, %v5641
      %v5664 = vpack.c.b16 %v5644, %v5643
      %v5665 = vpack.c.b16 %v5646, %v5645
      %v5666 = vpack.c.b16 %v5648, %v5647
      %v5686 = vsel %vm1626, %v5023, 0
      %v5689 = vsel %vm1626, %v5026, 0
      %v5692 = vsel %vm1626, %v5029, 0
      %v5695 = vsel %vm1626, %v5032, 0
      %v5698 = vsel %vm1626, %v5035, 0
      %v5701 = vsel %vm1626, %v5038, 0
      %v5704 = vsel %vm1626, %v5041, 0
      %v5707 = vsel %vm1626, %v5044, 0
      %v5710 = vsel %vm1626, %v5047, 0
      %v5713 = vsel %vm1626, %v5050, 0
      %v5716 = vsel %vm1626, %v5053, 0
      %v5719 = vsel %vm1626, %v5056, 0
      %v5722 = vsel %vm1626, %v5059, 0
      %v5725 = vsel %vm1626, %v5062, 0
      %v5728 = vsel %vm1626, %v5079, 0
      %5730 = vmatprep.subr.bf16.mxu0 0
      %5731 = vmatpush1.bf16.msra.mxu0 %v5656
      %5732 = vmatprep.subr.bf16.mxu0 0
      %5733 = vmatpush1.bf16.msra.mxu0 %v5655
      %5734 = vmatprep.subr.bf16.mxu0 0
      %5735 = vmatpush1.bf16.msra.mxu0 %v5654
      %5736 = vmatprep.subr.bf16.mxu0 0
      %5737 = vmatpush1.bf16.msra.mxu0 %v5653
      %5738 = vmatprep.subr.bf16.mxu0 0
      %5739 = vmatpush1.bf16.msra.mxu0 %v5652
      %5740 = vmatprep.subr.bf16.mxu0 0
      %5741 = vmatpush1.bf16.msra.mxu0 %v5651
      %5742 = vmatprep.subr.bf16.mxu0 0
      %5743 = vmatpush1.bf16.msra.mxu0 %v5650
      %5744 = vmatprep.subr.bf16.mxu0 0
      %5745 = vmatpush1.bf16.msra.mxu0 %v5649
      %5746 = vmatprep.subr.bf16.mxu0 0
      %5747 = vmatpush2.bf16.msra.mxu0 %v5664
      %5748 = vmatprep.subr.bf16.mxu0 0
      %5749 = vmatpush2.bf16.msra.mxu0 %v5663
      %5750 = vmatprep.subr.bf16.mxu0 0
      %5751 = vmatpush2.bf16.msra.mxu0 %v5662
      %5752 = vmatprep.subr.bf16.mxu0 0
      %5753 = vmatpush2.bf16.msra.mxu0 %v5661
      %5754 = vmatprep.subr.bf16.mxu0 0
      %5755 = vmatpush2.bf16.msra.mxu0 %v5660
      %5756 = vmatprep.subr.bf16.mxu0 0
      %5757 = vmatpush2.bf16.msra.mxu0 %v5659
      %5758 = vmatprep.subr.bf16.mxu0 0
      %5759 = vmatpush2.bf16.msra.mxu0 %v5658
      %5760 = vmatprep.subr.bf16.mxu0 0
      %5761 = vmatpush2.bf16.msra.mxu0 %v5657
      %5762 = vmatprep.mubr.bf16.mxu0 %v5452
      %5763 = vmatmul.mubr.bf16.gmra.mxu0 %v5325
      %v5764 = vpop.f32.mrf.mxu0
      %v5765 = vadd.f32 %v5575, %v5764
      %v5766 = vpop.f32.mrf.mxu0
      %v5767 = vpop.f32.mrf.mxu0
      %v5768 = vadd.f32 %v5575, %v5767
      %v5769 = vpop.f32.mrf.mxu0
      %5770 = vmatprep.mubr.bf16.mxu0 %v5455
      %5771 = vmatmul.mubr.bf16.gmra.mxu0 %v5328
      %v5772 = vpop.f32.mrf.mxu0
      %v5773 = vadd.f32 %v5575, %v5772
      %v5774 = vpop.f32.mrf.mxu0
      %v5775 = vpop.f32.mrf.mxu0
      %v5776 = vadd.f32 %v5575, %v5775
      %v5777 = vpop.f32.mrf.mxu0
      %5778 = vmatprep.mubr.bf16.mxu0 %v5458
      %5779 = vmatmul.mubr.bf16.gmra.mxu0 %v5331
      %v5780 = vpop.f32.mrf.mxu0
      %v5781 = vadd.f32 %v5575, %v5780
      %v5782 = vpop.f32.mrf.mxu0
      %v5783 = vpop.f32.mrf.mxu0
      %v5784 = vadd.f32 %v5575, %v5783
      %v5785 = vpop.f32.mrf.mxu0
      %5786 = vmatprep.mubr.bf16.mxu0 %v5461
      %5787 = vmatmul.mubr.bf16.gmra.mxu0 %v5334
      %v5788 = vpop.f32.mrf.mxu0
      %v5789 = vadd.f32 %v5575, %v5788
      %v5790 = vpop.f32.mrf.mxu0
      %v5791 = vpop.f32.mrf.mxu0
      %v5792 = vadd.f32 %v5575, %v5791
      %v5793 = vpop.f32.mrf.mxu0
      %5794 = vmatprep.mubr.bf16.mxu0 %v5464
      %5795 = vmatmul.mubr.bf16.gmra.mxu0 %v5337
      %v5796 = vpop.f32.mrf.mxu0
      %v5797 = vadd.f32 %v5575, %v5796
      %v5798 = vpop.f32.mrf.mxu0
      %v5799 = vpop.f32.mrf.mxu0
      %v5800 = vadd.f32 %v5575, %v5799
      %v5801 = vpop.f32.mrf.mxu0
      %5802 = vmatprep.mubr.bf16.mxu0 %v5467
      %5803 = vmatmul.mubr.bf16.gmra.mxu0 %v5340
      %v5804 = vpop.f32.mrf.mxu0
      %v5805 = vadd.f32 %v5575, %v5804
      %v5806 = vpop.f32.mrf.mxu0
      %v5807 = vpop.f32.mrf.mxu0
      %v5808 = vadd.f32 %v5575, %v5807
      %v5809 = vpop.f32.mrf.mxu0
      %5810 = vmatprep.mubr.bf16.mxu0 %v5470
      %5811 = vmatmul.mubr.bf16.gmra.mxu0 %v5343
      %v5812 = vpop.f32.mrf.mxu0
      %v5813 = vadd.f32 %v5575, %v5812
      %v5814 = vpop.f32.mrf.mxu0
      %v5815 = vpop.f32.mrf.mxu0
      %v5816 = vadd.f32 %v5575, %v5815
      %v5817 = vpop.f32.mrf.mxu0
      %5818 = vmatprep.mubr.bf16.mxu0 %v5473
      %5819 = vmatmul.mubr.bf16.gmra.mxu0 %v5346
      %v5820 = vpop.f32.mrf.mxu0
      %v5821 = vadd.f32 %v5575, %v5820
      %v5822 = vpop.f32.mrf.mxu0
      %v5823 = vpop.f32.mrf.mxu0
      %v5824 = vadd.f32 %v5575, %v5823
      %v5825 = vpop.f32.mrf.mxu0
      %5826 = vmatprep.mubr.bf16.mxu0 %v5476
      %5827 = vmatmul.mubr.bf16.gmra.mxu0 %v5349
      %v5828 = vpop.f32.mrf.mxu0
      %v5829 = vadd.f32 %v5575, %v5828
      %v5830 = vpop.f32.mrf.mxu0
      %v5831 = vpop.f32.mrf.mxu0
      %v5832 = vadd.f32 %v5575, %v5831
      %v5833 = vpop.f32.mrf.mxu0
      %5834 = vmatprep.mubr.bf16.mxu0 %v5479
      %5835 = vmatmul.mubr.bf16.gmra.mxu0 %v5352
      %v5836 = vpop.f32.mrf.mxu0
      %v5837 = vadd.f32 %v5575, %v5836
      %v5838 = vpop.f32.mrf.mxu0
      %v5839 = vpop.f32.mrf.mxu0
      %v5840 = vadd.f32 %v5575, %v5839
      %v5841 = vpop.f32.mrf.mxu0
      %5842 = vmatprep.mubr.bf16.mxu0 %v5482
      %5843 = vmatmul.mubr.bf16.gmra.mxu0 %v5355
      %v5844 = vpop.f32.mrf.mxu0
      %v5845 = vadd.f32 %v5575, %v5844
      %v5846 = vpop.f32.mrf.mxu0
      %v5847 = vpop.f32.mrf.mxu0
      %v5848 = vadd.f32 %v5575, %v5847
      %v5849 = vpop.f32.mrf.mxu0
      %5850 = vmatprep.mubr.bf16.mxu0 %v5485
      %5851 = vmatmul.mubr.bf16.gmra.mxu0 %v5358
      %v5852 = vpop.f32.mrf.mxu0
      %v5853 = vadd.f32 %v5575, %v5852
      %v5854 = vpop.f32.mrf.mxu0
      %v5855 = vpop.f32.mrf.mxu0
      %v5856 = vadd.f32 %v5575, %v5855
      %v5857 = vpop.f32.mrf.mxu0
      %5858 = vmatprep.mubr.bf16.mxu0 %v5488
      %5859 = vmatmul.mubr.bf16.gmra.mxu0 %v5361
      %v5860 = vpop.f32.mrf.mxu0
      %v5861 = vadd.f32 %v5575, %v5860
      %v5862 = vpop.f32.mrf.mxu0
      %v5863 = vpop.f32.mrf.mxu0
      %v5864 = vadd.f32 %v5575, %v5863
      %v5865 = vpop.f32.mrf.mxu0
      %5866 = vmatprep.mubr.bf16.mxu0 %v5491
      %5867 = vmatmul.mubr.bf16.gmra.mxu0 %v5364
      %v5868 = vpop.f32.mrf.mxu0
      %v5869 = vadd.f32 %v5575, %v5868
      %v5870 = vpop.f32.mrf.mxu0
      %v5871 = vpop.f32.mrf.mxu0
      %v5872 = vadd.f32 %v5575, %v5871
      %v5873 = vpop.f32.mrf.mxu0
      %5874 = vmatprep.mubr.bf16.mxu0 %v5494
      %5875 = vmatmul.mubr.bf16.gmra.mxu0 %v5367
      %v5876 = vpop.f32.mrf.mxu0
      %v5877 = vadd.f32 %v5575, %v5876
      %v5878 = vpop.f32.mrf.mxu0
      %v5879 = vpop.f32.mrf.mxu0
      %v5880 = vadd.f32 %v5575, %v5879
      %v5881 = vpop.f32.mrf.mxu0
      %5882 = vmatprep.mubr.bf16.mxu0 %v5496
      %5883 = vmatmul.mubr.bf16.gmra.mxu0 %v5370
      %v5884 = vpop.f32.mrf.mxu0
      %v5885 = vadd.f32 %v5575, %v5884
      %v5886 = vpop.f32.mrf.mxu0
      %v5887 = vpop.f32.mrf.mxu0
      %v5888 = vadd.f32 %v5575, %v5887
      %v5889 = vpop.f32.mrf.mxu0
      %5890 = vdwg.mxu0
      %5891 = vmatprep.subr.bf16.mxu0 0
      %5892 = vmatpush1.bf16.msra.mxu0 0
      %5893 = vmatprep.subr.bf16.mxu0 0
      %5894 = vmatpush1.bf16.msra.mxu0 0
      %5895 = vmatprep.subr.bf16.mxu0 0
      %5896 = vmatpush1.bf16.msra.mxu0 0
      %5897 = vmatprep.subr.bf16.mxu0 0
      %5898 = vmatpush1.bf16.msra.mxu0 0
      %5899 = vmatprep.subr.bf16.mxu0 0
      %5900 = vmatpush1.bf16.msra.mxu0 0
      %5901 = vmatprep.subr.bf16.mxu0 0
      %5902 = vmatpush1.bf16.msra.mxu0 0
      %5903 = vmatprep.subr.bf16.mxu0 0
      %5904 = vmatpush1.bf16.msra.mxu0 %v5666
      %5905 = vmatprep.subr.bf16.mxu0 0
      %5906 = vmatpush1.bf16.msra.mxu0 %v5665
      %5907 = vmatprep.subr.bf16.mxu0 0
      %5908 = vmatpush2.bf16.msra.mxu0 0
      %5909 = vmatprep.subr.bf16.mxu0 0
      %5910 = vmatpush2.bf16.msra.mxu0 0
      %5911 = vmatprep.subr.bf16.mxu0 0
      %5912 = vmatpush2.bf16.msra.mxu0 0
      %5913 = vmatprep.subr.bf16.mxu0 0
      %5914 = vmatpush2.bf16.msra.mxu0 0
      %5915 = vmatprep.subr.bf16.mxu0 0
      %5916 = vmatpush2.bf16.msra.mxu0 0
      %5917 = vmatprep.subr.bf16.mxu0 0
      %5918 = vmatpush2.bf16.msra.mxu0 0
      %5919 = vmatprep.subr.bf16.mxu0 0
      %5920 = vmatpush2.bf16.msra.mxu0 0
      %5921 = vmatprep.subr.bf16.mxu0 0
      %5922 = vmatpush2.bf16.msra.mxu0 0
      %5923 = vmatprep.mubr.bf16.mxu0 0
      %5924 = vmatmul.mubr.bf16.gmra.mxu0 %v5686
      %v5925 = vpop.f32.mrf.mxu0
      %v5926 = vadd.f32 %v5765, %v5925
      %v5927 = vpop.f32.mrf.mxu0
      %v5928 = vpop.f32.mrf.mxu0
      %v5929 = vadd.f32 %v5768, %v5928
      %v5930 = vpop.f32.mrf.mxu0
      %5931 = vmatprep.mubr.bf16.mxu0 0
      %5932 = vmatmul.mubr.bf16.gmra.mxu0 %v5689
      %v5933 = vpop.f32.mrf.mxu0
      %v5934 = vadd.f32 %v5773, %v5933
      %v5935 = vpop.f32.mrf.mxu0
      %v5936 = vpop.f32.mrf.mxu0
      %v5937 = vadd.f32 %v5776, %v5936
      %v5938 = vpop.f32.mrf.mxu0
      %5939 = vmatprep.mubr.bf16.mxu0 0
      %5940 = vmatmul.mubr.bf16.gmra.mxu0 %v5692
      %v5941 = vpop.f32.mrf.mxu0
      %v5942 = vadd.f32 %v5781, %v5941
      %v5943 = vpop.f32.mrf.mxu0
      %v5944 = vpop.f32.mrf.mxu0
      %v5945 = vadd.f32 %v5784, %v5944
      %v5946 = vpop.f32.mrf.mxu0
      %5947 = vmatprep.mubr.bf16.mxu0 0
      %5948 = vmatmul.mubr.bf16.gmra.mxu0 %v5695
      %v5949 = vpop.f32.mrf.mxu0
      %v5950 = vadd.f32 %v5789, %v5949
      %v5951 = vpop.f32.mrf.mxu0
      %v5952 = vpop.f32.mrf.mxu0
      %v5953 = vadd.f32 %v5792, %v5952
      %v5954 = vpop.f32.mrf.mxu0
      %5955 = vmatprep.mubr.bf16.mxu0 0
      %5956 = vmatmul.mubr.bf16.gmra.mxu0 %v5698
      %v5957 = vpop.f32.mrf.mxu0
      %v5958 = vadd.f32 %v5797, %v5957
      %v5959 = vpop.f32.mrf.mxu0
      %v5960 = vpop.f32.mrf.mxu0
      %v5961 = vadd.f32 %v5800, %v5960
      %v5962 = vpop.f32.mrf.mxu0
      %5963 = vmatprep.mubr.bf16.mxu0 0
      %5964 = vmatmul.mubr.bf16.gmra.mxu0 %v5701
      %v5965 = vpop.f32.mrf.mxu0
      %v5966 = vadd.f32 %v5805, %v5965
      %v5967 = vpop.f32.mrf.mxu0
      %v5968 = vpop.f32.mrf.mxu0
      %v5969 = vadd.f32 %v5808, %v5968
      %v5970 = vpop.f32.mrf.mxu0
      %5971 = vmatprep.mubr.bf16.mxu0 0
      %5972 = vmatmul.mubr.bf16.gmra.mxu0 %v5704
      %v5973 = vpop.f32.mrf.mxu0
      %v5974 = vadd.f32 %v5813, %v5973
      %v5975 = vpop.f32.mrf.mxu0
      %v5976 = vpop.f32.mrf.mxu0
      %v5977 = vadd.f32 %v5816, %v5976
      %v5978 = vpop.f32.mrf.mxu0
      %5979 = vmatprep.mubr.bf16.mxu0 0
      %5980 = vmatmul.mubr.bf16.gmra.mxu0 %v5707
      %v5981 = vpop.f32.mrf.mxu0
      %v5982 = vadd.f32 %v5821, %v5981
      %v5983 = vpop.f32.mrf.mxu0
      %v5984 = vpop.f32.mrf.mxu0
      %v5985 = vadd.f32 %v5824, %v5984
      %v5986 = vpop.f32.mrf.mxu0
      %5987 = vmatprep.mubr.bf16.mxu0 0
      %5988 = vmatmul.mubr.bf16.gmra.mxu0 %v5710
      %v5989 = vpop.f32.mrf.mxu0
      %v5990 = vadd.f32 %v5829, %v5989
      %v5991 = vpop.f32.mrf.mxu0
      %v5992 = vpop.f32.mrf.mxu0
      %v5993 = vadd.f32 %v5832, %v5992
      %v5994 = vpop.f32.mrf.mxu0
      %5995 = vmatprep.mubr.bf16.mxu0 0
      %5996 = vmatmul.mubr.bf16.gmra.mxu0 %v5713
      %v5997 = vpop.f32.mrf.mxu0
      %v5998 = vadd.f32 %v5837, %v5997
      %v5999 = vpop.f32.mrf.mxu0
      %v6000 = vpop.f32.mrf.mxu0
      %v6001 = vadd.f32 %v5840, %v6000
      %v6002 = vpop.f32.mrf.mxu0
      %6003 = vmatprep.mubr.bf16.mxu0 0
      %6004 = vmatmul.mubr.bf16.gmra.mxu0 %v5716
      %v6005 = vpop.f32.mrf.mxu0
      %v6006 = vadd.f32 %v5845, %v6005
      %v6007 = vpop.f32.mrf.mxu0
      %v6008 = vpop.f32.mrf.mxu0
      %v6009 = vadd.f32 %v5848, %v6008
      %v6010 = vpop.f32.mrf.mxu0
      %6011 = vmatprep.mubr.bf16.mxu0 0
      %6012 = vmatmul.mubr.bf16.gmra.mxu0 %v5719
      %v6013 = vpop.f32.mrf.mxu0
      %v6014 = vadd.f32 %v5853, %v6013
      %v6015 = vpop.f32.mrf.mxu0
      %v6016 = vpop.f32.mrf.mxu0
      %v6017 = vadd.f32 %v5856, %v6016
      %v6018 = vpop.f32.mrf.mxu0
      %6019 = vmatprep.mubr.bf16.mxu0 0
      %6020 = vmatmul.mubr.bf16.gmra.mxu0 %v5722
      %v6021 = vpop.f32.mrf.mxu0
      %v6022 = vadd.f32 %v5861, %v6021
      %v6023 = vpop.f32.mrf.mxu0
      %v6024 = vpop.f32.mrf.mxu0
      %v6025 = vadd.f32 %v5864, %v6024
      %v6026 = vpop.f32.mrf.mxu0
      %6027 = vmatprep.mubr.bf16.mxu0 0
      %6028 = vmatmul.mubr.bf16.gmra.mxu0 %v5725
      %v6029 = vpop.f32.mrf.mxu0
      %v6030 = vadd.f32 %v5869, %v6029
      %v6031 = vpop.f32.mrf.mxu0
      %v6032 = vpop.f32.mrf.mxu0
      %v6033 = vadd.f32 %v5872, %v6032
      %v6034 = vpop.f32.mrf.mxu0
      %6035 = vmatprep.mubr.bf16.mxu0 0
      %6036 = vmatmul.mubr.bf16.gmra.mxu0 %v5728
      %v6037 = vpop.f32.mrf.mxu0
      %v6038 = vadd.f32 %v5877, %v6037
      %v6039 = vpop.f32.mrf.mxu0
      %v6040 = vpop.f32.mrf.mxu0
      %v6041 = vadd.f32 %v5880, %v6040
      %v6042 = vpop.f32.mrf.mxu0
      %6043 = vmatprep.mubr.bf16.mxu0 0
      %6044 = vmatmul.mubr.bf16.gmra.mxu0 %v3481
      %v6045 = vpop.f32.mrf.mxu0
      %v6046 = vadd.f32 %v5885, %v6045
      %v6047 = vpop.f32.mrf.mxu0
      %v6048 = vpop.f32.mrf.mxu0
      %v6049 = vadd.f32 %v5888, %v6048
      %v6050 = vpop.f32.mrf.mxu0
      %6051 = vdwg.mxu0
      %v6052 = vld [vmem:[%s7] sm:$0x1]
      %v6054 = vlaneseq
      %v6055 = vshrl.u32 %v6054, 7
      %v6056 = vsub.s32 0, %v6055
      %v6057 = vrot.slane %v6052, %v6056
      %v6095 = vunpack.c.l.b16 %v5534
      %v6096 = vunpack.c.l.b16 %v5535
      %v6097 = vunpack.c.l.b16 %v5536
      %v6098 = vunpack.c.l.b16 %v5537
      %v6099 = vunpack.c.l.b16 %v5538
      %v6100 = vunpack.c.l.b16 %v5539
      %v6101 = vunpack.c.l.b16 %v5540
      %v6102 = vunpack.c.l.b16 %v5541
      %v6103 = vunpack.c.l.b16 %v5542
      %v6104 = vunpack.c.l.b16 %v5543
      %v6105 = vunpack.c.l.b16 %v5544
      %v6106 = vunpack.c.l.b16 %v5545
      %v6107 = vunpack.c.l.b16 %v5546
      %v6108 = vunpack.c.l.b16 %v5547
      %v6109 = vunpack.c.l.b16 %v5548
      %v6110 = vunpack.c.l.b16 %v5549
      %v6111 = vunpack.c.l.b16 %v5550
      %v6112 = vunpack.c.l.b16 %v5551
      %v6113 = vunpack.c.l.b16 %v5552
      %v6114 = vunpack.c.l.b16 %v5553
      %v6115 = vunpack.c.l.b16 %v5554
      %v6116 = vunpack.c.l.b16 %v5555
      %v6117 = vunpack.c.l.b16 %v5556
      %v6118 = vunpack.c.l.b16 %v5557
      %v6119 = vunpack.c.l.b16 %v5558
      %v6120 = vunpack.c.l.b16 %v5559
      %v6121 = vunpack.c.l.b16 %v5560
      %v6122 = vunpack.c.l.b16 %v5561
      %v6123 = vunpack.c.l.b16 %v5562
      %v6124 = vunpack.c.l.b16 %v5563
      %v6125 = vunpack.c.l.b16 %v5564
      %v6126 = vunpack.c.l.b16 %v5565
      %v6127 = vunpack.c.l.b16 %v5566
      %v6128 = vunpack.c.l.b16 %v5567
      %v6129 = vunpack.c.l.b16 %v5568
      %v6130 = vunpack.c.l.b16 %v5569
      %v6131 = vpack.c.b16 %v6096, %v6095
      %v6132 = vpack.c.b16 %v6098, %v6097
      %v6133 = vpack.c.b16 %v6100, %v6099
      %v6134 = vpack.c.b16 %v6102, %v6101
      %v6135 = vpack.c.b16 %v6104, %v6103
      %v6136 = vpack.c.b16 %v6106, %v6105
      %v6137 = vpack.c.b16 %v6108, %v6107
      %v6138 = vpack.c.b16 %v6110, %v6109
      %v6139 = vpack.c.b16 %v6112, %v6111
      %v6140 = vpack.c.b16 %v6114, %v6113
      %v6141 = vpack.c.b16 %v6116, %v6115
      %v6142 = vpack.c.b16 %v6118, %v6117
      %v6143 = vpack.c.b16 %v6120, %v6119
      %v6144 = vpack.c.b16 %v6122, %v6121
      %v6145 = vpack.c.b16 %v6124, %v6123
      %v6146 = vpack.c.b16 %v6126, %v6125
      %v6147 = vpack.c.b16 %v6128, %v6127
      %v6148 = vpack.c.b16 %v6130, %v6129
      %6167 = vmatprep.subr.bf16.mxu0 0
      %6168 = vmatpush1.bf16.msra.mxu0 %v6138
      %6169 = vmatprep.subr.bf16.mxu0 0
      %6170 = vmatpush1.bf16.msra.mxu0 %v6137
      %6171 = vmatprep.subr.bf16.mxu0 0
      %6172 = vmatpush1.bf16.msra.mxu0 %v6136
      %6173 = vmatprep.subr.bf16.mxu0 0
      %6174 = vmatpush1.bf16.msra.mxu0 %v6135
      %6175 = vmatprep.subr.bf16.mxu0 0
      %6176 = vmatpush1.bf16.msra.mxu0 %v6134
      %6177 = vmatprep.subr.bf16.mxu0 0
      %6178 = vmatpush1.bf16.msra.mxu0 %v6133
      %6179 = vmatprep.subr.bf16.mxu0 0
      %6180 = vmatpush1.bf16.msra.mxu0 %v6132
      %6181 = vmatprep.subr.bf16.mxu0 0
      %6182 = vmatpush1.bf16.msra.mxu0 %v6131
      %6183 = vmatprep.subr.bf16.mxu0 0
      %6184 = vmatpush2.bf16.msra.mxu0 %v6146
      %6185 = vmatprep.subr.bf16.mxu0 0
      %6186 = vmatpush2.bf16.msra.mxu0 %v6145
      %6187 = vmatprep.subr.bf16.mxu0 0
      %6188 = vmatpush2.bf16.msra.mxu0 %v6144
      %6189 = vmatprep.subr.bf16.mxu0 0
      %6190 = vmatpush2.bf16.msra.mxu0 %v6143
      %6191 = vmatprep.subr.bf16.mxu0 0
      %6192 = vmatpush2.bf16.msra.mxu0 %v6142
      %6193 = vmatprep.subr.bf16.mxu0 0
      %6194 = vmatpush2.bf16.msra.mxu0 %v6141
      %6195 = vmatprep.subr.bf16.mxu0 0
      %6196 = vmatpush2.bf16.msra.mxu0 %v6140
      %6197 = vmatprep.subr.bf16.mxu0 0
      %6198 = vmatpush2.bf16.msra.mxu0 %v6139
      %6199 = vmatprep.mubr.bf16.mxu0 %v5452
      %6200 = vmatmul.mubr.bf16.gmra.mxu0 %v5325
      %v6201 = vpop.f32.mrf.mxu0
      %v6202 = vadd.f32 %v6057, %v6201
      %v6203 = vpop.f32.mrf.mxu0
      %v6204 = vpop.f32.mrf.mxu0
      %v6205 = vadd.f32 %v6057, %v6204
      %v6206 = vpop.f32.mrf.mxu0
      %6207 = vmatprep.mubr.bf16.mxu0 %v5455
      %6208 = vmatmul.mubr.bf16.gmra.mxu0 %v5328
      %v6209 = vpop.f32.mrf.mxu0
      %v6210 = vadd.f32 %v6057, %v6209
      %v6211 = vpop.f32.mrf.mxu0
      %v6212 = vpop.f32.mrf.mxu0
      %v6213 = vadd.f32 %v6057, %v6212
      %v6214 = vpop.f32.mrf.mxu0
      %6215 = vmatprep.mubr.bf16.mxu0 %v5458
      %6216 = vmatmul.mubr.bf16.gmra.mxu0 %v5331
      %v6217 = vpop.f32.mrf.mxu0
      %v6218 = vadd.f32 %v6057, %v6217
      %v6219 = vpop.f32.mrf.mxu0
      %v6220 = vpop.f32.mrf.mxu0
      %v6221 = vadd.f32 %v6057, %v6220
      %v6222 = vpop.f32.mrf.mxu0
      %6223 = vmatprep.mubr.bf16.mxu0 %v5461
      %6224 = vmatmul.mubr.bf16.gmra.mxu0 %v5334
      %v6225 = vpop.f32.mrf.mxu0
      %v6226 = vadd.f32 %v6057, %v6225
      %v6227 = vpop.f32.mrf.mxu0
      %v6228 = vpop.f32.mrf.mxu0
      %v6229 = vadd.f32 %v6057, %v6228
      %v6230 = vpop.f32.mrf.mxu0
      %6231 = vmatprep.mubr.bf16.mxu0 %v5464
      %6232 = vmatmul.mubr.bf16.gmra.mxu0 %v5337
      %v6233 = vpop.f32.mrf.mxu0
      %v6234 = vadd.f32 %v6057, %v6233
      %v6235 = vpop.f32.mrf.mxu0
      %v6236 = vpop.f32.mrf.mxu0
      %v6237 = vadd.f32 %v6057, %v6236
      %v6238 = vpop.f32.mrf.mxu0
      %6239 = vmatprep.mubr.bf16.mxu0 %v5467
      %6240 = vmatmul.mubr.bf16.gmra.mxu0 %v5340
      %v6241 = vpop.f32.mrf.mxu0
      %v6242 = vadd.f32 %v6057, %v6241
      %v6243 = vpop.f32.mrf.mxu0
      %v6244 = vpop.f32.mrf.mxu0
      %v6245 = vadd.f32 %v6057, %v6244
      %v6246 = vpop.f32.mrf.mxu0
      %6247 = vmatprep.mubr.bf16.mxu0 %v5470
      %6248 = vmatmul.mubr.bf16.gmra.mxu0 %v5343
      %v6249 = vpop.f32.mrf.mxu0
      %v6250 = vadd.f32 %v6057, %v6249
      %v6251 = vpop.f32.mrf.mxu0
      %v6252 = vpop.f32.mrf.mxu0
      %v6253 = vadd.f32 %v6057, %v6252
      %v6254 = vpop.f32.mrf.mxu0
      %6255 = vmatprep.mubr.bf16.mxu0 %v5473
      %6256 = vmatmul.mubr.bf16.gmra.mxu0 %v5346
      %v6257 = vpop.f32.mrf.mxu0
      %v6258 = vadd.f32 %v6057, %v6257
      %v6259 = vpop.f32.mrf.mxu0
      %v6260 = vpop.f32.mrf.mxu0
      %v6261 = vadd.f32 %v6057, %v6260
      %v6262 = vpop.f32.mrf.mxu0
      %6263 = vmatprep.mubr.bf16.mxu0 %v5476
      %6264 = vmatmul.mubr.bf16.gmra.mxu0 %v5349
      %v6265 = vpop.f32.mrf.mxu0
      %v6266 = vadd.f32 %v6057, %v6265
      %v6267 = vpop.f32.mrf.mxu0
      %v6268 = vpop.f32.mrf.mxu0
      %v6269 = vadd.f32 %v6057, %v6268
      %v6270 = vpop.f32.mrf.mxu0
      %6271 = vmatprep.mubr.bf16.mxu0 %v5479
      %6272 = vmatmul.mubr.bf16.gmra.mxu0 %v5352
      %v6273 = vpop.f32.mrf.mxu0
      %v6274 = vadd.f32 %v6057, %v6273
      %v6275 = vpop.f32.mrf.mxu0
      %v6276 = vpop.f32.mrf.mxu0
      %v6277 = vadd.f32 %v6057, %v6276
      %v6278 = vpop.f32.mrf.mxu0
      %6279 = vmatprep.mubr.bf16.mxu0 %v5482
      %6280 = vmatmul.mubr.bf16.gmra.mxu0 %v5355
      %v6281 = vpop.f32.mrf.mxu0
      %v6282 = vadd.f32 %v6057, %v6281
      %v6283 = vpop.f32.mrf.mxu0
      %v6284 = vpop.f32.mrf.mxu0
      %v6285 = vadd.f32 %v6057, %v6284
      %v6286 = vpop.f32.mrf.mxu0
      %6287 = vmatprep.mubr.bf16.mxu0 %v5485
      %6288 = vmatmul.mubr.bf16.gmra.mxu0 %v5358
      %v6289 = vpop.f32.mrf.mxu0
      %v6290 = vadd.f32 %v6057, %v6289
      %v6291 = vpop.f32.mrf.mxu0
      %v6292 = vpop.f32.mrf.mxu0
      %v6293 = vadd.f32 %v6057, %v6292
      %v6294 = vpop.f32.mrf.mxu0
      %6295 = vmatprep.mubr.bf16.mxu0 %v5488
      %6296 = vmatmul.mubr.bf16.gmra.mxu0 %v5361
      %v6297 = vpop.f32.mrf.mxu0
      %v6298 = vadd.f32 %v6057, %v6297
      %v6299 = vpop.f32.mrf.mxu0
      %v6300 = vpop.f32.mrf.mxu0
      %v6301 = vadd.f32 %v6057, %v6300
      %v6302 = vpop.f32.mrf.mxu0
      %6303 = vmatprep.mubr.bf16.mxu0 %v5491
      %6304 = vmatmul.mubr.bf16.gmra.mxu0 %v5364
      %v6305 = vpop.f32.mrf.mxu0
      %v6306 = vadd.f32 %v6057, %v6305
      %v6307 = vpop.f32.mrf.mxu0
      %v6308 = vpop.f32.mrf.mxu0
      %v6309 = vadd.f32 %v6057, %v6308
      %v6310 = vpop.f32.mrf.mxu0
      %6311 = vmatprep.mubr.bf16.mxu0 %v5494
      %6312 = vmatmul.mubr.bf16.gmra.mxu0 %v5367
      %v6313 = vpop.f32.mrf.mxu0
      %v6314 = vadd.f32 %v6057, %v6313
      %v6315 = vpop.f32.mrf.mxu0
      %v6316 = vpop.f32.mrf.mxu0
      %v6317 = vadd.f32 %v6057, %v6316
      %v6318 = vpop.f32.mrf.mxu0
      %6319 = vmatprep.mubr.bf16.mxu0 %v5496
      %6320 = vmatmul.mubr.bf16.gmra.mxu0 %v5370
      %v6321 = vpop.f32.mrf.mxu0
      %v6322 = vadd.f32 %v6057, %v6321
      %v6323 = vpop.f32.mrf.mxu0
      %v6324 = vpop.f32.mrf.mxu0
      %v6325 = vadd.f32 %v6057, %v6324
      %v6326 = vpop.f32.mrf.mxu0
      %6327 = vdwg.mxu0
      %6328 = vmatprep.subr.bf16.mxu0 0
      %6329 = vmatpush1.bf16.msra.mxu0 0
      %6330 = vmatprep.subr.bf16.mxu0 0
      %6331 = vmatpush1.bf16.msra.mxu0 0
      %6332 = vmatprep.subr.bf16.mxu0 0
      %6333 = vmatpush1.bf16.msra.mxu0 0
      %6334 = vmatprep.subr.bf16.mxu0 0
      %6335 = vmatpush1.bf16.msra.mxu0 0
      %6336 = vmatprep.subr.bf16.mxu0 0
      %6337 = vmatpush1.bf16.msra.mxu0 0
      %6338 = vmatprep.subr.bf16.mxu0 0
      %6339 = vmatpush1.bf16.msra.mxu0 0
      %6340 = vmatprep.subr.bf16.mxu0 0
      %6341 = vmatpush1.bf16.msra.mxu0 %v6148
      %6342 = vmatprep.subr.bf16.mxu0 0
      %6343 = vmatpush1.bf16.msra.mxu0 %v6147
      %6344 = vmatprep.subr.bf16.mxu0 0
      %6345 = vmatpush2.bf16.msra.mxu0 0
      %6346 = vmatprep.subr.bf16.mxu0 0
      %6347 = vmatpush2.bf16.msra.mxu0 0
      %6348 = vmatprep.subr.bf16.mxu0 0
      %6349 = vmatpush2.bf16.msra.mxu0 0
      %6350 = vmatprep.subr.bf16.mxu0 0
      %6351 = vmatpush2.bf16.msra.mxu0 0
      %6352 = vmatprep.subr.bf16.mxu0 0
      %6353 = vmatpush2.bf16.msra.mxu0 0
      %6354 = vmatprep.subr.bf16.mxu0 0
      %6355 = vmatpush2.bf16.msra.mxu0 0
      %6356 = vmatprep.subr.bf16.mxu0 0
      %6357 = vmatpush2.bf16.msra.mxu0 0
      %6358 = vmatprep.subr.bf16.mxu0 0
      %6359 = vmatpush2.bf16.msra.mxu0 0
      %6360 = vmatprep.mubr.bf16.mxu0 0
      %6361 = vmatmul.mubr.bf16.gmra.mxu0 %v5686
      %v6362 = vpop.f32.mrf.mxu0
      %v6363 = vadd.f32 %v6202, %v6362
      %v6364 = vpop.f32.mrf.mxu0
      %v6365 = vpop.f32.mrf.mxu0
      %v6366 = vadd.f32 %v6205, %v6365
      %v6367 = vpop.f32.mrf.mxu0
      %6368 = vmatprep.mubr.bf16.mxu0 0
      %6369 = vmatmul.mubr.bf16.gmra.mxu0 %v5689
      %v6370 = vpop.f32.mrf.mxu0
      %v6371 = vadd.f32 %v6210, %v6370
      %v6372 = vpop.f32.mrf.mxu0
      %v6373 = vpop.f32.mrf.mxu0
      %v6374 = vadd.f32 %v6213, %v6373
      %v6375 = vpop.f32.mrf.mxu0
      %6376 = vmatprep.mubr.bf16.mxu0 0
      %6377 = vmatmul.mubr.bf16.gmra.mxu0 %v5692
      %v6378 = vpop.f32.mrf.mxu0
      %v6379 = vadd.f32 %v6218, %v6378
      %v6380 = vpop.f32.mrf.mxu0
      %v6381 = vpop.f32.mrf.mxu0
      %v6382 = vadd.f32 %v6221, %v6381
      %v6383 = vpop.f32.mrf.mxu0
      %6384 = vmatprep.mubr.bf16.mxu0 0
      %6385 = vmatmul.mubr.bf16.gmra.mxu0 %v5695
      %v6386 = vpop.f32.mrf.mxu0
      %v6387 = vadd.f32 %v6226, %v6386
      %v6388 = vpop.f32.mrf.mxu0
      %v6389 = vpop.f32.mrf.mxu0
      %v6390 = vadd.f32 %v6229, %v6389
      %v6391 = vpop.f32.mrf.mxu0
      %6392 = vmatprep.mubr.bf16.mxu0 0
      %6393 = vmatmul.mubr.bf16.gmra.mxu0 %v5698
      %v6394 = vpop.f32.mrf.mxu0
      %v6395 = vadd.f32 %v6234, %v6394
      %v6396 = vpop.f32.mrf.mxu0
      %v6397 = vpop.f32.mrf.mxu0
      %v6398 = vadd.f32 %v6237, %v6397
      %v6399 = vpop.f32.mrf.mxu0
      %6400 = vmatprep.mubr.bf16.mxu0 0
      %6401 = vmatmul.mubr.bf16.gmra.mxu0 %v5701
      %v6402 = vpop.f32.mrf.mxu0
      %v6403 = vadd.f32 %v6242, %v6402
      %v6404 = vpop.f32.mrf.mxu0
      %v6405 = vpop.f32.mrf.mxu0
      %v6406 = vadd.f32 %v6245, %v6405
      %v6407 = vpop.f32.mrf.mxu0
      %6408 = vmatprep.mubr.bf16.mxu0 0
      %6409 = vmatmul.mubr.bf16.gmra.mxu0 %v5704
      %v6410 = vpop.f32.mrf.mxu0
      %v6411 = vadd.f32 %v6250, %v6410
      %v6412 = vpop.f32.mrf.mxu0
      %v6413 = vpop.f32.mrf.mxu0
      %v6414 = vadd.f32 %v6253, %v6413
      %v6415 = vpop.f32.mrf.mxu0
      %6416 = vmatprep.mubr.bf16.mxu0 0
      %6417 = vmatmul.mubr.bf16.gmra.mxu0 %v5707
      %v6418 = vpop.f32.mrf.mxu0
      %v6419 = vadd.f32 %v6258, %v6418
      %v6420 = vpop.f32.mrf.mxu0
      %v6421 = vpop.f32.mrf.mxu0
      %v6422 = vadd.f32 %v6261, %v6421
      %v6423 = vpop.f32.mrf.mxu0
      %6424 = vmatprep.mubr.bf16.mxu0 0
      %6425 = vmatmul.mubr.bf16.gmra.mxu0 %v5710
      %v6426 = vpop.f32.mrf.mxu0
      %v6427 = vadd.f32 %v6266, %v6426
      %v6428 = vpop.f32.mrf.mxu0
      %v6429 = vpop.f32.mrf.mxu0
      %v6430 = vadd.f32 %v6269, %v6429
      %v6431 = vpop.f32.mrf.mxu0
      %6432 = vmatprep.mubr.bf16.mxu0 0
      %6433 = vmatmul.mubr.bf16.gmra.mxu0 %v5713
      %v6434 = vpop.f32.mrf.mxu0
      %v6435 = vadd.f32 %v6274, %v6434
      %v6436 = vpop.f32.mrf.mxu0
      %v6437 = vpop.f32.mrf.mxu0
      %v6438 = vadd.f32 %v6277, %v6437
      %v6439 = vpop.f32.mrf.mxu0
      %6440 = vmatprep.mubr.bf16.mxu0 0
      %6441 = vmatmul.mubr.bf16.gmra.mxu0 %v5716
      %v6442 = vpop.f32.mrf.mxu0
      %v6443 = vadd.f32 %v6282, %v6442
      %v6444 = vpop.f32.mrf.mxu0
      %v6445 = vpop.f32.mrf.mxu0
      %v6446 = vadd.f32 %v6285, %v6445
      %v6447 = vpop.f32.mrf.mxu0
      %6448 = vmatprep.mubr.bf16.mxu0 0
      %6449 = vmatmul.mubr.bf16.gmra.mxu0 %v5719
      %v6450 = vpop.f32.mrf.mxu0
      %v6451 = vadd.f32 %v6290, %v6450
      %v6452 = vpop.f32.mrf.mxu0
      %v6453 = vpop.f32.mrf.mxu0
      %v6454 = vadd.f32 %v6293, %v6453
      %v6455 = vpop.f32.mrf.mxu0
      %6456 = vmatprep.mubr.bf16.mxu0 0
      %6457 = vmatmul.mubr.bf16.gmra.mxu0 %v5722
      %v6458 = vpop.f32.mrf.mxu0
      %v6459 = vadd.f32 %v6298, %v6458
      %v6460 = vpop.f32.mrf.mxu0
      %v6461 = vpop.f32.mrf.mxu0
      %v6462 = vadd.f32 %v6301, %v6461
      %v6463 = vpop.f32.mrf.mxu0
      %6464 = vmatprep.mubr.bf16.mxu0 0
      %6465 = vmatmul.mubr.bf16.gmra.mxu0 %v5725
      %v6466 = vpop.f32.mrf.mxu0
      %v6467 = vadd.f32 %v6306, %v6466
      %v6468 = vpop.f32.mrf.mxu0
      %v6469 = vpop.f32.mrf.mxu0
      %v6470 = vadd.f32 %v6309, %v6469
      %v6471 = vpop.f32.mrf.mxu0
      %6472 = vmatprep.mubr.bf16.mxu0 0
      %6473 = vmatmul.mubr.bf16.gmra.mxu0 %v5728
      %v6474 = vpop.f32.mrf.mxu0
      %v6475 = vadd.f32 %v6314, %v6474
      %v6476 = vpop.f32.mrf.mxu0
      %v6477 = vpop.f32.mrf.mxu0
      %v6478 = vadd.f32 %v6317, %v6477
      %v6479 = vpop.f32.mrf.mxu0
      %6480 = vmatprep.mubr.bf16.mxu0 0
      %6481 = vmatmul.mubr.bf16.gmra.mxu0 %v3481
      %v6482 = vpop.f32.mrf.mxu0
      %v6483 = vadd.f32 %v6322, %v6482
      %v6484 = vpop.f32.mrf.mxu0
      %v6485 = vpop.f32.mrf.mxu0
      %v6486 = vadd.f32 %v6325, %v6485
      %v6487 = vpop.f32.mrf.mxu0
      %6488 = vdwg.mxu0
      %v6489 = vadd.f32 %v5926, 1.0
      %v6490 = vadd.f32 %v5929, 1.0
      %v6491 = vadd.f32 %v5934, 1.0
      %v6492 = vadd.f32 %v5937, 1.0
      %v6493 = vadd.f32 %v5942, 1.0
      %v6494 = vadd.f32 %v5945, 1.0
      %v6495 = vadd.f32 %v5950, 1.0
      %v6496 = vadd.f32 %v5953, 1.0
      %v6497 = vadd.f32 %v5958, 1.0
      %v6498 = vadd.f32 %v5961, 1.0
      %v6499 = vadd.f32 %v5966, 1.0
      %v6500 = vadd.f32 %v5969, 1.0
      %v6501 = vadd.f32 %v5974, 1.0
      %v6502 = vadd.f32 %v5977, 1.0
      %v6503 = vadd.f32 %v5982, 1.0
      %v6504 = vadd.f32 %v5985, 1.0
      %v6505 = vadd.f32 %v5990, 1.0
      %v6506 = vadd.f32 %v5993, 1.0
      %v6507 = vadd.f32 %v5998, 1.0
      %v6508 = vadd.f32 %v6001, 1.0
      %v6509 = vadd.f32 %v6006, 1.0
      %v6510 = vadd.f32 %v6009, 1.0
      %v6511 = vadd.f32 %v6014, 1.0
      %v6512 = vadd.f32 %v6017, 1.0
      %v6513 = vadd.f32 %v6022, 1.0
      %v6514 = vadd.f32 %v6025, 1.0
      %v6515 = vadd.f32 %v6030, 1.0
      %v6516 = vadd.f32 %v6033, 1.0
      %v6517 = vadd.f32 %v6038, 1.0
      %v6518 = vadd.f32 %v6041, 1.0
      %v6519 = vadd.f32 %v6046, 1.0
      %v6520 = vadd.f32 %v6049, 1.0
      %v6521 = vmul.f32 %v4274, %v6489
      %v6522 = vmul.f32 %v4275, %v6490
      %v6523 = vmul.f32 %v4276, %v6491
      %v6524 = vmul.f32 %v4277, %v6492
      %v6525 = vmul.f32 %v4278, %v6493
      %v6526 = vmul.f32 %v4279, %v6494
      %v6527 = vmul.f32 %v4280, %v6495
      %v6528 = vmul.f32 %v4281, %v6496
      %v6529 = vmul.f32 %v4282, %v6497
      %v6530 = vmul.f32 %v4283, %v6498
      %v6531 = vmul.f32 %v4284, %v6499
      %v6532 = vmul.f32 %v4285, %v6500
      %v6533 = vmul.f32 %v4286, %v6501
      %v6534 = vmul.f32 %v4287, %v6502
      %v6535 = vmul.f32 %v4288, %v6503
      %v6536 = vmul.f32 %v4289, %v6504
      %v6537 = vmul.f32 %v4290, %v6505
      %v6538 = vmul.f32 %v4291, %v6506
      %v6539 = vmul.f32 %v4292, %v6507
      %v6540 = vmul.f32 %v4293, %v6508
      %v6541 = vmul.f32 %v4294, %v6509
      %v6542 = vmul.f32 %v4295, %v6510
      %v6543 = vmul.f32 %v4296, %v6511
      %v6544 = vmul.f32 %v4297, %v6512
      %v6545 = vmul.f32 %v4298, %v6513
      %v6546 = vmul.f32 %v4299, %v6514
      %v6547 = vmul.f32 %v4300, %v6515
      %v6548 = vmul.f32 %v4301, %v6516
      %v6549 = vmul.f32 %v4302, %v6517
      %v6550 = vmul.f32 %v4303, %v6518
      %v6551 = vmul.f32 %v4304, %v6519
      %v6552 = vmul.f32 %v4305, %v6520
      %v6553 = vadd.f32 %v6521, %v6363
      %v6554 = vadd.f32 %v6522, %v6366
      %v6555 = vadd.f32 %v6523, %v6371
      %v6556 = vadd.f32 %v6524, %v6374
      %v6557 = vadd.f32 %v6525, %v6379
      %v6558 = vadd.f32 %v6526, %v6382
      %v6559 = vadd.f32 %v6527, %v6387
      %v6560 = vadd.f32 %v6528, %v6390
      %v6561 = vadd.f32 %v6529, %v6395
      %v6562 = vadd.f32 %v6530, %v6398
      %v6563 = vadd.f32 %v6531, %v6403
      %v6564 = vadd.f32 %v6532, %v6406
      %v6565 = vadd.f32 %v6533, %v6411
      %v6566 = vadd.f32 %v6534, %v6414
      %v6567 = vadd.f32 %v6535, %v6419
      %v6568 = vadd.f32 %v6536, %v6422
      %v6569 = vadd.f32 %v6537, %v6427
      %v6570 = vadd.f32 %v6538, %v6430
      %v6571 = vadd.f32 %v6539, %v6435
      %v6572 = vadd.f32 %v6540, %v6438
      %v6573 = vadd.f32 %v6541, %v6443
      %v6574 = vadd.f32 %v6542, %v6446
      %v6575 = vadd.f32 %v6543, %v6451
      %v6576 = vadd.f32 %v6544, %v6454
      %v6577 = vadd.f32 %v6545, %v6459
      %v6578 = vadd.f32 %v6546, %v6462
      %v6579 = vadd.f32 %v6547, %v6467
      %v6580 = vadd.f32 %v6548, %v6470
      %v6581 = vadd.f32 %v6549, %v6475
      %v6582 = vadd.f32 %v6550, %v6478
      %v6583 = vadd.f32 %v6551, %v6483
      %v6584 = vadd.f32 %v6552, %v6486
      %vm6585 = vcmp.ge.f32.partialorder %v6553, 0.0
      %vm6586 = vcmp.ge.f32.partialorder %v6554, 0.0
      %vm6587 = vcmp.ge.f32.partialorder %v6555, 0.0
      %vm6588 = vcmp.ge.f32.partialorder %v6556, 0.0
      %vm6589 = vcmp.ge.f32.partialorder %v6557, 0.0
      %vm6590 = vcmp.ge.f32.partialorder %v6558, 0.0
      %vm6591 = vcmp.ge.f32.partialorder %v6559, 0.0
      %vm6592 = vcmp.ge.f32.partialorder %v6560, 0.0
      %vm6593 = vcmp.ge.f32.partialorder %v6561, 0.0
      %vm6594 = vcmp.ge.f32.partialorder %v6562, 0.0
      %vm6595 = vcmp.ge.f32.partialorder %v6563, 0.0
      %vm6596 = vcmp.ge.f32.partialorder %v6564, 0.0
      %vm6597 = vcmp.ge.f32.partialorder %v6565, 0.0
      %vm6598 = vcmp.ge.f32.partialorder %v6566, 0.0
      %vm6599 = vcmp.ge.f32.partialorder %v6567, 0.0
      %vm6600 = vcmp.ge.f32.partialorder %v6568, 0.0
      %vm6601 = vcmp.ge.f32.partialorder %v6569, 0.0
      %vm6602 = vcmp.ge.f32.partialorder %v6570, 0.0
      %vm6603 = vcmp.ge.f32.partialorder %v6571, 0.0
      %vm6604 = vcmp.ge.f32.partialorder %v6572, 0.0
      %vm6605 = vcmp.ge.f32.partialorder %v6573, 0.0
      %vm6606 = vcmp.ge.f32.partialorder %v6574, 0.0
      %vm6607 = vcmp.ge.f32.partialorder %v6575, 0.0
      %vm6608 = vcmp.ge.f32.partialorder %v6576, 0.0
      %vm6609 = vcmp.ge.f32.partialorder %v6577, 0.0
      %vm6610 = vcmp.ge.f32.partialorder %v6578, 0.0
      %vm6611 = vcmp.ge.f32.partialorder %v6579, 0.0
      %vm6612 = vcmp.ge.f32.partialorder %v6580, 0.0
      %vm6613 = vcmp.ge.f32.partialorder %v6581, 0.0
      %vm6614 = vcmp.ge.f32.partialorder %v6582, 0.0
      %vm6615 = vcmp.ge.f32.partialorder %v6583, 0.0
      %vm6616 = vcmp.ge.f32.partialorder %v6584, 0.0
      %v6617 = vmul.f32 %v6553, 0.2
      %v6618 = vmul.f32 %v6554, 0.2
      %v6619 = vmul.f32 %v6555, 0.2
      %v6620 = vmul.f32 %v6556, 0.2
      %v6621 = vmul.f32 %v6557, 0.2
      %v6622 = vmul.f32 %v6558, 0.2
      %v6623 = vmul.f32 %v6559, 0.2
      %v6624 = vmul.f32 %v6560, 0.2
      %v6625 = vmul.f32 %v6561, 0.2
      %v6626 = vmul.f32 %v6562, 0.2
      %v6627 = vmul.f32 %v6563, 0.2
      %v6628 = vmul.f32 %v6564, 0.2
      %v6629 = vmul.f32 %v6565, 0.2
      %v6630 = vmul.f32 %v6566, 0.2
      %v6631 = vmul.f32 %v6567, 0.2
      %v6632 = vmul.f32 %v6568, 0.2
      %v6633 = vmul.f32 %v6569, 0.2
      %v6634 = vmul.f32 %v6570, 0.2
      %v6635 = vmul.f32 %v6571, 0.2
      %v6636 = vmul.f32 %v6572, 0.2
      %v6637 = vmul.f32 %v6573, 0.2
      %v6638 = vmul.f32 %v6574, 0.2
      %v6639 = vmul.f32 %v6575, 0.2
      %v6640 = vmul.f32 %v6576, 0.2
      %v6641 = vmul.f32 %v6577, 0.2
      %v6642 = vmul.f32 %v6578, 0.2
      %v6643 = vmul.f32 %v6579, 0.2
      %v6644 = vmul.f32 %v6580, 0.2
      %v6645 = vmul.f32 %v6581, 0.2
      %v6646 = vmul.f32 %v6582, 0.2
      %v6647 = vmul.f32 %v6583, 0.2
      %v6648 = vmul.f32 %v6584, 0.2
      %v6649 = vsel %vm6585, %v6553, %v6617
      %v6650 = vsel %vm6586, %v6554, %v6618
      %v6651 = vsel %vm6587, %v6555, %v6619
      %v6652 = vsel %vm6588, %v6556, %v6620
      %v6653 = vsel %vm6589, %v6557, %v6621
      %v6654 = vsel %vm6590, %v6558, %v6622
      %v6655 = vsel %vm6591, %v6559, %v6623
      %v6656 = vsel %vm6592, %v6560, %v6624
      %v6657 = vsel %vm6593, %v6561, %v6625
      %v6658 = vsel %vm6594, %v6562, %v6626
      %v6659 = vsel %vm6595, %v6563, %v6627
      %v6660 = vsel %vm6596, %v6564, %v6628
      %v6661 = vsel %vm6597, %v6565, %v6629
      %v6662 = vsel %vm6598, %v6566, %v6630
      %v6663 = vsel %vm6599, %v6567, %v6631
      %v6664 = vsel %vm6600, %v6568, %v6632
      %v6665 = vsel %vm6601, %v6569, %v6633
      %v6666 = vsel %vm6602, %v6570, %v6634
      %v6667 = vsel %vm6603, %v6571, %v6635
      %v6668 = vsel %vm6604, %v6572, %v6636
      %v6669 = vsel %vm6605, %v6573, %v6637
      %v6670 = vsel %vm6606, %v6574, %v6638
      %v6671 = vsel %vm6607, %v6575, %v6639
      %v6672 = vsel %vm6608, %v6576, %v6640
      %v6673 = vsel %vm6609, %v6577, %v6641
      %v6674 = vsel %vm6610, %v6578, %v6642
      %v6675 = vsel %vm6611, %v6579, %v6643
      %v6676 = vsel %vm6612, %v6580, %v6644
      %v6677 = vsel %vm6613, %v6581, %v6645
      %v6678 = vsel %vm6614, %v6582, %v6646
      %v6679 = vsel %vm6615, %v6583, %v6647
      %v6680 = vsel %vm6616, %v6584, %v6648
      %v6681 = vpack.c.bf16 %v6650, %v6649
      %v6682 = vpack.c.bf16 %v6652, %v6651
      %v6683 = vpack.c.bf16 %v6654, %v6653
      %v6684 = vpack.c.bf16 %v6656, %v6655
      %v6685 = vpack.c.bf16 %v6658, %v6657
      %v6686 = vpack.c.bf16 %v6660, %v6659
      %v6687 = vpack.c.bf16 %v6662, %v6661
      %v6688 = vpack.c.bf16 %v6664, %v6663
      %v6689 = vpack.c.bf16 %v6666, %v6665
      %v6690 = vpack.c.bf16 %v6668, %v6667
      %v6691 = vpack.c.bf16 %v6670, %v6669
      %v6692 = vpack.c.bf16 %v6672, %v6671
      %v6693 = vpack.c.bf16 %v6674, %v6673
      %v6694 = vpack.c.bf16 %v6676, %v6675
      %v6695 = vpack.c.bf16 %v6678, %v6677
      %v6696 = vpack.c.bf16 %v6680, %v6679
      %v6698 = vshrl.u32 %v6681, 16
      %v6700 = vrot.slane %v6698, 7
      %v6701 = vshll.u32 %v6681, 16
      %v6703 = vor.u32 %v6700, %v6701
      %v6705 = vshrl.u32 %v6682, 16
      %v6707 = vrot.slane %v6705, 7
      %v6708 = vshll.u32 %v6682, 16
      %v6710 = vor.u32 %v6707, %v6708
      %v6712 = vshrl.u32 %v6683, 16
      %v6714 = vrot.slane %v6712, 7
      %v6715 = vshll.u32 %v6683, 16
      %v6717 = vor.u32 %v6714, %v6715
      %v6719 = vshrl.u32 %v6684, 16
      %v6721 = vrot.slane %v6719, 7
      %v6722 = vshll.u32 %v6684, 16
      %v6724 = vor.u32 %v6721, %v6722
      %v6726 = vshrl.u32 %v6685, 16
      %v6728 = vrot.slane %v6726, 7
      %v6729 = vshll.u32 %v6685, 16
      %v6731 = vor.u32 %v6728, %v6729
      %v6733 = vshrl.u32 %v6686, 16
      %v6735 = vrot.slane %v6733, 7
      %v6736 = vshll.u32 %v6686, 16
      %v6738 = vor.u32 %v6735, %v6736
      %v6740 = vshrl.u32 %v6687, 16
      %v6742 = vrot.slane %v6740, 7
      %v6743 = vshll.u32 %v6687, 16
      %v6745 = vor.u32 %v6742, %v6743
      %v6747 = vshrl.u32 %v6688, 16
      %v6749 = vrot.slane %v6747, 7
      %v6750 = vshll.u32 %v6688, 16
      %v6752 = vor.u32 %v6749, %v6750
      %v6754 = vshrl.u32 %v6689, 16
      %v6756 = vrot.slane %v6754, 7
      %v6757 = vshll.u32 %v6689, 16
      %v6759 = vor.u32 %v6756, %v6757
      %v6761 = vshrl.u32 %v6690, 16
      %v6763 = vrot.slane %v6761, 7
      %v6764 = vshll.u32 %v6690, 16
      %v6766 = vor.u32 %v6763, %v6764
      %v6768 = vshrl.u32 %v6691, 16
      %v6770 = vrot.slane %v6768, 7
      %v6771 = vshll.u32 %v6691, 16
      %v6773 = vor.u32 %v6770, %v6771
      %v6775 = vshrl.u32 %v6692, 16
      %v6777 = vrot.slane %v6775, 7
      %v6778 = vshll.u32 %v6692, 16
      %v6780 = vor.u32 %v6777, %v6778
      %v6782 = vshrl.u32 %v6693, 16
      %v6784 = vrot.slane %v6782, 7
      %v6785 = vshll.u32 %v6693, 16
      %v6787 = vor.u32 %v6784, %v6785
      %v6789 = vshrl.u32 %v6694, 16
      %v6791 = vrot.slane %v6789, 7
      %v6792 = vshll.u32 %v6694, 16
      %v6794 = vor.u32 %v6791, %v6792
      %v6796 = vshrl.u32 %v6695, 16
      %v6798 = vrot.slane %v6796, 7
      %v6799 = vshll.u32 %v6695, 16
      %v6801 = vor.u32 %v6798, %v6799
      %v6803 = vshrl.u32 %v6696, 16
      %v6805 = vrot.slane %v6803, 7
      %v6806 = vshll.u32 %v6696, 16
      %v6808 = vor.u32 %v6805, %v6806
      %v6841 = vsel %vm945, 0, %v6703
      %v6842 = vsel %vm945, 0, %v6710
      %v6843 = vsel %vm945, 0, %v6717
      %v6844 = vsel %vm945, 0, %v6724
      %v6845 = vsel %vm945, 0, %v6731
      %v6846 = vsel %vm945, 0, %v6738
      %v6847 = vsel %vm945, 0, %v6745
      %v6848 = vsel %vm945, 0, %v6752
      %v6849 = vsel %vm945, 0, %v6759
      %v6850 = vsel %vm945, 0, %v6766
      %v6851 = vsel %vm945, 0, %v6773
      %v6852 = vsel %vm945, 0, %v6780
      %v6853 = vsel %vm945, 0, %v6787
      %v6854 = vsel %vm945, 0, %v6794
      %v6855 = vsel %vm945, 0, %v6801
      %v6856 = vsel %vm945, 0, %v6808
      %v6857 = vsel %vm945, %v6700, 0
      %v6858 = vsel %vm945, %v6707, 0
      %v6859 = vsel %vm945, %v6714, 0
      %v6860 = vsel %vm945, %v6721, 0
      %v6861 = vsel %vm945, %v6728, 0
      %v6862 = vsel %vm945, %v6735, 0
      %v6863 = vsel %vm945, %v6742, 0
      %v6864 = vsel %vm945, %v6749, 0
      %v6865 = vsel %vm945, %v6756, 0
      %v6866 = vsel %vm945, %v6763, 0
      %v6867 = vsel %vm945, %v6770, 0
      %v6868 = vsel %vm945, %v6777, 0
      %v6869 = vsel %vm945, %v6784, 0
      %v6870 = vsel %vm945, %v6791, 0
      %v6871 = vsel %vm945, %v6798, 0
      %v6872 = vsel %vm945, %v6805, 0
      %v6874 = vshrl.u32 %v6841, 16
      %v6876 = vshll.u32 %v6841, 16
      %v6878 = vrot.slane %v6876, 1
      %v6879 = vor.u32 %v6874, %v6878
      %v6881 = vshll.u32 %v6857, 16
      %v6883 = vrot.slane %v6881, 1
      %v6884 = vsel %vm980, %v6879, %v6883
      %v6886 = vshrl.u32 %v6842, 16
      %v6888 = vshll.u32 %v6842, 16
      %v6890 = vrot.slane %v6888, 1
      %v6891 = vor.u32 %v6886, %v6890
      %v6893 = vshll.u32 %v6858, 16
      %v6895 = vrot.slane %v6893, 1
      %v6896 = vsel %vm980, %v6891, %v6895
      %v6898 = vshrl.u32 %v6843, 16
      %v6900 = vshll.u32 %v6843, 16
      %v6902 = vrot.slane %v6900, 1
      %v6903 = vor.u32 %v6898, %v6902
      %v6905 = vshll.u32 %v6859, 16
      %v6907 = vrot.slane %v6905, 1
      %v6908 = vsel %vm980, %v6903, %v6907
      %v6910 = vshrl.u32 %v6844, 16
      %v6912 = vshll.u32 %v6844, 16
      %v6914 = vrot.slane %v6912, 1
      %v6915 = vor.u32 %v6910, %v6914
      %v6917 = vshll.u32 %v6860, 16
      %v6919 = vrot.slane %v6917, 1
      %v6920 = vsel %vm980, %v6915, %v6919
      %v6922 = vshrl.u32 %v6845, 16
      %v6924 = vshll.u32 %v6845, 16
      %v6926 = vrot.slane %v6924, 1
      %v6927 = vor.u32 %v6922, %v6926
      %v6929 = vshll.u32 %v6861, 16
      %v6931 = vrot.slane %v6929, 1
      %v6932 = vsel %vm980, %v6927, %v6931
      %v6934 = vshrl.u32 %v6846, 16
      %v6936 = vshll.u32 %v6846, 16
      %v6938 = vrot.slane %v6936, 1
      %v6939 = vor.u32 %v6934, %v6938
      %v6941 = vshll.u32 %v6862, 16
      %v6943 = vrot.slane %v6941, 1
      %v6944 = vsel %vm980, %v6939, %v6943
      %v6946 = vshrl.u32 %v6847, 16
      %v6948 = vshll.u32 %v6847, 16
      %v6950 = vrot.slane %v6948, 1
      %v6951 = vor.u32 %v6946, %v6950
      %v6953 = vshll.u32 %v6863, 16
      %v6955 = vrot.slane %v6953, 1
      %v6956 = vsel %vm980, %v6951, %v6955
      %v6958 = vshrl.u32 %v6848, 16
      %v6960 = vshll.u32 %v6848, 16
      %v6962 = vrot.slane %v6960, 1
      %v6963 = vor.u32 %v6958, %v6962
      %v6965 = vshll.u32 %v6864, 16
      %v6967 = vrot.slane %v6965, 1
      %v6968 = vsel %vm980, %v6963, %v6967
      %v6970 = vshrl.u32 %v6849, 16
      %v6972 = vshll.u32 %v6849, 16
      %v6974 = vrot.slane %v6972, 1
      %v6975 = vor.u32 %v6970, %v6974
      %v6977 = vshll.u32 %v6865, 16
      %v6979 = vrot.slane %v6977, 1
      %v6980 = vsel %vm980, %v6975, %v6979
      %v6982 = vshrl.u32 %v6850, 16
      %v6984 = vshll.u32 %v6850, 16
      %v6986 = vrot.slane %v6984, 1
      %v6987 = vor.u32 %v6982, %v6986
      %v6989 = vshll.u32 %v6866, 16
      %v6991 = vrot.slane %v6989, 1
      %v6992 = vsel %vm980, %v6987, %v6991
      %v6994 = vshrl.u32 %v6851, 16
      %v6996 = vshll.u32 %v6851, 16
      %v6998 = vrot.slane %v6996, 1
      %v6999 = vor.u32 %v6994, %v6998
      %v7001 = vshll.u32 %v6867, 16
      %v7003 = vrot.slane %v7001, 1
      %v7004 = vsel %vm980, %v6999, %v7003
      %v7006 = vshrl.u32 %v6852, 16
      %v7008 = vshll.u32 %v6852, 16
      %v7010 = vrot.slane %v7008, 1
      %v7011 = vor.u32 %v7006, %v7010
      %v7013 = vshll.u32 %v6868, 16
      %v7015 = vrot.slane %v7013, 1
      %v7016 = vsel %vm980, %v7011, %v7015
      %v7018 = vshrl.u32 %v6853, 16
      %v7020 = vshll.u32 %v6853, 16
      %v7022 = vrot.slane %v7020, 1
      %v7023 = vor.u32 %v7018, %v7022
      %v7025 = vshll.u32 %v6869, 16
      %v7027 = vrot.slane %v7025, 1
      %v7028 = vsel %vm980, %v7023, %v7027
      %v7030 = vshrl.u32 %v6854, 16
      %v7032 = vshll.u32 %v6854, 16
      %v7034 = vrot.slane %v7032, 1
      %v7035 = vor.u32 %v7030, %v7034
      %v7037 = vshll.u32 %v6870, 16
      %v7039 = vrot.slane %v7037, 1
      %v7040 = vsel %vm980, %v7035, %v7039
      %v7042 = vshrl.u32 %v6855, 16
      %v7044 = vshll.u32 %v6855, 16
      %v7046 = vrot.slane %v7044, 1
      %v7047 = vor.u32 %v7042, %v7046
      %v7049 = vshll.u32 %v6871, 16
      %v7051 = vrot.slane %v7049, 1
      %v7052 = vsel %vm980, %v7047, %v7051
      %v7083 = vrot.slane %v6841, 1
      %v7084 = vrot.slane %v6857, 1
      %v7085 = vsel %vm1205, %v7083, %v7084
      %v7086 = vrot.slane %v6842, 1
      %v7087 = vrot.slane %v6858, 1
      %v7088 = vsel %vm1205, %v7086, %v7087
      %v7089 = vrot.slane %v6843, 1
      %v7090 = vrot.slane %v6859, 1
      %v7091 = vsel %vm1205, %v7089, %v7090
      %v7092 = vrot.slane %v6844, 1
      %v7093 = vrot.slane %v6860, 1
      %v7094 = vsel %vm1205, %v7092, %v7093
      %v7095 = vrot.slane %v6845, 1
      %v7096 = vrot.slane %v6861, 1
      %v7097 = vsel %vm1205, %v7095, %v7096
      %v7098 = vrot.slane %v6846, 1
      %v7099 = vrot.slane %v6862, 1
      %v7100 = vsel %vm1205, %v7098, %v7099
      %v7101 = vrot.slane %v6847, 1
      %v7102 = vrot.slane %v6863, 1
      %v7103 = vsel %vm1205, %v7101, %v7102
      %v7104 = vrot.slane %v6848, 1
      %v7105 = vrot.slane %v6864, 1
      %v7106 = vsel %vm1205, %v7104, %v7105
      %v7107 = vrot.slane %v6849, 1
      %v7108 = vrot.slane %v6865, 1
      %v7109 = vsel %vm1205, %v7107, %v7108
      %v7110 = vrot.slane %v6850, 1
      %v7111 = vrot.slane %v6866, 1
      %v7112 = vsel %vm1205, %v7110, %v7111
      %v7113 = vrot.slane %v6851, 1
      %v7114 = vrot.slane %v6867, 1
      %v7115 = vsel %vm1205, %v7113, %v7114
      %v7116 = vrot.slane %v6852, 1
      %v7117 = vrot.slane %v6868, 1
      %v7118 = vsel %vm1205, %v7116, %v7117
      %v7119 = vrot.slane %v6853, 1
      %v7120 = vrot.slane %v6869, 1
      %v7121 = vsel %vm1205, %v7119, %v7120
      %v7122 = vrot.slane %v6854, 1
      %v7123 = vrot.slane %v6870, 1
      %v7124 = vsel %vm1205, %v7122, %v7123
      %v7125 = vrot.slane %v6855, 1
      %v7126 = vrot.slane %v6871, 1
      %v7127 = vsel %vm1205, %v7125, %v7126
      %v7129 = vshrl.u32 %v6856, 16
      %v7131 = vshll.u32 %v6856, 16
      %v7133 = vrot.slane %v7131, 1
      %v7134 = vor.u32 %v7129, %v7133
      %v7136 = vshll.u32 %v6872, 16
      %v7138 = vrot.slane %v7136, 1
      %v7139 = vsel %vm980, %v7134, %v7138
      %v7142 = vrot.slane %v6856, 1
      %v7143 = vrot.slane %v6872, 1
      %v7144 = vsel %vm1205, %v7142, %v7143
      %7145 = vrot.lane.b32.xlu0 %v992, 4
      %v7146 = vpop.permute.xlu0 %7145
      %7147 = vrot.lane.b32.xlu0 %v6884, 4
      %v7148 = vpop.permute.xlu0 %7147
      %7149 = vrot.lane.b32.xlu0 %v6896, 4
      %v7150 = vpop.permute.xlu0 %7149
      %7151 = vrot.lane.b32.xlu0 %v6908, 4
      %v7152 = vpop.permute.xlu0 %7151
      %7153 = vrot.lane.b32.xlu0 %v6920, 4
      %v7154 = vpop.permute.xlu0 %7153
      %7155 = vrot.lane.b32.xlu0 %v6932, 4
      %v7156 = vpop.permute.xlu0 %7155
      %7157 = vrot.lane.b32.xlu0 %v6944, 4
      %v7158 = vpop.permute.xlu0 %7157
      %7159 = vrot.lane.b32.xlu0 %v6956, 4
      %v7160 = vpop.permute.xlu0 %7159
      %7161 = vrot.lane.b32.xlu0 %v6968, 4
      %v7162 = vpop.permute.xlu0 %7161
      %7163 = vrot.lane.b32.xlu0 %v6980, 4
      %v7164 = vpop.permute.xlu0 %7163
      %7165 = vrot.lane.b32.xlu0 %v6992, 4
      %v7166 = vpop.permute.xlu0 %7165
      %7167 = vrot.lane.b32.xlu0 %v7004, 4
      %v7168 = vpop.permute.xlu0 %7167
      %7169 = vrot.lane.b32.xlu0 %v7016, 4
      %v7170 = vpop.permute.xlu0 %7169
      %7171 = vrot.lane.b32.xlu0 %v7028, 4
      %v7172 = vpop.permute.xlu0 %7171
      %7173 = vrot.lane.b32.xlu0 %v7040, 4
      %v7174 = vpop.permute.xlu0 %7173
      %7175 = vrot.lane.b32.xlu0 %v7052, 4
      %v7176 = vpop.permute.xlu0 %7175
      %7177 = vrot.lane.b32.xlu0 %v1208, 8
      %v7178 = vpop.permute.xlu0 %7177
      %7179 = vrot.lane.b32.xlu0 %v7085, 8
      %v7180 = vpop.permute.xlu0 %7179
      %7181 = vrot.lane.b32.xlu0 %v7088, 8
      %v7182 = vpop.permute.xlu0 %7181
      %7183 = vrot.lane.b32.xlu0 %v7091, 8
      %v7184 = vpop.permute.xlu0 %7183
      %7185 = vrot.lane.b32.xlu0 %v7094, 8
      %v7186 = vpop.permute.xlu0 %7185
      %7187 = vrot.lane.b32.xlu0 %v7097, 8
      %v7188 = vpop.permute.xlu0 %7187
      %7189 = vrot.lane.b32.xlu0 %v7100, 8
      %v7190 = vpop.permute.xlu0 %7189
      %7191 = vrot.lane.b32.xlu0 %v7103, 8
      %v7192 = vpop.permute.xlu0 %7191
      %7193 = vrot.lane.b32.xlu0 %v7106, 8
      %v7194 = vpop.permute.xlu0 %7193
      %7195 = vrot.lane.b32.xlu0 %v7109, 8
      %v7196 = vpop.permute.xlu0 %7195
      %7197 = vrot.lane.b32.xlu0 %v7112, 8
      %v7198 = vpop.permute.xlu0 %7197
      %7199 = vrot.lane.b32.xlu0 %v7115, 8
      %v7200 = vpop.permute.xlu0 %7199
      %7201 = vrot.lane.b32.xlu0 %v7118, 8
      %v7202 = vpop.permute.xlu0 %7201
      %7203 = vrot.lane.b32.xlu0 %v7121, 8
      %v7204 = vpop.permute.xlu0 %7203
      %7205 = vrot.lane.b32.xlu0 %v7124, 8
      %v7206 = vpop.permute.xlu0 %7205
      %7207 = vrot.lane.b32.xlu0 %v7127, 8
      %v7208 = vpop.permute.xlu0 %7207
      %7209 = vrot.lane.b32.xlu0 %v6841, 12
      %v7210 = vpop.permute.xlu0 %7209
      %7211 = vrot.lane.b32.xlu0 %v6842, 12
      %v7212 = vpop.permute.xlu0 %7211
      %7213 = vrot.lane.b32.xlu0 %v6843, 12
      %v7214 = vpop.permute.xlu0 %7213
      %7215 = vrot.lane.b32.xlu0 %v6844, 12
      %v7216 = vpop.permute.xlu0 %7215
      %7217 = vrot.lane.b32.xlu0 %v6845, 12
      %v7218 = vpop.permute.xlu0 %7217
      %7219 = vrot.lane.b32.xlu0 %v6846, 12
      %v7220 = vpop.permute.xlu0 %7219
      %7221 = vrot.lane.b32.xlu0 %v6847, 12
      %v7222 = vpop.permute.xlu0 %7221
      %7223 = vrot.lane.b32.xlu0 %v6848, 12
      %v7224 = vpop.permute.xlu0 %7223
      %7225 = vrot.lane.b32.xlu0 %v6849, 12
      %v7226 = vpop.permute.xlu0 %7225
      %7227 = vrot.lane.b32.xlu0 %v6850, 12
      %v7228 = vpop.permute.xlu0 %7227
      %7229 = vrot.lane.b32.xlu0 %v6851, 12
      %v7230 = vpop.permute.xlu0 %7229
      %7231 = vrot.lane.b32.xlu0 %v6852, 12
      %v7232 = vpop.permute.xlu0 %7231
      %7233 = vrot.lane.b32.xlu0 %v6853, 12
      %v7234 = vpop.permute.xlu0 %7233
      %7235 = vrot.lane.b32.xlu0 %v6854, 12
      %v7236 = vpop.permute.xlu0 %7235
      %7237 = vrot.lane.b32.xlu0 %v6855, 12
      %v7238 = vpop.permute.xlu0 %7237
      %7239 = vrot.lane.b32.xlu0 %v6856, 12
      %v7240 = vpop.permute.xlu0 %7239
      %7241 = vrot.lane.b32.xlu0 %v6884, 16
      %v7242 = vpop.permute.xlu0 %7241
      %7243 = vrot.lane.b32.xlu0 %v6896, 16
      %v7244 = vpop.permute.xlu0 %7243
      %7245 = vrot.lane.b32.xlu0 %v6908, 16
      %v7246 = vpop.permute.xlu0 %7245
      %7247 = vrot.lane.b32.xlu0 %v6920, 16
      %v7248 = vpop.permute.xlu0 %7247
      %7249 = vrot.lane.b32.xlu0 %v6932, 16
      %v7250 = vpop.permute.xlu0 %7249
      %7251 = vrot.lane.b32.xlu0 %v6944, 16
      %v7252 = vpop.permute.xlu0 %7251
      %7253 = vrot.lane.b32.xlu0 %v6956, 16
      %v7254 = vpop.permute.xlu0 %7253
      %7255 = vrot.lane.b32.xlu0 %v6968, 16
      %v7256 = vpop.permute.xlu0 %7255
      %7257 = vrot.lane.b32.xlu0 %v6980, 16
      %v7258 = vpop.permute.xlu0 %7257
      %7259 = vrot.lane.b32.xlu0 %v6992, 16
      %v7260 = vpop.permute.xlu0 %7259
      %7261 = vrot.lane.b32.xlu0 %v7004, 16
      %v7262 = vpop.permute.xlu0 %7261
      %7263 = vrot.lane.b32.xlu0 %v7016, 16
      %v7264 = vpop.permute.xlu0 %7263
      %7265 = vrot.lane.b32.xlu0 %v7028, 16
      %v7266 = vpop.permute.xlu0 %7265
      %7267 = vrot.lane.b32.xlu0 %v7040, 16
      %v7268 = vpop.permute.xlu0 %7267
      %7269 = vrot.lane.b32.xlu0 %v7052, 16
      %v7270 = vpop.permute.xlu0 %7269
      %7271 = vrot.lane.b32.xlu0 %v7139, 16
      %v7272 = vpop.permute.xlu0 %7271
      %7273 = vrot.lane.b32.xlu0 %v7085, 20
      %v7274 = vpop.permute.xlu0 %7273
      %7275 = vrot.lane.b32.xlu0 %v7088, 20
      %v7276 = vpop.permute.xlu0 %7275
      %7277 = vrot.lane.b32.xlu0 %v7091, 20
      %v7278 = vpop.permute.xlu0 %7277
      %7279 = vrot.lane.b32.xlu0 %v7094, 20
      %v7280 = vpop.permute.xlu0 %7279
      %7281 = vrot.lane.b32.xlu0 %v7097, 20
      %v7282 = vpop.permute.xlu0 %7281
      %7283 = vrot.lane.b32.xlu0 %v7100, 20
      %v7284 = vpop.permute.xlu0 %7283
      %7285 = vrot.lane.b32.xlu0 %v7103, 20
      %v7286 = vpop.permute.xlu0 %7285
      %7287 = vrot.lane.b32.xlu0 %v7106, 20
      %v7288 = vpop.permute.xlu0 %7287
      %7289 = vrot.lane.b32.xlu0 %v7109, 20
      %v7290 = vpop.permute.xlu0 %7289
      %7291 = vrot.lane.b32.xlu0 %v7112, 20
      %v7292 = vpop.permute.xlu0 %7291
      %7293 = vrot.lane.b32.xlu0 %v7115, 20
      %v7294 = vpop.permute.xlu0 %7293
      %7295 = vrot.lane.b32.xlu0 %v7118, 20
      %v7296 = vpop.permute.xlu0 %7295
      %7297 = vrot.lane.b32.xlu0 %v7121, 20
      %v7298 = vpop.permute.xlu0 %7297
      %7299 = vrot.lane.b32.xlu0 %v7124, 20
      %v7300 = vpop.permute.xlu0 %7299
      %7301 = vrot.lane.b32.xlu0 %v7127, 20
      %v7302 = vpop.permute.xlu0 %7301
      %7303 = vrot.lane.b32.xlu0 %v7144, 20
      %v7304 = vpop.permute.xlu0 %7303
      %7305 = vrot.lane.b32.xlu0 %v6842, 24
      %v7306 = vpop.permute.xlu0 %7305
      %7307 = vrot.lane.b32.xlu0 %v6843, 24
      %v7308 = vpop.permute.xlu0 %7307
      %7309 = vrot.lane.b32.xlu0 %v6844, 24
      %v7310 = vpop.permute.xlu0 %7309
      %7311 = vrot.lane.b32.xlu0 %v6845, 24
      %v7312 = vpop.permute.xlu0 %7311
      %7313 = vrot.lane.b32.xlu0 %v6846, 24
      %v7314 = vpop.permute.xlu0 %7313
      %7315 = vrot.lane.b32.xlu0 %v6847, 24
      %v7316 = vpop.permute.xlu0 %7315
      %7317 = vrot.lane.b32.xlu0 %v6848, 24
      %v7318 = vpop.permute.xlu0 %7317
      %7319 = vrot.lane.b32.xlu0 %v6849, 24
      %v7320 = vpop.permute.xlu0 %7319
      %7321 = vrot.lane.b32.xlu0 %v6850, 24
      %v7322 = vpop.permute.xlu0 %7321
      %7323 = vrot.lane.b32.xlu0 %v6851, 24
      %v7324 = vpop.permute.xlu0 %7323
      %7325 = vrot.lane.b32.xlu0 %v6852, 24
      %v7326 = vpop.permute.xlu0 %7325
      %7327 = vrot.lane.b32.xlu0 %v6853, 24
      %v7328 = vpop.permute.xlu0 %7327
      %7329 = vrot.lane.b32.xlu0 %v6854, 24
      %v7330 = vpop.permute.xlu0 %7329
      %7331 = vrot.lane.b32.xlu0 %v6855, 24
      %v7332 = vpop.permute.xlu0 %7331
      %7333 = vrot.lane.b32.xlu0 %v6856, 24
      %v7334 = vpop.permute.xlu0 %7333
      %7335 = vrot.lane.b32.xlu0 %v946, 24
      %v7336 = vpop.permute.xlu0 %7335
      %7337 = vrot.lane.b32.xlu0 %v6896, 28
      %v7338 = vpop.permute.xlu0 %7337
      %7339 = vrot.lane.b32.xlu0 %v6908, 28
      %v7340 = vpop.permute.xlu0 %7339
      %7341 = vrot.lane.b32.xlu0 %v6920, 28
      %v7342 = vpop.permute.xlu0 %7341
      %7343 = vrot.lane.b32.xlu0 %v6932, 28
      %v7344 = vpop.permute.xlu0 %7343
      %7345 = vrot.lane.b32.xlu0 %v6944, 28
      %v7346 = vpop.permute.xlu0 %7345
      %7347 = vrot.lane.b32.xlu0 %v6956, 28
      %v7348 = vpop.permute.xlu0 %7347
      %7349 = vrot.lane.b32.xlu0 %v6968, 28
      %v7350 = vpop.permute.xlu0 %7349
      %7351 = vrot.lane.b32.xlu0 %v6980, 28
      %v7352 = vpop.permute.xlu0 %7351
      %7353 = vrot.lane.b32.xlu0 %v6992, 28
      %v7354 = vpop.permute.xlu0 %7353
      %7355 = vrot.lane.b32.xlu0 %v7004, 28
      %v7356 = vpop.permute.xlu0 %7355
      %7357 = vrot.lane.b32.xlu0 %v7016, 28
      %v7358 = vpop.permute.xlu0 %7357
      %7359 = vrot.lane.b32.xlu0 %v7028, 28
      %v7360 = vpop.permute.xlu0 %7359
      %7361 = vrot.lane.b32.xlu0 %v7040, 28
      %v7362 = vpop.permute.xlu0 %7361
      %7363 = vrot.lane.b32.xlu0 %v7052, 28
      %v7364 = vpop.permute.xlu0 %7363
      %7365 = vrot.lane.b32.xlu0 %v7139, 28
      %v7366 = vpop.permute.xlu0 %7365
      %7367 = vrot.lane.b32.xlu0 %v992, 28
      %v7368 = vpop.permute.xlu0 %7367
      %7369 = vrot.lane.b32.xlu0 %v7088, 32
      %v7370 = vpop.permute.xlu0 %7369
      %7371 = vrot.lane.b32.xlu0 %v7091, 32
      %v7372 = vpop.permute.xlu0 %7371
      %7373 = vrot.lane.b32.xlu0 %v7094, 32
      %v7374 = vpop.permute.xlu0 %7373
      %7375 = vrot.lane.b32.xlu0 %v7097, 32
      %v7376 = vpop.permute.xlu0 %7375
      %7377 = vrot.lane.b32.xlu0 %v7100, 32
      %v7378 = vpop.permute.xlu0 %7377
      %7379 = vrot.lane.b32.xlu0 %v7103, 32
      %v7380 = vpop.permute.xlu0 %7379
      %7381 = vrot.lane.b32.xlu0 %v7106, 32
      %v7382 = vpop.permute.xlu0 %7381
      %7383 = vrot.lane.b32.xlu0 %v7109, 32
      %v7384 = vpop.permute.xlu0 %7383
      %7385 = vrot.lane.b32.xlu0 %v7112, 32
      %v7386 = vpop.permute.xlu0 %7385
      %7387 = vrot.lane.b32.xlu0 %v7115, 32
      %v7388 = vpop.permute.xlu0 %7387
      %7389 = vrot.lane.b32.xlu0 %v7118, 32
      %v7390 = vpop.permute.xlu0 %7389
      %7391 = vrot.lane.b32.xlu0 %v7121, 32
      %v7392 = vpop.permute.xlu0 %7391
      %7393 = vrot.lane.b32.xlu0 %v7124, 32
      %v7394 = vpop.permute.xlu0 %7393
      %7395 = vrot.lane.b32.xlu0 %v7127, 32
      %v7396 = vpop.permute.xlu0 %7395
      %7397 = vrot.lane.b32.xlu0 %v7144, 32
      %v7398 = vpop.permute.xlu0 %7397
      %7399 = vrot.lane.b32.xlu0 %v1208, 32
      %v7400 = vpop.permute.xlu0 %7399
      %v7402 = vsel %vm2144, %v946, %v7146
      %v7404 = vsel %vm2144, %v6841, %v7148
      %v7406 = vsel %vm2144, %v6842, %v7150
      %v7408 = vsel %vm2144, %v6843, %v7152
      %v7410 = vsel %vm2144, %v6844, %v7154
      %v7412 = vsel %vm2144, %v6845, %v7156
      %v7414 = vsel %vm2144, %v6846, %v7158
      %v7416 = vsel %vm2144, %v6847, %v7160
      %v7418 = vsel %vm2144, %v6848, %v7162
      %v7420 = vsel %vm2144, %v6849, %v7164
      %v7422 = vsel %vm2144, %v6850, %v7166
      %v7424 = vsel %vm2144, %v6851, %v7168
      %v7426 = vsel %vm2144, %v6852, %v7170
      %v7428 = vsel %vm2144, %v6853, %v7172
      %v7430 = vsel %vm2144, %v6854, %v7174
      %v7432 = vsel %vm2144, %v6855, %v7176
      %v7434 = vsel %vm1527, %v7402, %v7178
      %v7436 = vsel %vm1527, %v7404, %v7180
      %v7438 = vsel %vm1527, %v7406, %v7182
      %v7440 = vsel %vm1527, %v7408, %v7184
      %v7442 = vsel %vm1527, %v7410, %v7186
      %v7444 = vsel %vm1527, %v7412, %v7188
      %v7446 = vsel %vm1527, %v7414, %v7190
      %v7448 = vsel %vm1527, %v7416, %v7192
      %v7450 = vsel %vm1527, %v7418, %v7194
      %v7452 = vsel %vm1527, %v7420, %v7196
      %v7454 = vsel %vm1527, %v7422, %v7198
      %v7456 = vsel %vm1527, %v7424, %v7200
      %v7458 = vsel %vm1527, %v7426, %v7202
      %v7460 = vsel %vm1527, %v7428, %v7204
      %v7462 = vsel %vm1527, %v7430, %v7206
      %v7464 = vsel %vm1527, %v7432, %v7208
      %vm7465 = vcmask 97280
      %v7467 = vsel %vm7465, %v7434, %v7210
      %v7469 = vsel %vm7465, %v7436, %v7212
      %v7471 = vsel %vm7465, %v7438, %v7214
      %v7473 = vsel %vm7465, %v7440, %v7216
      %v7475 = vsel %vm7465, %v7442, %v7218
      %v7477 = vsel %vm7465, %v7444, %v7220
      %v7479 = vsel %vm7465, %v7446, %v7222
      %v7481 = vsel %vm7465, %v7448, %v7224
      %v7483 = vsel %vm7465, %v7450, %v7226
      %v7485 = vsel %vm7465, %v7452, %v7228
      %v7487 = vsel %vm7465, %v7454, %v7230
      %v7489 = vsel %vm7465, %v7456, %v7232
      %v7491 = vsel %vm7465, %v7458, %v7234
      %v7493 = vsel %vm7465, %v7460, %v7236
      %v7495 = vsel %vm7465, %v7462, %v7238
      %v7497 = vsel %vm7465, %v7464, %v7240
      %v7499 = vsel %vm1560, %v7467, %v7242
      %v7501 = vsel %vm1560, %v7469, %v7244
      %v7503 = vsel %vm1560, %v7471, %v7246
      %v7505 = vsel %vm1560, %v7473, %v7248
      %v7507 = vsel %vm1560, %v7475, %v7250
      %v7509 = vsel %vm1560, %v7477, %v7252
      %v7511 = vsel %vm1560, %v7479, %v7254
      %v7513 = vsel %vm1560, %v7481, %v7256
      %v7515 = vsel %vm1560, %v7483, %v7258
      %v7517 = vsel %vm1560, %v7485, %v7260
      %v7519 = vsel %vm1560, %v7487, %v7262
      %v7521 = vsel %vm1560, %v7489, %v7264
      %v7523 = vsel %vm1560, %v7491, %v7266
      %v7525 = vsel %vm1560, %v7493, %v7268
      %v7527 = vsel %vm1560, %v7495, %v7270
      %v7529 = vsel %vm1560, %v7497, %v7272
      %vm7530 = vcmask 162816
      %v7532 = vsel %vm7530, %v7499, %v7274
      %v7534 = vsel %vm7530, %v7501, %v7276
      %v7536 = vsel %vm7530, %v7503, %v7278
      %v7538 = vsel %vm7530, %v7505, %v7280
      %v7540 = vsel %vm7530, %v7507, %v7282
      %v7542 = vsel %vm7530, %v7509, %v7284
      %v7544 = vsel %vm7530, %v7511, %v7286
      %v7546 = vsel %vm7530, %v7513, %v7288
      %v7548 = vsel %vm7530, %v7515, %v7290
      %v7550 = vsel %vm7530, %v7517, %v7292
      %v7552 = vsel %vm7530, %v7519, %v7294
      %v7554 = vsel %vm7530, %v7521, %v7296
      %v7556 = vsel %vm7530, %v7523, %v7298
      %v7558 = vsel %vm7530, %v7525, %v7300
      %v7560 = vsel %vm7530, %v7527, %v7302
      %v7562 = vsel %vm7530, %v7529, %v7304
      %v7564 = vsel %vm1593, %v7532, %v7306
      %v7566 = vsel %vm1593, %v7534, %v7308
      %v7568 = vsel %vm1593, %v7536, %v7310
      %v7570 = vsel %vm1593, %v7538, %v7312
      %v7572 = vsel %vm1593, %v7540, %v7314
      %v7574 = vsel %vm1593, %v7542, %v7316
      %v7576 = vsel %vm1593, %v7544, %v7318
      %v7578 = vsel %vm1593, %v7546, %v7320
      %v7580 = vsel %vm1593, %v7548, %v7322
      %v7582 = vsel %vm1593, %v7550, %v7324
      %v7584 = vsel %vm1593, %v7552, %v7326
      %v7586 = vsel %vm1593, %v7554, %v7328
      %v7588 = vsel %vm1593, %v7556, %v7330
      %v7590 = vsel %vm1593, %v7558, %v7332
      %v7592 = vsel %vm1593, %v7560, %v7334
      %v7594 = vsel %vm1593, %v7562, %v7336
      %vm7595 = vcmask 228352
      %v7597 = vsel %vm7595, %v7564, %v7338
      %v7599 = vsel %vm7595, %v7566, %v7340
      %v7601 = vsel %vm7595, %v7568, %v7342
      %v7603 = vsel %vm7595, %v7570, %v7344
      %v7605 = vsel %vm7595, %v7572, %v7346
      %v7607 = vsel %vm7595, %v7574, %v7348
      %v7609 = vsel %vm7595, %v7576, %v7350
      %v7611 = vsel %vm7595, %v7578, %v7352
      %v7613 = vsel %vm7595, %v7580, %v7354
      %v7615 = vsel %vm7595, %v7582, %v7356
      %v7617 = vsel %vm7595, %v7584, %v7358
      %v7619 = vsel %vm7595, %v7586, %v7360
      %v7621 = vsel %vm7595, %v7588, %v7362
      %v7623 = vsel %vm7595, %v7590, %v7364
      %v7625 = vsel %vm7595, %v7592, %v7366
      %v7627 = vsel %vm7595, %v7594, %v7368
      %v7629 = vsel %vm1626, %v7597, %v7370
      %v7631 = vsel %vm1626, %v7599, %v7372
      %v7633 = vsel %vm1626, %v7601, %v7374
      %v7635 = vsel %vm1626, %v7603, %v7376
      %v7637 = vsel %vm1626, %v7605, %v7378
      %v7639 = vsel %vm1626, %v7607, %v7380
      %v7641 = vsel %vm1626, %v7609, %v7382
      %v7643 = vsel %vm1626, %v7611, %v7384
      %v7645 = vsel %vm1626, %v7613, %v7386
      %v7647 = vsel %vm1626, %v7615, %v7388
      %v7649 = vsel %vm1626, %v7617, %v7390
      %v7651 = vsel %vm1626, %v7619, %v7392
      %v7653 = vsel %vm1626, %v7621, %v7394
      %v7655 = vsel %vm1626, %v7623, %v7396
      %v7657 = vsel %vm1626, %v7625, %v7398
      %v7659 = vsel %vm1626, %v7627, %v7400
      %v7660 = vld [vmem:[%s16] sm:$0xf]
      %v7661 = vld [vmem:[%s16 + $0x4] sm:$0xf]
      %v7662 = vld [vmem:[%s16 + $0x8] sm:$0xf]
      %v7663 = vld [vmem:[%s16 + $0xc] sm:$0xf]
      %v7664 = vld [vmem:[%s16 + $0x10] sm:$0x3]
      %v7665 = vld [vmem:[%s17] sm:$0x1]
      %v7667 = vlaneseq
      %v7668 = vshrl.u32 %v7667, 7
      %v7669 = vsub.s32 0, %v7668
      %v7670 = vrot.slane %v7665, %v7669
      %v7677 = vunpack.c.l.b16 %v7660
      %v7678 = vunpack.c.l.b16 %v7661
      %v7679 = vunpack.c.l.b16 %v7662
      %v7680 = vunpack.c.l.b16 %v7663
      %v7681 = vunpack.c.l.b16 %v7664
      %v7682 = vpack.c.b16 %v7678, %v7677
      %v7683 = vpack.c.b16 %v7680, %v7679
      %v7684 = vpack.c.b16 %v7681, %v7681
      %vm7687 = vcmask 293888
      %v7688 = vsel %vm7687, %v7629, 0
      %v7690 = vsel %vm7687, %v7631, 0
      %v7692 = vsel %vm7687, %v7633, 0
      %v7694 = vsel %vm7687, %v7635, 0
      %v7696 = vsel %vm7687, %v7637, 0
      %v7698 = vsel %vm7687, %v7639, 0
      %v7700 = vsel %vm7687, %v7641, 0
      %v7702 = vsel %vm7687, %v7643, 0
      %v7704 = vsel %vm7687, %v7645, 0
      %v7706 = vsel %vm7687, %v7647, 0
      %v7708 = vsel %vm7687, %v7649, 0
      %v7710 = vsel %vm7687, %v7651, 0
      %v7712 = vsel %vm7687, %v7653, 0
      %v7714 = vsel %vm7687, %v7655, 0
      %v7716 = vsel %vm7687, %v7657, 0
      %v7718 = vsel %vm7687, %v7659, 0
      %v7721 = vsel %vm4467, %v7684, 0
      %7723 = vmatprep.subr.bf16.mxu0 0
      %7724 = vmatpush1.bf16.msra.mxu0 0
      %7725 = vmatprep.subr.bf16.mxu0 0
      %7726 = vmatpush1.bf16.msra.mxu0 0
      %7727 = vmatprep.subr.bf16.mxu0 0
      %7728 = vmatpush1.bf16.msra.mxu0 0
      %7729 = vmatprep.subr.bf16.mxu0 0
      %7730 = vmatpush1.bf16.msra.mxu0 0
      %7731 = vmatprep.subr.bf16.mxu0 0
      %7732 = vmatpush1.bf16.msra.mxu0 0
      %7733 = vmatprep.subr.bf16.mxu0 0
      %7734 = vmatpush1.bf16.msra.mxu0 %v7721
      %7735 = vmatprep.subr.bf16.mxu0 0
      %7736 = vmatpush1.bf16.msra.mxu0 %v7683
      %7737 = vmatprep.subr.bf16.mxu0 0
      %7738 = vmatpush1.bf16.msra.mxu0 %v7682
      %7739 = vmatprep.subr.bf16.mxu0 0
      %7740 = vmatpush2.bf16.msra.mxu0 0
      %7741 = vmatprep.subr.bf16.mxu0 0
      %7742 = vmatpush2.bf16.msra.mxu0 0
      %7743 = vmatprep.subr.bf16.mxu0 0
      %7744 = vmatpush2.bf16.msra.mxu0 0
      %7745 = vmatprep.subr.bf16.mxu0 0
      %7746 = vmatpush2.bf16.msra.mxu0 0
      %7747 = vmatprep.subr.bf16.mxu0 0
      %7748 = vmatpush2.bf16.msra.mxu0 0
      %7749 = vmatprep.subr.bf16.mxu0 0
      %7750 = vmatpush2.bf16.msra.mxu0 0
      %7751 = vmatprep.subr.bf16.mxu0 0
      %7752 = vmatpush2.bf16.msra.mxu0 0
      %7753 = vmatprep.subr.bf16.mxu0 0
      %7754 = vmatpush2.bf16.msra.mxu0 0
      %7755 = vmatprep.mubr.bf16.mxu0 0
      %7756 = vmatmul.mubr.bf16.gmra.mxu0 %v7688
      %v7757 = vpop.f32.mrf.mxu0
      %v7758 = vadd.f32 %v7670, %v7757
      %v7759 = vpop.f32.mrf.mxu0
      %v7760 = vpop.f32.mrf.mxu0
      %v7761 = vadd.f32 %v7670, %v7760
      %v7762 = vpop.f32.mrf.mxu0
      %7763 = vmatprep.mubr.bf16.mxu0 0
      %7764 = vmatmul.mubr.bf16.gmra.mxu0 %v7690
      %v7765 = vpop.f32.mrf.mxu0
      %v7766 = vadd.f32 %v7670, %v7765
      %v7767 = vpop.f32.mrf.mxu0
      %v7768 = vpop.f32.mrf.mxu0
      %v7769 = vadd.f32 %v7670, %v7768
      %v7770 = vpop.f32.mrf.mxu0
      %7771 = vmatprep.mubr.bf16.mxu0 0
      %7772 = vmatmul.mubr.bf16.gmra.mxu0 %v7692
      %v7773 = vpop.f32.mrf.mxu0
      %v7774 = vadd.f32 %v7670, %v7773
      %v7775 = vpop.f32.mrf.mxu0
      %v7776 = vpop.f32.mrf.mxu0
      %v7777 = vadd.f32 %v7670, %v7776
      %v7778 = vpop.f32.mrf.mxu0
      %7779 = vmatprep.mubr.bf16.mxu0 0
      %7780 = vmatmul.mubr.bf16.gmra.mxu0 %v7694
      %v7781 = vpop.f32.mrf.mxu0
      %v7782 = vadd.f32 %v7670, %v7781
      %v7783 = vpop.f32.mrf.mxu0
      %v7784 = vpop.f32.mrf.mxu0
      %v7785 = vadd.f32 %v7670, %v7784
      %v7786 = vpop.f32.mrf.mxu0
      %7787 = vmatprep.mubr.bf16.mxu0 0
      %7788 = vmatmul.mubr.bf16.gmra.mxu0 %v7696
      %v7789 = vpop.f32.mrf.mxu0
      %v7790 = vadd.f32 %v7670, %v7789
      %v7791 = vpop.f32.mrf.mxu0
      %v7792 = vpop.f32.mrf.mxu0
      %v7793 = vadd.f32 %v7670, %v7792
      %v7794 = vpop.f32.mrf.mxu0
      %7795 = vmatprep.mubr.bf16.mxu0 0
      %7796 = vmatmul.mubr.bf16.gmra.mxu0 %v7698
      %v7797 = vpop.f32.mrf.mxu0
      %v7798 = vadd.f32 %v7670, %v7797
      %v7799 = vpop.f32.mrf.mxu0
      %v7800 = vpop.f32.mrf.mxu0
      %v7801 = vadd.f32 %v7670, %v7800
      %v7802 = vpop.f32.mrf.mxu0
      %7803 = vmatprep.mubr.bf16.mxu0 0
      %7804 = vmatmul.mubr.bf16.gmra.mxu0 %v7700
      %v7805 = vpop.f32.mrf.mxu0
      %v7806 = vadd.f32 %v7670, %v7805
      %v7807 = vpop.f32.mrf.mxu0
      %v7808 = vpop.f32.mrf.mxu0
      %v7809 = vadd.f32 %v7670, %v7808
      %v7810 = vpop.f32.mrf.mxu0
      %7811 = vmatprep.mubr.bf16.mxu0 0
      %7812 = vmatmul.mubr.bf16.gmra.mxu0 %v7702
      %v7813 = vpop.f32.mrf.mxu0
      %v7814 = vadd.f32 %v7670, %v7813
      %v7815 = vpop.f32.mrf.mxu0
      %v7816 = vpop.f32.mrf.mxu0
      %v7817 = vadd.f32 %v7670, %v7816
      %v7818 = vpop.f32.mrf.mxu0
      %7819 = vmatprep.mubr.bf16.mxu0 0
      %7820 = vmatmul.mubr.bf16.gmra.mxu0 %v7704
      %v7821 = vpop.f32.mrf.mxu0
      %v7822 = vadd.f32 %v7670, %v7821
      %v7823 = vpop.f32.mrf.mxu0
      %v7824 = vpop.f32.mrf.mxu0
      %v7825 = vadd.f32 %v7670, %v7824
      %v7826 = vpop.f32.mrf.mxu0
      %7827 = vmatprep.mubr.bf16.mxu0 0
      %7828 = vmatmul.mubr.bf16.gmra.mxu0 %v7706
      %v7829 = vpop.f32.mrf.mxu0
      %v7830 = vadd.f32 %v7670, %v7829
      %v7831 = vpop.f32.mrf.mxu0
      %v7832 = vpop.f32.mrf.mxu0
      %v7833 = vadd.f32 %v7670, %v7832
      %v7834 = vpop.f32.mrf.mxu0
      %7835 = vmatprep.mubr.bf16.mxu0 0
      %7836 = vmatmul.mubr.bf16.gmra.mxu0 %v7708
      %v7837 = vpop.f32.mrf.mxu0
      %v7838 = vadd.f32 %v7670, %v7837
      %v7839 = vpop.f32.mrf.mxu0
      %v7840 = vpop.f32.mrf.mxu0
      %v7841 = vadd.f32 %v7670, %v7840
      %v7842 = vpop.f32.mrf.mxu0
      %7843 = vmatprep.mubr.bf16.mxu0 0
      %7844 = vmatmul.mubr.bf16.gmra.mxu0 %v7710
      %v7845 = vpop.f32.mrf.mxu0
      %v7846 = vadd.f32 %v7670, %v7845
      %v7847 = vpop.f32.mrf.mxu0
      %v7848 = vpop.f32.mrf.mxu0
      %v7849 = vadd.f32 %v7670, %v7848
      %v7850 = vpop.f32.mrf.mxu0
      %7851 = vmatprep.mubr.bf16.mxu0 0
      %7852 = vmatmul.mubr.bf16.gmra.mxu0 %v7712
      %v7853 = vpop.f32.mrf.mxu0
      %v7854 = vadd.f32 %v7670, %v7853
      %v7855 = vpop.f32.mrf.mxu0
      %v7856 = vpop.f32.mrf.mxu0
      %v7857 = vadd.f32 %v7670, %v7856
      %v7858 = vpop.f32.mrf.mxu0
      %7859 = vmatprep.mubr.bf16.mxu0 0
      %7860 = vmatmul.mubr.bf16.gmra.mxu0 %v7714
      %v7861 = vpop.f32.mrf.mxu0
      %v7862 = vadd.f32 %v7670, %v7861
      %v7863 = vpop.f32.mrf.mxu0
      %v7864 = vpop.f32.mrf.mxu0
      %v7865 = vadd.f32 %v7670, %v7864
      %v7866 = vpop.f32.mrf.mxu0
      %7867 = vmatprep.mubr.bf16.mxu0 0
      %7868 = vmatmul.mubr.bf16.gmra.mxu0 %v7716
      %v7869 = vpop.f32.mrf.mxu0
      %v7870 = vadd.f32 %v7670, %v7869
      %v7871 = vpop.f32.mrf.mxu0
      %v7872 = vpop.f32.mrf.mxu0
      %v7873 = vadd.f32 %v7670, %v7872
      %v7874 = vpop.f32.mrf.mxu0
      %7875 = vmatprep.mubr.bf16.mxu0 0
      %7876 = vmatmul.mubr.bf16.gmra.mxu0 %v7718
      %v7877 = vpop.f32.mrf.mxu0
      %v7878 = vadd.f32 %v7670, %v7877
      %v7879 = vpop.f32.mrf.mxu0
      %v7880 = vpop.f32.mrf.mxu0
      %v7881 = vadd.f32 %v7670, %v7880
      %v7882 = vpop.f32.mrf.mxu0
      %7883 = vdwg.mxu0
      %v7884 = vsel %vm2144, %v7758, 0.0
      %v7885 = vsel %vm2144, %v7761, 0.0
      %v7886 = vadd.f32 %v7884, %v7885
      %v7887 = vsel %vm2144, %v7766, 0.0
      %v7888 = vadd.f32 %v7886, %v7887
      %v7889 = vsel %vm2144, %v7769, 0.0
      %v7890 = vadd.f32 %v7888, %v7889
      %v7891 = vsel %vm2144, %v7774, 0.0
      %v7892 = vadd.f32 %v7890, %v7891
      %v7893 = vsel %vm2144, %v7777, 0.0
      %v7894 = vadd.f32 %v7892, %v7893
      %v7895 = vsel %vm2144, %v7782, 0.0
      %v7896 = vadd.f32 %v7894, %v7895
      %v7897 = vsel %vm2144, %v7785, 0.0
      %v7898 = vadd.f32 %v7896, %v7897
      %v7899 = vsel %vm2144, %v7790, 0.0
      %v7900 = vadd.f32 %v7898, %v7899
      %v7901 = vsel %vm2144, %v7793, 0.0
      %v7902 = vadd.f32 %v7900, %v7901
      %v7903 = vsel %vm2144, %v7798, 0.0
      %v7904 = vadd.f32 %v7902, %v7903
      %v7905 = vsel %vm2144, %v7801, 0.0
      %v7906 = vadd.f32 %v7904, %v7905
      %v7907 = vsel %vm2144, %v7806, 0.0
      %v7908 = vadd.f32 %v7906, %v7907
      %v7909 = vsel %vm2144, %v7809, 0.0
      %v7910 = vadd.f32 %v7908, %v7909
      %v7911 = vsel %vm2144, %v7814, 0.0
      %v7912 = vadd.f32 %v7910, %v7911
      %v7913 = vsel %vm2144, %v7817, 0.0
      %v7914 = vadd.f32 %v7912, %v7913
      %v7915 = vsel %vm2144, %v7822, 0.0
      %v7916 = vadd.f32 %v7914, %v7915
      %v7917 = vsel %vm2144, %v7825, 0.0
      %v7918 = vadd.f32 %v7916, %v7917
      %v7919 = vsel %vm2144, %v7830, 0.0
      %v7920 = vadd.f32 %v7918, %v7919
      %v7921 = vsel %vm2144, %v7833, 0.0
      %v7922 = vadd.f32 %v7920, %v7921
      %v7923 = vsel %vm2144, %v7838, 0.0
      %v7924 = vadd.f32 %v7922, %v7923
      %v7925 = vsel %vm2144, %v7841, 0.0
      %v7926 = vadd.f32 %v7924, %v7925
      %v7927 = vsel %vm2144, %v7846, 0.0
      %v7928 = vadd.f32 %v7926, %v7927
      %v7929 = vsel %vm2144, %v7849, 0.0
      %v7930 = vadd.f32 %v7928, %v7929
      %v7931 = vsel %vm2144, %v7854, 0.0
      %v7932 = vadd.f32 %v7930, %v7931
      %v7933 = vsel %vm2144, %v7857, 0.0
      %v7934 = vadd.f32 %v7932, %v7933
      %v7935 = vsel %vm2144, %v7862, 0.0
      %v7936 = vadd.f32 %v7934, %v7935
      %v7937 = vsel %vm2144, %v7865, 0.0
      %v7938 = vadd.f32 %v7936, %v7937
      %v7939 = vsel %vm2144, %v7870, 0.0
      %v7940 = vadd.f32 %v7938, %v7939
      %v7941 = vsel %vm2144, %v7873, 0.0
      %v7942 = vadd.f32 %v7940, %v7941
      %v7943 = vsel %vm2144, %v7878, 0.0
      %v7944 = vadd.f32 %v7942, %v7943
      %v7945 = vsel %vm2144, %v7881, 0.0
      %v7946 = vadd.f32 %v7944, %v7945
      %v7947 = vrot.slane %v7946, 4
      %v7948 = vadd.f32 %v7946, %v7947
      %v7949 = vrot.slane %v7948, 2
      %v7950 = vadd.f32 %v7948, %v7949
      %v7951 = vrot.slane %v7950, 1
      %v7952 = vadd.f32 %v7950, %v7951
      %v7953 = vmul.f32 %v7952, 0.00390625
      %v7954 = vmul.f32 %v7758, %v7758
      %v7955 = vmul.f32 %v7761, %v7761
      %v7956 = vmul.f32 %v7766, %v7766
      %v7957 = vmul.f32 %v7769, %v7769
      %v7958 = vmul.f32 %v7774, %v7774
      %v7959 = vmul.f32 %v7777, %v7777
      %v7960 = vmul.f32 %v7782, %v7782
      %v7961 = vmul.f32 %v7785, %v7785
      %v7962 = vmul.f32 %v7790, %v7790
      %v7963 = vmul.f32 %v7793, %v7793
      %v7964 = vmul.f32 %v7798, %v7798
      %v7965 = vmul.f32 %v7801, %v7801
      %v7966 = vmul.f32 %v7806, %v7806
      %v7967 = vmul.f32 %v7809, %v7809
      %v7968 = vmul.f32 %v7814, %v7814
      %v7969 = vmul.f32 %v7817, %v7817
      %v7970 = vmul.f32 %v7822, %v7822
      %v7971 = vmul.f32 %v7825, %v7825
      %v7972 = vmul.f32 %v7830, %v7830
      %v7973 = vmul.f32 %v7833, %v7833
      %v7974 = vmul.f32 %v7838, %v7838
      %v7975 = vmul.f32 %v7841, %v7841
      %v7976 = vmul.f32 %v7846, %v7846
      %v7977 = vmul.f32 %v7849, %v7849
      %v7978 = vmul.f32 %v7854, %v7854
      %v7979 = vmul.f32 %v7857, %v7857
      %v7980 = vmul.f32 %v7862, %v7862
      %v7981 = vmul.f32 %v7865, %v7865
      %v7982 = vmul.f32 %v7870, %v7870
      %v7983 = vmul.f32 %v7873, %v7873
      %v7984 = vmul.f32 %v7878, %v7878
      %v7985 = vmul.f32 %v7881, %v7881
      %v7986 = vsel %vm2144, %v7954, 0.0
      %v7987 = vsel %vm2144, %v7955, 0.0
      %v7988 = vadd.f32 %v7986, %v7987
      %v7989 = vsel %vm2144, %v7956, 0.0
      %v7990 = vadd.f32 %v7988, %v7989
      %v7991 = vsel %vm2144, %v7957, 0.0
      %v7992 = vadd.f32 %v7990, %v7991
      %v7993 = vsel %vm2144, %v7958, 0.0
      %v7994 = vadd.f32 %v7992, %v7993
      %v7995 = vsel %vm2144, %v7959, 0.0
      %v7996 = vadd.f32 %v7994, %v7995
      %v7997 = vsel %vm2144, %v7960, 0.0
      %v7998 = vadd.f32 %v7996, %v7997
      %v7999 = vsel %vm2144, %v7961, 0.0
      %v8000 = vadd.f32 %v7998, %v7999
      %v8001 = vsel %vm2144, %v7962, 0.0
      %v8002 = vadd.f32 %v8000, %v8001
      %v8003 = vsel %vm2144, %v7963, 0.0
      %v8004 = vadd.f32 %v8002, %v8003
      %v8005 = vsel %vm2144, %v7964, 0.0
      %v8006 = vadd.f32 %v8004, %v8005
      %v8007 = vsel %vm2144, %v7965, 0.0
      %v8008 = vadd.f32 %v8006, %v8007
      %v8009 = vsel %vm2144, %v7966, 0.0
      %v8010 = vadd.f32 %v8008, %v8009
      %v8011 = vsel %vm2144, %v7967, 0.0
      %v8012 = vadd.f32 %v8010, %v8011
      %v8013 = vsel %vm2144, %v7968, 0.0
      %v8014 = vadd.f32 %v8012, %v8013
      %v8015 = vsel %vm2144, %v7969, 0.0
      %v8016 = vadd.f32 %v8014, %v8015
      %v8017 = vsel %vm2144, %v7970, 0.0
      %v8018 = vadd.f32 %v8016, %v8017
      %v8019 = vsel %vm2144, %v7971, 0.0
      %v8020 = vadd.f32 %v8018, %v8019
      %v8021 = vsel %vm2144, %v7972, 0.0
      %v8022 = vadd.f32 %v8020, %v8021
      %v8023 = vsel %vm2144, %v7973, 0.0
      %v8024 = vadd.f32 %v8022, %v8023
      %v8025 = vsel %vm2144, %v7974, 0.0
      %v8026 = vadd.f32 %v8024, %v8025
      %v8027 = vsel %vm2144, %v7975, 0.0
      %v8028 = vadd.f32 %v8026, %v8027
      %v8029 = vsel %vm2144, %v7976, 0.0
      %v8030 = vadd.f32 %v8028, %v8029
      %v8031 = vsel %vm2144, %v7977, 0.0
      %v8032 = vadd.f32 %v8030, %v8031
      %v8033 = vsel %vm2144, %v7978, 0.0
      %v8034 = vadd.f32 %v8032, %v8033
      %v8035 = vsel %vm2144, %v7979, 0.0
      %v8036 = vadd.f32 %v8034, %v8035
      %v8037 = vsel %vm2144, %v7980, 0.0
      %v8038 = vadd.f32 %v8036, %v8037
      %v8039 = vsel %vm2144, %v7981, 0.0
      %v8040 = vadd.f32 %v8038, %v8039
      %v8041 = vsel %vm2144, %v7982, 0.0
      %v8042 = vadd.f32 %v8040, %v8041
      %v8043 = vsel %vm2144, %v7983, 0.0
      %v8044 = vadd.f32 %v8042, %v8043
      %v8045 = vsel %vm2144, %v7984, 0.0
      %v8046 = vadd.f32 %v8044, %v8045
      %v8047 = vsel %vm2144, %v7985, 0.0
      %v8048 = vadd.f32 %v8046, %v8047
      %v8049 = vrot.slane %v8048, 4
      %v8050 = vadd.f32 %v8048, %v8049
      %v8051 = vrot.slane %v8050, 2
      %v8052 = vadd.f32 %v8050, %v8051
      %v8053 = vrot.slane %v8052, 1
      %v8054 = vadd.f32 %v8052, %v8053
      %v8055 = vmul.f32 %v8054, 0.00390625
      %v8056 = vmul.f32 %v7953, %v7953
      %v8057 = vsub.f32 %v8055, %v8056
      %v8058 = vmax.f32 %v8057, 0.0
      %v8059 = vadd.f32 %v8058, 1e-05
      %v8060 = vrsqrt.pop %v8059
      %8061 = vrot.lane.b32.xlu0 %v2064, 96
      %v8062 = vpop.permute.xlu0 %8061
      %8063 = vrot.lane.b32.xlu0 %v2065, 96
      %v8064 = vpop.permute.xlu0 %8063
      %8065 = vrot.lane.b32.xlu0 %v2066, 96
      %v8066 = vpop.permute.xlu0 %8065
      %8067 = vrot.lane.b32.xlu0 %v2067, 96
      %v8068 = vpop.permute.xlu0 %8067
      %8069 = vrot.lane.b32.xlu0 %v2068, 96
      %v8070 = vpop.permute.xlu0 %8069
      %8071 = vrot.lane.b32.xlu0 %v2069, 96
      %v8072 = vpop.permute.xlu0 %8071
      %8073 = vrot.lane.b32.xlu0 %v2070, 96
      %v8074 = vpop.permute.xlu0 %8073
      %8075 = vrot.lane.b32.xlu0 %v2071, 96
      %v8076 = vpop.permute.xlu0 %8075
      %8077 = vrot.lane.b32.xlu0 %v2072, 96
      %v8078 = vpop.permute.xlu0 %8077
      %8079 = vrot.lane.b32.xlu0 %v2073, 96
      %v8080 = vpop.permute.xlu0 %8079
      %8081 = vrot.lane.b32.xlu0 %v2074, 96
      %v8082 = vpop.permute.xlu0 %8081
      %8083 = vrot.lane.b32.xlu0 %v2075, 96
      %v8084 = vpop.permute.xlu0 %8083
      %8085 = vrot.lane.b32.xlu0 %v2076, 96
      %v8086 = vpop.permute.xlu0 %8085
      %8087 = vrot.lane.b32.xlu0 %v2077, 96
      %v8088 = vpop.permute.xlu0 %8087
      %8089 = vrot.lane.b32.xlu0 %v2078, 96
      %v8090 = vpop.permute.xlu0 %8089
      %8091 = vrot.lane.b32.xlu0 %v2079, 96
      %v8092 = vpop.permute.xlu0 %8091
      %v8094 = vshrl.u32 %v8062, 16
      %v8096 = vrot.slane %v8094, 7
      %v8097 = vshll.u32 %v8062, 16
      %v8099 = vor.u32 %v8096, %v8097
      %v8101 = vshrl.u32 %v8064, 16
      %v8103 = vrot.slane %v8101, 7
      %v8104 = vshll.u32 %v8064, 16
      %v8106 = vor.u32 %v8103, %v8104
      %v8108 = vshrl.u32 %v8066, 16
      %v8110 = vrot.slane %v8108, 7
      %v8111 = vshll.u32 %v8066, 16
      %v8113 = vor.u32 %v8110, %v8111
      %v8115 = vshrl.u32 %v8068, 16
      %v8117 = vrot.slane %v8115, 7
      %v8118 = vshll.u32 %v8068, 16
      %v8120 = vor.u32 %v8117, %v8118
      %v8122 = vshrl.u32 %v8070, 16
      %v8124 = vrot.slane %v8122, 7
      %v8125 = vshll.u32 %v8070, 16
      %v8127 = vor.u32 %v8124, %v8125
      %v8129 = vshrl.u32 %v8072, 16
      %v8131 = vrot.slane %v8129, 7
      %v8132 = vshll.u32 %v8072, 16
      %v8134 = vor.u32 %v8131, %v8132
      %v8136 = vshrl.u32 %v8074, 16
      %v8138 = vrot.slane %v8136, 7
      %v8139 = vshll.u32 %v8074, 16
      %v8141 = vor.u32 %v8138, %v8139
      %v8143 = vshrl.u32 %v8076, 16
      %v8145 = vrot.slane %v8143, 7
      %v8146 = vshll.u32 %v8076, 16
      %v8148 = vor.u32 %v8145, %v8146
      %v8150 = vshrl.u32 %v8078, 16
      %v8152 = vrot.slane %v8150, 7
      %v8153 = vshll.u32 %v8078, 16
      %v8155 = vor.u32 %v8152, %v8153
      %v8157 = vshrl.u32 %v8080, 16
      %v8159 = vrot.slane %v8157, 7
      %v8160 = vshll.u32 %v8080, 16
      %v8162 = vor.u32 %v8159, %v8160
      %v8164 = vshrl.u32 %v8082, 16
      %v8166 = vrot.slane %v8164, 7
      %v8167 = vshll.u32 %v8082, 16
      %v8169 = vor.u32 %v8166, %v8167
      %v8171 = vshrl.u32 %v8084, 16
      %v8173 = vrot.slane %v8171, 7
      %v8174 = vshll.u32 %v8084, 16
      %v8176 = vor.u32 %v8173, %v8174
      %v8178 = vshrl.u32 %v8086, 16
      %v8180 = vrot.slane %v8178, 7
      %v8181 = vshll.u32 %v8086, 16
      %v8183 = vor.u32 %v8180, %v8181
      %v8185 = vshrl.u32 %v8088, 16
      %v8187 = vrot.slane %v8185, 7
      %v8188 = vshll.u32 %v8088, 16
      %v8190 = vor.u32 %v8187, %v8188
      %v8192 = vshrl.u32 %v8090, 16
      %v8194 = vrot.slane %v8192, 7
      %v8195 = vshll.u32 %v8090, 16
      %v8197 = vor.u32 %v8194, %v8195
      %v8199 = vshrl.u32 %v8092, 16
      %v8201 = vrot.slane %v8199, 7
      %v8202 = vshll.u32 %v8092, 16
      %v8204 = vor.u32 %v8201, %v8202
      %v8237 = vsel %vm945, 0, %v8099
      %v8238 = vsel %vm945, 0, %v8106
      %v8239 = vsel %vm945, 0, %v8113
      %v8240 = vsel %vm945, 0, %v8120
      %v8241 = vsel %vm945, 0, %v8127
      %v8242 = vsel %vm945, 0, %v8134
      %v8243 = vsel %vm945, 0, %v8141
      %v8244 = vsel %vm945, 0, %v8148
      %v8245 = vsel %vm945, 0, %v8155
      %v8246 = vsel %vm945, 0, %v8162
      %v8247 = vsel %vm945, 0, %v8169
      %v8248 = vsel %vm945, 0, %v8176
      %v8249 = vsel %vm945, 0, %v8183
      %v8250 = vsel %vm945, 0, %v8190
      %v8251 = vsel %vm945, 0, %v8197
      %v8252 = vsel %vm945, 0, %v8204
      %v8253 = vsel %vm945, %v8096, 0
      %v8254 = vsel %vm945, %v8103, 0
      %v8255 = vsel %vm945, %v8110, 0
      %v8256 = vsel %vm945, %v8117, 0
      %v8257 = vsel %vm945, %v8124, 0
      %v8258 = vsel %vm945, %v8131, 0
      %v8259 = vsel %vm945, %v8138, 0
      %v8260 = vsel %vm945, %v8145, 0
      %v8261 = vsel %vm945, %v8152, 0
      %v8262 = vsel %vm945, %v8159, 0
      %v8263 = vsel %vm945, %v8166, 0
      %v8264 = vsel %vm945, %v8173, 0
      %v8265 = vsel %vm945, %v8180, 0
      %v8266 = vsel %vm945, %v8187, 0
      %v8267 = vsel %vm945, %v8194, 0
      %v8268 = vsel %vm945, %v8201, 0
      %v8270 = vshrl.u32 %v8237, 16
      %v8272 = vshll.u32 %v8237, 16
      %v8274 = vrot.slane %v8272, 1
      %v8275 = vor.u32 %v8270, %v8274
      %v8277 = vshll.u32 %v8253, 16
      %v8279 = vrot.slane %v8277, 1
      %v8280 = vsel %vm980, %v8275, %v8279
      %v8282 = vshrl.u32 %v8238, 16
      %v8284 = vshll.u32 %v8238, 16
      %v8286 = vrot.slane %v8284, 1
      %v8287 = vor.u32 %v8282, %v8286
      %v8289 = vshll.u32 %v8254, 16
      %v8291 = vrot.slane %v8289, 1
      %v8292 = vsel %vm980, %v8287, %v8291
      %v8294 = vshrl.u32 %v8239, 16
      %v8296 = vshll.u32 %v8239, 16
      %v8298 = vrot.slane %v8296, 1
      %v8299 = vor.u32 %v8294, %v8298
      %v8301 = vshll.u32 %v8255, 16
      %v8303 = vrot.slane %v8301, 1
      %v8304 = vsel %vm980, %v8299, %v8303
      %v8306 = vshrl.u32 %v8240, 16
      %v8308 = vshll.u32 %v8240, 16
      %v8310 = vrot.slane %v8308, 1
      %v8311 = vor.u32 %v8306, %v8310
      %v8313 = vshll.u32 %v8256, 16
      %v8315 = vrot.slane %v8313, 1
      %v8316 = vsel %vm980, %v8311, %v8315
      %v8318 = vshrl.u32 %v8241, 16
      %v8320 = vshll.u32 %v8241, 16
      %v8322 = vrot.slane %v8320, 1
      %v8323 = vor.u32 %v8318, %v8322
      %v8325 = vshll.u32 %v8257, 16
      %v8327 = vrot.slane %v8325, 1
      %v8328 = vsel %vm980, %v8323, %v8327
      %v8330 = vshrl.u32 %v8242, 16
      %v8332 = vshll.u32 %v8242, 16
      %v8334 = vrot.slane %v8332, 1
      %v8335 = vor.u32 %v8330, %v8334
      %v8337 = vshll.u32 %v8258, 16
      %v8339 = vrot.slane %v8337, 1
      %v8340 = vsel %vm980, %v8335, %v8339
      %v8342 = vshrl.u32 %v8243, 16
      %v8344 = vshll.u32 %v8243, 16
      %v8346 = vrot.slane %v8344, 1
      %v8347 = vor.u32 %v8342, %v8346
      %v8349 = vshll.u32 %v8259, 16
      %v8351 = vrot.slane %v8349, 1
      %v8352 = vsel %vm980, %v8347, %v8351
      %v8354 = vshrl.u32 %v8244, 16
      %v8356 = vshll.u32 %v8244, 16
      %v8358 = vrot.slane %v8356, 1
      %v8359 = vor.u32 %v8354, %v8358
      %v8361 = vshll.u32 %v8260, 16
      %v8363 = vrot.slane %v8361, 1
      %v8364 = vsel %vm980, %v8359, %v8363
      %v8366 = vshrl.u32 %v8245, 16
      %v8368 = vshll.u32 %v8245, 16
      %v8370 = vrot.slane %v8368, 1
      %v8371 = vor.u32 %v8366, %v8370
      %v8373 = vshll.u32 %v8261, 16
      %v8375 = vrot.slane %v8373, 1
      %v8376 = vsel %vm980, %v8371, %v8375
      %v8378 = vshrl.u32 %v8246, 16
      %v8380 = vshll.u32 %v8246, 16
      %v8382 = vrot.slane %v8380, 1
      %v8383 = vor.u32 %v8378, %v8382
      %v8385 = vshll.u32 %v8262, 16
      %v8387 = vrot.slane %v8385, 1
      %v8388 = vsel %vm980, %v8383, %v8387
      %v8390 = vshrl.u32 %v8247, 16
      %v8392 = vshll.u32 %v8247, 16
      %v8394 = vrot.slane %v8392, 1
      %v8395 = vor.u32 %v8390, %v8394
      %v8397 = vshll.u32 %v8263, 16
      %v8399 = vrot.slane %v8397, 1
      %v8400 = vsel %vm980, %v8395, %v8399
      %v8402 = vshrl.u32 %v8248, 16
      %v8404 = vshll.u32 %v8248, 16
      %v8406 = vrot.slane %v8404, 1
      %v8407 = vor.u32 %v8402, %v8406
      %v8409 = vshll.u32 %v8264, 16
      %v8411 = vrot.slane %v8409, 1
      %v8412 = vsel %vm980, %v8407, %v8411
      %v8414 = vshrl.u32 %v8249, 16
      %v8416 = vshll.u32 %v8249, 16
      %v8418 = vrot.slane %v8416, 1
      %v8419 = vor.u32 %v8414, %v8418
      %v8421 = vshll.u32 %v8265, 16
      %v8423 = vrot.slane %v8421, 1
      %v8424 = vsel %vm980, %v8419, %v8423
      %v8426 = vshrl.u32 %v8250, 16
      %v8428 = vshll.u32 %v8250, 16
      %v8430 = vrot.slane %v8428, 1
      %v8431 = vor.u32 %v8426, %v8430
      %v8433 = vshll.u32 %v8266, 16
      %v8435 = vrot.slane %v8433, 1
      %v8436 = vsel %vm980, %v8431, %v8435
      %v8438 = vshrl.u32 %v8251, 16
      %v8440 = vshll.u32 %v8251, 16
      %v8442 = vrot.slane %v8440, 1
      %v8443 = vor.u32 %v8438, %v8442
      %v8445 = vshll.u32 %v8267, 16
      %v8447 = vrot.slane %v8445, 1
      %v8448 = vsel %vm980, %v8443, %v8447
      %v8479 = vrot.slane %v8237, 1
      %v8480 = vrot.slane %v8253, 1
      %v8481 = vsel %vm1205, %v8479, %v8480
      %v8482 = vrot.slane %v8238, 1
      %v8483 = vrot.slane %v8254, 1
      %v8484 = vsel %vm1205, %v8482, %v8483
      %v8485 = vrot.slane %v8239, 1
      %v8486 = vrot.slane %v8255, 1
      %v8487 = vsel %vm1205, %v8485, %v8486
      %v8488 = vrot.slane %v8240, 1
      %v8489 = vrot.slane %v8256, 1
      %v8490 = vsel %vm1205, %v8488, %v8489
      %v8491 = vrot.slane %v8241, 1
      %v8492 = vrot.slane %v8257, 1
      %v8493 = vsel %vm1205, %v8491, %v8492
      %v8494 = vrot.slane %v8242, 1
      %v8495 = vrot.slane %v8258, 1
      %v8496 = vsel %vm1205, %v8494, %v8495
      %v8497 = vrot.slane %v8243, 1
      %v8498 = vrot.slane %v8259, 1
      %v8499 = vsel %vm1205, %v8497, %v8498
      %v8500 = vrot.slane %v8244, 1
      %v8501 = vrot.slane %v8260, 1
      %v8502 = vsel %vm1205, %v8500, %v8501
      %v8503 = vrot.slane %v8245, 1
      %v8504 = vrot.slane %v8261, 1
      %v8505 = vsel %vm1205, %v8503, %v8504
      %v8506 = vrot.slane %v8246, 1
      %v8507 = vrot.slane %v8262, 1
      %v8508 = vsel %vm1205, %v8506, %v8507
      %v8509 = vrot.slane %v8247, 1
      %v8510 = vrot.slane %v8263, 1
      %v8511 = vsel %vm1205, %v8509, %v8510
      %v8512 = vrot.slane %v8248, 1
      %v8513 = vrot.slane %v8264, 1
      %v8514 = vsel %vm1205, %v8512, %v8513
      %v8515 = vrot.slane %v8249, 1
      %v8516 = vrot.slane %v8265, 1
      %v8517 = vsel %vm1205, %v8515, %v8516
      %v8518 = vrot.slane %v8250, 1
      %v8519 = vrot.slane %v8266, 1
      %v8520 = vsel %vm1205, %v8518, %v8519
      %v8521 = vrot.slane %v8251, 1
      %v8522 = vrot.slane %v8267, 1
      %v8523 = vsel %vm1205, %v8521, %v8522
      %v8525 = vshrl.u32 %v8252, 16
      %v8527 = vshll.u32 %v8252, 16
      %v8529 = vrot.slane %v8527, 1
      %v8530 = vor.u32 %v8525, %v8529
      %v8532 = vshll.u32 %v8268, 16
      %v8534 = vrot.slane %v8532, 1
      %v8535 = vsel %vm980, %v8530, %v8534
      %v8538 = vrot.slane %v8252, 1
      %v8539 = vrot.slane %v8268, 1
      %v8540 = vsel %vm1205, %v8538, %v8539
      %8541 = vrot.lane.b32.xlu0 %v8280, 32
      %v8542 = vpop.permute.xlu0 %8541
      %8543 = vrot.lane.b32.xlu0 %v8292, 32
      %v8544 = vpop.permute.xlu0 %8543
      %8545 = vrot.lane.b32.xlu0 %v8304, 32
      %v8546 = vpop.permute.xlu0 %8545
      %8547 = vrot.lane.b32.xlu0 %v8316, 32
      %v8548 = vpop.permute.xlu0 %8547
      %8549 = vrot.lane.b32.xlu0 %v8328, 32
      %v8550 = vpop.permute.xlu0 %8549
      %8551 = vrot.lane.b32.xlu0 %v8340, 32
      %v8552 = vpop.permute.xlu0 %8551
      %8553 = vrot.lane.b32.xlu0 %v8352, 32
      %v8554 = vpop.permute.xlu0 %8553
      %8555 = vrot.lane.b32.xlu0 %v8364, 32
      %v8556 = vpop.permute.xlu0 %8555
      %8557 = vrot.lane.b32.xlu0 %v8376, 32
      %v8558 = vpop.permute.xlu0 %8557
      %8559 = vrot.lane.b32.xlu0 %v8388, 32
      %v8560 = vpop.permute.xlu0 %8559
      %8561 = vrot.lane.b32.xlu0 %v8400, 32
      %v8562 = vpop.permute.xlu0 %8561
      %8563 = vrot.lane.b32.xlu0 %v8412, 32
      %v8564 = vpop.permute.xlu0 %8563
      %8565 = vrot.lane.b32.xlu0 %v8424, 32
      %v8566 = vpop.permute.xlu0 %8565
      %8567 = vrot.lane.b32.xlu0 %v8436, 32
      %v8568 = vpop.permute.xlu0 %8567
      %8569 = vrot.lane.b32.xlu0 %v8448, 32
      %v8570 = vpop.permute.xlu0 %8569
      %8571 = vrot.lane.b32.xlu0 %v8481, 64
      %v8572 = vpop.permute.xlu0 %8571
      %8573 = vrot.lane.b32.xlu0 %v8484, 64
      %v8574 = vpop.permute.xlu0 %8573
      %8575 = vrot.lane.b32.xlu0 %v8487, 64
      %v8576 = vpop.permute.xlu0 %8575
      %8577 = vrot.lane.b32.xlu0 %v8490, 64
      %v8578 = vpop.permute.xlu0 %8577
      %8579 = vrot.lane.b32.xlu0 %v8493, 64
      %v8580 = vpop.permute.xlu0 %8579
      %8581 = vrot.lane.b32.xlu0 %v8496, 64
      %v8582 = vpop.permute.xlu0 %8581
      %8583 = vrot.lane.b32.xlu0 %v8499, 64
      %v8584 = vpop.permute.xlu0 %8583
      %8585 = vrot.lane.b32.xlu0 %v8502, 64
      %v8586 = vpop.permute.xlu0 %8585
      %8587 = vrot.lane.b32.xlu0 %v8505, 64
      %v8588 = vpop.permute.xlu0 %8587
      %8589 = vrot.lane.b32.xlu0 %v8508, 64
      %v8590 = vpop.permute.xlu0 %8589
      %8591 = vrot.lane.b32.xlu0 %v8511, 64
      %v8592 = vpop.permute.xlu0 %8591
      %8593 = vrot.lane.b32.xlu0 %v8514, 64
      %v8594 = vpop.permute.xlu0 %8593
      %8595 = vrot.lane.b32.xlu0 %v8517, 64
      %v8596 = vpop.permute.xlu0 %8595
      %8597 = vrot.lane.b32.xlu0 %v8520, 64
      %v8598 = vpop.permute.xlu0 %8597
      %8599 = vrot.lane.b32.xlu0 %v8523, 64
      %v8600 = vpop.permute.xlu0 %8599
      %8601 = vrot.lane.b32.xlu0 %v8237, 96
      %v8602 = vpop.permute.xlu0 %8601
      %8603 = vrot.lane.b32.xlu0 %v8238, 96
      %v8604 = vpop.permute.xlu0 %8603
      %8605 = vrot.lane.b32.xlu0 %v8239, 96
      %v8606 = vpop.permute.xlu0 %8605
      %8607 = vrot.lane.b32.xlu0 %v8240, 96
      %v8608 = vpop.permute.xlu0 %8607
      %8609 = vrot.lane.b32.xlu0 %v8241, 96
      %v8610 = vpop.permute.xlu0 %8609
      %8611 = vrot.lane.b32.xlu0 %v8242, 96
      %v8612 = vpop.permute.xlu0 %8611
      %8613 = vrot.lane.b32.xlu0 %v8243, 96
      %v8614 = vpop.permute.xlu0 %8613
      %8615 = vrot.lane.b32.xlu0 %v8244, 96
      %v8616 = vpop.permute.xlu0 %8615
      %8617 = vrot.lane.b32.xlu0 %v8245, 96
      %v8618 = vpop.permute.xlu0 %8617
      %8619 = vrot.lane.b32.xlu0 %v8246, 96
      %v8620 = vpop.permute.xlu0 %8619
      %8621 = vrot.lane.b32.xlu0 %v8247, 96
      %v8622 = vpop.permute.xlu0 %8621
      %8623 = vrot.lane.b32.xlu0 %v8248, 96
      %v8624 = vpop.permute.xlu0 %8623
      %8625 = vrot.lane.b32.xlu0 %v8249, 96
      %v8626 = vpop.permute.xlu0 %8625
      %8627 = vrot.lane.b32.xlu0 %v8250, 96
      %v8628 = vpop.permute.xlu0 %8627
      %8629 = vrot.lane.b32.xlu0 %v8251, 96
      %v8630 = vpop.permute.xlu0 %8629
      %8631 = vrot.lane.b32.xlu0 %v8252, 96
      %v8632 = vpop.permute.xlu0 %8631
      %8633 = vrot.lane.b32.xlu0 %v8481, 32
      %v8634 = vpop.permute.xlu0 %8633
      %8635 = vrot.lane.b32.xlu0 %v8484, 32
      %v8636 = vpop.permute.xlu0 %8635
      %8637 = vrot.lane.b32.xlu0 %v8487, 32
      %v8638 = vpop.permute.xlu0 %8637
      %8639 = vrot.lane.b32.xlu0 %v8490, 32
      %v8640 = vpop.permute.xlu0 %8639
      %8641 = vrot.lane.b32.xlu0 %v8493, 32
      %v8642 = vpop.permute.xlu0 %8641
      %8643 = vrot.lane.b32.xlu0 %v8496, 32
      %v8644 = vpop.permute.xlu0 %8643
      %8645 = vrot.lane.b32.xlu0 %v8499, 32
      %v8646 = vpop.permute.xlu0 %8645
      %8647 = vrot.lane.b32.xlu0 %v8502, 32
      %v8648 = vpop.permute.xlu0 %8647
      %8649 = vrot.lane.b32.xlu0 %v8505, 32
      %v8650 = vpop.permute.xlu0 %8649
      %8651 = vrot.lane.b32.xlu0 %v8508, 32
      %v8652 = vpop.permute.xlu0 %8651
      %8653 = vrot.lane.b32.xlu0 %v8511, 32
      %v8654 = vpop.permute.xlu0 %8653
      %8655 = vrot.lane.b32.xlu0 %v8514, 32
      %v8656 = vpop.permute.xlu0 %8655
      %8657 = vrot.lane.b32.xlu0 %v8517, 32
      %v8658 = vpop.permute.xlu0 %8657
      %8659 = vrot.lane.b32.xlu0 %v8520, 32
      %v8660 = vpop.permute.xlu0 %8659
      %8661 = vrot.lane.b32.xlu0 %v8523, 32
      %v8662 = vpop.permute.xlu0 %8661
      %8663 = vrot.lane.b32.xlu0 %v8540, 32
      %v8664 = vpop.permute.xlu0 %8663
      %8665 = vrot.lane.b32.xlu0 %v8238, 64
      %v8666 = vpop.permute.xlu0 %8665
      %8667 = vrot.lane.b32.xlu0 %v8239, 64
      %v8668 = vpop.permute.xlu0 %8667
      %8669 = vrot.lane.b32.xlu0 %v8240, 64
      %v8670 = vpop.permute.xlu0 %8669
      %8671 = vrot.lane.b32.xlu0 %v8241, 64
      %v8672 = vpop.permute.xlu0 %8671
      %8673 = vrot.lane.b32.xlu0 %v8242, 64
      %v8674 = vpop.permute.xlu0 %8673
      %8675 = vrot.lane.b32.xlu0 %v8243, 64
      %v8676 = vpop.permute.xlu0 %8675
      %8677 = vrot.lane.b32.xlu0 %v8244, 64
      %v8678 = vpop.permute.xlu0 %8677
      %8679 = vrot.lane.b32.xlu0 %v8245, 64
      %v8680 = vpop.permute.xlu0 %8679
      %8681 = vrot.lane.b32.xlu0 %v8246, 64
      %v8682 = vpop.permute.xlu0 %8681
      %8683 = vrot.lane.b32.xlu0 %v8247, 64
      %v8684 = vpop.permute.xlu0 %8683
      %8685 = vrot.lane.b32.xlu0 %v8248, 64
      %v8686 = vpop.permute.xlu0 %8685
      %8687 = vrot.lane.b32.xlu0 %v8249, 64
      %v8688 = vpop.permute.xlu0 %8687
      %8689 = vrot.lane.b32.xlu0 %v8250, 64
      %v8690 = vpop.permute.xlu0 %8689
      %8691 = vrot.lane.b32.xlu0 %v8251, 64
      %v8692 = vpop.permute.xlu0 %8691
      %8693 = vrot.lane.b32.xlu0 %v8252, 64
      %v8694 = vpop.permute.xlu0 %8693
      %8695 = vrot.lane.b32.xlu0 %v8292, 96
      %v8696 = vpop.permute.xlu0 %8695
      %8697 = vrot.lane.b32.xlu0 %v8304, 96
      %v8698 = vpop.permute.xlu0 %8697
      %8699 = vrot.lane.b32.xlu0 %v8316, 96
      %v8700 = vpop.permute.xlu0 %8699
      %8701 = vrot.lane.b32.xlu0 %v8328, 96
      %v8702 = vpop.permute.xlu0 %8701
      %8703 = vrot.lane.b32.xlu0 %v8340, 96
      %v8704 = vpop.permute.xlu0 %8703
      %8705 = vrot.lane.b32.xlu0 %v8352, 96
      %v8706 = vpop.permute.xlu0 %8705
      %8707 = vrot.lane.b32.xlu0 %v8364, 96
      %v8708 = vpop.permute.xlu0 %8707
      %8709 = vrot.lane.b32.xlu0 %v8376, 96
      %v8710 = vpop.permute.xlu0 %8709
      %8711 = vrot.lane.b32.xlu0 %v8388, 96
      %v8712 = vpop.permute.xlu0 %8711
      %8713 = vrot.lane.b32.xlu0 %v8400, 96
      %v8714 = vpop.permute.xlu0 %8713
      %8715 = vrot.lane.b32.xlu0 %v8412, 96
      %v8716 = vpop.permute.xlu0 %8715
      %8717 = vrot.lane.b32.xlu0 %v8424, 96
      %v8718 = vpop.permute.xlu0 %8717
      %8719 = vrot.lane.b32.xlu0 %v8436, 96
      %v8720 = vpop.permute.xlu0 %8719
      %8721 = vrot.lane.b32.xlu0 %v8448, 96
      %v8722 = vpop.permute.xlu0 %8721
      %8723 = vrot.lane.b32.xlu0 %v8535, 96
      %v8724 = vpop.permute.xlu0 %8723
      %v8726 = vsel %vm1626, %v8237, %v8542
      %v8728 = vsel %vm1626, %v8238, %v8544
      %v8730 = vsel %vm1626, %v8239, %v8546
      %v8732 = vsel %vm1626, %v8240, %v8548
      %v8734 = vsel %vm1626, %v8241, %v8550
      %v8736 = vsel %vm1626, %v8242, %v8552
      %v8738 = vsel %vm1626, %v8243, %v8554
      %v8740 = vsel %vm1626, %v8244, %v8556
      %v8742 = vsel %vm1626, %v8245, %v8558
      %v8744 = vsel %vm1626, %v8246, %v8560
      %v8746 = vsel %vm1626, %v8247, %v8562
      %v8748 = vsel %vm1626, %v8248, %v8564
      %v8750 = vsel %vm1626, %v8249, %v8566
      %v8752 = vsel %vm1626, %v8250, %v8568
      %v8754 = vsel %vm1626, %v8251, %v8570
      %v8756 = vsel %vm1758, %v8726, %v8572
      %v8758 = vsel %vm1758, %v8728, %v8574
      %v8760 = vsel %vm1758, %v8730, %v8576
      %v8762 = vsel %vm1758, %v8732, %v8578
      %v8764 = vsel %vm1758, %v8734, %v8580
      %v8766 = vsel %vm1758, %v8736, %v8582
      %v8768 = vsel %vm1758, %v8738, %v8584
      %v8770 = vsel %vm1758, %v8740, %v8586
      %v8772 = vsel %vm1758, %v8742, %v8588
      %v8774 = vsel %vm1758, %v8744, %v8590
      %v8776 = vsel %vm1758, %v8746, %v8592
      %v8778 = vsel %vm1758, %v8748, %v8594
      %v8780 = vsel %vm1758, %v8750, %v8596
      %v8782 = vsel %vm1758, %v8752, %v8598
      %v8784 = vsel %vm1758, %v8754, %v8600
      %v8786 = vsel %vm3071, %v3040, %v8602
      %v8789 = vsel %vm3071, %v8756, %v8604
      %v8792 = vsel %vm3071, %v8758, %v8606
      %v8795 = vsel %vm3071, %v8760, %v8608
      %v8798 = vsel %vm3071, %v8762, %v8610
      %v8801 = vsel %vm3071, %v8764, %v8612
      %v8804 = vsel %vm3071, %v8766, %v8614
      %v8807 = vsel %vm3071, %v8768, %v8616
      %v8810 = vsel %vm3071, %v8770, %v8618
      %v8813 = vsel %vm3071, %v8772, %v8620
      %v8816 = vsel %vm3071, %v8774, %v8622
      %v8819 = vsel %vm3071, %v8776, %v8624
      %v8822 = vsel %vm3071, %v8778, %v8626
      %v8825 = vsel %vm3071, %v8780, %v8628
      %v8828 = vsel %vm3071, %v8782, %v8630
      %v8831 = vsel %vm3071, %v8784, %v8632
      %v8835 = vsel %vm1626, %v8280, %v8634
      %v8838 = vsel %vm1626, %v8292, %v8636
      %v8841 = vsel %vm1626, %v8304, %v8638
      %v8844 = vsel %vm1626, %v8316, %v8640
      %v8847 = vsel %vm1626, %v8328, %v8642
      %v8850 = vsel %vm1626, %v8340, %v8644
      %v8853 = vsel %vm1626, %v8352, %v8646
      %v8856 = vsel %vm1626, %v8364, %v8648
      %v8859 = vsel %vm1626, %v8376, %v8650
      %v8862 = vsel %vm1626, %v8388, %v8652
      %v8865 = vsel %vm1626, %v8400, %v8654
      %v8868 = vsel %vm1626, %v8412, %v8656
      %v8871 = vsel %vm1626, %v8424, %v8658
      %v8874 = vsel %vm1626, %v8436, %v8660
      %v8877 = vsel %vm1626, %v8448, %v8662
      %v8880 = vsel %vm1626, %v8535, %v8664
      %v8882 = vsel %vm1758, %v8835, %v8666
      %v8884 = vsel %vm1758, %v8838, %v8668
      %v8886 = vsel %vm1758, %v8841, %v8670
      %v8888 = vsel %vm1758, %v8844, %v8672
      %v8890 = vsel %vm1758, %v8847, %v8674
      %v8892 = vsel %vm1758, %v8850, %v8676
      %v8894 = vsel %vm1758, %v8853, %v8678
      %v8896 = vsel %vm1758, %v8856, %v8680
      %v8898 = vsel %vm1758, %v8859, %v8682
      %v8900 = vsel %vm1758, %v8862, %v8684
      %v8902 = vsel %vm1758, %v8865, %v8686
      %v8904 = vsel %vm1758, %v8868, %v8688
      %v8906 = vsel %vm1758, %v8871, %v8690
      %v8908 = vsel %vm1758, %v8874, %v8692
      %v8910 = vsel %vm1758, %v8877, %v8694
      %v8911 = vsel %vm1758, %v8880, %v2975
      %v8913 = vsel %vm3071, %v8882, %v8696
      %v8916 = vsel %vm3071, %v8884, %v8698
      %v8919 = vsel %vm3071, %v8886, %v8700
      %v8922 = vsel %vm3071, %v8888, %v8702
      %v8925 = vsel %vm3071, %v8890, %v8704
      %v8928 = vsel %vm3071, %v8892, %v8706
      %v8931 = vsel %vm3071, %v8894, %v8708
      %v8934 = vsel %vm3071, %v8896, %v8710
      %v8937 = vsel %vm3071, %v8898, %v8712
      %v8940 = vsel %vm3071, %v8900, %v8714
      %v8943 = vsel %vm3071, %v8902, %v8716
      %v8946 = vsel %vm3071, %v8904, %v8718
      %v8949 = vsel %vm3071, %v8906, %v8720
      %v8952 = vsel %vm3071, %v8908, %v8722
      %v8955 = vsel %vm3071, %v8910, %v8724
      %v8957 = vsel %vm3071, %v8911, %v3007
      %v8959 = vld [vmem:[%s12] sm:$0xf]
      %v8960 = vld [vmem:[%s12 + $0x4] sm:$0xf]
      %v8961 = vld [vmem:[%s12 + $0x8] sm:$0xf]
      %v8962 = vld [vmem:[%s12 + $0xc] sm:$0xf]
      %v8963 = vld [vmem:[%s12 + $0x10] sm:$0xf]
      %v8964 = vld [vmem:[%s12 + $0x14] sm:$0xf]
      %v8965 = vld [vmem:[%s12 + $0x18] sm:$0xf]
      %v8966 = vld [vmem:[%s12 + $0x1c] sm:$0xf]
      %v8967 = vld [vmem:[%s12 + $0x20] sm:$0xf]
      %v8968 = vld [vmem:[%s12 + $0x24] sm:$0xf]
      %v8969 = vld [vmem:[%s12 + $0x28] sm:$0xf]
      %v8970 = vld [vmem:[%s12 + $0x2c] sm:$0xf]
      %v8971 = vld [vmem:[%s12 + $0x30] sm:$0xf]
      %v8972 = vld [vmem:[%s12 + $0x34] sm:$0xf]
      %v8973 = vld [vmem:[%s12 + $0x38] sm:$0xf]
      %v8974 = vld [vmem:[%s12 + $0x3c] sm:$0xf]
      %v8975 = vld [vmem:[%s12 + $0x40] sm:$0xf]
      %v8976 = vld [vmem:[%s12 + $0x44] sm:$0xf]
      %v8977 = vld [vmem:[%s12 + $0x48] sm:$0xf]
      %v8978 = vld [vmem:[%s12 + $0x4c] sm:$0xf]
      %v8979 = vld [vmem:[%s12 + $0x50] sm:$0xf]
      %v8980 = vld [vmem:[%s12 + $0x54] sm:$0xf]
      %v8981 = vld [vmem:[%s12 + $0x58] sm:$0xf]
      %v8982 = vld [vmem:[%s12 + $0x5c] sm:$0xf]
      %v8983 = vld [vmem:[%s12 + $0x60] sm:$0xf]
      %v8984 = vld [vmem:[%s12 + $0x64] sm:$0xf]
      %v8985 = vld [vmem:[%s12 + $0x68] sm:$0xf]
      %v8986 = vld [vmem:[%s12 + $0x6c] sm:$0xf]
      %v8987 = vld [vmem:[%s12 + $0x70] sm:$0xf]
      %v8988 = vld [vmem:[%s12 + $0x74] sm:$0xf]
      %v8989 = vld [vmem:[%s12 + $0x78] sm:$0xf]
      %v8990 = vld [vmem:[%s12 + $0x7c] sm:$0xf]
      %v8991 = vld [vmem:[%s12 + $0x80] sm:$0xf]
      %v8992 = vld [vmem:[%s12 + $0x84] sm:$0xf]
      %v8993 = vld [vmem:[%s12 + $0x88] sm:$0xf]
      %v8994 = vld [vmem:[%s12 + $0x8c] sm:$0xf]
      %v8995 = vld [vmem:[%s14] sm:$0xf]
      %v8996 = vld [vmem:[%s14 + $0x4] sm:$0xf]
      %v8997 = vld [vmem:[%s14 + $0x8] sm:$0xf]
      %v8998 = vld [vmem:[%s14 + $0xc] sm:$0xf]
      %v8999 = vld [vmem:[%s14 + $0x10] sm:$0xf]
      %v9000 = vld [vmem:[%s14 + $0x14] sm:$0xf]
      %v9001 = vld [vmem:[%s14 + $0x18] sm:$0xf]
      %v9002 = vld [vmem:[%s14 + $0x1c] sm:$0xf]
      %v9003 = vld [vmem:[%s14 + $0x20] sm:$0xf]
      %v9004 = vld [vmem:[%s14 + $0x24] sm:$0xf]
      %v9005 = vld [vmem:[%s14 + $0x28] sm:$0xf]
      %v9006 = vld [vmem:[%s14 + $0x2c] sm:$0xf]
      %v9007 = vld [vmem:[%s14 + $0x30] sm:$0xf]
      %v9008 = vld [vmem:[%s14 + $0x34] sm:$0xf]
      %v9009 = vld [vmem:[%s14 + $0x38] sm:$0xf]
      %v9010 = vld [vmem:[%s14 + $0x3c] sm:$0xf]
      %v9011 = vld [vmem:[%s14 + $0x40] sm:$0xf]
      %v9012 = vld [vmem:[%s14 + $0x44] sm:$0xf]
      %v9013 = vld [vmem:[%s14 + $0x48] sm:$0xf]
      %v9014 = vld [vmem:[%s14 + $0x4c] sm:$0xf]
      %v9015 = vld [vmem:[%s14 + $0x50] sm:$0xf]
      %v9016 = vld [vmem:[%s14 + $0x54] sm:$0xf]
      %v9017 = vld [vmem:[%s14 + $0x58] sm:$0xf]
      %v9018 = vld [vmem:[%s14 + $0x5c] sm:$0xf]
      %v9019 = vld [vmem:[%s14 + $0x60] sm:$0xf]
      %v9020 = vld [vmem:[%s14 + $0x64] sm:$0xf]
      %v9021 = vld [vmem:[%s14 + $0x68] sm:$0xf]
      %v9022 = vld [vmem:[%s14 + $0x6c] sm:$0xf]
      %v9023 = vld [vmem:[%s14 + $0x70] sm:$0xf]
      %v9024 = vld [vmem:[%s14 + $0x74] sm:$0xf]
      %v9025 = vld [vmem:[%s14 + $0x78] sm:$0xf]
      %v9026 = vld [vmem:[%s14 + $0x7c] sm:$0xf]
      %v9027 = vld [vmem:[%s14 + $0x80] sm:$0xf]
      %v9028 = vld [vmem:[%s14 + $0x84] sm:$0xf]
      %v9029 = vld [vmem:[%s14 + $0x88] sm:$0xf]
      %v9030 = vld [vmem:[%s14 + $0x8c] sm:$0xf]
      %v9031 = vld [vmem:[%s13] sm:$0x1]
      %v9033 = vlaneseq
      %v9034 = vshrl.u32 %v9033, 7
      %v9035 = vsub.s32 0, %v9034
      %v9036 = vrot.slane %v9031, %v9035
      %v9074 = vunpack.c.l.b16 %v8959
      %v9075 = vunpack.c.l.b16 %v8960
      %v9076 = vunpack.c.l.b16 %v8961
      %v9077 = vunpack.c.l.b16 %v8962
      %v9078 = vunpack.c.l.b16 %v8963
      %v9079 = vunpack.c.l.b16 %v8964
      %v9080 = vunpack.c.l.b16 %v8965
      %v9081 = vunpack.c.l.b16 %v8966
      %v9082 = vunpack.c.l.b16 %v8967
      %v9083 = vunpack.c.l.b16 %v8968
      %v9084 = vunpack.c.l.b16 %v8969
      %v9085 = vunpack.c.l.b16 %v8970
      %v9086 = vunpack.c.l.b16 %v8971
      %v9087 = vunpack.c.l.b16 %v8972
      %v9088 = vunpack.c.l.b16 %v8973
      %v9089 = vunpack.c.l.b16 %v8974
      %v9090 = vunpack.c.l.b16 %v8975
      %v9091 = vunpack.c.l.b16 %v8976
      %v9092 = vunpack.c.l.b16 %v8977
      %v9093 = vunpack.c.l.b16 %v8978
      %v9094 = vunpack.c.l.b16 %v8979
      %v9095 = vunpack.c.l.b16 %v8980
      %v9096 = vunpack.c.l.b16 %v8981
      %v9097 = vunpack.c.l.b16 %v8982
      %v9098 = vunpack.c.l.b16 %v8983
      %v9099 = vunpack.c.l.b16 %v8984
      %v9100 = vunpack.c.l.b16 %v8985
      %v9101 = vunpack.c.l.b16 %v8986
      %v9102 = vunpack.c.l.b16 %v8987
      %v9103 = vunpack.c.l.b16 %v8988
      %v9104 = vunpack.c.l.b16 %v8989
      %v9105 = vunpack.c.l.b16 %v8990
      %v9106 = vunpack.c.l.b16 %v8991
      %v9107 = vunpack.c.l.b16 %v8992
      %v9108 = vunpack.c.l.b16 %v8993
      %v9109 = vunpack.c.l.b16 %v8994
      %v9110 = vpack.c.b16 %v9075, %v9074
      %v9111 = vpack.c.b16 %v9077, %v9076
      %v9112 = vpack.c.b16 %v9079, %v9078
      %v9113 = vpack.c.b16 %v9081, %v9080
      %v9114 = vpack.c.b16 %v9083, %v9082
      %v9115 = vpack.c.b16 %v9085, %v9084
      %v9116 = vpack.c.b16 %v9087, %v9086
      %v9117 = vpack.c.b16 %v9089, %v9088
      %v9118 = vpack.c.b16 %v9091, %v9090
      %v9119 = vpack.c.b16 %v9093, %v9092
      %v9120 = vpack.c.b16 %v9095, %v9094
      %v9121 = vpack.c.b16 %v9097, %v9096
      %v9122 = vpack.c.b16 %v9099, %v9098
      %v9123 = vpack.c.b16 %v9101, %v9100
      %v9124 = vpack.c.b16 %v9103, %v9102
      %v9125 = vpack.c.b16 %v9105, %v9104
      %v9126 = vpack.c.b16 %v9107, %v9106
      %v9127 = vpack.c.b16 %v9109, %v9108
      %v9147 = vsel %vm1626, %v8484, 0
      %v9150 = vsel %vm1626, %v8487, 0
      %v9153 = vsel %vm1626, %v8490, 0
      %v9156 = vsel %vm1626, %v8493, 0
      %v9159 = vsel %vm1626, %v8496, 0
      %v9162 = vsel %vm1626, %v8499, 0
      %v9165 = vsel %vm1626, %v8502, 0
      %v9168 = vsel %vm1626, %v8505, 0
      %v9171 = vsel %vm1626, %v8508, 0
      %v9174 = vsel %vm1626, %v8511, 0
      %v9177 = vsel %vm1626, %v8514, 0
      %v9180 = vsel %vm1626, %v8517, 0
      %v9183 = vsel %vm1626, %v8520, 0
      %v9186 = vsel %vm1626, %v8523, 0
      %v9189 = vsel %vm1626, %v8540, 0
      %9191 = vmatprep.subr.bf16.mxu0 0
      %9192 = vmatpush1.bf16.msra.mxu0 %v9117
      %9193 = vmatprep.subr.bf16.mxu0 0
      %9194 = vmatpush1.bf16.msra.mxu0 %v9116
      %9195 = vmatprep.subr.bf16.mxu0 0
      %9196 = vmatpush1.bf16.msra.mxu0 %v9115
      %9197 = vmatprep.subr.bf16.mxu0 0
      %9198 = vmatpush1.bf16.msra.mxu0 %v9114
      %9199 = vmatprep.subr.bf16.mxu0 0
      %9200 = vmatpush1.bf16.msra.mxu0 %v9113
      %9201 = vmatprep.subr.bf16.mxu0 0
      %9202 = vmatpush1.bf16.msra.mxu0 %v9112
      %9203 = vmatprep.subr.bf16.mxu0 0
      %9204 = vmatpush1.bf16.msra.mxu0 %v9111
      %9205 = vmatprep.subr.bf16.mxu0 0
      %9206 = vmatpush1.bf16.msra.mxu0 %v9110
      %9207 = vmatprep.subr.bf16.mxu0 0
      %9208 = vmatpush2.bf16.msra.mxu0 %v9125
      %9209 = vmatprep.subr.bf16.mxu0 0
      %9210 = vmatpush2.bf16.msra.mxu0 %v9124
      %9211 = vmatprep.subr.bf16.mxu0 0
      %9212 = vmatpush2.bf16.msra.mxu0 %v9123
      %9213 = vmatprep.subr.bf16.mxu0 0
      %9214 = vmatpush2.bf16.msra.mxu0 %v9122
      %9215 = vmatprep.subr.bf16.mxu0 0
      %9216 = vmatpush2.bf16.msra.mxu0 %v9121
      %9217 = vmatprep.subr.bf16.mxu0 0
      %9218 = vmatpush2.bf16.msra.mxu0 %v9120
      %9219 = vmatprep.subr.bf16.mxu0 0
      %9220 = vmatpush2.bf16.msra.mxu0 %v9119
      %9221 = vmatprep.subr.bf16.mxu0 0
      %9222 = vmatpush2.bf16.msra.mxu0 %v9118
      %9223 = vmatprep.mubr.bf16.mxu0 %v8913
      %9224 = vmatmul.mubr.bf16.gmra.mxu0 %v8786
      %v9225 = vpop.f32.mrf.mxu0
      %v9226 = vadd.f32 %v9036, %v9225
      %v9227 = vpop.f32.mrf.mxu0
      %v9228 = vpop.f32.mrf.mxu0
      %v9229 = vadd.f32 %v9036, %v9228
      %v9230 = vpop.f32.mrf.mxu0
      %9231 = vmatprep.mubr.bf16.mxu0 %v8916
      %9232 = vmatmul.mubr.bf16.gmra.mxu0 %v8789
      %v9233 = vpop.f32.mrf.mxu0
      %v9234 = vadd.f32 %v9036, %v9233
      %v9235 = vpop.f32.mrf.mxu0
      %v9236 = vpop.f32.mrf.mxu0
      %v9237 = vadd.f32 %v9036, %v9236
      %v9238 = vpop.f32.mrf.mxu0
      %9239 = vmatprep.mubr.bf16.mxu0 %v8919
      %9240 = vmatmul.mubr.bf16.gmra.mxu0 %v8792
      %v9241 = vpop.f32.mrf.mxu0
      %v9242 = vadd.f32 %v9036, %v9241
      %v9243 = vpop.f32.mrf.mxu0
      %v9244 = vpop.f32.mrf.mxu0
      %v9245 = vadd.f32 %v9036, %v9244
      %v9246 = vpop.f32.mrf.mxu0
      %9247 = vmatprep.mubr.bf16.mxu0 %v8922
      %9248 = vmatmul.mubr.bf16.gmra.mxu0 %v8795
      %v9249 = vpop.f32.mrf.mxu0
      %v9250 = vadd.f32 %v9036, %v9249
      %v9251 = vpop.f32.mrf.mxu0
      %v9252 = vpop.f32.mrf.mxu0
      %v9253 = vadd.f32 %v9036, %v9252
      %v9254 = vpop.f32.mrf.mxu0
      %9255 = vmatprep.mubr.bf16.mxu0 %v8925
      %9256 = vmatmul.mubr.bf16.gmra.mxu0 %v8798
      %v9257 = vpop.f32.mrf.mxu0
      %v9258 = vadd.f32 %v9036, %v9257
      %v9259 = vpop.f32.mrf.mxu0
      %v9260 = vpop.f32.mrf.mxu0
      %v9261 = vadd.f32 %v9036, %v9260
      %v9262 = vpop.f32.mrf.mxu0
      %9263 = vmatprep.mubr.bf16.mxu0 %v8928
      %9264 = vmatmul.mubr.bf16.gmra.mxu0 %v8801
      %v9265 = vpop.f32.mrf.mxu0
      %v9266 = vadd.f32 %v9036, %v9265
      %v9267 = vpop.f32.mrf.mxu0
      %v9268 = vpop.f32.mrf.mxu0
      %v9269 = vadd.f32 %v9036, %v9268
      %v9270 = vpop.f32.mrf.mxu0
      %9271 = vmatprep.mubr.bf16.mxu0 %v8931
      %9272 = vmatmul.mubr.bf16.gmra.mxu0 %v8804
      %v9273 = vpop.f32.mrf.mxu0
      %v9274 = vadd.f32 %v9036, %v9273
      %v9275 = vpop.f32.mrf.mxu0
      %v9276 = vpop.f32.mrf.mxu0
      %v9277 = vadd.f32 %v9036, %v9276
      %v9278 = vpop.f32.mrf.mxu0
      %9279 = vmatprep.mubr.bf16.mxu0 %v8934
      %9280 = vmatmul.mubr.bf16.gmra.mxu0 %v8807
      %v9281 = vpop.f32.mrf.mxu0
      %v9282 = vadd.f32 %v9036, %v9281
      %v9283 = vpop.f32.mrf.mxu0
      %v9284 = vpop.f32.mrf.mxu0
      %v9285 = vadd.f32 %v9036, %v9284
      %v9286 = vpop.f32.mrf.mxu0
      %9287 = vmatprep.mubr.bf16.mxu0 %v8937
      %9288 = vmatmul.mubr.bf16.gmra.mxu0 %v8810
      %v9289 = vpop.f32.mrf.mxu0
      %v9290 = vadd.f32 %v9036, %v9289
      %v9291 = vpop.f32.mrf.mxu0
      %v9292 = vpop.f32.mrf.mxu0
      %v9293 = vadd.f32 %v9036, %v9292
      %v9294 = vpop.f32.mrf.mxu0
      %9295 = vmatprep.mubr.bf16.mxu0 %v8940
      %9296 = vmatmul.mubr.bf16.gmra.mxu0 %v8813
      %v9297 = vpop.f32.mrf.mxu0
      %v9298 = vadd.f32 %v9036, %v9297
      %v9299 = vpop.f32.mrf.mxu0
      %v9300 = vpop.f32.mrf.mxu0
      %v9301 = vadd.f32 %v9036, %v9300
      %v9302 = vpop.f32.mrf.mxu0
      %9303 = vmatprep.mubr.bf16.mxu0 %v8943
      %9304 = vmatmul.mubr.bf16.gmra.mxu0 %v8816
      %v9305 = vpop.f32.mrf.mxu0
      %v9306 = vadd.f32 %v9036, %v9305
      %v9307 = vpop.f32.mrf.mxu0
      %v9308 = vpop.f32.mrf.mxu0
      %v9309 = vadd.f32 %v9036, %v9308
      %v9310 = vpop.f32.mrf.mxu0
      %9311 = vmatprep.mubr.bf16.mxu0 %v8946
      %9312 = vmatmul.mubr.bf16.gmra.mxu0 %v8819
      %v9313 = vpop.f32.mrf.mxu0
      %v9314 = vadd.f32 %v9036, %v9313
      %v9315 = vpop.f32.mrf.mxu0
      %v9316 = vpop.f32.mrf.mxu0
      %v9317 = vadd.f32 %v9036, %v9316
      %v9318 = vpop.f32.mrf.mxu0
      %9319 = vmatprep.mubr.bf16.mxu0 %v8949
      %9320 = vmatmul.mubr.bf16.gmra.mxu0 %v8822
      %v9321 = vpop.f32.mrf.mxu0
      %v9322 = vadd.f32 %v9036, %v9321
      %v9323 = vpop.f32.mrf.mxu0
      %v9324 = vpop.f32.mrf.mxu0
      %v9325 = vadd.f32 %v9036, %v9324
      %v9326 = vpop.f32.mrf.mxu0
      %9327 = vmatprep.mubr.bf16.mxu0 %v8952
      %9328 = vmatmul.mubr.bf16.gmra.mxu0 %v8825
      %v9329 = vpop.f32.mrf.mxu0
      %v9330 = vadd.f32 %v9036, %v9329
      %v9331 = vpop.f32.mrf.mxu0
      %v9332 = vpop.f32.mrf.mxu0
      %v9333 = vadd.f32 %v9036, %v9332
      %v9334 = vpop.f32.mrf.mxu0
      %9335 = vmatprep.mubr.bf16.mxu0 %v8955
      %9336 = vmatmul.mubr.bf16.gmra.mxu0 %v8828
      %v9337 = vpop.f32.mrf.mxu0
      %v9338 = vadd.f32 %v9036, %v9337
      %v9339 = vpop.f32.mrf.mxu0
      %v9340 = vpop.f32.mrf.mxu0
      %v9341 = vadd.f32 %v9036, %v9340
      %v9342 = vpop.f32.mrf.mxu0
      %9343 = vmatprep.mubr.bf16.mxu0 %v8957
      %9344 = vmatmul.mubr.bf16.gmra.mxu0 %v8831
      %v9345 = vpop.f32.mrf.mxu0
      %v9346 = vadd.f32 %v9036, %v9345
      %v9347 = vpop.f32.mrf.mxu0
      %v9348 = vpop.f32.mrf.mxu0
      %v9349 = vadd.f32 %v9036, %v9348
      %v9350 = vpop.f32.mrf.mxu0
      %9351 = vdwg.mxu0
      %9352 = vmatprep.subr.bf16.mxu0 0
      %9353 = vmatpush1.bf16.msra.mxu0 0
      %9354 = vmatprep.subr.bf16.mxu0 0
      %9355 = vmatpush1.bf16.msra.mxu0 0
      %9356 = vmatprep.subr.bf16.mxu0 0
      %9357 = vmatpush1.bf16.msra.mxu0 0
      %9358 = vmatprep.subr.bf16.mxu0 0
      %9359 = vmatpush1.bf16.msra.mxu0 0
      %9360 = vmatprep.subr.bf16.mxu0 0
      %9361 = vmatpush1.bf16.msra.mxu0 0
      %9362 = vmatprep.subr.bf16.mxu0 0
      %9363 = vmatpush1.bf16.msra.mxu0 0
      %9364 = vmatprep.subr.bf16.mxu0 0
      %9365 = vmatpush1.bf16.msra.mxu0 %v9127
      %9366 = vmatprep.subr.bf16.mxu0 0
      %9367 = vmatpush1.bf16.msra.mxu0 %v9126
      %9368 = vmatprep.subr.bf16.mxu0 0
      %9369 = vmatpush2.bf16.msra.mxu0 0
      %9370 = vmatprep.subr.bf16.mxu0 0
      %9371 = vmatpush2.bf16.msra.mxu0 0
      %9372 = vmatprep.subr.bf16.mxu0 0
      %9373 = vmatpush2.bf16.msra.mxu0 0
      %9374 = vmatprep.subr.bf16.mxu0 0
      %9375 = vmatpush2.bf16.msra.mxu0 0
      %9376 = vmatprep.subr.bf16.mxu0 0
      %9377 = vmatpush2.bf16.msra.mxu0 0
      %9378 = vmatprep.subr.bf16.mxu0 0
      %9379 = vmatpush2.bf16.msra.mxu0 0
      %9380 = vmatprep.subr.bf16.mxu0 0
      %9381 = vmatpush2.bf16.msra.mxu0 0
      %9382 = vmatprep.subr.bf16.mxu0 0
      %9383 = vmatpush2.bf16.msra.mxu0 0
      %9384 = vmatprep.mubr.bf16.mxu0 0
      %9385 = vmatmul.mubr.bf16.gmra.mxu0 %v9147
      %v9386 = vpop.f32.mrf.mxu0
      %v9387 = vadd.f32 %v9226, %v9386
      %v9388 = vpop.f32.mrf.mxu0
      %v9389 = vpop.f32.mrf.mxu0
      %v9390 = vadd.f32 %v9229, %v9389
      %v9391 = vpop.f32.mrf.mxu0
      %9392 = vmatprep.mubr.bf16.mxu0 0
      %9393 = vmatmul.mubr.bf16.gmra.mxu0 %v9150
      %v9394 = vpop.f32.mrf.mxu0
      %v9395 = vadd.f32 %v9234, %v9394
      %v9396 = vpop.f32.mrf.mxu0
      %v9397 = vpop.f32.mrf.mxu0
      %v9398 = vadd.f32 %v9237, %v9397
      %v9399 = vpop.f32.mrf.mxu0
      %9400 = vmatprep.mubr.bf16.mxu0 0
      %9401 = vmatmul.mubr.bf16.gmra.mxu0 %v9153
      %v9402 = vpop.f32.mrf.mxu0
      %v9403 = vadd.f32 %v9242, %v9402
      %v9404 = vpop.f32.mrf.mxu0
      %v9405 = vpop.f32.mrf.mxu0
      %v9406 = vadd.f32 %v9245, %v9405
      %v9407 = vpop.f32.mrf.mxu0
      %9408 = vmatprep.mubr.bf16.mxu0 0
      %9409 = vmatmul.mubr.bf16.gmra.mxu0 %v9156
      %v9410 = vpop.f32.mrf.mxu0
      %v9411 = vadd.f32 %v9250, %v9410
      %v9412 = vpop.f32.mrf.mxu0
      %v9413 = vpop.f32.mrf.mxu0
      %v9414 = vadd.f32 %v9253, %v9413
      %v9415 = vpop.f32.mrf.mxu0
      %9416 = vmatprep.mubr.bf16.mxu0 0
      %9417 = vmatmul.mubr.bf16.gmra.mxu0 %v9159
      %v9418 = vpop.f32.mrf.mxu0
      %v9419 = vadd.f32 %v9258, %v9418
      %v9420 = vpop.f32.mrf.mxu0
      %v9421 = vpop.f32.mrf.mxu0
      %v9422 = vadd.f32 %v9261, %v9421
      %v9423 = vpop.f32.mrf.mxu0
      %9424 = vmatprep.mubr.bf16.mxu0 0
      %9425 = vmatmul.mubr.bf16.gmra.mxu0 %v9162
      %v9426 = vpop.f32.mrf.mxu0
      %v9427 = vadd.f32 %v9266, %v9426
      %v9428 = vpop.f32.mrf.mxu0
      %v9429 = vpop.f32.mrf.mxu0
      %v9430 = vadd.f32 %v9269, %v9429
      %v9431 = vpop.f32.mrf.mxu0
      %9432 = vmatprep.mubr.bf16.mxu0 0
      %9433 = vmatmul.mubr.bf16.gmra.mxu0 %v9165
      %v9434 = vpop.f32.mrf.mxu0
      %v9435 = vadd.f32 %v9274, %v9434
      %v9436 = vpop.f32.mrf.mxu0
      %v9437 = vpop.f32.mrf.mxu0
      %v9438 = vadd.f32 %v9277, %v9437
      %v9439 = vpop.f32.mrf.mxu0
      %9440 = vmatprep.mubr.bf16.mxu0 0
      %9441 = vmatmul.mubr.bf16.gmra.mxu0 %v9168
      %v9442 = vpop.f32.mrf.mxu0
      %v9443 = vadd.f32 %v9282, %v9442
      %v9444 = vpop.f32.mrf.mxu0
      %v9445 = vpop.f32.mrf.mxu0
      %v9446 = vadd.f32 %v9285, %v9445
      %v9447 = vpop.f32.mrf.mxu0
      %9448 = vmatprep.mubr.bf16.mxu0 0
      %9449 = vmatmul.mubr.bf16.gmra.mxu0 %v9171
      %v9450 = vpop.f32.mrf.mxu0
      %v9451 = vadd.f32 %v9290, %v9450
      %v9452 = vpop.f32.mrf.mxu0
      %v9453 = vpop.f32.mrf.mxu0
      %v9454 = vadd.f32 %v9293, %v9453
      %v9455 = vpop.f32.mrf.mxu0
      %9456 = vmatprep.mubr.bf16.mxu0 0
      %9457 = vmatmul.mubr.bf16.gmra.mxu0 %v9174
      %v9458 = vpop.f32.mrf.mxu0
      %v9459 = vadd.f32 %v9298, %v9458
      %v9460 = vpop.f32.mrf.mxu0
      %v9461 = vpop.f32.mrf.mxu0
      %v9462 = vadd.f32 %v9301, %v9461
      %v9463 = vpop.f32.mrf.mxu0
      %9464 = vmatprep.mubr.bf16.mxu0 0
      %9465 = vmatmul.mubr.bf16.gmra.mxu0 %v9177
      %v9466 = vpop.f32.mrf.mxu0
      %v9467 = vadd.f32 %v9306, %v9466
      %v9468 = vpop.f32.mrf.mxu0
      %v9469 = vpop.f32.mrf.mxu0
      %v9470 = vadd.f32 %v9309, %v9469
      %v9471 = vpop.f32.mrf.mxu0
      %9472 = vmatprep.mubr.bf16.mxu0 0
      %9473 = vmatmul.mubr.bf16.gmra.mxu0 %v9180
      %v9474 = vpop.f32.mrf.mxu0
      %v9475 = vadd.f32 %v9314, %v9474
      %v9476 = vpop.f32.mrf.mxu0
      %v9477 = vpop.f32.mrf.mxu0
      %v9478 = vadd.f32 %v9317, %v9477
      %v9479 = vpop.f32.mrf.mxu0
      %9480 = vmatprep.mubr.bf16.mxu0 0
      %9481 = vmatmul.mubr.bf16.gmra.mxu0 %v9183
      %v9482 = vpop.f32.mrf.mxu0
      %v9483 = vadd.f32 %v9322, %v9482
      %v9484 = vpop.f32.mrf.mxu0
      %v9485 = vpop.f32.mrf.mxu0
      %v9486 = vadd.f32 %v9325, %v9485
      %v9487 = vpop.f32.mrf.mxu0
      %9488 = vmatprep.mubr.bf16.mxu0 0
      %9489 = vmatmul.mubr.bf16.gmra.mxu0 %v9186
      %v9490 = vpop.f32.mrf.mxu0
      %v9491 = vadd.f32 %v9330, %v9490
      %v9492 = vpop.f32.mrf.mxu0
      %v9493 = vpop.f32.mrf.mxu0
      %v9494 = vadd.f32 %v9333, %v9493
      %v9495 = vpop.f32.mrf.mxu0
      %9496 = vmatprep.mubr.bf16.mxu0 0
      %9497 = vmatmul.mubr.bf16.gmra.mxu0 %v9189
      %v9498 = vpop.f32.mrf.mxu0
      %v9499 = vadd.f32 %v9338, %v9498
      %v9500 = vpop.f32.mrf.mxu0
      %v9501 = vpop.f32.mrf.mxu0
      %v9502 = vadd.f32 %v9341, %v9501
      %v9503 = vpop.f32.mrf.mxu0
      %9504 = vmatprep.mubr.bf16.mxu0 0
      %9505 = vmatmul.mubr.bf16.gmra.mxu0 %v3481
      %v9506 = vpop.f32.mrf.mxu0
      %v9507 = vadd.f32 %v9346, %v9506
      %v9508 = vpop.f32.mrf.mxu0
      %v9509 = vpop.f32.mrf.mxu0
      %v9510 = vadd.f32 %v9349, %v9509
      %v9511 = vpop.f32.mrf.mxu0
      %9512 = vdwg.mxu0
      %v9513 = vld [vmem:[%s15] sm:$0x1]
      %v9515 = vlaneseq
      %v9516 = vshrl.u32 %v9515, 7
      %v9517 = vsub.s32 0, %v9516
      %v9518 = vrot.slane %v9513, %v9517
      %v9556 = vunpack.c.l.b16 %v8995
      %v9557 = vunpack.c.l.b16 %v8996
      %v9558 = vunpack.c.l.b16 %v8997
      %v9559 = vunpack.c.l.b16 %v8998
      %v9560 = vunpack.c.l.b16 %v8999
      %v9561 = vunpack.c.l.b16 %v9000
      %v9562 = vunpack.c.l.b16 %v9001
      %v9563 = vunpack.c.l.b16 %v9002
      %v9564 = vunpack.c.l.b16 %v9003
      %v9565 = vunpack.c.l.b16 %v9004
      %v9566 = vunpack.c.l.b16 %v9005
      %v9567 = vunpack.c.l.b16 %v9006
      %v9568 = vunpack.c.l.b16 %v9007
      %v9569 = vunpack.c.l.b16 %v9008
      %v9570 = vunpack.c.l.b16 %v9009
      %v9571 = vunpack.c.l.b16 %v9010
      %v9572 = vunpack.c.l.b16 %v9011
      %v9573 = vunpack.c.l.b16 %v9012
      %v9574 = vunpack.c.l.b16 %v9013
      %v9575 = vunpack.c.l.b16 %v9014
      %v9576 = vunpack.c.l.b16 %v9015
      %v9577 = vunpack.c.l.b16 %v9016
      %v9578 = vunpack.c.l.b16 %v9017
      %v9579 = vunpack.c.l.b16 %v9018
      %v9580 = vunpack.c.l.b16 %v9019
      %v9581 = vunpack.c.l.b16 %v9020
      %v9582 = vunpack.c.l.b16 %v9021
      %v9583 = vunpack.c.l.b16 %v9022
      %v9584 = vunpack.c.l.b16 %v9023
      %v9585 = vunpack.c.l.b16 %v9024
      %v9586 = vunpack.c.l.b16 %v9025
      %v9587 = vunpack.c.l.b16 %v9026
      %v9588 = vunpack.c.l.b16 %v9027
      %v9589 = vunpack.c.l.b16 %v9028
      %v9590 = vunpack.c.l.b16 %v9029
      %v9591 = vunpack.c.l.b16 %v9030
      %v9592 = vpack.c.b16 %v9557, %v9556
      %v9593 = vpack.c.b16 %v9559, %v9558
      %v9594 = vpack.c.b16 %v9561, %v9560
      %v9595 = vpack.c.b16 %v9563, %v9562
      %v9596 = vpack.c.b16 %v9565, %v9564
      %v9597 = vpack.c.b16 %v9567, %v9566
      %v9598 = vpack.c.b16 %v9569, %v9568
      %v9599 = vpack.c.b16 %v9571, %v9570
      %v9600 = vpack.c.b16 %v9573, %v9572
      %v9601 = vpack.c.b16 %v9575, %v9574
      %v9602 = vpack.c.b16 %v9577, %v9576
      %v9603 = vpack.c.b16 %v9579, %v9578
      %v9604 = vpack.c.b16 %v9581, %v9580
      %v9605 = vpack.c.b16 %v9583, %v9582
      %v9606 = vpack.c.b16 %v9585, %v9584
      %v9607 = vpack.c.b16 %v9587, %v9586
      %v9608 = vpack.c.b16 %v9589, %v9588
      %v9609 = vpack.c.b16 %v9591, %v9590
      %9628 = vmatprep.subr.bf16.mxu0 0
      %9629 = vmatpush1.bf16.msra.mxu0 %v9599
      %9630 = vmatprep.subr.bf16.mxu0 0
      %9631 = vmatpush1.bf16.msra.mxu0 %v9598
      %9632 = vmatprep.subr.bf16.mxu0 0
      %9633 = vmatpush1.bf16.msra.mxu0 %v9597
      %9634 = vmatprep.subr.bf16.mxu0 0
      %9635 = vmatpush1.bf16.msra.mxu0 %v9596
      %9636 = vmatprep.subr.bf16.mxu0 0
      %9637 = vmatpush1.bf16.msra.mxu0 %v9595
      %9638 = vmatprep.subr.bf16.mxu0 0
      %9639 = vmatpush1.bf16.msra.mxu0 %v9594
      %9640 = vmatprep.subr.bf16.mxu0 0
      %9641 = vmatpush1.bf16.msra.mxu0 %v9593
      %9642 = vmatprep.subr.bf16.mxu0 0
      %9643 = vmatpush1.bf16.msra.mxu0 %v9592
      %9644 = vmatprep.subr.bf16.mxu0 0
      %9645 = vmatpush2.bf16.msra.mxu0 %v9607
      %9646 = vmatprep.subr.bf16.mxu0 0
      %9647 = vmatpush2.bf16.msra.mxu0 %v9606
      %9648 = vmatprep.subr.bf16.mxu0 0
      %9649 = vmatpush2.bf16.msra.mxu0 %v9605
      %9650 = vmatprep.subr.bf16.mxu0 0
      %9651 = vmatpush2.bf16.msra.mxu0 %v9604
      %9652 = vmatprep.subr.bf16.mxu0 0
      %9653 = vmatpush2.bf16.msra.mxu0 %v9603
      %9654 = vmatprep.subr.bf16.mxu0 0
      %9655 = vmatpush2.bf16.msra.mxu0 %v9602
      %9656 = vmatprep.subr.bf16.mxu0 0
      %9657 = vmatpush2.bf16.msra.mxu0 %v9601
      %9658 = vmatprep.subr.bf16.mxu0 0
      %9659 = vmatpush2.bf16.msra.mxu0 %v9600
      %9660 = vmatprep.mubr.bf16.mxu0 %v8913
      %9661 = vmatmul.mubr.bf16.gmra.mxu0 %v8786
      %v9662 = vpop.f32.mrf.mxu0
      %v9663 = vadd.f32 %v9518, %v9662
      %v9664 = vpop.f32.mrf.mxu0
      %v9665 = vpop.f32.mrf.mxu0
      %v9666 = vadd.f32 %v9518, %v9665
      %v9667 = vpop.f32.mrf.mxu0
      %9668 = vmatprep.mubr.bf16.mxu0 %v8916
      %9669 = vmatmul.mubr.bf16.gmra.mxu0 %v8789
      %v9670 = vpop.f32.mrf.mxu0
      %v9671 = vadd.f32 %v9518, %v9670
      %v9672 = vpop.f32.mrf.mxu0
      %v9673 = vpop.f32.mrf.mxu0
      %v9674 = vadd.f32 %v9518, %v9673
      %v9675 = vpop.f32.mrf.mxu0
      %9676 = vmatprep.mubr.bf16.mxu0 %v8919
      %9677 = vmatmul.mubr.bf16.gmra.mxu0 %v8792
      %v9678 = vpop.f32.mrf.mxu0
      %v9679 = vadd.f32 %v9518, %v9678
      %v9680 = vpop.f32.mrf.mxu0
      %v9681 = vpop.f32.mrf.mxu0
      %v9682 = vadd.f32 %v9518, %v9681
      %v9683 = vpop.f32.mrf.mxu0
      %9684 = vmatprep.mubr.bf16.mxu0 %v8922
      %9685 = vmatmul.mubr.bf16.gmra.mxu0 %v8795
      %v9686 = vpop.f32.mrf.mxu0
      %v9687 = vadd.f32 %v9518, %v9686
      %v9688 = vpop.f32.mrf.mxu0
      %v9689 = vpop.f32.mrf.mxu0
      %v9690 = vadd.f32 %v9518, %v9689
      %v9691 = vpop.f32.mrf.mxu0
      %9692 = vmatprep.mubr.bf16.mxu0 %v8925
      %9693 = vmatmul.mubr.bf16.gmra.mxu0 %v8798
      %v9694 = vpop.f32.mrf.mxu0
      %v9695 = vadd.f32 %v9518, %v9694
      %v9696 = vpop.f32.mrf.mxu0
      %v9697 = vpop.f32.mrf.mxu0
      %v9698 = vadd.f32 %v9518, %v9697
      %v9699 = vpop.f32.mrf.mxu0
      %9700 = vmatprep.mubr.bf16.mxu0 %v8928
      %9701 = vmatmul.mubr.bf16.gmra.mxu0 %v8801
      %v9702 = vpop.f32.mrf.mxu0
      %v9703 = vadd.f32 %v9518, %v9702
      %v9704 = vpop.f32.mrf.mxu0
      %v9705 = vpop.f32.mrf.mxu0
      %v9706 = vadd.f32 %v9518, %v9705
      %v9707 = vpop.f32.mrf.mxu0
      %9708 = vmatprep.mubr.bf16.mxu0 %v8931
      %9709 = vmatmul.mubr.bf16.gmra.mxu0 %v8804
      %v9710 = vpop.f32.mrf.mxu0
      %v9711 = vadd.f32 %v9518, %v9710
      %v9712 = vpop.f32.mrf.mxu0
      %v9713 = vpop.f32.mrf.mxu0
      %v9714 = vadd.f32 %v9518, %v9713
      %v9715 = vpop.f32.mrf.mxu0
      %9716 = vmatprep.mubr.bf16.mxu0 %v8934
      %9717 = vmatmul.mubr.bf16.gmra.mxu0 %v8807
      %v9718 = vpop.f32.mrf.mxu0
      %v9719 = vadd.f32 %v9518, %v9718
      %v9720 = vpop.f32.mrf.mxu0
      %v9721 = vpop.f32.mrf.mxu0
      %v9722 = vadd.f32 %v9518, %v9721
      %v9723 = vpop.f32.mrf.mxu0
      %9724 = vmatprep.mubr.bf16.mxu0 %v8937
      %9725 = vmatmul.mubr.bf16.gmra.mxu0 %v8810
      %v9726 = vpop.f32.mrf.mxu0
      %v9727 = vadd.f32 %v9518, %v9726
      %v9728 = vpop.f32.mrf.mxu0
      %v9729 = vpop.f32.mrf.mxu0
      %v9730 = vadd.f32 %v9518, %v9729
      %v9731 = vpop.f32.mrf.mxu0
      %9732 = vmatprep.mubr.bf16.mxu0 %v8940
      %9733 = vmatmul.mubr.bf16.gmra.mxu0 %v8813
      %v9734 = vpop.f32.mrf.mxu0
      %v9735 = vadd.f32 %v9518, %v9734
      %v9736 = vpop.f32.mrf.mxu0
      %v9737 = vpop.f32.mrf.mxu0
      %v9738 = vadd.f32 %v9518, %v9737
      %v9739 = vpop.f32.mrf.mxu0
      %9740 = vmatprep.mubr.bf16.mxu0 %v8943
      %9741 = vmatmul.mubr.bf16.gmra.mxu0 %v8816
      %v9742 = vpop.f32.mrf.mxu0
      %v9743 = vadd.f32 %v9518, %v9742
      %v9744 = vpop.f32.mrf.mxu0
      %v9745 = vpop.f32.mrf.mxu0
      %v9746 = vadd.f32 %v9518, %v9745
      %v9747 = vpop.f32.mrf.mxu0
      %9748 = vmatprep.mubr.bf16.mxu0 %v8946
      %9749 = vmatmul.mubr.bf16.gmra.mxu0 %v8819
      %v9750 = vpop.f32.mrf.mxu0
      %v9751 = vadd.f32 %v9518, %v9750
      %v9752 = vpop.f32.mrf.mxu0
      %v9753 = vpop.f32.mrf.mxu0
      %v9754 = vadd.f32 %v9518, %v9753
      %v9755 = vpop.f32.mrf.mxu0
      %9756 = vmatprep.mubr.bf16.mxu0 %v8949
      %9757 = vmatmul.mubr.bf16.gmra.mxu0 %v8822
      %v9758 = vpop.f32.mrf.mxu0
      %v9759 = vadd.f32 %v9518, %v9758
      %v9760 = vpop.f32.mrf.mxu0
      %v9761 = vpop.f32.mrf.mxu0
      %v9762 = vadd.f32 %v9518, %v9761
      %v9763 = vpop.f32.mrf.mxu0
      %9764 = vmatprep.mubr.bf16.mxu0 %v8952
      %9765 = vmatmul.mubr.bf16.gmra.mxu0 %v8825
      %v9766 = vpop.f32.mrf.mxu0
      %v9767 = vadd.f32 %v9518, %v9766
      %v9768 = vpop.f32.mrf.mxu0
      %v9769 = vpop.f32.mrf.mxu0
      %v9770 = vadd.f32 %v9518, %v9769
      %v9771 = vpop.f32.mrf.mxu0
      %9772 = vmatprep.mubr.bf16.mxu0 %v8955
      %9773 = vmatmul.mubr.bf16.gmra.mxu0 %v8828
      %v9774 = vpop.f32.mrf.mxu0
      %v9775 = vadd.f32 %v9518, %v9774
      %v9776 = vpop.f32.mrf.mxu0
      %v9777 = vpop.f32.mrf.mxu0
      %v9778 = vadd.f32 %v9518, %v9777
      %v9779 = vpop.f32.mrf.mxu0
      %9780 = vmatprep.mubr.bf16.mxu0 %v8957
      %9781 = vmatmul.mubr.bf16.gmra.mxu0 %v8831
      %v9782 = vpop.f32.mrf.mxu0
      %v9783 = vadd.f32 %v9518, %v9782
      %v9784 = vpop.f32.mrf.mxu0
      %v9785 = vpop.f32.mrf.mxu0
      %v9786 = vadd.f32 %v9518, %v9785
      %v9787 = vpop.f32.mrf.mxu0
      %9788 = vdwg.mxu0
      %9789 = vmatprep.subr.bf16.mxu0 0
      %9790 = vmatpush1.bf16.msra.mxu0 0
      %9791 = vmatprep.subr.bf16.mxu0 0
      %9792 = vmatpush1.bf16.msra.mxu0 0
      %9793 = vmatprep.subr.bf16.mxu0 0
      %9794 = vmatpush1.bf16.msra.mxu0 0
      %9795 = vmatprep.subr.bf16.mxu0 0
      %9796 = vmatpush1.bf16.msra.mxu0 0
      %9797 = vmatprep.subr.bf16.mxu0 0
      %9798 = vmatpush1.bf16.msra.mxu0 0
      %9799 = vmatprep.subr.bf16.mxu0 0
      %9800 = vmatpush1.bf16.msra.mxu0 0
      %9801 = vmatprep.subr.bf16.mxu0 0
      %9802 = vmatpush1.bf16.msra.mxu0 %v9609
      %9803 = vmatprep.subr.bf16.mxu0 0
      %9804 = vmatpush1.bf16.msra.mxu0 %v9608
      %9805 = vmatprep.subr.bf16.mxu0 0
      %9806 = vmatpush2.bf16.msra.mxu0 0
      %9807 = vmatprep.subr.bf16.mxu0 0
      %9808 = vmatpush2.bf16.msra.mxu0 0
      %9809 = vmatprep.subr.bf16.mxu0 0
      %9810 = vmatpush2.bf16.msra.mxu0 0
      %9811 = vmatprep.subr.bf16.mxu0 0
      %9812 = vmatpush2.bf16.msra.mxu0 0
      %9813 = vmatprep.subr.bf16.mxu0 0
      %9814 = vmatpush2.bf16.msra.mxu0 0
      %9815 = vmatprep.subr.bf16.mxu0 0
      %9816 = vmatpush2.bf16.msra.mxu0 0
      %9817 = vmatprep.subr.bf16.mxu0 0
      %9818 = vmatpush2.bf16.msra.mxu0 0
      %9819 = vmatprep.subr.bf16.mxu0 0
      %9820 = vmatpush2.bf16.msra.mxu0 0
      %9821 = vmatprep.mubr.bf16.mxu0 0
      %9822 = vmatmul.mubr.bf16.gmra.mxu0 %v9147
      %v9823 = vpop.f32.mrf.mxu0
      %v9824 = vadd.f32 %v9663, %v9823
      %v9825 = vpop.f32.mrf.mxu0
      %v9826 = vpop.f32.mrf.mxu0
      %v9827 = vadd.f32 %v9666, %v9826
      %v9828 = vpop.f32.mrf.mxu0
      %9829 = vmatprep.mubr.bf16.mxu0 0
      %9830 = vmatmul.mubr.bf16.gmra.mxu0 %v9150
      %v9831 = vpop.f32.mrf.mxu0
      %v9832 = vadd.f32 %v9671, %v9831
      %v9833 = vpop.f32.mrf.mxu0
      %v9834 = vpop.f32.mrf.mxu0
      %v9835 = vadd.f32 %v9674, %v9834
      %v9836 = vpop.f32.mrf.mxu0
      %9837 = vmatprep.mubr.bf16.mxu0 0
      %9838 = vmatmul.mubr.bf16.gmra.mxu0 %v9153
      %v9839 = vpop.f32.mrf.mxu0
      %v9840 = vadd.f32 %v9679, %v9839
      %v9841 = vpop.f32.mrf.mxu0
      %v9842 = vpop.f32.mrf.mxu0
      %v9843 = vadd.f32 %v9682, %v9842
      %v9844 = vpop.f32.mrf.mxu0
      %9845 = vmatprep.mubr.bf16.mxu0 0
      %9846 = vmatmul.mubr.bf16.gmra.mxu0 %v9156
      %v9847 = vpop.f32.mrf.mxu0
      %v9848 = vadd.f32 %v9687, %v9847
      %v9849 = vpop.f32.mrf.mxu0
      %v9850 = vpop.f32.mrf.mxu0
      %v9851 = vadd.f32 %v9690, %v9850
      %v9852 = vpop.f32.mrf.mxu0
      %9853 = vmatprep.mubr.bf16.mxu0 0
      %9854 = vmatmul.mubr.bf16.gmra.mxu0 %v9159
      %v9855 = vpop.f32.mrf.mxu0
      %v9856 = vadd.f32 %v9695, %v9855
      %v9857 = vpop.f32.mrf.mxu0
      %v9858 = vpop.f32.mrf.mxu0
      %v9859 = vadd.f32 %v9698, %v9858
      %v9860 = vpop.f32.mrf.mxu0
      %9861 = vmatprep.mubr.bf16.mxu0 0
      %9862 = vmatmul.mubr.bf16.gmra.mxu0 %v9162
      %v9863 = vpop.f32.mrf.mxu0
      %v9864 = vadd.f32 %v9703, %v9863
      %v9865 = vpop.f32.mrf.mxu0
      %v9866 = vpop.f32.mrf.mxu0
      %v9867 = vadd.f32 %v9706, %v9866
      %v9868 = vpop.f32.mrf.mxu0
      %9869 = vmatprep.mubr.bf16.mxu0 0
      %9870 = vmatmul.mubr.bf16.gmra.mxu0 %v9165
      %v9871 = vpop.f32.mrf.mxu0
      %v9872 = vadd.f32 %v9711, %v9871
      %v9873 = vpop.f32.mrf.mxu0
      %v9874 = vpop.f32.mrf.mxu0
      %v9875 = vadd.f32 %v9714, %v9874
      %v9876 = vpop.f32.mrf.mxu0
      %9877 = vmatprep.mubr.bf16.mxu0 0
      %9878 = vmatmul.mubr.bf16.gmra.mxu0 %v9168
      %v9879 = vpop.f32.mrf.mxu0
      %v9880 = vadd.f32 %v9719, %v9879
      %v9881 = vpop.f32.mrf.mxu0
      %v9882 = vpop.f32.mrf.mxu0
      %v9883 = vadd.f32 %v9722, %v9882
      %v9884 = vpop.f32.mrf.mxu0
      %9885 = vmatprep.mubr.bf16.mxu0 0
      %9886 = vmatmul.mubr.bf16.gmra.mxu0 %v9171
      %v9887 = vpop.f32.mrf.mxu0
      %v9888 = vadd.f32 %v9727, %v9887
      %v9889 = vpop.f32.mrf.mxu0
      %v9890 = vpop.f32.mrf.mxu0
      %v9891 = vadd.f32 %v9730, %v9890
      %v9892 = vpop.f32.mrf.mxu0
      %9893 = vmatprep.mubr.bf16.mxu0 0
      %9894 = vmatmul.mubr.bf16.gmra.mxu0 %v9174
      %v9895 = vpop.f32.mrf.mxu0
      %v9896 = vadd.f32 %v9735, %v9895
      %v9897 = vpop.f32.mrf.mxu0
      %v9898 = vpop.f32.mrf.mxu0
      %v9899 = vadd.f32 %v9738, %v9898
      %v9900 = vpop.f32.mrf.mxu0
      %9901 = vmatprep.mubr.bf16.mxu0 0
      %9902 = vmatmul.mubr.bf16.gmra.mxu0 %v9177
      %v9903 = vpop.f32.mrf.mxu0
      %v9904 = vadd.f32 %v9743, %v9903
      %v9905 = vpop.f32.mrf.mxu0
      %v9906 = vpop.f32.mrf.mxu0
      %v9907 = vadd.f32 %v9746, %v9906
      %v9908 = vpop.f32.mrf.mxu0
      %9909 = vmatprep.mubr.bf16.mxu0 0
      %9910 = vmatmul.mubr.bf16.gmra.mxu0 %v9180
      %v9911 = vpop.f32.mrf.mxu0
      %v9912 = vadd.f32 %v9751, %v9911
      %v9913 = vpop.f32.mrf.mxu0
      %v9914 = vpop.f32.mrf.mxu0
      %v9915 = vadd.f32 %v9754, %v9914
      %v9916 = vpop.f32.mrf.mxu0
      %9917 = vmatprep.mubr.bf16.mxu0 0
      %9918 = vmatmul.mubr.bf16.gmra.mxu0 %v9183
      %v9919 = vpop.f32.mrf.mxu0
      %v9920 = vadd.f32 %v9759, %v9919
      %v9921 = vpop.f32.mrf.mxu0
      %v9922 = vpop.f32.mrf.mxu0
      %v9923 = vadd.f32 %v9762, %v9922
      %v9924 = vpop.f32.mrf.mxu0
      %9925 = vmatprep.mubr.bf16.mxu0 0
      %9926 = vmatmul.mubr.bf16.gmra.mxu0 %v9186
      %v9927 = vpop.f32.mrf.mxu0
      %v9928 = vadd.f32 %v9767, %v9927
      %v9929 = vpop.f32.mrf.mxu0
      %v9930 = vpop.f32.mrf.mxu0
      %v9931 = vadd.f32 %v9770, %v9930
      %v9932 = vpop.f32.mrf.mxu0
      %9933 = vmatprep.mubr.bf16.mxu0 0
      %9934 = vmatmul.mubr.bf16.gmra.mxu0 %v9189
      %v9935 = vpop.f32.mrf.mxu0
      %v9936 = vadd.f32 %v9775, %v9935
      %v9937 = vpop.f32.mrf.mxu0
      %v9938 = vpop.f32.mrf.mxu0
      %v9939 = vadd.f32 %v9778, %v9938
      %v9940 = vpop.f32.mrf.mxu0
      %9941 = vmatprep.mubr.bf16.mxu0 0
      %9942 = vmatmul.mubr.bf16.gmra.mxu0 %v3481
      %v9943 = vpop.f32.mrf.mxu0
      %v9944 = vadd.f32 %v9783, %v9943
      %v9945 = vpop.f32.mrf.mxu0
      %v9946 = vpop.f32.mrf.mxu0
      %v9947 = vadd.f32 %v9786, %v9946
      %v9948 = vpop.f32.mrf.mxu0
      %9949 = vdwg.mxu0
      %v9950 = vsub.f32 %v7758, %v7953
      %v9951 = vsub.f32 %v7761, %v7953
      %v9952 = vsub.f32 %v7766, %v7953
      %v9953 = vsub.f32 %v7769, %v7953
      %v9954 = vsub.f32 %v7774, %v7953
      %v9955 = vsub.f32 %v7777, %v7953
      %v9956 = vsub.f32 %v7782, %v7953
      %v9957 = vsub.f32 %v7785, %v7953
      %v9958 = vsub.f32 %v7790, %v7953
      %v9959 = vsub.f32 %v7793, %v7953
      %v9960 = vsub.f32 %v7798, %v7953
      %v9961 = vsub.f32 %v7801, %v7953
      %v9962 = vsub.f32 %v7806, %v7953
      %v9963 = vsub.f32 %v7809, %v7953
      %v9964 = vsub.f32 %v7814, %v7953
      %v9965 = vsub.f32 %v7817, %v7953
      %v9966 = vsub.f32 %v7822, %v7953
      %v9967 = vsub.f32 %v7825, %v7953
      %v9968 = vsub.f32 %v7830, %v7953
      %v9969 = vsub.f32 %v7833, %v7953
      %v9970 = vsub.f32 %v7838, %v7953
      %v9971 = vsub.f32 %v7841, %v7953
      %v9972 = vsub.f32 %v7846, %v7953
      %v9973 = vsub.f32 %v7849, %v7953
      %v9974 = vsub.f32 %v7854, %v7953
      %v9975 = vsub.f32 %v7857, %v7953
      %v9976 = vsub.f32 %v7862, %v7953
      %v9977 = vsub.f32 %v7865, %v7953
      %v9978 = vsub.f32 %v7870, %v7953
      %v9979 = vsub.f32 %v7873, %v7953
      %v9980 = vsub.f32 %v7878, %v7953
      %v9981 = vsub.f32 %v7881, %v7953
      %v9982 = vmul.f32 %v9950, %v8060
      %v9983 = vmul.f32 %v9951, %v8060
      %v9984 = vmul.f32 %v9952, %v8060
      %v9985 = vmul.f32 %v9953, %v8060
      %v9986 = vmul.f32 %v9954, %v8060
      %v9987 = vmul.f32 %v9955, %v8060
      %v9988 = vmul.f32 %v9956, %v8060
      %v9989 = vmul.f32 %v9957, %v8060
      %v9990 = vmul.f32 %v9958, %v8060
      %v9991 = vmul.f32 %v9959, %v8060
      %v9992 = vmul.f32 %v9960, %v8060
      %v9993 = vmul.f32 %v9961, %v8060
      %v9994 = vmul.f32 %v9962, %v8060
      %v9995 = vmul.f32 %v9963, %v8060
      %v9996 = vmul.f32 %v9964, %v8060
      %v9997 = vmul.f32 %v9965, %v8060
      %v9998 = vmul.f32 %v9966, %v8060
      %v9999 = vmul.f32 %v9967, %v8060
      %v10000 = vmul.f32 %v9968, %v8060
      %v10001 = vmul.f32 %v9969, %v8060
      %v10002 = vmul.f32 %v9970, %v8060
      %v10003 = vmul.f32 %v9971, %v8060
      %v10004 = vmul.f32 %v9972, %v8060
      %v10005 = vmul.f32 %v9973, %v8060
      %v10006 = vmul.f32 %v9974, %v8060
      %v10007 = vmul.f32 %v9975, %v8060
      %v10008 = vmul.f32 %v9976, %v8060
      %v10009 = vmul.f32 %v9977, %v8060
      %v10010 = vmul.f32 %v9978, %v8060
      %v10011 = vmul.f32 %v9979, %v8060
      %v10012 = vmul.f32 %v9980, %v8060
      %v10013 = vmul.f32 %v9981, %v8060
      %v10014 = vadd.f32 %v9387, 1.0
      %v10015 = vadd.f32 %v9390, 1.0
      %v10016 = vadd.f32 %v9395, 1.0
      %v10017 = vadd.f32 %v9398, 1.0
      %v10018 = vadd.f32 %v9403, 1.0
      %v10019 = vadd.f32 %v9406, 1.0
      %v10020 = vadd.f32 %v9411, 1.0
      %v10021 = vadd.f32 %v9414, 1.0
      %v10022 = vadd.f32 %v9419, 1.0
      %v10023 = vadd.f32 %v9422, 1.0
      %v10024 = vadd.f32 %v9427, 1.0
      %v10025 = vadd.f32 %v9430, 1.0
      %v10026 = vadd.f32 %v9435, 1.0
      %v10027 = vadd.f32 %v9438, 1.0
      %v10028 = vadd.f32 %v9443, 1.0
      %v10029 = vadd.f32 %v9446, 1.0
      %v10030 = vadd.f32 %v9451, 1.0
      %v10031 = vadd.f32 %v9454, 1.0
      %v10032 = vadd.f32 %v9459, 1.0
      %v10033 = vadd.f32 %v9462, 1.0
      %v10034 = vadd.f32 %v9467, 1.0
      %v10035 = vadd.f32 %v9470, 1.0
      %v10036 = vadd.f32 %v9475, 1.0
      %v10037 = vadd.f32 %v9478, 1.0
      %v10038 = vadd.f32 %v9483, 1.0
      %v10039 = vadd.f32 %v9486, 1.0
      %v10040 = vadd.f32 %v9491, 1.0
      %v10041 = vadd.f32 %v9494, 1.0
      %v10042 = vadd.f32 %v9499, 1.0
      %v10043 = vadd.f32 %v9502, 1.0
      %v10044 = vadd.f32 %v9507, 1.0
      %v10045 = vadd.f32 %v9510, 1.0
      %v10046 = vmul.f32 %v9982, %v10014
      %v10047 = vmul.f32 %v9983, %v10015
      %v10048 = vmul.f32 %v9984, %v10016
      %v10049 = vmul.f32 %v9985, %v10017
      %v10050 = vmul.f32 %v9986, %v10018
      %v10051 = vmul.f32 %v9987, %v10019
      %v10052 = vmul.f32 %v9988, %v10020
      %v10053 = vmul.f32 %v9989, %v10021
      %v10054 = vmul.f32 %v9990, %v10022
      %v10055 = vmul.f32 %v9991, %v10023
      %v10056 = vmul.f32 %v9992, %v10024
      %v10057 = vmul.f32 %v9993, %v10025
      %v10058 = vmul.f32 %v9994, %v10026
      %v10059 = vmul.f32 %v9995, %v10027
      %v10060 = vmul.f32 %v9996, %v10028
      %v10061 = vmul.f32 %v9997, %v10029
      %v10062 = vmul.f32 %v9998, %v10030
      %v10063 = vmul.f32 %v9999, %v10031
      %v10064 = vmul.f32 %v10000, %v10032
      %v10065 = vmul.f32 %v10001, %v10033
      %v10066 = vmul.f32 %v10002, %v10034
      %v10067 = vmul.f32 %v10003, %v10035
      %v10068 = vmul.f32 %v10004, %v10036
      %v10069 = vmul.f32 %v10005, %v10037
      %v10070 = vmul.f32 %v10006, %v10038
      %v10071 = vmul.f32 %v10007, %v10039
      %v10072 = vmul.f32 %v10008, %v10040
      %v10073 = vmul.f32 %v10009, %v10041
      %v10074 = vmul.f32 %v10010, %v10042
      %v10075 = vmul.f32 %v10011, %v10043
      %v10076 = vmul.f32 %v10012, %v10044
      %v10077 = vmul.f32 %v10013, %v10045
      %v10078 = vadd.f32 %v10046, %v9824
      %v10079 = vadd.f32 %v10047, %v9827
      %v10080 = vadd.f32 %v10048, %v9832
      %v10081 = vadd.f32 %v10049, %v9835
      %v10082 = vadd.f32 %v10050, %v9840
      %v10083 = vadd.f32 %v10051, %v9843
      %v10084 = vadd.f32 %v10052, %v9848
      %v10085 = vadd.f32 %v10053, %v9851
      %v10086 = vadd.f32 %v10054, %v9856
      %v10087 = vadd.f32 %v10055, %v9859
      %v10088 = vadd.f32 %v10056, %v9864
      %v10089 = vadd.f32 %v10057, %v9867
      %v10090 = vadd.f32 %v10058, %v9872
      %v10091 = vadd.f32 %v10059, %v9875
      %v10092 = vadd.f32 %v10060, %v9880
      %v10093 = vadd.f32 %v10061, %v9883
      %v10094 = vadd.f32 %v10062, %v9888
      %v10095 = vadd.f32 %v10063, %v9891
      %v10096 = vadd.f32 %v10064, %v9896
      %v10097 = vadd.f32 %v10065, %v9899
      %v10098 = vadd.f32 %v10066, %v9904
      %v10099 = vadd.f32 %v10067, %v9907
      %v10100 = vadd.f32 %v10068, %v9912
      %v10101 = vadd.f32 %v10069, %v9915
      %v10102 = vadd.f32 %v10070, %v9920
      %v10103 = vadd.f32 %v10071, %v9923
      %v10104 = vadd.f32 %v10072, %v9928
      %v10105 = vadd.f32 %v10073, %v9931
      %v10106 = vadd.f32 %v10074, %v9936
      %v10107 = vadd.f32 %v10075, %v9939
      %v10108 = vadd.f32 %v10076, %v9944
      %v10109 = vadd.f32 %v10077, %v9947
      %vm10110 = vcmp.ge.f32.partialorder %v10078, 0.0
      %vm10111 = vcmp.ge.f32.partialorder %v10079, 0.0
      %vm10112 = vcmp.ge.f32.partialorder %v10080, 0.0
      %vm10113 = vcmp.ge.f32.partialorder %v10081, 0.0
      %vm10114 = vcmp.ge.f32.partialorder %v10082, 0.0
      %vm10115 = vcmp.ge.f32.partialorder %v10083, 0.0
      %vm10116 = vcmp.ge.f32.partialorder %v10084, 0.0
      %vm10117 = vcmp.ge.f32.partialorder %v10085, 0.0
      %vm10118 = vcmp.ge.f32.partialorder %v10086, 0.0
      %vm10119 = vcmp.ge.f32.partialorder %v10087, 0.0
      %vm10120 = vcmp.ge.f32.partialorder %v10088, 0.0
      %vm10121 = vcmp.ge.f32.partialorder %v10089, 0.0
      %vm10122 = vcmp.ge.f32.partialorder %v10090, 0.0
      %vm10123 = vcmp.ge.f32.partialorder %v10091, 0.0
      %vm10124 = vcmp.ge.f32.partialorder %v10092, 0.0
      %vm10125 = vcmp.ge.f32.partialorder %v10093, 0.0
      %vm10126 = vcmp.ge.f32.partialorder %v10094, 0.0
      %vm10127 = vcmp.ge.f32.partialorder %v10095, 0.0
      %vm10128 = vcmp.ge.f32.partialorder %v10096, 0.0
      %vm10129 = vcmp.ge.f32.partialorder %v10097, 0.0
      %vm10130 = vcmp.ge.f32.partialorder %v10098, 0.0
      %vm10131 = vcmp.ge.f32.partialorder %v10099, 0.0
      %vm10132 = vcmp.ge.f32.partialorder %v10100, 0.0
      %vm10133 = vcmp.ge.f32.partialorder %v10101, 0.0
      %vm10134 = vcmp.ge.f32.partialorder %v10102, 0.0
      %vm10135 = vcmp.ge.f32.partialorder %v10103, 0.0
      %vm10136 = vcmp.ge.f32.partialorder %v10104, 0.0
      %vm10137 = vcmp.ge.f32.partialorder %v10105, 0.0
      %vm10138 = vcmp.ge.f32.partialorder %v10106, 0.0
      %vm10139 = vcmp.ge.f32.partialorder %v10107, 0.0
      %vm10140 = vcmp.ge.f32.partialorder %v10108, 0.0
      %vm10141 = vcmp.ge.f32.partialorder %v10109, 0.0
      %v10142 = vmul.f32 %v10078, 0.2
      %v10143 = vmul.f32 %v10079, 0.2
      %v10144 = vmul.f32 %v10080, 0.2
      %v10145 = vmul.f32 %v10081, 0.2
      %v10146 = vmul.f32 %v10082, 0.2
      %v10147 = vmul.f32 %v10083, 0.2
      %v10148 = vmul.f32 %v10084, 0.2
      %v10149 = vmul.f32 %v10085, 0.2
      %v10150 = vmul.f32 %v10086, 0.2
      %v10151 = vmul.f32 %v10087, 0.2
      %v10152 = vmul.f32 %v10088, 0.2
      %v10153 = vmul.f32 %v10089, 0.2
      %v10154 = vmul.f32 %v10090, 0.2
      %v10155 = vmul.f32 %v10091, 0.2
      %v10156 = vmul.f32 %v10092, 0.2
      %v10157 = vmul.f32 %v10093, 0.2
      %v10158 = vmul.f32 %v10094, 0.2
      %v10159 = vmul.f32 %v10095, 0.2
      %v10160 = vmul.f32 %v10096, 0.2
      %v10161 = vmul.f32 %v10097, 0.2
      %v10162 = vmul.f32 %v10098, 0.2
      %v10163 = vmul.f32 %v10099, 0.2
      %v10164 = vmul.f32 %v10100, 0.2
      %v10165 = vmul.f32 %v10101, 0.2
      %v10166 = vmul.f32 %v10102, 0.2
      %v10167 = vmul.f32 %v10103, 0.2
      %v10168 = vmul.f32 %v10104, 0.2
      %v10169 = vmul.f32 %v10105, 0.2
      %v10170 = vmul.f32 %v10106, 0.2
      %v10171 = vmul.f32 %v10107, 0.2
      %v10172 = vmul.f32 %v10108, 0.2
      %v10173 = vmul.f32 %v10109, 0.2
      %v10174 = vsel %vm10110, %v10078, %v10142
      %v10175 = vsel %vm10111, %v10079, %v10143
      %v10176 = vsel %vm10112, %v10080, %v10144
      %v10177 = vsel %vm10113, %v10081, %v10145
      %v10178 = vsel %vm10114, %v10082, %v10146
      %v10179 = vsel %vm10115, %v10083, %v10147
      %v10180 = vsel %vm10116, %v10084, %v10148
      %v10181 = vsel %vm10117, %v10085, %v10149
      %v10182 = vsel %vm10118, %v10086, %v10150
      %v10183 = vsel %vm10119, %v10087, %v10151
      %v10184 = vsel %vm10120, %v10088, %v10152
      %v10185 = vsel %vm10121, %v10089, %v10153
      %v10186 = vsel %vm10122, %v10090, %v10154
      %v10187 = vsel %vm10123, %v10091, %v10155
      %v10188 = vsel %vm10124, %v10092, %v10156
      %v10189 = vsel %vm10125, %v10093, %v10157
      %v10190 = vsel %vm10126, %v10094, %v10158
      %v10191 = vsel %vm10127, %v10095, %v10159
      %v10192 = vsel %vm10128, %v10096, %v10160
      %v10193 = vsel %vm10129, %v10097, %v10161
      %v10194 = vsel %vm10130, %v10098, %v10162
      %v10195 = vsel %vm10131, %v10099, %v10163
      %v10196 = vsel %vm10132, %v10100, %v10164
      %v10197 = vsel %vm10133, %v10101, %v10165
      %v10198 = vsel %vm10134, %v10102, %v10166
      %v10199 = vsel %vm10135, %v10103, %v10167
      %v10200 = vsel %vm10136, %v10104, %v10168
      %v10201 = vsel %vm10137, %v10105, %v10169
      %v10202 = vsel %vm10138, %v10106, %v10170
      %v10203 = vsel %vm10139, %v10107, %v10171
      %v10204 = vsel %vm10140, %v10108, %v10172
      %v10205 = vsel %vm10141, %v10109, %v10173
      %v10206 = vpack.c.bf16 %v10175, %v10174
      %v10207 = vpack.c.bf16 %v10177, %v10176
      %v10208 = vpack.c.bf16 %v10179, %v10178
      %v10209 = vpack.c.bf16 %v10181, %v10180
      %v10210 = vpack.c.bf16 %v10183, %v10182
      %v10211 = vpack.c.bf16 %v10185, %v10184
      %v10212 = vpack.c.bf16 %v10187, %v10186
      %v10213 = vpack.c.bf16 %v10189, %v10188
      %v10214 = vpack.c.bf16 %v10191, %v10190
      %v10215 = vpack.c.bf16 %v10193, %v10192
      %v10216 = vpack.c.bf16 %v10195, %v10194
      %v10217 = vpack.c.bf16 %v10197, %v10196
      %v10218 = vpack.c.bf16 %v10199, %v10198
      %v10219 = vpack.c.bf16 %v10201, %v10200
      %v10220 = vpack.c.bf16 %v10203, %v10202
      %v10221 = vpack.c.bf16 %v10205, %v10204
      %v10223 = vshrl.u32 %v10206, 16
      %v10225 = vrot.slane %v10223, 7
      %v10226 = vshll.u32 %v10206, 16
      %v10228 = vor.u32 %v10225, %v10226
      %v10230 = vshrl.u32 %v10207, 16
      %v10232 = vrot.slane %v10230, 7
      %v10233 = vshll.u32 %v10207, 16
      %v10235 = vor.u32 %v10232, %v10233
      %v10237 = vshrl.u32 %v10208, 16
      %v10239 = vrot.slane %v10237, 7
      %v10240 = vshll.u32 %v10208, 16
      %v10242 = vor.u32 %v10239, %v10240
      %v10244 = vshrl.u32 %v10209, 16
      %v10246 = vrot.slane %v10244, 7
      %v10247 = vshll.u32 %v10209, 16
      %v10249 = vor.u32 %v10246, %v10247
      %v10251 = vshrl.u32 %v10210, 16
      %v10253 = vrot.slane %v10251, 7
      %v10254 = vshll.u32 %v10210, 16
      %v10256 = vor.u32 %v10253, %v10254
      %v10258 = vshrl.u32 %v10211, 16
      %v10260 = vrot.slane %v10258, 7
      %v10261 = vshll.u32 %v10211, 16
      %v10263 = vor.u32 %v10260, %v10261
      %v10265 = vshrl.u32 %v10212, 16
      %v10267 = vrot.slane %v10265, 7
      %v10268 = vshll.u32 %v10212, 16
      %v10270 = vor.u32 %v10267, %v10268
      %v10272 = vshrl.u32 %v10213, 16
      %v10274 = vrot.slane %v10272, 7
      %v10275 = vshll.u32 %v10213, 16
      %v10277 = vor.u32 %v10274, %v10275
      %v10279 = vshrl.u32 %v10214, 16
      %v10281 = vrot.slane %v10279, 7
      %v10282 = vshll.u32 %v10214, 16
      %v10284 = vor.u32 %v10281, %v10282
      %v10286 = vshrl.u32 %v10215, 16
      %v10288 = vrot.slane %v10286, 7
      %v10289 = vshll.u32 %v10215, 16
      %v10291 = vor.u32 %v10288, %v10289
      %v10293 = vshrl.u32 %v10216, 16
      %v10295 = vrot.slane %v10293, 7
      %v10296 = vshll.u32 %v10216, 16
      %v10298 = vor.u32 %v10295, %v10296
      %v10300 = vshrl.u32 %v10217, 16
      %v10302 = vrot.slane %v10300, 7
      %v10303 = vshll.u32 %v10217, 16
      %v10305 = vor.u32 %v10302, %v10303
      %v10307 = vshrl.u32 %v10218, 16
      %v10309 = vrot.slane %v10307, 7
      %v10310 = vshll.u32 %v10218, 16
      %v10312 = vor.u32 %v10309, %v10310
      %v10314 = vshrl.u32 %v10219, 16
      %v10316 = vrot.slane %v10314, 7
      %v10317 = vshll.u32 %v10219, 16
      %v10319 = vor.u32 %v10316, %v10317
      %v10321 = vshrl.u32 %v10220, 16
      %v10323 = vrot.slane %v10321, 7
      %v10324 = vshll.u32 %v10220, 16
      %v10326 = vor.u32 %v10323, %v10324
      %v10328 = vshrl.u32 %v10221, 16
      %v10330 = vrot.slane %v10328, 7
      %v10331 = vshll.u32 %v10221, 16
      %v10333 = vor.u32 %v10330, %v10331
      %v10366 = vsel %vm945, 0, %v10228
      %v10367 = vsel %vm945, 0, %v10235
      %v10368 = vsel %vm945, 0, %v10242
      %v10369 = vsel %vm945, 0, %v10249
      %v10370 = vsel %vm945, 0, %v10256
      %v10371 = vsel %vm945, 0, %v10263
      %v10372 = vsel %vm945, 0, %v10270
      %v10373 = vsel %vm945, 0, %v10277
      %v10374 = vsel %vm945, 0, %v10284
      %v10375 = vsel %vm945, 0, %v10291
      %v10376 = vsel %vm945, 0, %v10298
      %v10377 = vsel %vm945, 0, %v10305
      %v10378 = vsel %vm945, 0, %v10312
      %v10379 = vsel %vm945, 0, %v10319
      %v10380 = vsel %vm945, 0, %v10326
      %v10381 = vsel %vm945, 0, %v10333
      %v10382 = vsel %vm945, %v10225, 0
      %v10383 = vsel %vm945, %v10232, 0
      %v10384 = vsel %vm945, %v10239, 0
      %v10385 = vsel %vm945, %v10246, 0
      %v10386 = vsel %vm945, %v10253, 0
      %v10387 = vsel %vm945, %v10260, 0
      %v10388 = vsel %vm945, %v10267, 0
      %v10389 = vsel %vm945, %v10274, 0
      %v10390 = vsel %vm945, %v10281, 0
      %v10391 = vsel %vm945, %v10288, 0
      %v10392 = vsel %vm945, %v10295, 0
      %v10393 = vsel %vm945, %v10302, 0
      %v10394 = vsel %vm945, %v10309, 0
      %v10395 = vsel %vm945, %v10316, 0
      %v10396 = vsel %vm945, %v10323, 0
      %v10397 = vsel %vm945, %v10330, 0
      %v10399 = vshrl.u32 %v10366, 16
      %v10401 = vshll.u32 %v10366, 16
      %v10403 = vrot.slane %v10401, 1
      %v10404 = vor.u32 %v10399, %v10403
      %v10406 = vshll.u32 %v10382, 16
      %v10408 = vrot.slane %v10406, 1
      %v10409 = vsel %vm980, %v10404, %v10408
      %v10411 = vshrl.u32 %v10367, 16
      %v10413 = vshll.u32 %v10367, 16
      %v10415 = vrot.slane %v10413, 1
      %v10416 = vor.u32 %v10411, %v10415
      %v10418 = vshll.u32 %v10383, 16
      %v10420 = vrot.slane %v10418, 1
      %v10421 = vsel %vm980, %v10416, %v10420
      %v10423 = vshrl.u32 %v10368, 16
      %v10425 = vshll.u32 %v10368, 16
      %v10427 = vrot.slane %v10425, 1
      %v10428 = vor.u32 %v10423, %v10427
      %v10430 = vshll.u32 %v10384, 16
      %v10432 = vrot.slane %v10430, 1
      %v10433 = vsel %vm980, %v10428, %v10432
      %v10435 = vshrl.u32 %v10369, 16
      %v10437 = vshll.u32 %v10369, 16
      %v10439 = vrot.slane %v10437, 1
      %v10440 = vor.u32 %v10435, %v10439
      %v10442 = vshll.u32 %v10385, 16
      %v10444 = vrot.slane %v10442, 1
      %v10445 = vsel %vm980, %v10440, %v10444
      %v10447 = vshrl.u32 %v10370, 16
      %v10449 = vshll.u32 %v10370, 16
      %v10451 = vrot.slane %v10449, 1
      %v10452 = vor.u32 %v10447, %v10451
      %v10454 = vshll.u32 %v10386, 16
      %v10456 = vrot.slane %v10454, 1
      %v10457 = vsel %vm980, %v10452, %v10456
      %v10459 = vshrl.u32 %v10371, 16
      %v10461 = vshll.u32 %v10371, 16
      %v10463 = vrot.slane %v10461, 1
      %v10464 = vor.u32 %v10459, %v10463
      %v10466 = vshll.u32 %v10387, 16
      %v10468 = vrot.slane %v10466, 1
      %v10469 = vsel %vm980, %v10464, %v10468
      %v10471 = vshrl.u32 %v10372, 16
      %v10473 = vshll.u32 %v10372, 16
      %v10475 = vrot.slane %v10473, 1
      %v10476 = vor.u32 %v10471, %v10475
      %v10478 = vshll.u32 %v10388, 16
      %v10480 = vrot.slane %v10478, 1
      %v10481 = vsel %vm980, %v10476, %v10480
      %v10483 = vshrl.u32 %v10373, 16
      %v10485 = vshll.u32 %v10373, 16
      %v10487 = vrot.slane %v10485, 1
      %v10488 = vor.u32 %v10483, %v10487
      %v10490 = vshll.u32 %v10389, 16
      %v10492 = vrot.slane %v10490, 1
      %v10493 = vsel %vm980, %v10488, %v10492
      %v10495 = vshrl.u32 %v10374, 16
      %v10497 = vshll.u32 %v10374, 16
      %v10499 = vrot.slane %v10497, 1
      %v10500 = vor.u32 %v10495, %v10499
      %v10502 = vshll.u32 %v10390, 16
      %v10504 = vrot.slane %v10502, 1
      %v10505 = vsel %vm980, %v10500, %v10504
      %v10507 = vshrl.u32 %v10375, 16
      %v10509 = vshll.u32 %v10375, 16
      %v10511 = vrot.slane %v10509, 1
      %v10512 = vor.u32 %v10507, %v10511
      %v10514 = vshll.u32 %v10391, 16
      %v10516 = vrot.slane %v10514, 1
      %v10517 = vsel %vm980, %v10512, %v10516
      %v10519 = vshrl.u32 %v10376, 16
      %v10521 = vshll.u32 %v10376, 16
      %v10523 = vrot.slane %v10521, 1
      %v10524 = vor.u32 %v10519, %v10523
      %v10526 = vshll.u32 %v10392, 16
      %v10528 = vrot.slane %v10526, 1
      %v10529 = vsel %vm980, %v10524, %v10528
      %v10531 = vshrl.u32 %v10377, 16
      %v10533 = vshll.u32 %v10377, 16
      %v10535 = vrot.slane %v10533, 1
      %v10536 = vor.u32 %v10531, %v10535
      %v10538 = vshll.u32 %v10393, 16
      %v10540 = vrot.slane %v10538, 1
      %v10541 = vsel %vm980, %v10536, %v10540
      %v10543 = vshrl.u32 %v10378, 16
      %v10545 = vshll.u32 %v10378, 16
      %v10547 = vrot.slane %v10545, 1
      %v10548 = vor.u32 %v10543, %v10547
      %v10550 = vshll.u32 %v10394, 16
      %v10552 = vrot.slane %v10550, 1
      %v10553 = vsel %vm980, %v10548, %v10552
      %v10555 = vshrl.u32 %v10379, 16
      %v10557 = vshll.u32 %v10379, 16
      %v10559 = vrot.slane %v10557, 1
      %v10560 = vor.u32 %v10555, %v10559
      %v10562 = vshll.u32 %v10395, 16
      %v10564 = vrot.slane %v10562, 1
      %v10565 = vsel %vm980, %v10560, %v10564
      %v10567 = vshrl.u32 %v10380, 16
      %v10569 = vshll.u32 %v10380, 16
      %v10571 = vrot.slane %v10569, 1
      %v10572 = vor.u32 %v10567, %v10571
      %v10574 = vshll.u32 %v10396, 16
      %v10576 = vrot.slane %v10574, 1
      %v10577 = vsel %vm980, %v10572, %v10576
      %v10608 = vrot.slane %v10366, 1
      %v10609 = vrot.slane %v10382, 1
      %v10610 = vsel %vm1205, %v10608, %v10609
      %v10611 = vrot.slane %v10367, 1
      %v10612 = vrot.slane %v10383, 1
      %v10613 = vsel %vm1205, %v10611, %v10612
      %v10614 = vrot.slane %v10368, 1
      %v10615 = vrot.slane %v10384, 1
      %v10616 = vsel %vm1205, %v10614, %v10615
      %v10617 = vrot.slane %v10369, 1
      %v10618 = vrot.slane %v10385, 1
      %v10619 = vsel %vm1205, %v10617, %v10618
      %v10620 = vrot.slane %v10370, 1
      %v10621 = vrot.slane %v10386, 1
      %v10622 = vsel %vm1205, %v10620, %v10621
      %v10623 = vrot.slane %v10371, 1
      %v10624 = vrot.slane %v10387, 1
      %v10625 = vsel %vm1205, %v10623, %v10624
      %v10626 = vrot.slane %v10372, 1
      %v10627 = vrot.slane %v10388, 1
      %v10628 = vsel %vm1205, %v10626, %v10627
      %v10629 = vrot.slane %v10373, 1
      %v10630 = vrot.slane %v10389, 1
      %v10631 = vsel %vm1205, %v10629, %v10630
      %v10632 = vrot.slane %v10374, 1
      %v10633 = vrot.slane %v10390, 1
      %v10634 = vsel %vm1205, %v10632, %v10633
      %v10635 = vrot.slane %v10375, 1
      %v10636 = vrot.slane %v10391, 1
      %v10637 = vsel %vm1205, %v10635, %v10636
      %v10638 = vrot.slane %v10376, 1
      %v10639 = vrot.slane %v10392, 1
      %v10640 = vsel %vm1205, %v10638, %v10639
      %v10641 = vrot.slane %v10377, 1
      %v10642 = vrot.slane %v10393, 1
      %v10643 = vsel %vm1205, %v10641, %v10642
      %v10644 = vrot.slane %v10378, 1
      %v10645 = vrot.slane %v10394, 1
      %v10646 = vsel %vm1205, %v10644, %v10645
      %v10647 = vrot.slane %v10379, 1
      %v10648 = vrot.slane %v10395, 1
      %v10649 = vsel %vm1205, %v10647, %v10648
      %v10650 = vrot.slane %v10380, 1
      %v10651 = vrot.slane %v10396, 1
      %v10652 = vsel %vm1205, %v10650, %v10651
      %v10654 = vshrl.u32 %v10381, 16
      %v10656 = vshll.u32 %v10381, 16
      %v10658 = vrot.slane %v10656, 1
      %v10659 = vor.u32 %v10654, %v10658
      %v10661 = vshll.u32 %v10397, 16
      %v10663 = vrot.slane %v10661, 1
      %v10664 = vsel %vm980, %v10659, %v10663
      %v10667 = vrot.slane %v10381, 1
      %v10668 = vrot.slane %v10397, 1
      %v10669 = vsel %vm1205, %v10667, %v10668
      %10670 = vrot.lane.b32.xlu0 %v10409, 4
      %v10671 = vpop.permute.xlu0 %10670
      %10672 = vrot.lane.b32.xlu0 %v10421, 4
      %v10673 = vpop.permute.xlu0 %10672
      %10674 = vrot.lane.b32.xlu0 %v10433, 4
      %v10675 = vpop.permute.xlu0 %10674
      %10676 = vrot.lane.b32.xlu0 %v10445, 4
      %v10677 = vpop.permute.xlu0 %10676
      %10678 = vrot.lane.b32.xlu0 %v10457, 4
      %v10679 = vpop.permute.xlu0 %10678
      %10680 = vrot.lane.b32.xlu0 %v10469, 4
      %v10681 = vpop.permute.xlu0 %10680
      %10682 = vrot.lane.b32.xlu0 %v10481, 4
      %v10683 = vpop.permute.xlu0 %10682
      %10684 = vrot.lane.b32.xlu0 %v10493, 4
      %v10685 = vpop.permute.xlu0 %10684
      %10686 = vrot.lane.b32.xlu0 %v10505, 4
      %v10687 = vpop.permute.xlu0 %10686
      %10688 = vrot.lane.b32.xlu0 %v10517, 4
      %v10689 = vpop.permute.xlu0 %10688
      %10690 = vrot.lane.b32.xlu0 %v10529, 4
      %v10691 = vpop.permute.xlu0 %10690
      %10692 = vrot.lane.b32.xlu0 %v10541, 4
      %v10693 = vpop.permute.xlu0 %10692
      %10694 = vrot.lane.b32.xlu0 %v10553, 4
      %v10695 = vpop.permute.xlu0 %10694
      %10696 = vrot.lane.b32.xlu0 %v10565, 4
      %v10697 = vpop.permute.xlu0 %10696
      %10698 = vrot.lane.b32.xlu0 %v10577, 4
      %v10699 = vpop.permute.xlu0 %10698
      %10700 = vrot.lane.b32.xlu0 %v10610, 8
      %v10701 = vpop.permute.xlu0 %10700
      %10702 = vrot.lane.b32.xlu0 %v10613, 8
      %v10703 = vpop.permute.xlu0 %10702
      %10704 = vrot.lane.b32.xlu0 %v10616, 8
      %v10705 = vpop.permute.xlu0 %10704
      %10706 = vrot.lane.b32.xlu0 %v10619, 8
      %v10707 = vpop.permute.xlu0 %10706
      %10708 = vrot.lane.b32.xlu0 %v10622, 8
      %v10709 = vpop.permute.xlu0 %10708
      %10710 = vrot.lane.b32.xlu0 %v10625, 8
      %v10711 = vpop.permute.xlu0 %10710
      %10712 = vrot.lane.b32.xlu0 %v10628, 8
      %v10713 = vpop.permute.xlu0 %10712
      %10714 = vrot.lane.b32.xlu0 %v10631, 8
      %v10715 = vpop.permute.xlu0 %10714
      %10716 = vrot.lane.b32.xlu0 %v10634, 8
      %v10717 = vpop.permute.xlu0 %10716
      %10718 = vrot.lane.b32.xlu0 %v10637, 8
      %v10719 = vpop.permute.xlu0 %10718
      %10720 = vrot.lane.b32.xlu0 %v10640, 8
      %v10721 = vpop.permute.xlu0 %10720
      %10722 = vrot.lane.b32.xlu0 %v10643, 8
      %v10723 = vpop.permute.xlu0 %10722
      %10724 = vrot.lane.b32.xlu0 %v10646, 8
      %v10725 = vpop.permute.xlu0 %10724
      %10726 = vrot.lane.b32.xlu0 %v10649, 8
      %v10727 = vpop.permute.xlu0 %10726
      %10728 = vrot.lane.b32.xlu0 %v10652, 8
      %v10729 = vpop.permute.xlu0 %10728
      %10730 = vrot.lane.b32.xlu0 %v10366, 12
      %v10731 = vpop.permute.xlu0 %10730
      %10732 = vrot.lane.b32.xlu0 %v10367, 12
      %v10733 = vpop.permute.xlu0 %10732
      %10734 = vrot.lane.b32.xlu0 %v10368, 12
      %v10735 = vpop.permute.xlu0 %10734
      %10736 = vrot.lane.b32.xlu0 %v10369, 12
      %v10737 = vpop.permute.xlu0 %10736
      %10738 = vrot.lane.b32.xlu0 %v10370, 12
      %v10739 = vpop.permute.xlu0 %10738
      %10740 = vrot.lane.b32.xlu0 %v10371, 12
      %v10741 = vpop.permute.xlu0 %10740
      %10742 = vrot.lane.b32.xlu0 %v10372, 12
      %v10743 = vpop.permute.xlu0 %10742
      %10744 = vrot.lane.b32.xlu0 %v10373, 12
      %v10745 = vpop.permute.xlu0 %10744
      %10746 = vrot.lane.b32.xlu0 %v10374, 12
      %v10747 = vpop.permute.xlu0 %10746
      %10748 = vrot.lane.b32.xlu0 %v10375, 12
      %v10749 = vpop.permute.xlu0 %10748
      %10750 = vrot.lane.b32.xlu0 %v10376, 12
      %v10751 = vpop.permute.xlu0 %10750
      %10752 = vrot.lane.b32.xlu0 %v10377, 12
      %v10753 = vpop.permute.xlu0 %10752
      %10754 = vrot.lane.b32.xlu0 %v10378, 12
      %v10755 = vpop.permute.xlu0 %10754
      %10756 = vrot.lane.b32.xlu0 %v10379, 12
      %v10757 = vpop.permute.xlu0 %10756
      %10758 = vrot.lane.b32.xlu0 %v10380, 12
      %v10759 = vpop.permute.xlu0 %10758
      %10760 = vrot.lane.b32.xlu0 %v10381, 12
      %v10761 = vpop.permute.xlu0 %10760
      %10762 = vrot.lane.b32.xlu0 %v10409, 16
      %v10763 = vpop.permute.xlu0 %10762
      %10764 = vrot.lane.b32.xlu0 %v10421, 16
      %v10765 = vpop.permute.xlu0 %10764
      %10766 = vrot.lane.b32.xlu0 %v10433, 16
      %v10767 = vpop.permute.xlu0 %10766
      %10768 = vrot.lane.b32.xlu0 %v10445, 16
      %v10769 = vpop.permute.xlu0 %10768
      %10770 = vrot.lane.b32.xlu0 %v10457, 16
      %v10771 = vpop.permute.xlu0 %10770
      %10772 = vrot.lane.b32.xlu0 %v10469, 16
      %v10773 = vpop.permute.xlu0 %10772
      %10774 = vrot.lane.b32.xlu0 %v10481, 16
      %v10775 = vpop.permute.xlu0 %10774
      %10776 = vrot.lane.b32.xlu0 %v10493, 16
      %v10777 = vpop.permute.xlu0 %10776
      %10778 = vrot.lane.b32.xlu0 %v10505, 16
      %v10779 = vpop.permute.xlu0 %10778
      %10780 = vrot.lane.b32.xlu0 %v10517, 16
      %v10781 = vpop.permute.xlu0 %10780
      %10782 = vrot.lane.b32.xlu0 %v10529, 16
      %v10783 = vpop.permute.xlu0 %10782
      %10784 = vrot.lane.b32.xlu0 %v10541, 16
      %v10785 = vpop.permute.xlu0 %10784
      %10786 = vrot.lane.b32.xlu0 %v10553, 16
      %v10787 = vpop.permute.xlu0 %10786
      %10788 = vrot.lane.b32.xlu0 %v10565, 16
      %v10789 = vpop.permute.xlu0 %10788
      %10790 = vrot.lane.b32.xlu0 %v10577, 16
      %v10791 = vpop.permute.xlu0 %10790
      %10792 = vrot.lane.b32.xlu0 %v10664, 16
      %v10793 = vpop.permute.xlu0 %10792
      %10794 = vrot.lane.b32.xlu0 %v10610, 20
      %v10795 = vpop.permute.xlu0 %10794
      %10796 = vrot.lane.b32.xlu0 %v10613, 20
      %v10797 = vpop.permute.xlu0 %10796
      %10798 = vrot.lane.b32.xlu0 %v10616, 20
      %v10799 = vpop.permute.xlu0 %10798
      %10800 = vrot.lane.b32.xlu0 %v10619, 20
      %v10801 = vpop.permute.xlu0 %10800
      %10802 = vrot.lane.b32.xlu0 %v10622, 20
      %v10803 = vpop.permute.xlu0 %10802
      %10804 = vrot.lane.b32.xlu0 %v10625, 20
      %v10805 = vpop.permute.xlu0 %10804
      %10806 = vrot.lane.b32.xlu0 %v10628, 20
      %v10807 = vpop.permute.xlu0 %10806
      %10808 = vrot.lane.b32.xlu0 %v10631, 20
      %v10809 = vpop.permute.xlu0 %10808
      %10810 = vrot.lane.b32.xlu0 %v10634, 20
      %v10811 = vpop.permute.xlu0 %10810
      %10812 = vrot.lane.b32.xlu0 %v10637, 20
      %v10813 = vpop.permute.xlu0 %10812
      %10814 = vrot.lane.b32.xlu0 %v10640, 20
      %v10815 = vpop.permute.xlu0 %10814
      %10816 = vrot.lane.b32.xlu0 %v10643, 20
      %v10817 = vpop.permute.xlu0 %10816
      %10818 = vrot.lane.b32.xlu0 %v10646, 20
      %v10819 = vpop.permute.xlu0 %10818
      %10820 = vrot.lane.b32.xlu0 %v10649, 20
      %v10821 = vpop.permute.xlu0 %10820
      %10822 = vrot.lane.b32.xlu0 %v10652, 20
      %v10823 = vpop.permute.xlu0 %10822
      %10824 = vrot.lane.b32.xlu0 %v10669, 20
      %v10825 = vpop.permute.xlu0 %10824
      %10826 = vrot.lane.b32.xlu0 %v10367, 24
      %v10827 = vpop.permute.xlu0 %10826
      %10828 = vrot.lane.b32.xlu0 %v10368, 24
      %v10829 = vpop.permute.xlu0 %10828
      %10830 = vrot.lane.b32.xlu0 %v10369, 24
      %v10831 = vpop.permute.xlu0 %10830
      %10832 = vrot.lane.b32.xlu0 %v10370, 24
      %v10833 = vpop.permute.xlu0 %10832
      %10834 = vrot.lane.b32.xlu0 %v10371, 24
      %v10835 = vpop.permute.xlu0 %10834
      %10836 = vrot.lane.b32.xlu0 %v10372, 24
      %v10837 = vpop.permute.xlu0 %10836
      %10838 = vrot.lane.b32.xlu0 %v10373, 24
      %v10839 = vpop.permute.xlu0 %10838
      %10840 = vrot.lane.b32.xlu0 %v10374, 24
      %v10841 = vpop.permute.xlu0 %10840
      %10842 = vrot.lane.b32.xlu0 %v10375, 24
      %v10843 = vpop.permute.xlu0 %10842
      %10844 = vrot.lane.b32.xlu0 %v10376, 24
      %v10845 = vpop.permute.xlu0 %10844
      %10846 = vrot.lane.b32.xlu0 %v10377, 24
      %v10847 = vpop.permute.xlu0 %10846
      %10848 = vrot.lane.b32.xlu0 %v10378, 24
      %v10849 = vpop.permute.xlu0 %10848
      %10850 = vrot.lane.b32.xlu0 %v10379, 24
      %v10851 = vpop.permute.xlu0 %10850
      %10852 = vrot.lane.b32.xlu0 %v10380, 24
      %v10853 = vpop.permute.xlu0 %10852
      %10854 = vrot.lane.b32.xlu0 %v10381, 24
      %v10855 = vpop.permute.xlu0 %10854
      %10856 = vrot.lane.b32.xlu0 %v10421, 28
      %v10857 = vpop.permute.xlu0 %10856
      %10858 = vrot.lane.b32.xlu0 %v10433, 28
      %v10859 = vpop.permute.xlu0 %10858
      %10860 = vrot.lane.b32.xlu0 %v10445, 28
      %v10861 = vpop.permute.xlu0 %10860
      %10862 = vrot.lane.b32.xlu0 %v10457, 28
      %v10863 = vpop.permute.xlu0 %10862
      %10864 = vrot.lane.b32.xlu0 %v10469, 28
      %v10865 = vpop.permute.xlu0 %10864
      %10866 = vrot.lane.b32.xlu0 %v10481, 28
      %v10867 = vpop.permute.xlu0 %10866
      %10868 = vrot.lane.b32.xlu0 %v10493, 28
      %v10869 = vpop.permute.xlu0 %10868
      %10870 = vrot.lane.b32.xlu0 %v10505, 28
      %v10871 = vpop.permute.xlu0 %10870
      %10872 = vrot.lane.b32.xlu0 %v10517, 28
      %v10873 = vpop.permute.xlu0 %10872
      %10874 = vrot.lane.b32.xlu0 %v10529, 28
      %v10875 = vpop.permute.xlu0 %10874
      %10876 = vrot.lane.b32.xlu0 %v10541, 28
      %v10877 = vpop.permute.xlu0 %10876
      %10878 = vrot.lane.b32.xlu0 %v10553, 28
      %v10879 = vpop.permute.xlu0 %10878
      %10880 = vrot.lane.b32.xlu0 %v10565, 28
      %v10881 = vpop.permute.xlu0 %10880
      %10882 = vrot.lane.b32.xlu0 %v10577, 28
      %v10883 = vpop.permute.xlu0 %10882
      %10884 = vrot.lane.b32.xlu0 %v10664, 28
      %v10885 = vpop.permute.xlu0 %10884
      %10886 = vrot.lane.b32.xlu0 %v10613, 32
      %v10887 = vpop.permute.xlu0 %10886
      %10888 = vrot.lane.b32.xlu0 %v10616, 32
      %v10889 = vpop.permute.xlu0 %10888
      %10890 = vrot.lane.b32.xlu0 %v10619, 32
      %v10891 = vpop.permute.xlu0 %10890
      %10892 = vrot.lane.b32.xlu0 %v10622, 32
      %v10893 = vpop.permute.xlu0 %10892
      %10894 = vrot.lane.b32.xlu0 %v10625, 32
      %v10895 = vpop.permute.xlu0 %10894
      %10896 = vrot.lane.b32.xlu0 %v10628, 32
      %v10897 = vpop.permute.xlu0 %10896
      %10898 = vrot.lane.b32.xlu0 %v10631, 32
      %v10899 = vpop.permute.xlu0 %10898
      %10900 = vrot.lane.b32.xlu0 %v10634, 32
      %v10901 = vpop.permute.xlu0 %10900
      %10902 = vrot.lane.b32.xlu0 %v10637, 32
      %v10903 = vpop.permute.xlu0 %10902
      %10904 = vrot.lane.b32.xlu0 %v10640, 32
      %v10905 = vpop.permute.xlu0 %10904
      %10906 = vrot.lane.b32.xlu0 %v10643, 32
      %v10907 = vpop.permute.xlu0 %10906
      %10908 = vrot.lane.b32.xlu0 %v10646, 32
      %v10909 = vpop.permute.xlu0 %10908
      %10910 = vrot.lane.b32.xlu0 %v10649, 32
      %v10911 = vpop.permute.xlu0 %10910
      %10912 = vrot.lane.b32.xlu0 %v10652, 32
      %v10913 = vpop.permute.xlu0 %10912
      %10914 = vrot.lane.b32.xlu0 %v10669, 32
      %v10915 = vpop.permute.xlu0 %10914
      %v10917 = vsel %vm2144, %v10366, %v10671
      %v10919 = vsel %vm2144, %v10367, %v10673
      %v10921 = vsel %vm2144, %v10368, %v10675
      %v10923 = vsel %vm2144, %v10369, %v10677
      %v10925 = vsel %vm2144, %v10370, %v10679
      %v10927 = vsel %vm2144, %v10371, %v10681
      %v10929 = vsel %vm2144, %v10372, %v10683
      %v10931 = vsel %vm2144, %v10373, %v10685
      %v10933 = vsel %vm2144, %v10374, %v10687
      %v10935 = vsel %vm2144, %v10375, %v10689
      %v10937 = vsel %vm2144, %v10376, %v10691
      %v10939 = vsel %vm2144, %v10377, %v10693
      %v10941 = vsel %vm2144, %v10378, %v10695
      %v10943 = vsel %vm2144, %v10379, %v10697
      %v10945 = vsel %vm2144, %v10380, %v10699
      %v10947 = vsel %vm1527, %v10917, %v10701
      %v10949 = vsel %vm1527, %v10919, %v10703
      %v10951 = vsel %vm1527, %v10921, %v10705
      %v10953 = vsel %vm1527, %v10923, %v10707
      %v10955 = vsel %vm1527, %v10925, %v10709
      %v10957 = vsel %vm1527, %v10927, %v10711
      %v10959 = vsel %vm1527, %v10929, %v10713
      %v10961 = vsel %vm1527, %v10931, %v10715
      %v10963 = vsel %vm1527, %v10933, %v10717
      %v10965 = vsel %vm1527, %v10935, %v10719
      %v10967 = vsel %vm1527, %v10937, %v10721
      %v10969 = vsel %vm1527, %v10939, %v10723
      %v10971 = vsel %vm1527, %v10941, %v10725
      %v10973 = vsel %vm1527, %v10943, %v10727
      %v10975 = vsel %vm1527, %v10945, %v10729
      %v10977 = vsel %vm7465, %v7434, %v10731
      %v10979 = vsel %vm7465, %v10947, %v10733
      %v10981 = vsel %vm7465, %v10949, %v10735
      %v10983 = vsel %vm7465, %v10951, %v10737
      %v10985 = vsel %vm7465, %v10953, %v10739
      %v10987 = vsel %vm7465, %v10955, %v10741
      %v10989 = vsel %vm7465, %v10957, %v10743
      %v10991 = vsel %vm7465, %v10959, %v10745
      %v10993 = vsel %vm7465, %v10961, %v10747
      %v10995 = vsel %vm7465, %v10963, %v10749
      %v10997 = vsel %vm7465, %v10965, %v10751
      %v10999 = vsel %vm7465, %v10967, %v10753
      %v11001 = vsel %vm7465, %v10969, %v10755
      %v11003 = vsel %vm7465, %v10971, %v10757
      %v11005 = vsel %vm7465, %v10973, %v10759
      %v11007 = vsel %vm7465, %v10975, %v10761
      %v11009 = vsel %vm1560, %v10977, %v10763
      %v11011 = vsel %vm1560, %v10979, %v10765
      %v11013 = vsel %vm1560, %v10981, %v10767
      %v11015 = vsel %vm1560, %v10983, %v10769
      %v11017 = vsel %vm1560, %v10985, %v10771
      %v11019 = vsel %vm1560, %v10987, %v10773
      %v11021 = vsel %vm1560, %v10989, %v10775
      %v11023 = vsel %vm1560, %v10991, %v10777
      %v11025 = vsel %vm1560, %v10993, %v10779
      %v11027 = vsel %vm1560, %v10995, %v10781
      %v11029 = vsel %vm1560, %v10997, %v10783
      %v11031 = vsel %vm1560, %v10999, %v10785
      %v11033 = vsel %vm1560, %v11001, %v10787
      %v11035 = vsel %vm1560, %v11003, %v10789
      %v11037 = vsel %vm1560, %v11005, %v10791
      %v11039 = vsel %vm1560, %v11007, %v10793
      %v11041 = vsel %vm7530, %v11009, %v10795
      %v11043 = vsel %vm7530, %v11011, %v10797
      %v11045 = vsel %vm7530, %v11013, %v10799
      %v11047 = vsel %vm7530, %v11015, %v10801
      %v11049 = vsel %vm7530, %v11017, %v10803
      %v11051 = vsel %vm7530, %v11019, %v10805
      %v11053 = vsel %vm7530, %v11021, %v10807
      %v11055 = vsel %vm7530, %v11023, %v10809
      %v11057 = vsel %vm7530, %v11025, %v10811
      %v11059 = vsel %vm7530, %v11027, %v10813
      %v11061 = vsel %vm7530, %v11029, %v10815
      %v11063 = vsel %vm7530, %v11031, %v10817
      %v11065 = vsel %vm7530, %v11033, %v10819
      %v11067 = vsel %vm7530, %v11035, %v10821
      %v11069 = vsel %vm7530, %v11037, %v10823
      %v11071 = vsel %vm7530, %v11039, %v10825
      %v11073 = vsel %vm1593, %v11041, %v10827
      %v11075 = vsel %vm1593, %v11043, %v10829
      %v11077 = vsel %vm1593, %v11045, %v10831
      %v11079 = vsel %vm1593, %v11047, %v10833
      %v11081 = vsel %vm1593, %v11049, %v10835
      %v11083 = vsel %vm1593, %v11051, %v10837
      %v11085 = vsel %vm1593, %v11053, %v10839
      %v11087 = vsel %vm1593, %v11055, %v10841
      %v11089 = vsel %vm1593, %v11057, %v10843
      %v11091 = vsel %vm1593, %v11059, %v10845
      %v11093 = vsel %vm1593, %v11061, %v10847
      %v11095 = vsel %vm1593, %v11063, %v10849
      %v11097 = vsel %vm1593, %v11065, %v10851
      %v11099 = vsel %vm1593, %v11067, %v10853
      %v11101 = vsel %vm1593, %v11069, %v10855
      %v11102 = vsel %vm1593, %v11071, %v7336
      %v11104 = vsel %vm7595, %v11073, %v10857
      %v11106 = vsel %vm7595, %v11075, %v10859
      %v11108 = vsel %vm7595, %v11077, %v10861
      %v11110 = vsel %vm7595, %v11079, %v10863
      %v11112 = vsel %vm7595, %v11081, %v10865
      %v11114 = vsel %vm7595, %v11083, %v10867
      %v11116 = vsel %vm7595, %v11085, %v10869
      %v11118 = vsel %vm7595, %v11087, %v10871
      %v11120 = vsel %vm7595, %v11089, %v10873
      %v11122 = vsel %vm7595, %v11091, %v10875
      %v11124 = vsel %vm7595, %v11093, %v10877
      %v11126 = vsel %vm7595, %v11095, %v10879
      %v11128 = vsel %vm7595, %v11097, %v10881
      %v11130 = vsel %vm7595, %v11099, %v10883
      %v11132 = vsel %vm7595, %v11101, %v10885
      %v11133 = vsel %vm7595, %v11102, %v7368
      %v11135 = vsel %vm1626, %v11104, %v10887
      %v11137 = vsel %vm1626, %v11106, %v10889
      %v11139 = vsel %vm1626, %v11108, %v10891
      %v11141 = vsel %vm1626, %v11110, %v10893
      %v11143 = vsel %vm1626, %v11112, %v10895
      %v11145 = vsel %vm1626, %v11114, %v10897
      %v11147 = vsel %vm1626, %v11116, %v10899
      %v11149 = vsel %vm1626, %v11118, %v10901
      %v11151 = vsel %vm1626, %v11120, %v10903
      %v11153 = vsel %vm1626, %v11122, %v10905
      %v11155 = vsel %vm1626, %v11124, %v10907
      %v11157 = vsel %vm1626, %v11126, %v10909
      %v11159 = vsel %vm1626, %v11128, %v10911
      %v11161 = vsel %vm1626, %v11130, %v10913
      %v11163 = vsel %vm1626, %v11132, %v10915
      %v11164 = vsel %vm1626, %v11133, %v7400
      %v11165 = vld [vmem:[%s18] sm:$0xf]
      %v11166 = vld [vmem:[%s18 + $0x4] sm:$0xf]
      %v11167 = vld [vmem:[%s18 + $0x8] sm:$0xf]
      %v11168 = vld [vmem:[%s18 + $0xc] sm:$0xf]
      %v11169 = vld [vmem:[%s18 + $0x10] sm:$0x3]
      %v11170 = vld [vmem:[%s19] sm:$0x1]
      %v11172 = vlaneseq
      %v11173 = vshrl.u32 %v11172, 7
      %v11174 = vsub.s32 0, %v11173
      %v11175 = vrot.slane %v11170, %v11174
      %v11182 = vunpack.c.l.b16 %v11165
      %v11183 = vunpack.c.l.b16 %v11166
      %v11184 = vunpack.c.l.b16 %v11167
      %v11185 = vunpack.c.l.b16 %v11168
      %v11186 = vunpack.c.l.b16 %v11169
      %v11187 = vpack.c.b16 %v11183, %v11182
      %v11188 = vpack.c.b16 %v11185, %v11184
      %v11189 = vpack.c.b16 %v11186, %v11186
      %v11192 = vsel %vm7687, %v11135, 0
      %v11194 = vsel %vm7687, %v11137, 0
      %v11196 = vsel %vm7687, %v11139, 0
      %v11198 = vsel %vm7687, %v11141, 0
      %v11200 = vsel %vm7687, %v11143, 0
      %v11202 = vsel %vm7687, %v11145, 0
      %v11204 = vsel %vm7687, %v11147, 0
      %v11206 = vsel %vm7687, %v11149, 0
      %v11208 = vsel %vm7687, %v11151, 0
      %v11210 = vsel %vm7687, %v11153, 0
      %v11212 = vsel %vm7687, %v11155, 0
      %v11214 = vsel %vm7687, %v11157, 0
      %v11216 = vsel %vm7687, %v11159, 0
      %v11218 = vsel %vm7687, %v11161, 0
      %v11220 = vsel %vm7687, %v11163, 0
      %v11222 = vsel %vm7687, %v11164, 0
      %v11225 = vsel %vm4467, %v11189, 0
      %11227 = vmatprep.subr.bf16.mxu0 0
      %11228 = vmatpush1.bf16.msra.mxu0 0
      %11229 = vmatprep.subr.bf16.mxu0 0
      %11230 = vmatpush1.bf16.msra.mxu0 0
      %11231 = vmatprep.subr.bf16.mxu0 0
      %11232 = vmatpush1.bf16.msra.mxu0 0
      %11233 = vmatprep.subr.bf16.mxu0 0
      %11234 = vmatpush1.bf16.msra.mxu0 0
      %11235 = vmatprep.subr.bf16.mxu0 0
      %11236 = vmatpush1.bf16.msra.mxu0 0
      %11237 = vmatprep.subr.bf16.mxu0 0
      %11238 = vmatpush1.bf16.msra.mxu0 %v11225
      %11239 = vmatprep.subr.bf16.mxu0 0
      %11240 = vmatpush1.bf16.msra.mxu0 %v11188
      %11241 = vmatprep.subr.bf16.mxu0 0
      %11242 = vmatpush1.bf16.msra.mxu0 %v11187
      %11243 = vmatprep.subr.bf16.mxu0 0
      %11244 = vmatpush2.bf16.msra.mxu0 0
      %11245 = vmatprep.subr.bf16.mxu0 0
      %11246 = vmatpush2.bf16.msra.mxu0 0
      %11247 = vmatprep.subr.bf16.mxu0 0
      %11248 = vmatpush2.bf16.msra.mxu0 0
      %11249 = vmatprep.subr.bf16.mxu0 0
      %11250 = vmatpush2.bf16.msra.mxu0 0
      %11251 = vmatprep.subr.bf16.mxu0 0
      %11252 = vmatpush2.bf16.msra.mxu0 0
      %11253 = vmatprep.subr.bf16.mxu0 0
      %11254 = vmatpush2.bf16.msra.mxu0 0
      %11255 = vmatprep.subr.bf16.mxu0 0
      %11256 = vmatpush2.bf16.msra.mxu0 0
      %11257 = vmatprep.subr.bf16.mxu0 0
      %11258 = vmatpush2.bf16.msra.mxu0 0
      %11259 = vmatprep.mubr.bf16.mxu0 0
      %11260 = vmatmul.mubr.bf16.gmra.mxu0 %v11192
      %v11261 = vpop.f32.mrf.mxu0
      %v11262 = vadd.f32 %v11175, %v11261
      %v11263 = vpop.f32.mrf.mxu0
      %v11264 = vpop.f32.mrf.mxu0
      %v11265 = vadd.f32 %v11175, %v11264
      %v11266 = vpop.f32.mrf.mxu0
      %11267 = vmatprep.mubr.bf16.mxu0 0
      %11268 = vmatmul.mubr.bf16.gmra.mxu0 %v11194
      %v11269 = vpop.f32.mrf.mxu0
      %v11270 = vadd.f32 %v11175, %v11269
      %v11271 = vpop.f32.mrf.mxu0
      %v11272 = vpop.f32.mrf.mxu0
      %v11273 = vadd.f32 %v11175, %v11272
      %v11274 = vpop.f32.mrf.mxu0
      %11275 = vmatprep.mubr.bf16.mxu0 0
      %11276 = vmatmul.mubr.bf16.gmra.mxu0 %v11196
      %v11277 = vpop.f32.mrf.mxu0
      %v11278 = vadd.f32 %v11175, %v11277
      %v11279 = vpop.f32.mrf.mxu0
      %v11280 = vpop.f32.mrf.mxu0
      %v11281 = vadd.f32 %v11175, %v11280
      %v11282 = vpop.f32.mrf.mxu0
      %11283 = vmatprep.mubr.bf16.mxu0 0
      %11284 = vmatmul.mubr.bf16.gmra.mxu0 %v11198
      %v11285 = vpop.f32.mrf.mxu0
      %v11286 = vadd.f32 %v11175, %v11285
      %v11287 = vpop.f32.mrf.mxu0
      %v11288 = vpop.f32.mrf.mxu0
      %v11289 = vadd.f32 %v11175, %v11288
      %v11290 = vpop.f32.mrf.mxu0
      %11291 = vmatprep.mubr.bf16.mxu0 0
      %11292 = vmatmul.mubr.bf16.gmra.mxu0 %v11200
      %v11293 = vpop.f32.mrf.mxu0
      %v11294 = vadd.f32 %v11175, %v11293
      %v11295 = vpop.f32.mrf.mxu0
      %v11296 = vpop.f32.mrf.mxu0
      %v11297 = vadd.f32 %v11175, %v11296
      %v11298 = vpop.f32.mrf.mxu0
      %11299 = vmatprep.mubr.bf16.mxu0 0
      %11300 = vmatmul.mubr.bf16.gmra.mxu0 %v11202
      %v11301 = vpop.f32.mrf.mxu0
      %v11302 = vadd.f32 %v11175, %v11301
      %v11303 = vpop.f32.mrf.mxu0
      %v11304 = vpop.f32.mrf.mxu0
      %v11305 = vadd.f32 %v11175, %v11304
      %v11306 = vpop.f32.mrf.mxu0
      %11307 = vmatprep.mubr.bf16.mxu0 0
      %11308 = vmatmul.mubr.bf16.gmra.mxu0 %v11204
      %v11309 = vpop.f32.mrf.mxu0
      %v11310 = vadd.f32 %v11175, %v11309
      %v11311 = vpop.f32.mrf.mxu0
      %v11312 = vpop.f32.mrf.mxu0
      %v11313 = vadd.f32 %v11175, %v11312
      %v11314 = vpop.f32.mrf.mxu0
      %11315 = vmatprep.mubr.bf16.mxu0 0
      %11316 = vmatmul.mubr.bf16.gmra.mxu0 %v11206
      %v11317 = vpop.f32.mrf.mxu0
      %v11318 = vadd.f32 %v11175, %v11317
      %v11319 = vpop.f32.mrf.mxu0
      %v11320 = vpop.f32.mrf.mxu0
      %v11321 = vadd.f32 %v11175, %v11320
      %v11322 = vpop.f32.mrf.mxu0
      %11323 = vmatprep.mubr.bf16.mxu0 0
      %11324 = vmatmul.mubr.bf16.gmra.mxu0 %v11208
      %v11325 = vpop.f32.mrf.mxu0
      %v11326 = vadd.f32 %v11175, %v11325
      %v11327 = vpop.f32.mrf.mxu0
      %v11328 = vpop.f32.mrf.mxu0
      %v11329 = vadd.f32 %v11175, %v11328
      %v11330 = vpop.f32.mrf.mxu0
      %11331 = vmatprep.mubr.bf16.mxu0 0
      %11332 = vmatmul.mubr.bf16.gmra.mxu0 %v11210
      %v11333 = vpop.f32.mrf.mxu0
      %v11334 = vadd.f32 %v11175, %v11333
      %v11335 = vpop.f32.mrf.mxu0
      %v11336 = vpop.f32.mrf.mxu0
      %v11337 = vadd.f32 %v11175, %v11336
      %v11338 = vpop.f32.mrf.mxu0
      %11339 = vmatprep.mubr.bf16.mxu0 0
      %11340 = vmatmul.mubr.bf16.gmra.mxu0 %v11212
      %v11341 = vpop.f32.mrf.mxu0
      %v11342 = vadd.f32 %v11175, %v11341
      %v11343 = vpop.f32.mrf.mxu0
      %v11344 = vpop.f32.mrf.mxu0
      %v11345 = vadd.f32 %v11175, %v11344
      %v11346 = vpop.f32.mrf.mxu0
      %11347 = vmatprep.mubr.bf16.mxu0 0
      %11348 = vmatmul.mubr.bf16.gmra.mxu0 %v11214
      %v11349 = vpop.f32.mrf.mxu0
      %v11350 = vadd.f32 %v11175, %v11349
      %v11351 = vpop.f32.mrf.mxu0
      %v11352 = vpop.f32.mrf.mxu0
      %v11353 = vadd.f32 %v11175, %v11352
      %v11354 = vpop.f32.mrf.mxu0
      %11355 = vmatprep.mubr.bf16.mxu0 0
      %11356 = vmatmul.mubr.bf16.gmra.mxu0 %v11216
      %v11357 = vpop.f32.mrf.mxu0
      %v11358 = vadd.f32 %v11175, %v11357
      %v11359 = vpop.f32.mrf.mxu0
      %v11360 = vpop.f32.mrf.mxu0
      %v11361 = vadd.f32 %v11175, %v11360
      %v11362 = vpop.f32.mrf.mxu0
      %11363 = vmatprep.mubr.bf16.mxu0 0
      %11364 = vmatmul.mubr.bf16.gmra.mxu0 %v11218
      %v11365 = vpop.f32.mrf.mxu0
      %v11366 = vadd.f32 %v11175, %v11365
      %v11367 = vpop.f32.mrf.mxu0
      %v11368 = vpop.f32.mrf.mxu0
      %v11369 = vadd.f32 %v11175, %v11368
      %v11370 = vpop.f32.mrf.mxu0
      %11371 = vmatprep.mubr.bf16.mxu0 0
      %11372 = vmatmul.mubr.bf16.gmra.mxu0 %v11220
      %v11373 = vpop.f32.mrf.mxu0
      %v11374 = vadd.f32 %v11175, %v11373
      %v11375 = vpop.f32.mrf.mxu0
      %v11376 = vpop.f32.mrf.mxu0
      %v11377 = vadd.f32 %v11175, %v11376
      %v11378 = vpop.f32.mrf.mxu0
      %11379 = vmatprep.mubr.bf16.mxu0 0
      %11380 = vmatmul.mubr.bf16.gmra.mxu0 %v11222
      %v11381 = vpop.f32.mrf.mxu0
      %v11382 = vadd.f32 %v11175, %v11381
      %v11383 = vpop.f32.mrf.mxu0
      %v11384 = vpop.f32.mrf.mxu0
      %v11385 = vadd.f32 %v11175, %v11384
      %v11386 = vpop.f32.mrf.mxu0
      %11387 = vdwg.mxu0
      %v11388 = vadd.f32 %v11262, %v4506
      %v11389 = vadd.f32 %v11265, %v4509
      %v11390 = vadd.f32 %v11270, %v4514
      %v11391 = vadd.f32 %v11273, %v4517
      %v11392 = vadd.f32 %v11278, %v4522
      %v11393 = vadd.f32 %v11281, %v4525
      %v11394 = vadd.f32 %v11286, %v4530
      %v11395 = vadd.f32 %v11289, %v4533
      %v11396 = vadd.f32 %v11294, %v4538
      %v11397 = vadd.f32 %v11297, %v4541
      %v11398 = vadd.f32 %v11302, %v4546
      %v11399 = vadd.f32 %v11305, %v4549
      %v11400 = vadd.f32 %v11310, %v4554
      %v11401 = vadd.f32 %v11313, %v4557
      %v11402 = vadd.f32 %v11318, %v4562
      %v11403 = vadd.f32 %v11321, %v4565
      %v11404 = vadd.f32 %v11326, %v4570
      %v11405 = vadd.f32 %v11329, %v4573
      %v11406 = vadd.f32 %v11334, %v4578
      %v11407 = vadd.f32 %v11337, %v4581
      %v11408 = vadd.f32 %v11342, %v4586
      %v11409 = vadd.f32 %v11345, %v4589
      %v11410 = vadd.f32 %v11350, %v4594
      %v11411 = vadd.f32 %v11353, %v4597
      %v11412 = vadd.f32 %v11358, %v4602
      %v11413 = vadd.f32 %v11361, %v4605
      %v11414 = vadd.f32 %v11366, %v4610
      %v11415 = vadd.f32 %v11369, %v4613
      %v11416 = vadd.f32 %v11374, %v4618
      %v11417 = vadd.f32 %v11377, %v4621
      %v11418 = vadd.f32 %v11382, %v4626
      %v11419 = vadd.f32 %v11385, %v4629
      %v11420 = vpack.c.bf16 %v11389, %v11388
      %v11421 = vpack.c.bf16 %v11391, %v11390
      %v11422 = vpack.c.bf16 %v11393, %v11392
      %v11423 = vpack.c.bf16 %v11395, %v11394
      %v11424 = vpack.c.bf16 %v11397, %v11396
      %v11425 = vpack.c.bf16 %v11399, %v11398
      %v11426 = vpack.c.bf16 %v11401, %v11400
      %v11427 = vpack.c.bf16 %v11403, %v11402
      %v11428 = vpack.c.bf16 %v11405, %v11404
      %v11429 = vpack.c.bf16 %v11407, %v11406
      %v11430 = vpack.c.bf16 %v11409, %v11408
      %v11431 = vpack.c.bf16 %v11411, %v11410
      %v11432 = vpack.c.bf16 %v11413, %v11412
      %v11433 = vpack.c.bf16 %v11415, %v11414
      %v11434 = vpack.c.bf16 %v11417, %v11416
      %v11435 = vpack.c.bf16 %v11419, %v11418
      %v11452 = vunpack.c.l.b16 %v11420
      %v11453 = vunpack.c.h.b16 %v11420
      %v11454 = vunpack.c.l.b16 %v11421
      %v11455 = vunpack.c.h.b16 %v11421
      %v11456 = vunpack.c.l.b16 %v11422
      %v11457 = vunpack.c.h.b16 %v11422
      %v11458 = vunpack.c.l.b16 %v11423
      %v11459 = vunpack.c.h.b16 %v11423
      %v11460 = vunpack.c.l.b16 %v11424
      %v11461 = vunpack.c.h.b16 %v11424
      %v11462 = vunpack.c.l.b16 %v11425
      %v11463 = vunpack.c.h.b16 %v11425
      %v11464 = vunpack.c.l.b16 %v11426
      %v11465 = vunpack.c.h.b16 %v11426
      %v11466 = vunpack.c.l.b16 %v11427
      %v11467 = vunpack.c.h.b16 %v11427
      %v11468 = vunpack.c.l.b16 %v11428
      %v11469 = vunpack.c.h.b16 %v11428
      %v11470 = vunpack.c.l.b16 %v11429
      %v11471 = vunpack.c.h.b16 %v11429
      %v11472 = vunpack.c.l.b16 %v11430
      %v11473 = vunpack.c.h.b16 %v11430
      %v11474 = vunpack.c.l.b16 %v11431
      %v11475 = vunpack.c.h.b16 %v11431
      %v11476 = vunpack.c.l.b16 %v11432
      %v11477 = vunpack.c.h.b16 %v11432
      %v11478 = vunpack.c.l.b16 %v11433
      %v11479 = vunpack.c.h.b16 %v11433
      %v11480 = vunpack.c.l.b16 %v11434
      %v11481 = vunpack.c.h.b16 %v11434
      %v11482 = vunpack.c.l.b16 %v11435
      %v11483 = vunpack.c.h.b16 %v11435
      %v11484 = vpack.c.b16 %v11452, %v11452
      %v11485 = vpack.c.b16 %v11453, %v11453
      %v11486 = vpack.c.b16 %v11454, %v11454
      %v11487 = vpack.c.b16 %v11455, %v11455
      %v11488 = vpack.c.b16 %v11456, %v11456
      %v11489 = vpack.c.b16 %v11457, %v11457
      %v11490 = vpack.c.b16 %v11458, %v11458
      %v11491 = vpack.c.b16 %v11459, %v11459
      %v11492 = vpack.c.b16 %v11460, %v11460
      %v11493 = vpack.c.b16 %v11461, %v11461
      %v11494 = vpack.c.b16 %v11462, %v11462
      %v11495 = vpack.c.b16 %v11463, %v11463
      %v11496 = vpack.c.b16 %v11464, %v11464
      %v11497 = vpack.c.b16 %v11465, %v11465
      %v11498 = vpack.c.b16 %v11466, %v11466
      %v11499 = vpack.c.b16 %v11467, %v11467
      %v11500 = vpack.c.b16 %v11468, %v11468
      %v11501 = vpack.c.b16 %v11469, %v11469
      %v11502 = vpack.c.b16 %v11470, %v11470
      %v11503 = vpack.c.b16 %v11471, %v11471
      %v11504 = vpack.c.b16 %v11472, %v11472
      %v11505 = vpack.c.b16 %v11473, %v11473
      %v11506 = vpack.c.b16 %v11474, %v11474
      %v11507 = vpack.c.b16 %v11475, %v11475
      %v11508 = vpack.c.b16 %v11476, %v11476
      %v11509 = vpack.c.b16 %v11477, %v11477
      %v11510 = vpack.c.b16 %v11478, %v11478
      %v11511 = vpack.c.b16 %v11479, %v11479
      %v11512 = vpack.c.b16 %v11480, %v11480
      %v11513 = vpack.c.b16 %v11481, %v11481
      %v11514 = vpack.c.b16 %v11482, %v11482
      %v11515 = vpack.c.b16 %v11483, %v11483
      %vm11548 = vcmask 60416
      %11549 = vst.msk [vmem:[%s676] sm:$0xf] %vm11548, %v11484
      %11550 = vst.msk [vmem:[%s676 + $0x4] sm:$0xf] %vm11548, %v11485
      %11551 = vst.msk [vmem:[%s676 + $0x8] sm:$0xf] %vm11548, %v11486
      %11552 = vst.msk [vmem:[%s676 + $0xc] sm:$0xf] %vm11548, %v11487
      %11553 = vst.msk [vmem:[%s676 + $0x10] sm:$0xf] %vm11548, %v11488
      %11554 = vst.msk [vmem:[%s676 + $0x14] sm:$0xf] %vm11548, %v11489
      %11555 = vst.msk [vmem:[%s676 + $0x18] sm:$0xf] %vm11548, %v11490
      %11556 = vst.msk [vmem:[%s676 + $0x1c] sm:$0xf] %vm11548, %v11491
      %11557 = vst.msk [vmem:[%s676 + $0x20] sm:$0xf] %vm11548, %v11492
      %11558 = vst.msk [vmem:[%s676 + $0x24] sm:$0xf] %vm11548, %v11493
      %11559 = vst.msk [vmem:[%s676 + $0x28] sm:$0xf] %vm11548, %v11494
      %11560 = vst.msk [vmem:[%s676 + $0x2c] sm:$0xf] %vm11548, %v11495
      %11561 = vst.msk [vmem:[%s676 + $0x30] sm:$0xf] %vm11548, %v11496
      %11562 = vst.msk [vmem:[%s676 + $0x34] sm:$0xf] %vm11548, %v11497
      %11563 = vst.msk [vmem:[%s676 + $0x38] sm:$0xf] %vm11548, %v11498
      %11564 = vst.msk [vmem:[%s676 + $0x3c] sm:$0xf] %vm11548, %v11499
      %11565 = vst.msk [vmem:[%s676 + $0x40] sm:$0xf] %vm11548, %v11500
      %11566 = vst.msk [vmem:[%s676 + $0x44] sm:$0xf] %vm11548, %v11501
      %11567 = vst.msk [vmem:[%s676 + $0x48] sm:$0xf] %vm11548, %v11502
      %11568 = vst.msk [vmem:[%s676 + $0x4c] sm:$0xf] %vm11548, %v11503
      %11569 = vst.msk [vmem:[%s676 + $0x50] sm:$0xf] %vm11548, %v11504
      %11570 = vst.msk [vmem:[%s676 + $0x54] sm:$0xf] %vm11548, %v11505
      %11571 = vst.msk [vmem:[%s676 + $0x58] sm:$0xf] %vm11548, %v11506
      %11572 = vst.msk [vmem:[%s676 + $0x5c] sm:$0xf] %vm11548, %v11507
      %11573 = vst.msk [vmem:[%s676 + $0x60] sm:$0xf] %vm11548, %v11508
      %11574 = vst.msk [vmem:[%s676 + $0x64] sm:$0xf] %vm11548, %v11509
      %11575 = vst.msk [vmem:[%s676 + $0x68] sm:$0xf] %vm11548, %v11510
      %11576 = vst.msk [vmem:[%s676 + $0x6c] sm:$0xf] %vm11548, %v11511
      %11577 = vst.msk [vmem:[%s676 + $0x70] sm:$0xf] %vm11548, %v11512
      %11578 = vst.msk [vmem:[%s676 + $0x74] sm:$0xf] %vm11548, %v11513
      %11579 = vst.msk [vmem:[%s676 + $0x78] sm:$0xf] %vm11548, %v11514
      %11580 = vst.msk [vmem:[%s676 + $0x7c] sm:$0xf] %vm11548, %v11515
      %p11581 = scmp.lt.s32.totalorder %s32, 1
      %s11582 = scalar_select %p11581, %s32, 1
      %s11583 = smul.addr %s11582, 32
      %s11584 = smul.addr %s11583, 4
      %s11585 = scalar_lea.vmem %s21, %s11584
      // Predicated region
      $region105: #{resnet_block_with_spade.1} parent=103 // pred_check
        %p11586 = pneg %p501
      $region106: #{resnet_block_with_spade.1} parent=103 // pred_check_branch
        %11588 = sbr.rel (%p11586) target = $region108
      $region107: #{resnet_block_with_spade.1} parent=103 // pred_region
        _
      $region108: #{resnet_block_with_spade.1} parent=103 // pred_fallthru
        _
    $region104: #{resnet_block_with_spade.1} parent=5 // pred_fallthru
      _
    %p11589 = scmp.le.s32.totalorder 2, %s27
    // Predicated region
    $region109: #{resnet_block_with_spade.1} parent=5 // pred_check
      %p11590 = pneg %p11589
    $region110: #{resnet_block_with_spade.1} parent=5 // pred_check_branch
      %11592 = sbr.rel (%p11590) target = $region112
    $region111: #{resnet_block_with_spade.1} parent=5 // pred_region
      %s11593 = ssub.s32 %s27, 2
      // Predicated region
      $region113: #{resnet_block_with_spade.1} parent=111 // pred_check
        %p11594 = pneg %p507
      $region114: #{resnet_block_with_spade.1} parent=111 // pred_check_branch
        %11596 = sbr.rel (%p11594) target = $region116
      $region115: #{resnet_block_with_spade.1} parent=111 // pred_region
        %p11597 = scmp.lt.s32.totalorder %s33, 1
        %s11598 = scalar_select %p11597, %s33, 1
        %s11599 = smul.addr %s11598, 32
        %s11600 = smul.addr %s11599, 4
        %s11601 = scalar_lea.vmem %s21, %s11600
      $region116: #{resnet_block_with_spade.1} parent=111 // pred_fallthru
        _
    $region112: #{resnet_block_with_spade.1} parent=5 // pred_fallthru
      _
  $region6: #{resnet_block_with_spade.1} parent=0 // loop_footer
    %s31 = sadd.s32 1, %s27
  $region7: #{resnet_block_with_spade.1} parent=0 // loop_footer_branch
    %26 = sbr.rel target = $region3
  $region8: #{resnet_block_with_spade.1} parent=0 // loop_exit
    _

</llo_original>
